<compile_context>
chip_gen: v5e
topology: v5e:2x2
jax: 0.10.0
libtpu: 0.0.40
codegen_flags: <defaults>
</compile_context>

<pallas_src>
import jax
import jax.numpy as jnp
from jax import lax
from jax.experimental import pallas as pl
from jax.experimental.pallas import tpu as pltpu


def _batched_mm(lhs, rhs):
    # (B, M, K) x (B, K, N) -> (B, M, N) on the MXU with f32 accumulation.
    return lax.dot_general(lhs, rhs, (((2,), (1,)), ((0,), (0,))),
                           preferred_element_type=jnp.float32)


# ---------------------------------------------------------------------------
# Fused LeNet kernel: one grid step == one image.
# ---------------------------------------------------------------------------
def _lenet_kernel(x_ref, w1_ref, b1_ref, w2_ref, b2_ref,
                  fc1_ref, fb1_ref, fc2_ref, fb2_ref, fc3_ref, fb3_ref,
                  p1_ref, p2_ref, out_ref):
    f32 = jnp.float32
    x = x_ref[0, 0]                                          # (28, 28)

    # ---- zero-pad to 32x32 (padding=2) and move rows to the leading axis --
    zc = jnp.zeros((28, 2), f32)
    xp = jnp.concatenate([zc, x, zc], axis=1)                # (28, 32)
    zr = jnp.zeros((2, 32), f32)
    xp = jnp.concatenate([zr, xp, zr], axis=0)               # (32, 32)
    xrows = jnp.concatenate([xp[r:r + 1, :][None] for r in range(32)],
                            axis=0)                          # (32, 1, 32)

    # ---- conv1 (1->6, 5x5) + sigmoid: batched matmul over output rows -----
    # rhs1[oh, kh*5+kw, ow] = xp[oh+kh, ow+kw]
    rhs1 = jnp.concatenate(
        [xrows[kh:kh + 28, :, kw:kw + 28]
         for kh in range(5) for kw in range(5)], axis=1)     # (28, 25, 28)
    lhs1 = jnp.broadcast_to(w1_ref[...][None], (28, 6, 25))  # (28, 6, 25)
    y1 = jax.nn.sigmoid(_batched_mm(lhs1, rhs1) + b1_ref[...])   # (28, 6, 28)

    # ---- avgpool 2x2 -> (14, 6, 14), layout [h, c, w] ----------------------
    p1w = jnp.broadcast_to(p1_ref[...][None], (28, 28, 14))
    z1 = _batched_mm(y1, p1w)                                # (28, 6, 14)
    h1 = jnp.concatenate(
        [((z1[2 * i] + z1[2 * i + 1]) * 0.5)[None] for i in range(14)],
        axis=0)                                              # (14, 6, 14)

    # ---- conv2 (6->16, 5x5, valid) + sigmoid -------------------------------
    # rhs2[oh, c*25+kh*5+kw, ow] = h1[oh+kh, c, ow+kw]
    blocks = []
    for c in range(6):
        pieces = [h1[kh:kh + 10, c:c + 1, kw:kw + 10]
                  for kh in range(5) for kw in range(5)]
        blocks.append(jnp.concatenate(pieces, axis=1))       # (10, 25, 10)
    rhs2 = jnp.concatenate(blocks, axis=1)                   # (10, 150, 10)
    lhs2 = jnp.broadcast_to(w2_ref[...][None], (10, 16, 150))
    y2 = jax.nn.sigmoid(_batched_mm(lhs2, rhs2) + b2_ref[...])   # (10, 16, 10)

    # ---- avgpool 2x2 -> (5, 16, 5), layout [h, c, w] -----------------------
    p2w = jnp.broadcast_to(p2_ref[...][None], (10, 10, 5))
    z2 = _batched_mm(y2, p2w)                                # (10, 16, 5)
    h2 = jnp.concatenate(
        [((z2[2 * i] + z2[2 * i + 1]) * 0.5)[None] for i in range(5)],
        axis=0)                                              # (5, 16, 5)

    # ---- flatten in (h, c, w) order (fc1 weight pre-permuted to match) ----
    flat = jnp.concatenate(
        [h2[h, c:c + 1, :] for h in range(5) for c in range(16)],
        axis=1)                                              # (1, 400)

    # ---- MLP head ----------------------------------------------------------
    a1 = jax.nn.sigmoid(
        jnp.dot(flat, fc1_ref[...], preferred_element_type=f32) + fb1_ref[...])
    a2 = jax.nn.sigmoid(
        jnp.dot(a1, fc2_ref[...], preferred_element_type=f32) + fb2_ref[...])
    out_ref[0] = (
        jnp.dot(a2, fc3_ref[...], preferred_element_type=f32) + fb3_ref[...])


def _full_spec(a):
    nd = a.ndim
    return pl.BlockSpec(a.shape, lambda i, nd=nd: (0,) * nd)


def lenet_forward(x, p):
    """x: (N, 1, 28, 28) float32 NCHW -> logits (N, num_classes)."""
    N = x.shape[0]
    C = p['fc3_w'].shape[1]
    f32 = jnp.float32
    x = x.astype(f32)

    # Cheap, one-time weight re-layouts (plain JAX on the tiny weight tensors).
    w1 = p['conv1_w'].reshape(6, 25)                         # (kh, kw) order
    b1 = p['conv1_b'].reshape(1, 6, 1)
    w2 = p['conv2_w'].reshape(16, 150)                       # (c, kh, kw) order
    b2 = p['conv2_b'].reshape(1, 16, 1)
    # fc1 rows from PyTorch flatten order (c, h, w) -> kernel order (h, c, w).
    fc1 = p['fc1_w'].reshape(16, 5, 5, 120).transpose(1, 0, 2, 3).reshape(400, 120)
    fb1 = p['fc1_b'].reshape(1, 120)
    fc2 = p['fc2_w']
    fb2 = p['fc2_b'].reshape(1, 84)
    fc3 = p['fc3_w']
    fb3 = p['fc3_b'].reshape(1, C)
    # Constant 2x2 width-averaging matrices (0.5 where row//2 == col).
    p1 = 0.5 * (jnp.arange(28)[:, None] // 2 == jnp.arange(14)[None, :]).astype(f32)
    p2 = 0.5 * (jnp.arange(10)[:, None] // 2 == jnp.arange(5)[None, :]).astype(f32)

    consts = (w1, b1, w2, b2, fc1, fb1, fc2, fb2, fc3, fb3, p1, p2)

    out = pl.pallas_call(
        _lenet_kernel,
        out_shape=jax.ShapeDtypeStruct((N, 1, C), f32),
        grid=(N,),
        in_specs=[pl.BlockSpec((1, 1, 28, 28), lambda i: (i, 0, 0, 0))]
                 + [_full_spec(a) for a in consts],
        out_specs=pl.BlockSpec((1, 1, C), lambda i: (i, 0, 0)),
        compiler_params=pltpu.CompilerParams(
            dimension_semantics=("parallel",)),
    )(x, *consts)
    return out.reshape(N, C)


# ---------------------------------------------------------------------------
# Parameters (deterministic, PyTorch-style U(-1/sqrt(fan_in), 1/sqrt(fan_in)))
# ---------------------------------------------------------------------------
def init_params(key, num_classes=10):
    ks = jax.random.split(key, 10)

    def uni(k, shape, fan_in):
        bound = 1.0 / float(fan_in) ** 0.5
        return jax.random.uniform(k, shape, jnp.float32, -bound, bound)

    return {
        'conv1_w': uni(ks[0], (6, 1, 5, 5), 1 * 5 * 5),
        'conv1_b': uni(ks[1], (6,), 1 * 5 * 5),
        'conv2_w': uni(ks[2], (16, 6, 5, 5), 6 * 5 * 5),
        'conv2_b': uni(ks[3], (16,), 6 * 5 * 5),
        'fc1_w': uni(ks[4], (16 * 5 * 5, 120), 16 * 5 * 5),   # stored (in, out)
        'fc1_b': uni(ks[5], (120,), 16 * 5 * 5),
        'fc2_w': uni(ks[6], (120, 84), 120),
        'fc2_b': uni(ks[7], (84,), 120),
        'fc3_w': uni(ks[8], (84, num_classes), 84),
        'fc3_b': uni(ks[9], (num_classes,), 84),
    }


# ---------------------------------------------------------------------------
# Pure-JAX reference (matches the PyTorch module semantics)
# ---------------------------------------------------------------------------
def lenet_reference(x, p):
    dn = ('NCHW', 'OIHW', 'NCHW')
    h = lax.conv_general_dilated(x, p['conv1_w'], (1, 1), ((2, 2), (2, 2)),
                                 dimension_numbers=dn)
    h = jax.nn.sigmoid(h + p['conv1_b'][None, :, None, None])
    h = lax.reduce_window(h, 0., lax.add, (1, 1, 2, 2), (1, 1, 2, 2), 'VALID') / 4.
    h = lax.conv_general_dilated(h, p['conv2_w'], (1, 1), 'VALID',
                                 dimension_numbers=dn)
    h = jax.nn.sigmoid(h + p['conv2_b'][None, :, None, None])
    h = lax.reduce_window(h, 0., lax.add, (1, 1, 2, 2), (1, 1, 2, 2), 'VALID') / 4.
    h = h.reshape(h.shape[0], -1)
    h = jax.nn.sigmoid(h @ p['fc1_w'] + p['fc1_b'])
    h = jax.nn.sigmoid(h @ p['fc2_w'] + p['fc2_b'])
    return h @ p['fc3_w'] + p['fc3_b']


if __name__ == "__main__":
    key = jax.random.PRNGKey(0)
    kx, kp = jax.random.split(key)
    # LeNet expects 28x28 single-channel images so Flatten yields 16*5*5=400.
    x = jax.random.normal(kx, (2, 1, 28, 28), jnp.float32)
    params = init_params(kp, num_classes=10)

    out = jax.jit(lenet_forward)(x, params)
    out = jax.block_until_ready(out)

    ref = lenet_reference(x, params)
    assert out.shape == (2, 10), out.shape
    assert jnp.allclose(out, ref, atol=2e-4, rtol=2e-4), \
        float(jnp.max(jnp.abs(out - ref)))
    print("KERNEL_OK")
</pallas_src>

<mosaic_0001>
module attributes {stable_mosaic.version = 11 : i64} {
  func.func @_lenet_kernel(%arg0: i32, %arg1: memref<1x1x28x28xf32, #tpu.memory_space<vmem>>, %arg2: memref<6x25xf32, #tpu.memory_space<vmem>>, %arg3: memref<1x6x1xf32, #tpu.memory_space<vmem>>, %arg4: memref<16x150xf32, #tpu.memory_space<vmem>>, %arg5: memref<1x16x1xf32, #tpu.memory_space<vmem>>, %arg6: memref<400x120xf32, #tpu.memory_space<vmem>>, %arg7: memref<1x120xf32, #tpu.memory_space<vmem>>, %arg8: memref<120x84xf32, #tpu.memory_space<vmem>>, %arg9: memref<1x84xf32, #tpu.memory_space<vmem>>, %arg10: memref<84x10xf32, #tpu.memory_space<vmem>>, %arg11: memref<1x10xf32, #tpu.memory_space<vmem>>, %arg12: memref<28x14xf32, #tpu.memory_space<vmem>>, %arg13: memref<10x5xf32, #tpu.memory_space<vmem>>, %arg14: memref<1x1x10xf32, #tpu.memory_space<vmem>>) attributes {dimension_semantics = [#tpu.dimension_semantics<parallel>], iteration_bounds = array<i64: 2>, scalar_prefetch = 0 : i64, scratch_operands = 0 : i64, tpu.core_type = #tpu.core_type<tc>, window_params = [{transform_indices = @transform_0, window_bounds = array<i64: 1, 1, 28, 28>}, {pipeline_mode = #tpu.pipeline_mode<synchronous>, transform_indices = @transform_1, window_bounds = array<i64: 6, 25>}, {pipeline_mode = #tpu.pipeline_mode<synchronous>, transform_indices = @transform_2, window_bounds = array<i64: 1, 6, 1>}, {pipeline_mode = #tpu.pipeline_mode<synchronous>, transform_indices = @transform_3, window_bounds = array<i64: 16, 150>}, {pipeline_mode = #tpu.pipeline_mode<synchronous>, transform_indices = @transform_4, window_bounds = array<i64: 1, 16, 1>}, {pipeline_mode = #tpu.pipeline_mode<synchronous>, transform_indices = @transform_5, window_bounds = array<i64: 400, 120>}, {pipeline_mode = #tpu.pipeline_mode<synchronous>, transform_indices = @transform_6, window_bounds = array<i64: 1, 120>}, {pipeline_mode = #tpu.pipeline_mode<synchronous>, transform_indices = @transform_7, window_bounds = array<i64: 120, 84>}, {pipeline_mode = #tpu.pipeline_mode<synchronous>, transform_indices = @transform_8, window_bounds = array<i64: 1, 84>}, {pipeline_mode = #tpu.pipeline_mode<synchronous>, transform_indices = @transform_9, window_bounds = array<i64: 84, 10>}, {pipeline_mode = #tpu.pipeline_mode<synchronous>, transform_indices = @transform_10, window_bounds = array<i64: 1, 10>}, {pipeline_mode = #tpu.pipeline_mode<synchronous>, transform_indices = @transform_11, window_bounds = array<i64: 28, 14>}, {pipeline_mode = #tpu.pipeline_mode<synchronous>, transform_indices = @transform_12, window_bounds = array<i64: 10, 5>}, {transform_indices = @transform_13, window_bounds = array<i64: 1, 1, 10>}]} {
    %c0 = arith.constant 0 : index
    %c0_0 = arith.constant 0 : index
    %c0_1 = arith.constant 0 : index
    %c0_2 = arith.constant 0 : index
    %0 = vector.load %arg1[%c0, %c0_0, %c0_1, %c0_2] : memref<1x1x28x28xf32, #tpu.memory_space<vmem>>, vector<1x1x28x28xf32>
    %1 = vector.shape_cast %0 : vector<1x1x28x28xf32> to vector<28x28xf32>
    %cst = arith.constant 0.000000e+00 : f32
    %2 = vector.broadcast %cst : f32 to vector<28x2xf32>
    %3 = tpu.concatenate %2, %1, %2 in 1 : vector<28x2xf32>, vector<28x28xf32>, vector<28x2xf32> -> vector<28x32xf32>
    %cst_3 = arith.constant 0.000000e+00 : f32
    %4 = vector.broadcast %cst_3 : f32 to vector<2x32xf32>
    %5 = tpu.concatenate %4, %3, %4 in 0 : vector<2x32xf32>, vector<28x32xf32>, vector<2x32xf32> -> vector<32x32xf32>
    %6 = vector.extract_strided_slice %5 {offsets = [0, 0], sizes = [1, 32], strides = [1, 1]} : vector<32x32xf32> to vector<1x32xf32>
    %7 = vector.shape_cast %6 : vector<1x32xf32> to vector<1x1x32xf32>
    %8 = vector.extract_strided_slice %5 {offsets = [1, 0], sizes = [1, 32], strides = [1, 1]} : vector<32x32xf32> to vector<1x32xf32>
    %9 = vector.shape_cast %8 : vector<1x32xf32> to vector<1x1x32xf32>
    %10 = vector.extract_strided_slice %5 {offsets = [2, 0], sizes = [1, 32], strides = [1, 1]} : vector<32x32xf32> to vector<1x32xf32>
    %11 = vector.shape_cast %10 : vector<1x32xf32> to vector<1x1x32xf32>
    %12 = vector.extract_strided_slice %5 {offsets = [3, 0], sizes = [1, 32], strides = [1, 1]} : vector<32x32xf32> to vector<1x32xf32>
    %13 = vector.shape_cast %12 : vector<1x32xf32> to vector<1x1x32xf32>
    %14 = vector.extract_strided_slice %5 {offsets = [4, 0], sizes = [1, 32], strides = [1, 1]} : vector<32x32xf32> to vector<1x32xf32>
    %15 = vector.shape_cast %14 : vector<1x32xf32> to vector<1x1x32xf32>
    %16 = vector.extract_strided_slice %5 {offsets = [5, 0], sizes = [1, 32], strides = [1, 1]} : vector<32x32xf32> to vector<1x32xf32>
    %17 = vector.shape_cast %16 : vector<1x32xf32> to vector<1x1x32xf32>
    %18 = vector.extract_strided_slice %5 {offsets = [6, 0], sizes = [1, 32], strides = [1, 1]} : vector<32x32xf32> to vector<1x32xf32>
    %19 = vector.shape_cast %18 : vector<1x32xf32> to vector<1x1x32xf32>
    %20 = vector.extract_strided_slice %5 {offsets = [7, 0], sizes = [1, 32], strides = [1, 1]} : vector<32x32xf32> to vector<1x32xf32>
    %21 = vector.shape_cast %20 : vector<1x32xf32> to vector<1x1x32xf32>
    %22 = vector.extract_strided_slice %5 {offsets = [8, 0], sizes = [1, 32], strides = [1, 1]} : vector<32x32xf32> to vector<1x32xf32>
    %23 = vector.shape_cast %22 : vector<1x32xf32> to vector<1x1x32xf32>
    %24 = vector.extract_strided_slice %5 {offsets = [9, 0], sizes = [1, 32], strides = [1, 1]} : vector<32x32xf32> to vector<1x32xf32>
    %25 = vector.shape_cast %24 : vector<1x32xf32> to vector<1x1x32xf32>
    %26 = vector.extract_strided_slice %5 {offsets = [10, 0], sizes = [1, 32], strides = [1, 1]} : vector<32x32xf32> to vector<1x32xf32>
    %27 = vector.shape_cast %26 : vector<1x32xf32> to vector<1x1x32xf32>
    %28 = vector.extract_strided_slice %5 {offsets = [11, 0], sizes = [1, 32], strides = [1, 1]} : vector<32x32xf32> to vector<1x32xf32>
    %29 = vector.shape_cast %28 : vector<1x32xf32> to vector<1x1x32xf32>
    %30 = vector.extract_strided_slice %5 {offsets = [12, 0], sizes = [1, 32], strides = [1, 1]} : vector<32x32xf32> to vector<1x32xf32>
    %31 = vector.shape_cast %30 : vector<1x32xf32> to vector<1x1x32xf32>
    %32 = vector.extract_strided_slice %5 {offsets = [13, 0], sizes = [1, 32], strides = [1, 1]} : vector<32x32xf32> to vector<1x32xf32>
    %33 = vector.shape_cast %32 : vector<1x32xf32> to vector<1x1x32xf32>
    %34 = vector.extract_strided_slice %5 {offsets = [14, 0], sizes = [1, 32], strides = [1, 1]} : vector<32x32xf32> to vector<1x32xf32>
    %35 = vector.shape_cast %34 : vector<1x32xf32> to vector<1x1x32xf32>
    %36 = vector.extract_strided_slice %5 {offsets = [15, 0], sizes = [1, 32], strides = [1, 1]} : vector<32x32xf32> to vector<1x32xf32>
    %37 = vector.shape_cast %36 : vector<1x32xf32> to vector<1x1x32xf32>
    %38 = vector.extract_strided_slice %5 {offsets = [16, 0], sizes = [1, 32], strides = [1, 1]} : vector<32x32xf32> to vector<1x32xf32>
    %39 = vector.shape_cast %38 : vector<1x32xf32> to vector<1x1x32xf32>
    %40 = vector.extract_strided_slice %5 {offsets = [17, 0], sizes = [1, 32], strides = [1, 1]} : vector<32x32xf32> to vector<1x32xf32>
    %41 = vector.shape_cast %40 : vector<1x32xf32> to vector<1x1x32xf32>
    %42 = vector.extract_strided_slice %5 {offsets = [18, 0], sizes = [1, 32], strides = [1, 1]} : vector<32x32xf32> to vector<1x32xf32>
    %43 = vector.shape_cast %42 : vector<1x32xf32> to vector<1x1x32xf32>
    %44 = vector.extract_strided_slice %5 {offsets = [19, 0], sizes = [1, 32], strides = [1, 1]} : vector<32x32xf32> to vector<1x32xf32>
    %45 = vector.shape_cast %44 : vector<1x32xf32> to vector<1x1x32xf32>
    %46 = vector.extract_strided_slice %5 {offsets = [20, 0], sizes = [1, 32], strides = [1, 1]} : vector<32x32xf32> to vector<1x32xf32>
    %47 = vector.shape_cast %46 : vector<1x32xf32> to vector<1x1x32xf32>
    %48 = vector.extract_strided_slice %5 {offsets = [21, 0], sizes = [1, 32], strides = [1, 1]} : vector<32x32xf32> to vector<1x32xf32>
    %49 = vector.shape_cast %48 : vector<1x32xf32> to vector<1x1x32xf32>
    %50 = vector.extract_strided_slice %5 {offsets = [22, 0], sizes = [1, 32], strides = [1, 1]} : vector<32x32xf32> to vector<1x32xf32>
    %51 = vector.shape_cast %50 : vector<1x32xf32> to vector<1x1x32xf32>
    %52 = vector.extract_strided_slice %5 {offsets = [23, 0], sizes = [1, 32], strides = [1, 1]} : vector<32x32xf32> to vector<1x32xf32>
    %53 = vector.shape_cast %52 : vector<1x32xf32> to vector<1x1x32xf32>
    %54 = vector.extract_strided_slice %5 {offsets = [24, 0], sizes = [1, 32], strides = [1, 1]} : vector<32x32xf32> to vector<1x32xf32>
    %55 = vector.shape_cast %54 : vector<1x32xf32> to vector<1x1x32xf32>
    %56 = vector.extract_strided_slice %5 {offsets = [25, 0], sizes = [1, 32], strides = [1, 1]} : vector<32x32xf32> to vector<1x32xf32>
    %57 = vector.shape_cast %56 : vector<1x32xf32> to vector<1x1x32xf32>
    %58 = vector.extract_strided_slice %5 {offsets = [26, 0], sizes = [1, 32], strides = [1, 1]} : vector<32x32xf32> to vector<1x32xf32>
    %59 = vector.shape_cast %58 : vector<1x32xf32> to vector<1x1x32xf32>
    %60 = vector.extract_strided_slice %5 {offsets = [27, 0], sizes = [1, 32], strides = [1, 1]} : vector<32x32xf32> to vector<1x32xf32>
    %61 = vector.shape_cast %60 : vector<1x32xf32> to vector<1x1x32xf32>
    %62 = vector.extract_strided_slice %5 {offsets = [28, 0], sizes = [1, 32], strides = [1, 1]} : vector<32x32xf32> to vector<1x32xf32>
    %63 = vector.shape_cast %62 : vector<1x32xf32> to vector<1x1x32xf32>
    %64 = vector.extract_strided_slice %5 {offsets = [29, 0], sizes = [1, 32], strides = [1, 1]} : vector<32x32xf32> to vector<1x32xf32>
    %65 = vector.shape_cast %64 : vector<1x32xf32> to vector<1x1x32xf32>
    %66 = vector.extract_strided_slice %5 {offsets = [30, 0], sizes = [1, 32], strides = [1, 1]} : vector<32x32xf32> to vector<1x32xf32>
    %67 = vector.shape_cast %66 : vector<1x32xf32> to vector<1x1x32xf32>
    %68 = vector.extract_strided_slice %5 {offsets = [31, 0], sizes = [1, 32], strides = [1, 1]} : vector<32x32xf32> to vector<1x32xf32>
    %69 = vector.shape_cast %68 : vector<1x32xf32> to vector<1x1x32xf32>
    %70 = tpu.concatenate %7, %9, %11, %13, %15, %17, %19, %21, %23, %25, %27, %29, %31, %33, %35, %37 in 0 : vector<1x1x32xf32>, vector<1x1x32xf32>, vector<1x1x32xf32>, vector<1x1x32xf32>, vector<1x1x32xf32>, vector<1x1x32xf32>, vector<1x1x32xf32>, vector<1x1x32xf32>, vector<1x1x32xf32>, vector<1x1x32xf32>, vector<1x1x32xf32>, vector<1x1x32xf32>, vector<1x1x32xf32>, vector<1x1x32xf32>, vector<1x1x32xf32>, vector<1x1x32xf32> -> vector<16x1x32xf32>
    %71 = tpu.concatenate %39, %41, %43, %45, %47, %49, %51, %53, %55, %57, %59, %61, %63, %65, %67, %69 in 0 : vector<1x1x32xf32>, vector<1x1x32xf32>, vector<1x1x32xf32>, vector<1x1x32xf32>, vector<1x1x32xf32>, vector<1x1x32xf32>, vector<1x1x32xf32>, vector<1x1x32xf32>, vector<1x1x32xf32>, vector<1x1x32xf32>, vector<1x1x32xf32>, vector<1x1x32xf32>, vector<1x1x32xf32>, vector<1x1x32xf32>, vector<1x1x32xf32>, vector<1x1x32xf32> -> vector<16x1x32xf32>
    %72 = tpu.concatenate %70, %71 in 0 : vector<16x1x32xf32>, vector<16x1x32xf32> -> vector<32x1x32xf32>
    %73 = vector.extract_strided_slice %72 {offsets = [0, 0, 0], sizes = [28, 1, 28], strides = [1, 1, 1]} : vector<32x1x32xf32> to vector<28x1x28xf32>
    %74 = vector.extract_strided_slice %72 {offsets = [0, 0, 1], sizes = [28, 1, 28], strides = [1, 1, 1]} : vector<32x1x32xf32> to vector<28x1x28xf32>
    %75 = vector.extract_strided_slice %72 {offsets = [0, 0, 2], sizes = [28, 1, 28], strides = [1, 1, 1]} : vector<32x1x32xf32> to vector<28x1x28xf32>
    %76 = vector.extract_strided_slice %72 {offsets = [0, 0, 3], sizes = [28, 1, 28], strides = [1, 1, 1]} : vector<32x1x32xf32> to vector<28x1x28xf32>
    %77 = vector.extract_strided_slice %72 {offsets = [0, 0, 4], sizes = [28, 1, 28], strides = [1, 1, 1]} : vector<32x1x32xf32> to vector<28x1x28xf32>
    %78 = vector.extract_strided_slice %72 {offsets = [1, 0, 0], sizes = [28, 1, 28], strides = [1, 1, 1]} : vector<32x1x32xf32> to vector<28x1x28xf32>
    %79 = vector.extract_strided_slice %72 {offsets = [1, 0, 1], sizes = [28, 1, 28], strides = [1, 1, 1]} : vector<32x1x32xf32> to vector<28x1x28xf32>
    %80 = vector.extract_strided_slice %72 {offsets = [1, 0, 2], sizes = [28, 1, 28], strides = [1, 1, 1]} : vector<32x1x32xf32> to vector<28x1x28xf32>
    %81 = vector.extract_strided_slice %72 {offsets = [1, 0, 3], sizes = [28, 1, 28], strides = [1, 1, 1]} : vector<32x1x32xf32> to vector<28x1x28xf32>
    %82 = vector.extract_strided_slice %72 {offsets = [1, 0, 4], sizes = [28, 1, 28], strides = [1, 1, 1]} : vector<32x1x32xf32> to vector<28x1x28xf32>
    %83 = vector.extract_strided_slice %72 {offsets = [2, 0, 0], sizes = [28, 1, 28], strides = [1, 1, 1]} : vector<32x1x32xf32> to vector<28x1x28xf32>
    %84 = vector.extract_strided_slice %72 {offsets = [2, 0, 1], sizes = [28, 1, 28], strides = [1, 1, 1]} : vector<32x1x32xf32> to vector<28x1x28xf32>
    %85 = vector.extract_strided_slice %72 {offsets = [2, 0, 2], sizes = [28, 1, 28], strides = [1, 1, 1]} : vector<32x1x32xf32> to vector<28x1x28xf32>
    %86 = vector.extract_strided_slice %72 {offsets = [2, 0, 3], sizes = [28, 1, 28], strides = [1, 1, 1]} : vector<32x1x32xf32> to vector<28x1x28xf32>
    %87 = vector.extract_strided_slice %72 {offsets = [2, 0, 4], sizes = [28, 1, 28], strides = [1, 1, 1]} : vector<32x1x32xf32> to vector<28x1x28xf32>
    %88 = vector.extract_strided_slice %72 {offsets = [3, 0, 0], sizes = [28, 1, 28], strides = [1, 1, 1]} : vector<32x1x32xf32> to vector<28x1x28xf32>
    %89 = vector.extract_strided_slice %72 {offsets = [3, 0, 1], sizes = [28, 1, 28], strides = [1, 1, 1]} : vector<32x1x32xf32> to vector<28x1x28xf32>
    %90 = vector.extract_strided_slice %72 {offsets = [3, 0, 2], sizes = [28, 1, 28], strides = [1, 1, 1]} : vector<32x1x32xf32> to vector<28x1x28xf32>
    %91 = vector.extract_strided_slice %72 {offsets = [3, 0, 3], sizes = [28, 1, 28], strides = [1, 1, 1]} : vector<32x1x32xf32> to vector<28x1x28xf32>
    %92 = vector.extract_strided_slice %72 {offsets = [3, 0, 4], sizes = [28, 1, 28], strides = [1, 1, 1]} : vector<32x1x32xf32> to vector<28x1x28xf32>
    %93 = vector.extract_strided_slice %72 {offsets = [4, 0, 0], sizes = [28, 1, 28], strides = [1, 1, 1]} : vector<32x1x32xf32> to vector<28x1x28xf32>
    %94 = vector.extract_strided_slice %72 {offsets = [4, 0, 1], sizes = [28, 1, 28], strides = [1, 1, 1]} : vector<32x1x32xf32> to vector<28x1x28xf32>
    %95 = vector.extract_strided_slice %72 {offsets = [4, 0, 2], sizes = [28, 1, 28], strides = [1, 1, 1]} : vector<32x1x32xf32> to vector<28x1x28xf32>
    %96 = vector.extract_strided_slice %72 {offsets = [4, 0, 3], sizes = [28, 1, 28], strides = [1, 1, 1]} : vector<32x1x32xf32> to vector<28x1x28xf32>
    %97 = vector.extract_strided_slice %72 {offsets = [4, 0, 4], sizes = [28, 1, 28], strides = [1, 1, 1]} : vector<32x1x32xf32> to vector<28x1x28xf32>
    %98 = tpu.concatenate %73, %74, %75, %76, %77, %78, %79, %80, %81, %82, %83, %84, %85, %86, %87, %88 in 1 : vector<28x1x28xf32>, vector<28x1x28xf32>, vector<28x1x28xf32>, vector<28x1x28xf32>, vector<28x1x28xf32>, vector<28x1x28xf32>, vector<28x1x28xf32>, vector<28x1x28xf32>, vector<28x1x28xf32>, vector<28x1x28xf32>, vector<28x1x28xf32>, vector<28x1x28xf32>, vector<28x1x28xf32>, vector<28x1x28xf32>, vector<28x1x28xf32>, vector<28x1x28xf32> -> vector<28x16x28xf32>
    %99 = tpu.concatenate %89, %90, %91, %92, %93, %94, %95, %96, %97 in 1 : vector<28x1x28xf32>, vector<28x1x28xf32>, vector<28x1x28xf32>, vector<28x1x28xf32>, vector<28x1x28xf32>, vector<28x1x28xf32>, vector<28x1x28xf32>, vector<28x1x28xf32>, vector<28x1x28xf32> -> vector<28x9x28xf32>
    %100 = tpu.concatenate %98, %99 in 1 : vector<28x16x28xf32>, vector<28x9x28xf32> -> vector<28x25x28xf32>
    %c0_4 = arith.constant 0 : index
    %c0_5 = arith.constant 0 : index
    %101 = vector.load %arg2[%c0_4, %c0_5] : memref<6x25xf32, #tpu.memory_space<vmem>>, vector<6x25xf32>
    %102 = vector.shape_cast %101 : vector<6x25xf32> to vector<1x6x25xf32>
    %103 = vector.shape_cast %102 : vector<1x6x25xf32> to vector<1x6x25xf32>
    %104 = vector.broadcast %103 : vector<1x6x25xf32> to vector<28x6x25xf32>
    %cst_6 = arith.constant dense<0.000000e+00> : vector<28x6x28xf32>
    %105 = tpu.matmul %104, %100, %cst_6 {dimension_numbers = #tpu.dot_dimension_numbers<[2], [1], [1], [2], [0, 0, 0, 1, 1, 2], [0], [0]>} : vector<28x6x25xf32>, vector<28x25x28xf32>, vector<28x6x28xf32> -> vector<28x6x28xf32>
    %c0_7 = arith.constant 0 : index
    %c0_8 = arith.constant 0 : index
    %c0_9 = arith.constant 0 : index
    %106 = vector.load %arg3[%c0_7, %c0_8, %c0_9] : memref<1x6x1xf32, #tpu.memory_space<vmem>>, vector<1x6x1xf32>
    %107 = vector.broadcast %106 : vector<1x6x1xf32> to vector<28x6x28xf32>
    %108 = arith.addf %105, %107 : vector<28x6x28xf32>
    %109 = arith.negf %108 : vector<28x6x28xf32>
    %110 = math.exp %109 : vector<28x6x28xf32>
    %cst_10 = arith.constant 1.000000e+00 : f32
    %111 = vector.broadcast %cst_10 : f32 to vector<28x6x28xf32>
    %112 = arith.addf %111, %110 : vector<28x6x28xf32>
    %113 = arith.divf %111, %112 : vector<28x6x28xf32>
    %c0_11 = arith.constant 0 : index
    %c0_12 = arith.constant 0 : index
    %114 = vector.load %arg12[%c0_11, %c0_12] : memref<28x14xf32, #tpu.memory_space<vmem>>, vector<28x14xf32>
    %115 = vector.shape_cast %114 : vector<28x14xf32> to vector<1x28x14xf32>
    %116 = vector.shape_cast %115 : vector<1x28x14xf32> to vector<1x28x14xf32>
    %117 = vector.broadcast %116 : vector<1x28x14xf32> to vector<28x28x14xf32>
    %cst_13 = arith.constant dense<0.000000e+00> : vector<28x6x14xf32>
    %118 = tpu.matmul %113, %117, %cst_13 {dimension_numbers = #tpu.dot_dimension_numbers<[2], [1], [1], [2], [0, 0, 0, 1, 1, 2], [0], [0]>} : vector<28x6x28xf32>, vector<28x28x14xf32>, vector<28x6x14xf32> -> vector<28x6x14xf32>
    %119 = vector.extract_strided_slice %118 {offsets = [0, 0, 0], sizes = [1, 6, 14], strides = [1, 1, 1]} : vector<28x6x14xf32> to vector<1x6x14xf32>
    %120 = vector.shape_cast %119 : vector<1x6x14xf32> to vector<6x14xf32>
    %121 = vector.extract_strided_slice %118 {offsets = [1, 0, 0], sizes = [1, 6, 14], strides = [1, 1, 1]} : vector<28x6x14xf32> to vector<1x6x14xf32>
    %122 = vector.shape_cast %121 : vector<1x6x14xf32> to vector<6x14xf32>
    %123 = arith.addf %120, %122 : vector<6x14xf32>
    %cst_14 = arith.constant 5.000000e-01 : f32
    %124 = vector.broadcast %cst_14 : f32 to vector<6x14xf32>
    %125 = arith.mulf %123, %124 : vector<6x14xf32>
    %126 = vector.shape_cast %125 : vector<6x14xf32> to vector<1x6x14xf32>
    %127 = vector.extract_strided_slice %118 {offsets = [2, 0, 0], sizes = [1, 6, 14], strides = [1, 1, 1]} : vector<28x6x14xf32> to vector<1x6x14xf32>
    %128 = vector.shape_cast %127 : vector<1x6x14xf32> to vector<6x14xf32>
    %129 = vector.extract_strided_slice %118 {offsets = [3, 0, 0], sizes = [1, 6, 14], strides = [1, 1, 1]} : vector<28x6x14xf32> to vector<1x6x14xf32>
    %130 = vector.shape_cast %129 : vector<1x6x14xf32> to vector<6x14xf32>
    %131 = arith.addf %128, %130 : vector<6x14xf32>
    %cst_15 = arith.constant 5.000000e-01 : f32
    %132 = vector.broadcast %cst_15 : f32 to vector<6x14xf32>
    %133 = arith.mulf %131, %132 : vector<6x14xf32>
    %134 = vector.shape_cast %133 : vector<6x14xf32> to vector<1x6x14xf32>
    %135 = vector.extract_strided_slice %118 {offsets = [4, 0, 0], sizes = [1, 6, 14], strides = [1, 1, 1]} : vector<28x6x14xf32> to vector<1x6x14xf32>
    %136 = vector.shape_cast %135 : vector<1x6x14xf32> to vector<6x14xf32>
    %137 = vector.extract_strided_slice %118 {offsets = [5, 0, 0], sizes = [1, 6, 14], strides = [1, 1, 1]} : vector<28x6x14xf32> to vector<1x6x14xf32>
    %138 = vector.shape_cast %137 : vector<1x6x14xf32> to vector<6x14xf32>
    %139 = arith.addf %136, %138 : vector<6x14xf32>
    %cst_16 = arith.constant 5.000000e-01 : f32
    %140 = vector.broadcast %cst_16 : f32 to vector<6x14xf32>
    %141 = arith.mulf %139, %140 : vector<6x14xf32>
    %142 = vector.shape_cast %141 : vector<6x14xf32> to vector<1x6x14xf32>
    %143 = vector.extract_strided_slice %118 {offsets = [6, 0, 0], sizes = [1, 6, 14], strides = [1, 1, 1]} : vector<28x6x14xf32> to vector<1x6x14xf32>
    %144 = vector.shape_cast %143 : vector<1x6x14xf32> to vector<6x14xf32>
    %145 = vector.extract_strided_slice %118 {offsets = [7, 0, 0], sizes = [1, 6, 14], strides = [1, 1, 1]} : vector<28x6x14xf32> to vector<1x6x14xf32>
    %146 = vector.shape_cast %145 : vector<1x6x14xf32> to vector<6x14xf32>
    %147 = arith.addf %144, %146 : vector<6x14xf32>
    %cst_17 = arith.constant 5.000000e-01 : f32
    %148 = vector.broadcast %cst_17 : f32 to vector<6x14xf32>
    %149 = arith.mulf %147, %148 : vector<6x14xf32>
    %150 = vector.shape_cast %149 : vector<6x14xf32> to vector<1x6x14xf32>
    %151 = vector.extract_strided_slice %118 {offsets = [8, 0, 0], sizes = [1, 6, 14], strides = [1, 1, 1]} : vector<28x6x14xf32> to vector<1x6x14xf32>
    %152 = vector.shape_cast %151 : vector<1x6x14xf32> to vector<6x14xf32>
    %153 = vector.extract_strided_slice %118 {offsets = [9, 0, 0], sizes = [1, 6, 14], strides = [1, 1, 1]} : vector<28x6x14xf32> to vector<1x6x14xf32>
    %154 = vector.shape_cast %153 : vector<1x6x14xf32> to vector<6x14xf32>
    %155 = arith.addf %152, %154 : vector<6x14xf32>
    %cst_18 = arith.constant 5.000000e-01 : f32
    %156 = vector.broadcast %cst_18 : f32 to vector<6x14xf32>
    %157 = arith.mulf %155, %156 : vector<6x14xf32>
    %158 = vector.shape_cast %157 : vector<6x14xf32> to vector<1x6x14xf32>
    %159 = vector.extract_strided_slice %118 {offsets = [10, 0, 0], sizes = [1, 6, 14], strides = [1, 1, 1]} : vector<28x6x14xf32> to vector<1x6x14xf32>
    %160 = vector.shape_cast %159 : vector<1x6x14xf32> to vector<6x14xf32>
    %161 = vector.extract_strided_slice %118 {offsets = [11, 0, 0], sizes = [1, 6, 14], strides = [1, 1, 1]} : vector<28x6x14xf32> to vector<1x6x14xf32>
    %162 = vector.shape_cast %161 : vector<1x6x14xf32> to vector<6x14xf32>
    %163 = arith.addf %160, %162 : vector<6x14xf32>
    %cst_19 = arith.constant 5.000000e-01 : f32
    %164 = vector.broadcast %cst_19 : f32 to vector<6x14xf32>
    %165 = arith.mulf %163, %164 : vector<6x14xf32>
    %166 = vector.shape_cast %165 : vector<6x14xf32> to vector<1x6x14xf32>
    %167 = vector.extract_strided_slice %118 {offsets = [12, 0, 0], sizes = [1, 6, 14], strides = [1, 1, 1]} : vector<28x6x14xf32> to vector<1x6x14xf32>
    %168 = vector.shape_cast %167 : vector<1x6x14xf32> to vector<6x14xf32>
    %169 = vector.extract_strided_slice %118 {offsets = [13, 0, 0], sizes = [1, 6, 14], strides = [1, 1, 1]} : vector<28x6x14xf32> to vector<1x6x14xf32>
    %170 = vector.shape_cast %169 : vector<1x6x14xf32> to vector<6x14xf32>
    %171 = arith.addf %168, %170 : vector<6x14xf32>
    %cst_20 = arith.constant 5.000000e-01 : f32
    %172 = vector.broadcast %cst_20 : f32 to vector<6x14xf32>
    %173 = arith.mulf %171, %172 : vector<6x14xf32>
    %174 = vector.shape_cast %173 : vector<6x14xf32> to vector<1x6x14xf32>
    %175 = vector.extract_strided_slice %118 {offsets = [14, 0, 0], sizes = [1, 6, 14], strides = [1, 1, 1]} : vector<28x6x14xf32> to vector<1x6x14xf32>
    %176 = vector.shape_cast %175 : vector<1x6x14xf32> to vector<6x14xf32>
    %177 = vector.extract_strided_slice %118 {offsets = [15, 0, 0], sizes = [1, 6, 14], strides = [1, 1, 1]} : vector<28x6x14xf32> to vector<1x6x14xf32>
    %178 = vector.shape_cast %177 : vector<1x6x14xf32> to vector<6x14xf32>
    %179 = arith.addf %176, %178 : vector<6x14xf32>
    %cst_21 = arith.constant 5.000000e-01 : f32
    %180 = vector.broadcast %cst_21 : f32 to vector<6x14xf32>
    %181 = arith.mulf %179, %180 : vector<6x14xf32>
    %182 = vector.shape_cast %181 : vector<6x14xf32> to vector<1x6x14xf32>
    %183 = vector.extract_strided_slice %118 {offsets = [16, 0, 0], sizes = [1, 6, 14], strides = [1, 1, 1]} : vector<28x6x14xf32> to vector<1x6x14xf32>
    %184 = vector.shape_cast %183 : vector<1x6x14xf32> to vector<6x14xf32>
    %185 = vector.extract_strided_slice %118 {offsets = [17, 0, 0], sizes = [1, 6, 14], strides = [1, 1, 1]} : vector<28x6x14xf32> to vector<1x6x14xf32>
    %186 = vector.shape_cast %185 : vector<1x6x14xf32> to vector<6x14xf32>
    %187 = arith.addf %184, %186 : vector<6x14xf32>
    %cst_22 = arith.constant 5.000000e-01 : f32
    %188 = vector.broadcast %cst_22 : f32 to vector<6x14xf32>
    %189 = arith.mulf %187, %188 : vector<6x14xf32>
    %190 = vector.shape_cast %189 : vector<6x14xf32> to vector<1x6x14xf32>
    %191 = vector.extract_strided_slice %118 {offsets = [18, 0, 0], sizes = [1, 6, 14], strides = [1, 1, 1]} : vector<28x6x14xf32> to vector<1x6x14xf32>
    %192 = vector.shape_cast %191 : vector<1x6x14xf32> to vector<6x14xf32>
    %193 = vector.extract_strided_slice %118 {offsets = [19, 0, 0], sizes = [1, 6, 14], strides = [1, 1, 1]} : vector<28x6x14xf32> to vector<1x6x14xf32>
    %194 = vector.shape_cast %193 : vector<1x6x14xf32> to vector<6x14xf32>
    %195 = arith.addf %192, %194 : vector<6x14xf32>
    %cst_23 = arith.constant 5.000000e-01 : f32
    %196 = vector.broadcast %cst_23 : f32 to vector<6x14xf32>
    %197 = arith.mulf %195, %196 : vector<6x14xf32>
    %198 = vector.shape_cast %197 : vector<6x14xf32> to vector<1x6x14xf32>
    %199 = vector.extract_strided_slice %118 {offsets = [20, 0, 0], sizes = [1, 6, 14], strides = [1, 1, 1]} : vector<28x6x14xf32> to vector<1x6x14xf32>
    %200 = vector.shape_cast %199 : vector<1x6x14xf32> to vector<6x14xf32>
    %201 = vector.extract_strided_slice %118 {offsets = [21, 0, 0], sizes = [1, 6, 14], strides = [1, 1, 1]} : vector<28x6x14xf32> to vector<1x6x14xf32>
    %202 = vector.shape_cast %201 : vector<1x6x14xf32> to vector<6x14xf32>
    %203 = arith.addf %200, %202 : vector<6x14xf32>
    %cst_24 = arith.constant 5.000000e-01 : f32
    %204 = vector.broadcast %cst_24 : f32 to vector<6x14xf32>
    %205 = arith.mulf %203, %204 : vector<6x14xf32>
    %206 = vector.shape_cast %205 : vector<6x14xf32> to vector<1x6x14xf32>
    %207 = vector.extract_strided_slice %118 {offsets = [22, 0, 0], sizes = [1, 6, 14], strides = [1, 1, 1]} : vector<28x6x14xf32> to vector<1x6x14xf32>
    %208 = vector.shape_cast %207 : vector<1x6x14xf32> to vector<6x14xf32>
    %209 = vector.extract_strided_slice %118 {offsets = [23, 0, 0], sizes = [1, 6, 14], strides = [1, 1, 1]} : vector<28x6x14xf32> to vector<1x6x14xf32>
    %210 = vector.shape_cast %209 : vector<1x6x14xf32> to vector<6x14xf32>
    %211 = arith.addf %208, %210 : vector<6x14xf32>
    %cst_25 = arith.constant 5.000000e-01 : f32
    %212 = vector.broadcast %cst_25 : f32 to vector<6x14xf32>
    %213 = arith.mulf %211, %212 : vector<6x14xf32>
    %214 = vector.shape_cast %213 : vector<6x14xf32> to vector<1x6x14xf32>
    %215 = vector.extract_strided_slice %118 {offsets = [24, 0, 0], sizes = [1, 6, 14], strides = [1, 1, 1]} : vector<28x6x14xf32> to vector<1x6x14xf32>
    %216 = vector.shape_cast %215 : vector<1x6x14xf32> to vector<6x14xf32>
    %217 = vector.extract_strided_slice %118 {offsets = [25, 0, 0], sizes = [1, 6, 14], strides = [1, 1, 1]} : vector<28x6x14xf32> to vector<1x6x14xf32>
    %218 = vector.shape_cast %217 : vector<1x6x14xf32> to vector<6x14xf32>
    %219 = arith.addf %216, %218 : vector<6x14xf32>
    %cst_26 = arith.constant 5.000000e-01 : f32
    %220 = vector.broadcast %cst_26 : f32 to vector<6x14xf32>
    %221 = arith.mulf %219, %220 : vector<6x14xf32>
    %222 = vector.shape_cast %221 : vector<6x14xf32> to vector<1x6x14xf32>
    %223 = vector.extract_strided_slice %118 {offsets = [26, 0, 0], sizes = [1, 6, 14], strides = [1, 1, 1]} : vector<28x6x14xf32> to vector<1x6x14xf32>
    %224 = vector.shape_cast %223 : vector<1x6x14xf32> to vector<6x14xf32>
    %225 = vector.extract_strided_slice %118 {offsets = [27, 0, 0], sizes = [1, 6, 14], strides = [1, 1, 1]} : vector<28x6x14xf32> to vector<1x6x14xf32>
    %226 = vector.shape_cast %225 : vector<1x6x14xf32> to vector<6x14xf32>
    %227 = arith.addf %224, %226 : vector<6x14xf32>
    %cst_27 = arith.constant 5.000000e-01 : f32
    %228 = vector.broadcast %cst_27 : f32 to vector<6x14xf32>
    %229 = arith.mulf %227, %228 : vector<6x14xf32>
    %230 = vector.shape_cast %229 : vector<6x14xf32> to vector<1x6x14xf32>
    %231 = tpu.concatenate %126, %134, %142, %150, %158, %166, %174, %182, %190, %198, %206, %214, %222, %230 in 0 : vector<1x6x14xf32>, vector<1x6x14xf32>, vector<1x6x14xf32>, vector<1x6x14xf32>, vector<1x6x14xf32>, vector<1x6x14xf32>, vector<1x6x14xf32>, vector<1x6x14xf32>, vector<1x6x14xf32>, vector<1x6x14xf32>, vector<1x6x14xf32>, vector<1x6x14xf32>, vector<1x6x14xf32>, vector<1x6x14xf32> -> vector<14x6x14xf32>
    %232 = vector.extract_strided_slice %231 {offsets = [0, 0, 0], sizes = [10, 1, 10], strides = [1, 1, 1]} : vector<14x6x14xf32> to vector<10x1x10xf32>
    %233 = vector.extract_strided_slice %231 {offsets = [0, 0, 1], sizes = [10, 1, 10], strides = [1, 1, 1]} : vector<14x6x14xf32> to vector<10x1x10xf32>
    %234 = vector.extract_strided_slice %231 {offsets = [0, 0, 2], sizes = [10, 1, 10], strides = [1, 1, 1]} : vector<14x6x14xf32> to vector<10x1x10xf32>
    %235 = vector.extract_strided_slice %231 {offsets = [0, 0, 3], sizes = [10, 1, 10], strides = [1, 1, 1]} : vector<14x6x14xf32> to vector<10x1x10xf32>
    %236 = vector.extract_strided_slice %231 {offsets = [0, 0, 4], sizes = [10, 1, 10], strides = [1, 1, 1]} : vector<14x6x14xf32> to vector<10x1x10xf32>
    %237 = vector.extract_strided_slice %231 {offsets = [1, 0, 0], sizes = [10, 1, 10], strides = [1, 1, 1]} : vector<14x6x14xf32> to vector<10x1x10xf32>
    %238 = vector.extract_strided_slice %231 {offsets = [1, 0, 1], sizes = [10, 1, 10], strides = [1, 1, 1]} : vector<14x6x14xf32> to vector<10x1x10xf32>
    %239 = vector.extract_strided_slice %231 {offsets = [1, 0, 2], sizes = [10, 1, 10], strides = [1, 1, 1]} : vector<14x6x14xf32> to vector<10x1x10xf32>
    %240 = vector.extract_strided_slice %231 {offsets = [1, 0, 3], sizes = [10, 1, 10], strides = [1, 1, 1]} : vector<14x6x14xf32> to vector<10x1x10xf32>
    %241 = vector.extract_strided_slice %231 {offsets = [1, 0, 4], sizes = [10, 1, 10], strides = [1, 1, 1]} : vector<14x6x14xf32> to vector<10x1x10xf32>
    %242 = vector.extract_strided_slice %231 {offsets = [2, 0, 0], sizes = [10, 1, 10], strides = [1, 1, 1]} : vector<14x6x14xf32> to vector<10x1x10xf32>
    %243 = vector.extract_strided_slice %231 {offsets = [2, 0, 1], sizes = [10, 1, 10], strides = [1, 1, 1]} : vector<14x6x14xf32> to vector<10x1x10xf32>
    %244 = vector.extract_strided_slice %231 {offsets = [2, 0, 2], sizes = [10, 1, 10], strides = [1, 1, 1]} : vector<14x6x14xf32> to vector<10x1x10xf32>
    %245 = vector.extract_strided_slice %231 {offsets = [2, 0, 3], sizes = [10, 1, 10], strides = [1, 1, 1]} : vector<14x6x14xf32> to vector<10x1x10xf32>
    %246 = vector.extract_strided_slice %231 {offsets = [2, 0, 4], sizes = [10, 1, 10], strides = [1, 1, 1]} : vector<14x6x14xf32> to vector<10x1x10xf32>
    %247 = vector.extract_strided_slice %231 {offsets = [3, 0, 0], sizes = [10, 1, 10], strides = [1, 1, 1]} : vector<14x6x14xf32> to vector<10x1x10xf32>
    %248 = vector.extract_strided_slice %231 {offsets = [3, 0, 1], sizes = [10, 1, 10], strides = [1, 1, 1]} : vector<14x6x14xf32> to vector<10x1x10xf32>
    %249 = vector.extract_strided_slice %231 {offsets = [3, 0, 2], sizes = [10, 1, 10], strides = [1, 1, 1]} : vector<14x6x14xf32> to vector<10x1x10xf32>
    %250 = vector.extract_strided_slice %231 {offsets = [3, 0, 3], sizes = [10, 1, 10], strides = [1, 1, 1]} : vector<14x6x14xf32> to vector<10x1x10xf32>
    %251 = vector.extract_strided_slice %231 {offsets = [3, 0, 4], sizes = [10, 1, 10], strides = [1, 1, 1]} : vector<14x6x14xf32> to vector<10x1x10xf32>
    %252 = vector.extract_strided_slice %231 {offsets = [4, 0, 0], sizes = [10, 1, 10], strides = [1, 1, 1]} : vector<14x6x14xf32> to vector<10x1x10xf32>
    %253 = vector.extract_strided_slice %231 {offsets = [4, 0, 1], sizes = [10, 1, 10], strides = [1, 1, 1]} : vector<14x6x14xf32> to vector<10x1x10xf32>
    %254 = vector.extract_strided_slice %231 {offsets = [4, 0, 2], sizes = [10, 1, 10], strides = [1, 1, 1]} : vector<14x6x14xf32> to vector<10x1x10xf32>
    %255 = vector.extract_strided_slice %231 {offsets = [4, 0, 3], sizes = [10, 1, 10], strides = [1, 1, 1]} : vector<14x6x14xf32> to vector<10x1x10xf32>
    %256 = vector.extract_strided_slice %231 {offsets = [4, 0, 4], sizes = [10, 1, 10], strides = [1, 1, 1]} : vector<14x6x14xf32> to vector<10x1x10xf32>
    %257 = tpu.concatenate %232, %233, %234, %235, %236, %237, %238, %239, %240, %241, %242, %243, %244, %245, %246, %247 in 1 : vector<10x1x10xf32>, vector<10x1x10xf32>, vector<10x1x10xf32>, vector<10x1x10xf32>, vector<10x1x10xf32>, vector<10x1x10xf32>, vector<10x1x10xf32>, vector<10x1x10xf32>, vector<10x1x10xf32>, vector<10x1x10xf32>, vector<10x1x10xf32>, vector<10x1x10xf32>, vector<10x1x10xf32>, vector<10x1x10xf32>, vector<10x1x10xf32>, vector<10x1x10xf32> -> vector<10x16x10xf32>
    %258 = tpu.concatenate %248, %249, %250, %251, %252, %253, %254, %255, %256 in 1 : vector<10x1x10xf32>, vector<10x1x10xf32>, vector<10x1x10xf32>, vector<10x1x10xf32>, vector<10x1x10xf32>, vector<10x1x10xf32>, vector<10x1x10xf32>, vector<10x1x10xf32>, vector<10x1x10xf32> -> vector<10x9x10xf32>
    %259 = tpu.concatenate %257, %258 in 1 : vector<10x16x10xf32>, vector<10x9x10xf32> -> vector<10x25x10xf32>
    %260 = vector.extract_strided_slice %231 {offsets = [0, 1, 0], sizes = [10, 1, 10], strides = [1, 1, 1]} : vector<14x6x14xf32> to vector<10x1x10xf32>
    %261 = vector.extract_strided_slice %231 {offsets = [0, 1, 1], sizes = [10, 1, 10], strides = [1, 1, 1]} : vector<14x6x14xf32> to vector<10x1x10xf32>
    %262 = vector.extract_strided_slice %231 {offsets = [0, 1, 2], sizes = [10, 1, 10], strides = [1, 1, 1]} : vector<14x6x14xf32> to vector<10x1x10xf32>
    %263 = vector.extract_strided_slice %231 {offsets = [0, 1, 3], sizes = [10, 1, 10], strides = [1, 1, 1]} : vector<14x6x14xf32> to vector<10x1x10xf32>
    %264 = vector.extract_strided_slice %231 {offsets = [0, 1, 4], sizes = [10, 1, 10], strides = [1, 1, 1]} : vector<14x6x14xf32> to vector<10x1x10xf32>
    %265 = vector.extract_strided_slice %231 {offsets = [1, 1, 0], sizes = [10, 1, 10], strides = [1, 1, 1]} : vector<14x6x14xf32> to vector<10x1x10xf32>
    %266 = vector.extract_strided_slice %231 {offsets = [1, 1, 1], sizes = [10, 1, 10], strides = [1, 1, 1]} : vector<14x6x14xf32> to vector<10x1x10xf32>
    %267 = vector.extract_strided_slice %231 {offsets = [1, 1, 2], sizes = [10, 1, 10], strides = [1, 1, 1]} : vector<14x6x14xf32> to vector<10x1x10xf32>
    %268 = vector.extract_strided_slice %231 {offsets = [1, 1, 3], sizes = [10, 1, 10], strides = [1, 1, 1]} : vector<14x6x14xf32> to vector<10x1x10xf32>
    %269 = vector.extract_strided_slice %231 {offsets = [1, 1, 4], sizes = [10, 1, 10], strides = [1, 1, 1]} : vector<14x6x14xf32> to vector<10x1x10xf32>
    %270 = vector.extract_strided_slice %231 {offsets = [2, 1, 0], sizes = [10, 1, 10], strides = [1, 1, 1]} : vector<14x6x14xf32> to vector<10x1x10xf32>
    %271 = vector.extract_strided_slice %231 {offsets = [2, 1, 1], sizes = [10, 1, 10], strides = [1, 1, 1]} : vector<14x6x14xf32> to vector<10x1x10xf32>
    %272 = vector.extract_strided_slice %231 {offsets = [2, 1, 2], sizes = [10, 1, 10], strides = [1, 1, 1]} : vector<14x6x14xf32> to vector<10x1x10xf32>
    %273 = vector.extract_strided_slice %231 {offsets = [2, 1, 3], sizes = [10, 1, 10], strides = [1, 1, 1]} : vector<14x6x14xf32> to vector<10x1x10xf32>
    %274 = vector.extract_strided_slice %231 {offsets = [2, 1, 4], sizes = [10, 1, 10], strides = [1, 1, 1]} : vector<14x6x14xf32> to vector<10x1x10xf32>
    %275 = vector.extract_strided_slice %231 {offsets = [3, 1, 0], sizes = [10, 1, 10], strides = [1, 1, 1]} : vector<14x6x14xf32> to vector<10x1x10xf32>
    %276 = vector.extract_strided_slice %231 {offsets = [3, 1, 1], sizes = [10, 1, 10], strides = [1, 1, 1]} : vector<14x6x14xf32> to vector<10x1x10xf32>
    %277 = vector.extract_strided_slice %231 {offsets = [3, 1, 2], sizes = [10, 1, 10], strides = [1, 1, 1]} : vector<14x6x14xf32> to vector<10x1x10xf32>
    %278 = vector.extract_strided_slice %231 {offsets = [3, 1, 3], sizes = [10, 1, 10], strides = [1, 1, 1]} : vector<14x6x14xf32> to vector<10x1x10xf32>
    %279 = vector.extract_strided_slice %231 {offsets = [3, 1, 4], sizes = [10, 1, 10], strides = [1, 1, 1]} : vector<14x6x14xf32> to vector<10x1x10xf32>
    %280 = vector.extract_strided_slice %231 {offsets = [4, 1, 0], sizes = [10, 1, 10], strides = [1, 1, 1]} : vector<14x6x14xf32> to vector<10x1x10xf32>
    %281 = vector.extract_strided_slice %231 {offsets = [4, 1, 1], sizes = [10, 1, 10], strides = [1, 1, 1]} : vector<14x6x14xf32> to vector<10x1x10xf32>
    %282 = vector.extract_strided_slice %231 {offsets = [4, 1, 2], sizes = [10, 1, 10], strides = [1, 1, 1]} : vector<14x6x14xf32> to vector<10x1x10xf32>
    %283 = vector.extract_strided_slice %231 {offsets = [4, 1, 3], sizes = [10, 1, 10], strides = [1, 1, 1]} : vector<14x6x14xf32> to vector<10x1x10xf32>
    %284 = vector.extract_strided_slice %231 {offsets = [4, 1, 4], sizes = [10, 1, 10], strides = [1, 1, 1]} : vector<14x6x14xf32> to vector<10x1x10xf32>
    %285 = tpu.concatenate %260, %261, %262, %263, %264, %265, %266, %267, %268, %269, %270, %271, %272, %273, %274, %275 in 1 : vector<10x1x10xf32>, vector<10x1x10xf32>, vector<10x1x10xf32>, vector<10x1x10xf32>, vector<10x1x10xf32>, vector<10x1x10xf32>, vector<10x1x10xf32>, vector<10x1x10xf32>, vector<10x1x10xf32>, vector<10x1x10xf32>, vector<10x1x10xf32>, vector<10x1x10xf32>, vector<10x1x10xf32>, vector<10x1x10xf32>, vector<10x1x10xf32>, vector<10x1x10xf32> -> vector<10x16x10xf32>
    %286 = tpu.concatenate %276, %277, %278, %279, %280, %281, %282, %283, %284 in 1 : vector<10x1x10xf32>, vector<10x1x10xf32>, vector<10x1x10xf32>, vector<10x1x10xf32>, vector<10x1x10xf32>, vector<10x1x10xf32>, vector<10x1x10xf32>, vector<10x1x10xf32>, vector<10x1x10xf32> -> vector<10x9x10xf32>
    %287 = tpu.concatenate %285, %286 in 1 : vector<10x16x10xf32>, vector<10x9x10xf32> -> vector<10x25x10xf32>
    %288 = vector.extract_strided_slice %231 {offsets = [0, 2, 0], sizes = [10, 1, 10], strides = [1, 1, 1]} : vector<14x6x14xf32> to vector<10x1x10xf32>
    %289 = vector.extract_strided_slice %231 {offsets = [0, 2, 1], sizes = [10, 1, 10], strides = [1, 1, 1]} : vector<14x6x14xf32> to vector<10x1x10xf32>
    %290 = vector.extract_strided_slice %231 {offsets = [0, 2, 2], sizes = [10, 1, 10], strides = [1, 1, 1]} : vector<14x6x14xf32> to vector<10x1x10xf32>
    %291 = vector.extract_strided_slice %231 {offsets = [0, 2, 3], sizes = [10, 1, 10], strides = [1, 1, 1]} : vector<14x6x14xf32> to vector<10x1x10xf32>
    %292 = vector.extract_strided_slice %231 {offsets = [0, 2, 4], sizes = [10, 1, 10], strides = [1, 1, 1]} : vector<14x6x14xf32> to vector<10x1x10xf32>
    %293 = vector.extract_strided_slice %231 {offsets = [1, 2, 0], sizes = [10, 1, 10], strides = [1, 1, 1]} : vector<14x6x14xf32> to vector<10x1x10xf32>
    %294 = vector.extract_strided_slice %231 {offsets = [1, 2, 1], sizes = [10, 1, 10], strides = [1, 1, 1]} : vector<14x6x14xf32> to vector<10x1x10xf32>
    %295 = vector.extract_strided_slice %231 {offsets = [1, 2, 2], sizes = [10, 1, 10], strides = [1, 1, 1]} : vector<14x6x14xf32> to vector<10x1x10xf32>
    %296 = vector.extract_strided_slice %231 {offsets = [1, 2, 3], sizes = [10, 1, 10], strides = [1, 1, 1]} : vector<14x6x14xf32> to vector<10x1x10xf32>
    %297 = vector.extract_strided_slice %231 {offsets = [1, 2, 4], sizes = [10, 1, 10], strides = [1, 1, 1]} : vector<14x6x14xf32> to vector<10x1x10xf32>
    %298 = vector.extract_strided_slice %231 {offsets = [2, 2, 0], sizes = [10, 1, 10], strides = [1, 1, 1]} : vector<14x6x14xf32> to vector<10x1x10xf32>
    %299 = vector.extract_strided_slice %231 {offsets = [2, 2, 1], sizes = [10, 1, 10], strides = [1, 1, 1]} : vector<14x6x14xf32> to vector<10x1x10xf32>
    %300 = vector.extract_strided_slice %231 {offsets = [2, 2, 2], sizes = [10, 1, 10], strides = [1, 1, 1]} : vector<14x6x14xf32> to vector<10x1x10xf32>
    %301 = vector.extract_strided_slice %231 {offsets = [2, 2, 3], sizes = [10, 1, 10], strides = [1, 1, 1]} : vector<14x6x14xf32> to vector<10x1x10xf32>
    %302 = vector.extract_strided_slice %231 {offsets = [2, 2, 4], sizes = [10, 1, 10], strides = [1, 1, 1]} : vector<14x6x14xf32> to vector<10x1x10xf32>
    %303 = vector.extract_strided_slice %231 {offsets = [3, 2, 0], sizes = [10, 1, 10], strides = [1, 1, 1]} : vector<14x6x14xf32> to vector<10x1x10xf32>
    %304 = vector.extract_strided_slice %231 {offsets = [3, 2, 1], sizes = [10, 1, 10], strides = [1, 1, 1]} : vector<14x6x14xf32> to vector<10x1x10xf32>
    %305 = vector.extract_strided_slice %231 {offsets = [3, 2, 2], sizes = [10, 1, 10], strides = [1, 1, 1]} : vector<14x6x14xf32> to vector<10x1x10xf32>
    %306 = vector.extract_strided_slice %231 {offsets = [3, 2, 3], sizes = [10, 1, 10], strides = [1, 1, 1]} : vector<14x6x14xf32> to vector<10x1x10xf32>
    %307 = vector.extract_strided_slice %231 {offsets = [3, 2, 4], sizes = [10, 1, 10], strides = [1, 1, 1]} : vector<14x6x14xf32> to vector<10x1x10xf32>
    %308 = vector.extract_strided_slice %231 {offsets = [4, 2, 0], sizes = [10, 1, 10], strides = [1, 1, 1]} : vector<14x6x14xf32> to vector<10x1x10xf32>
    %309 = vector.extract_strided_slice %231 {offsets = [4, 2, 1], sizes = [10, 1, 10], strides = [1, 1, 1]} : vector<14x6x14xf32> to vector<10x1x10xf32>
    %310 = vector.extract_strided_slice %231 {offsets = [4, 2, 2], sizes = [10, 1, 10], strides = [1, 1, 1]} : vector<14x6x14xf32> to vector<10x1x10xf32>
    %311 = vector.extract_strided_slice %231 {offsets = [4, 2, 3], sizes = [10, 1, 10], strides = [1, 1, 1]} : vector<14x6x14xf32> to vector<10x1x10xf32>
    %312 = vector.extract_strided_slice %231 {offsets = [4, 2, 4], sizes = [10, 1, 10], strides = [1, 1, 1]} : vector<14x6x14xf32> to vector<10x1x10xf32>
    %313 = tpu.concatenate %288, %289, %290, %291, %292, %293, %294, %295, %296, %297, %298, %299, %300, %301, %302, %303 in 1 : vector<10x1x10xf32>, vector<10x1x10xf32>, vector<10x1x10xf32>, vector<10x1x10xf32>, vector<10x1x10xf32>, vector<10x1x10xf32>, vector<10x1x10xf32>, vector<10x1x10xf32>, vector<10x1x10xf32>, vector<10x1x10xf32>, vector<10x1x10xf32>, vector<10x1x10xf32>, vector<10x1x10xf32>, vector<10x1x10xf32>, vector<10x1x10xf32>, vector<10x1x10xf32> -> vector<10x16x10xf32>
    %314 = tpu.concatenate %304, %305, %306, %307, %308, %309, %310, %311, %312 in 1 : vector<10x1x10xf32>, vector<10x1x10xf32>, vector<10x1x10xf32>, vector<10x1x10xf32>, vector<10x1x10xf32>, vector<10x1x10xf32>, vector<10x1x10xf32>, vector<10x1x10xf32>, vector<10x1x10xf32> -> vector<10x9x10xf32>
    %315 = tpu.concatenate %313, %314 in 1 : vector<10x16x10xf32>, vector<10x9x10xf32> -> vector<10x25x10xf32>
    %316 = vector.extract_strided_slice %231 {offsets = [0, 3, 0], sizes = [10, 1, 10], strides = [1, 1, 1]} : vector<14x6x14xf32> to vector<10x1x10xf32>
    %317 = vector.extract_strided_slice %231 {offsets = [0, 3, 1], sizes = [10, 1, 10], strides = [1, 1, 1]} : vector<14x6x14xf32> to vector<10x1x10xf32>
    %318 = vector.extract_strided_slice %231 {offsets = [0, 3, 2], sizes = [10, 1, 10], strides = [1, 1, 1]} : vector<14x6x14xf32> to vector<10x1x10xf32>
    %319 = vector.extract_strided_slice %231 {offsets = [0, 3, 3], sizes = [10, 1, 10], strides = [1, 1, 1]} : vector<14x6x14xf32> to vector<10x1x10xf32>
    %320 = vector.extract_strided_slice %231 {offsets = [0, 3, 4], sizes = [10, 1, 10], strides = [1, 1, 1]} : vector<14x6x14xf32> to vector<10x1x10xf32>
    %321 = vector.extract_strided_slice %231 {offsets = [1, 3, 0], sizes = [10, 1, 10], strides = [1, 1, 1]} : vector<14x6x14xf32> to vector<10x1x10xf32>
    %322 = vector.extract_strided_slice %231 {offsets = [1, 3, 1], sizes = [10, 1, 10], strides = [1, 1, 1]} : vector<14x6x14xf32> to vector<10x1x10xf32>
    %323 = vector.extract_strided_slice %231 {offsets = [1, 3, 2], sizes = [10, 1, 10], strides = [1, 1, 1]} : vector<14x6x14xf32> to vector<10x1x10xf32>
    %324 = vector.extract_strided_slice %231 {offsets = [1, 3, 3], sizes = [10, 1, 10], strides = [1, 1, 1]} : vector<14x6x14xf32> to vector<10x1x10xf32>
    %325 = vector.extract_strided_slice %231 {offsets = [1, 3, 4], sizes = [10, 1, 10], strides = [1, 1, 1]} : vector<14x6x14xf32> to vector<10x1x10xf32>
    %326 = vector.extract_strided_slice %231 {offsets = [2, 3, 0], sizes = [10, 1, 10], strides = [1, 1, 1]} : vector<14x6x14xf32> to vector<10x1x10xf32>
    %327 = vector.extract_strided_slice %231 {offsets = [2, 3, 1], sizes = [10, 1, 10], strides = [1, 1, 1]} : vector<14x6x14xf32> to vector<10x1x10xf32>
    %328 = vector.extract_strided_slice %231 {offsets = [2, 3, 2], sizes = [10, 1, 10], strides = [1, 1, 1]} : vector<14x6x14xf32> to vector<10x1x10xf32>
    %329 = vector.extract_strided_slice %231 {offsets = [2, 3, 3], sizes = [10, 1, 10], strides = [1, 1, 1]} : vector<14x6x14xf32> to vector<10x1x10xf32>
    %330 = vector.extract_strided_slice %231 {offsets = [2, 3, 4], sizes = [10, 1, 10], strides = [1, 1, 1]} : vector<14x6x14xf32> to vector<10x1x10xf32>
    %331 = vector.extract_strided_slice %231 {offsets = [3, 3, 0], sizes = [10, 1, 10], strides = [1, 1, 1]} : vector<14x6x14xf32> to vector<10x1x10xf32>
    %332 = vector.extract_strided_slice %231 {offsets = [3, 3, 1], sizes = [10, 1, 10], strides = [1, 1, 1]} : vector<14x6x14xf32> to vector<10x1x10xf32>
    %333 = vector.extract_strided_slice %231 {offsets = [3, 3, 2], sizes = [10, 1, 10], strides = [1, 1, 1]} : vector<14x6x14xf32> to vector<10x1x10xf32>
    %334 = vector.extract_strided_slice %231 {offsets = [3, 3, 3], sizes = [10, 1, 10], strides = [1, 1, 1]} : vector<14x6x14xf32> to vector<10x1x10xf32>
    %335 = vector.extract_strided_slice %231 {offsets = [3, 3, 4], sizes = [10, 1, 10], strides = [1, 1, 1]} : vector<14x6x14xf32> to vector<10x1x10xf32>
    %336 = vector.extract_strided_slice %231 {offsets = [4, 3, 0], sizes = [10, 1, 10], strides = [1, 1, 1]} : vector<14x6x14xf32> to vector<10x1x10xf32>
    %337 = vector.extract_strided_slice %231 {offsets = [4, 3, 1], sizes = [10, 1, 10], strides = [1, 1, 1]} : vector<14x6x14xf32> to vector<10x1x10xf32>
    %338 = vector.extract_strided_slice %231 {offsets = [4, 3, 2], sizes = [10, 1, 10], strides = [1, 1, 1]} : vector<14x6x14xf32> to vector<10x1x10xf32>
    %339 = vector.extract_strided_slice %231 {offsets = [4, 3, 3], sizes = [10, 1, 10], strides = [1, 1, 1]} : vector<14x6x14xf32> to vector<10x1x10xf32>
    %340 = vector.extract_strided_slice %231 {offsets = [4, 3, 4], sizes = [10, 1, 10], strides = [1, 1, 1]} : vector<14x6x14xf32> to vector<10x1x10xf32>
    %341 = tpu.concatenate %316, %317, %318, %319, %320, %321, %322, %323, %324, %325, %326, %327, %328, %329, %330, %331 in 1 : vector<10x1x10xf32>, vector<10x1x10xf32>, vector<10x1x10xf32>, vector<10x1x10xf32>, vector<10x1x10xf32>, vector<10x1x10xf32>, vector<10x1x10xf32>, vector<10x1x10xf32>, vector<10x1x10xf32>, vector<10x1x10xf32>, vector<10x1x10xf32>, vector<10x1x10xf32>, vector<10x1x10xf32>, vector<10x1x10xf32>, vector<10x1x10xf32>, vector<10x1x10xf32> -> vector<10x16x10xf32>
    %342 = tpu.concatenate %332, %333, %334, %335, %336, %337, %338, %339, %340 in 1 : vector<10x1x10xf32>, vector<10x1x10xf32>, vector<10x1x10xf32>, vector<10x1x10xf32>, vector<10x1x10xf32>, vector<10x1x10xf32>, vector<10x1x10xf32>, vector<10x1x10xf32>, vector<10x1x10xf32> -> vector<10x9x10xf32>
    %343 = tpu.concatenate %341, %342 in 1 : vector<10x16x10xf32>, vector<10x9x10xf32> -> vector<10x25x10xf32>
    %344 = vector.extract_strided_slice %231 {offsets = [0, 4, 0], sizes = [10, 1, 10], strides = [1, 1, 1]} : vector<14x6x14xf32> to vector<10x1x10xf32>
    %345 = vector.extract_strided_slice %231 {offsets = [0, 4, 1], sizes = [10, 1, 10], strides = [1, 1, 1]} : vector<14x6x14xf32> to vector<10x1x10xf32>
    %346 = vector.extract_strided_slice %231 {offsets = [0, 4, 2], sizes = [10, 1, 10], strides = [1, 1, 1]} : vector<14x6x14xf32> to vector<10x1x10xf32>
    %347 = vector.extract_strided_slice %231 {offsets = [0, 4, 3], sizes = [10, 1, 10], strides = [1, 1, 1]} : vector<14x6x14xf32> to vector<10x1x10xf32>
    %348 = vector.extract_strided_slice %231 {offsets = [0, 4, 4], sizes = [10, 1, 10], strides = [1, 1, 1]} : vector<14x6x14xf32> to vector<10x1x10xf32>
    %349 = vector.extract_strided_slice %231 {offsets = [1, 4, 0], sizes = [10, 1, 10], strides = [1, 1, 1]} : vector<14x6x14xf32> to vector<10x1x10xf32>
    %350 = vector.extract_strided_slice %231 {offsets = [1, 4, 1], sizes = [10, 1, 10], strides = [1, 1, 1]} : vector<14x6x14xf32> to vector<10x1x10xf32>
    %351 = vector.extract_strided_slice %231 {offsets = [1, 4, 2], sizes = [10, 1, 10], strides = [1, 1, 1]} : vector<14x6x14xf32> to vector<10x1x10xf32>
    %352 = vector.extract_strided_slice %231 {offsets = [1, 4, 3], sizes = [10, 1, 10], strides = [1, 1, 1]} : vector<14x6x14xf32> to vector<10x1x10xf32>
    %353 = vector.extract_strided_slice %231 {offsets = [1, 4, 4], sizes = [10, 1, 10], strides = [1, 1, 1]} : vector<14x6x14xf32> to vector<10x1x10xf32>
    %354 = vector.extract_strided_slice %231 {offsets = [2, 4, 0], sizes = [10, 1, 10], strides = [1, 1, 1]} : vector<14x6x14xf32> to vector<10x1x10xf32>
    %355 = vector.extract_strided_slice %231 {offsets = [2, 4, 1], sizes = [10, 1, 10], strides = [1, 1, 1]} : vector<14x6x14xf32> to vector<10x1x10xf32>
    %356 = vector.extract_strided_slice %231 {offsets = [2, 4, 2], sizes = [10, 1, 10], strides = [1, 1, 1]} : vector<14x6x14xf32> to vector<10x1x10xf32>
    %357 = vector.extract_strided_slice %231 {offsets = [2, 4, 3], sizes = [10, 1, 10], strides = [1, 1, 1]} : vector<14x6x14xf32> to vector<10x1x10xf32>
    %358 = vector.extract_strided_slice %231 {offsets = [2, 4, 4], sizes = [10, 1, 10], strides = [1, 1, 1]} : vector<14x6x14xf32> to vector<10x1x10xf32>
    %359 = vector.extract_strided_slice %231 {offsets = [3, 4, 0], sizes = [10, 1, 10], strides = [1, 1, 1]} : vector<14x6x14xf32> to vector<10x1x10xf32>
    %360 = vector.extract_strided_slice %231 {offsets = [3, 4, 1], sizes = [10, 1, 10], strides = [1, 1, 1]} : vector<14x6x14xf32> to vector<10x1x10xf32>
    %361 = vector.extract_strided_slice %231 {offsets = [3, 4, 2], sizes = [10, 1, 10], strides = [1, 1, 1]} : vector<14x6x14xf32> to vector<10x1x10xf32>
    %362 = vector.extract_strided_slice %231 {offsets = [3, 4, 3], sizes = [10, 1, 10], strides = [1, 1, 1]} : vector<14x6x14xf32> to vector<10x1x10xf32>
    %363 = vector.extract_strided_slice %231 {offsets = [3, 4, 4], sizes = [10, 1, 10], strides = [1, 1, 1]} : vector<14x6x14xf32> to vector<10x1x10xf32>
    %364 = vector.extract_strided_slice %231 {offsets = [4, 4, 0], sizes = [10, 1, 10], strides = [1, 1, 1]} : vector<14x6x14xf32> to vector<10x1x10xf32>
    %365 = vector.extract_strided_slice %231 {offsets = [4, 4, 1], sizes = [10, 1, 10], strides = [1, 1, 1]} : vector<14x6x14xf32> to vector<10x1x10xf32>
    %366 = vector.extract_strided_slice %231 {offsets = [4, 4, 2], sizes = [10, 1, 10], strides = [1, 1, 1]} : vector<14x6x14xf32> to vector<10x1x10xf32>
    %367 = vector.extract_strided_slice %231 {offsets = [4, 4, 3], sizes = [10, 1, 10], strides = [1, 1, 1]} : vector<14x6x14xf32> to vector<10x1x10xf32>
    %368 = vector.extract_strided_slice %231 {offsets = [4, 4, 4], sizes = [10, 1, 10], strides = [1, 1, 1]} : vector<14x6x14xf32> to vector<10x1x10xf32>
    %369 = tpu.concatenate %344, %345, %346, %347, %348, %349, %350, %351, %352, %353, %354, %355, %356, %357, %358, %359 in 1 : vector<10x1x10xf32>, vector<10x1x10xf32>, vector<10x1x10xf32>, vector<10x1x10xf32>, vector<10x1x10xf32>, vector<10x1x10xf32>, vector<10x1x10xf32>, vector<10x1x10xf32>, vector<10x1x10xf32>, vector<10x1x10xf32>, vector<10x1x10xf32>, vector<10x1x10xf32>, vector<10x1x10xf32>, vector<10x1x10xf32>, vector<10x1x10xf32>, vector<10x1x10xf32> -> vector<10x16x10xf32>
    %370 = tpu.concatenate %360, %361, %362, %363, %364, %365, %366, %367, %368 in 1 : vector<10x1x10xf32>, vector<10x1x10xf32>, vector<10x1x10xf32>, vector<10x1x10xf32>, vector<10x1x10xf32>, vector<10x1x10xf32>, vector<10x1x10xf32>, vector<10x1x10xf32>, vector<10x1x10xf32> -> vector<10x9x10xf32>
    %371 = tpu.concatenate %369, %370 in 1 : vector<10x16x10xf32>, vector<10x9x10xf32> -> vector<10x25x10xf32>
    %372 = vector.extract_strided_slice %231 {offsets = [0, 5, 0], sizes = [10, 1, 10], strides = [1, 1, 1]} : vector<14x6x14xf32> to vector<10x1x10xf32>
    %373 = vector.extract_strided_slice %231 {offsets = [0, 5, 1], sizes = [10, 1, 10], strides = [1, 1, 1]} : vector<14x6x14xf32> to vector<10x1x10xf32>
    %374 = vector.extract_strided_slice %231 {offsets = [0, 5, 2], sizes = [10, 1, 10], strides = [1, 1, 1]} : vector<14x6x14xf32> to vector<10x1x10xf32>
    %375 = vector.extract_strided_slice %231 {offsets = [0, 5, 3], sizes = [10, 1, 10], strides = [1, 1, 1]} : vector<14x6x14xf32> to vector<10x1x10xf32>
    %376 = vector.extract_strided_slice %231 {offsets = [0, 5, 4], sizes = [10, 1, 10], strides = [1, 1, 1]} : vector<14x6x14xf32> to vector<10x1x10xf32>
    %377 = vector.extract_strided_slice %231 {offsets = [1, 5, 0], sizes = [10, 1, 10], strides = [1, 1, 1]} : vector<14x6x14xf32> to vector<10x1x10xf32>
    %378 = vector.extract_strided_slice %231 {offsets = [1, 5, 1], sizes = [10, 1, 10], strides = [1, 1, 1]} : vector<14x6x14xf32> to vector<10x1x10xf32>
    %379 = vector.extract_strided_slice %231 {offsets = [1, 5, 2], sizes = [10, 1, 10], strides = [1, 1, 1]} : vector<14x6x14xf32> to vector<10x1x10xf32>
    %380 = vector.extract_strided_slice %231 {offsets = [1, 5, 3], sizes = [10, 1, 10], strides = [1, 1, 1]} : vector<14x6x14xf32> to vector<10x1x10xf32>
    %381 = vector.extract_strided_slice %231 {offsets = [1, 5, 4], sizes = [10, 1, 10], strides = [1, 1, 1]} : vector<14x6x14xf32> to vector<10x1x10xf32>
    %382 = vector.extract_strided_slice %231 {offsets = [2, 5, 0], sizes = [10, 1, 10], strides = [1, 1, 1]} : vector<14x6x14xf32> to vector<10x1x10xf32>
    %383 = vector.extract_strided_slice %231 {offsets = [2, 5, 1], sizes = [10, 1, 10], strides = [1, 1, 1]} : vector<14x6x14xf32> to vector<10x1x10xf32>
    %384 = vector.extract_strided_slice %231 {offsets = [2, 5, 2], sizes = [10, 1, 10], strides = [1, 1, 1]} : vector<14x6x14xf32> to vector<10x1x10xf32>
    %385 = vector.extract_strided_slice %231 {offsets = [2, 5, 3], sizes = [10, 1, 10], strides = [1, 1, 1]} : vector<14x6x14xf32> to vector<10x1x10xf32>
    %386 = vector.extract_strided_slice %231 {offsets = [2, 5, 4], sizes = [10, 1, 10], strides = [1, 1, 1]} : vector<14x6x14xf32> to vector<10x1x10xf32>
    %387 = vector.extract_strided_slice %231 {offsets = [3, 5, 0], sizes = [10, 1, 10], strides = [1, 1, 1]} : vector<14x6x14xf32> to vector<10x1x10xf32>
    %388 = vector.extract_strided_slice %231 {offsets = [3, 5, 1], sizes = [10, 1, 10], strides = [1, 1, 1]} : vector<14x6x14xf32> to vector<10x1x10xf32>
    %389 = vector.extract_strided_slice %231 {offsets = [3, 5, 2], sizes = [10, 1, 10], strides = [1, 1, 1]} : vector<14x6x14xf32> to vector<10x1x10xf32>
    %390 = vector.extract_strided_slice %231 {offsets = [3, 5, 3], sizes = [10, 1, 10], strides = [1, 1, 1]} : vector<14x6x14xf32> to vector<10x1x10xf32>
    %391 = vector.extract_strided_slice %231 {offsets = [3, 5, 4], sizes = [10, 1, 10], strides = [1, 1, 1]} : vector<14x6x14xf32> to vector<10x1x10xf32>
    %392 = vector.extract_strided_slice %231 {offsets = [4, 5, 0], sizes = [10, 1, 10], strides = [1, 1, 1]} : vector<14x6x14xf32> to vector<10x1x10xf32>
    %393 = vector.extract_strided_slice %231 {offsets = [4, 5, 1], sizes = [10, 1, 10], strides = [1, 1, 1]} : vector<14x6x14xf32> to vector<10x1x10xf32>
    %394 = vector.extract_strided_slice %231 {offsets = [4, 5, 2], sizes = [10, 1, 10], strides = [1, 1, 1]} : vector<14x6x14xf32> to vector<10x1x10xf32>
    %395 = vector.extract_strided_slice %231 {offsets = [4, 5, 3], sizes = [10, 1, 10], strides = [1, 1, 1]} : vector<14x6x14xf32> to vector<10x1x10xf32>
    %396 = vector.extract_strided_slice %231 {offsets = [4, 5, 4], sizes = [10, 1, 10], strides = [1, 1, 1]} : vector<14x6x14xf32> to vector<10x1x10xf32>
    %397 = tpu.concatenate %372, %373, %374, %375, %376, %377, %378, %379, %380, %381, %382, %383, %384, %385, %386, %387 in 1 : vector<10x1x10xf32>, vector<10x1x10xf32>, vector<10x1x10xf32>, vector<10x1x10xf32>, vector<10x1x10xf32>, vector<10x1x10xf32>, vector<10x1x10xf32>, vector<10x1x10xf32>, vector<10x1x10xf32>, vector<10x1x10xf32>, vector<10x1x10xf32>, vector<10x1x10xf32>, vector<10x1x10xf32>, vector<10x1x10xf32>, vector<10x1x10xf32>, vector<10x1x10xf32> -> vector<10x16x10xf32>
    %398 = tpu.concatenate %388, %389, %390, %391, %392, %393, %394, %395, %396 in 1 : vector<10x1x10xf32>, vector<10x1x10xf32>, vector<10x1x10xf32>, vector<10x1x10xf32>, vector<10x1x10xf32>, vector<10x1x10xf32>, vector<10x1x10xf32>, vector<10x1x10xf32>, vector<10x1x10xf32> -> vector<10x9x10xf32>
    %399 = tpu.concatenate %397, %398 in 1 : vector<10x16x10xf32>, vector<10x9x10xf32> -> vector<10x25x10xf32>
    %400 = tpu.concatenate %259, %287, %315, %343, %371, %399 in 1 : vector<10x25x10xf32>, vector<10x25x10xf32>, vector<10x25x10xf32>, vector<10x25x10xf32>, vector<10x25x10xf32>, vector<10x25x10xf32> -> vector<10x150x10xf32>
    %c0_28 = arith.constant 0 : index
    %c0_29 = arith.constant 0 : index
    %401 = vector.load %arg4[%c0_28, %c0_29] : memref<16x150xf32, #tpu.memory_space<vmem>>, vector<16x150xf32>
    %402 = vector.shape_cast %401 : vector<16x150xf32> to vector<1x16x150xf32>
    %403 = vector.shape_cast %402 : vector<1x16x150xf32> to vector<1x16x150xf32>
    %404 = vector.broadcast %403 : vector<1x16x150xf32> to vector<10x16x150xf32>
    %cst_30 = arith.constant dense<0.000000e+00> : vector<10x16x10xf32>
    %405 = tpu.matmul %404, %400, %cst_30 {dimension_numbers = #tpu.dot_dimension_numbers<[2], [1], [1], [2], [0, 0, 0, 1, 1, 2], [0], [0]>} : vector<10x16x150xf32>, vector<10x150x10xf32>, vector<10x16x10xf32> -> vector<10x16x10xf32>
    %c0_31 = arith.constant 0 : index
    %c0_32 = arith.constant 0 : index
    %c0_33 = arith.constant 0 : index
    %406 = vector.load %arg5[%c0_31, %c0_32, %c0_33] : memref<1x16x1xf32, #tpu.memory_space<vmem>>, vector<1x16x1xf32>
    %407 = vector.broadcast %406 : vector<1x16x1xf32> to vector<10x16x10xf32>
    %408 = arith.addf %405, %407 : vector<10x16x10xf32>
    %409 = arith.negf %408 : vector<10x16x10xf32>
    %410 = math.exp %409 : vector<10x16x10xf32>
    %cst_34 = arith.constant 1.000000e+00 : f32
    %411 = vector.broadcast %cst_34 : f32 to vector<10x16x10xf32>
    %412 = arith.addf %411, %410 : vector<10x16x10xf32>
    %413 = arith.divf %411, %412 : vector<10x16x10xf32>
    %c0_35 = arith.constant 0 : index
    %c0_36 = arith.constant 0 : index
    %414 = vector.load %arg13[%c0_35, %c0_36] : memref<10x5xf32, #tpu.memory_space<vmem>>, vector<10x5xf32>
    %415 = vector.shape_cast %414 : vector<10x5xf32> to vector<1x10x5xf32>
    %416 = vector.shape_cast %415 : vector<1x10x5xf32> to vector<1x10x5xf32>
    %417 = vector.broadcast %416 : vector<1x10x5xf32> to vector<10x10x5xf32>
    %cst_37 = arith.constant dense<0.000000e+00> : vector<10x16x5xf32>
    %418 = tpu.matmul %413, %417, %cst_37 {dimension_numbers = #tpu.dot_dimension_numbers<[2], [1], [1], [2], [0, 0, 0, 1, 1, 2], [0], [0]>} : vector<10x16x10xf32>, vector<10x10x5xf32>, vector<10x16x5xf32> -> vector<10x16x5xf32>
    %419 = vector.extract_strided_slice %418 {offsets = [0, 0, 0], sizes = [1, 16, 5], strides = [1, 1, 1]} : vector<10x16x5xf32> to vector<1x16x5xf32>
    %420 = vector.shape_cast %419 : vector<1x16x5xf32> to vector<16x5xf32>
    %421 = vector.extract_strided_slice %418 {offsets = [1, 0, 0], sizes = [1, 16, 5], strides = [1, 1, 1]} : vector<10x16x5xf32> to vector<1x16x5xf32>
    %422 = vector.shape_cast %421 : vector<1x16x5xf32> to vector<16x5xf32>
    %423 = arith.addf %420, %422 : vector<16x5xf32>
    %cst_38 = arith.constant 5.000000e-01 : f32
    %424 = vector.broadcast %cst_38 : f32 to vector<16x5xf32>
    %425 = arith.mulf %423, %424 : vector<16x5xf32>
    %426 = vector.shape_cast %425 : vector<16x5xf32> to vector<1x16x5xf32>
    %427 = vector.extract_strided_slice %418 {offsets = [2, 0, 0], sizes = [1, 16, 5], strides = [1, 1, 1]} : vector<10x16x5xf32> to vector<1x16x5xf32>
    %428 = vector.shape_cast %427 : vector<1x16x5xf32> to vector<16x5xf32>
    %429 = vector.extract_strided_slice %418 {offsets = [3, 0, 0], sizes = [1, 16, 5], strides = [1, 1, 1]} : vector<10x16x5xf32> to vector<1x16x5xf32>
    %430 = vector.shape_cast %429 : vector<1x16x5xf32> to vector<16x5xf32>
    %431 = arith.addf %428, %430 : vector<16x5xf32>
    %cst_39 = arith.constant 5.000000e-01 : f32
    %432 = vector.broadcast %cst_39 : f32 to vector<16x5xf32>
    %433 = arith.mulf %431, %432 : vector<16x5xf32>
    %434 = vector.shape_cast %433 : vector<16x5xf32> to vector<1x16x5xf32>
    %435 = vector.extract_strided_slice %418 {offsets = [4, 0, 0], sizes = [1, 16, 5], strides = [1, 1, 1]} : vector<10x16x5xf32> to vector<1x16x5xf32>
    %436 = vector.shape_cast %435 : vector<1x16x5xf32> to vector<16x5xf32>
    %437 = vector.extract_strided_slice %418 {offsets = [5, 0, 0], sizes = [1, 16, 5], strides = [1, 1, 1]} : vector<10x16x5xf32> to vector<1x16x5xf32>
    %438 = vector.shape_cast %437 : vector<1x16x5xf32> to vector<16x5xf32>
    %439 = arith.addf %436, %438 : vector<16x5xf32>
    %cst_40 = arith.constant 5.000000e-01 : f32
    %440 = vector.broadcast %cst_40 : f32 to vector<16x5xf32>
    %441 = arith.mulf %439, %440 : vector<16x5xf32>
    %442 = vector.shape_cast %441 : vector<16x5xf32> to vector<1x16x5xf32>
    %443 = vector.extract_strided_slice %418 {offsets = [6, 0, 0], sizes = [1, 16, 5], strides = [1, 1, 1]} : vector<10x16x5xf32> to vector<1x16x5xf32>
    %444 = vector.shape_cast %443 : vector<1x16x5xf32> to vector<16x5xf32>
    %445 = vector.extract_strided_slice %418 {offsets = [7, 0, 0], sizes = [1, 16, 5], strides = [1, 1, 1]} : vector<10x16x5xf32> to vector<1x16x5xf32>
    %446 = vector.shape_cast %445 : vector<1x16x5xf32> to vector<16x5xf32>
    %447 = arith.addf %444, %446 : vector<16x5xf32>
    %cst_41 = arith.constant 5.000000e-01 : f32
    %448 = vector.broadcast %cst_41 : f32 to vector<16x5xf32>
    %449 = arith.mulf %447, %448 : vector<16x5xf32>
    %450 = vector.shape_cast %449 : vector<16x5xf32> to vector<1x16x5xf32>
    %451 = vector.extract_strided_slice %418 {offsets = [8, 0, 0], sizes = [1, 16, 5], strides = [1, 1, 1]} : vector<10x16x5xf32> to vector<1x16x5xf32>
    %452 = vector.shape_cast %451 : vector<1x16x5xf32> to vector<16x5xf32>
    %453 = vector.extract_strided_slice %418 {offsets = [9, 0, 0], sizes = [1, 16, 5], strides = [1, 1, 1]} : vector<10x16x5xf32> to vector<1x16x5xf32>
    %454 = vector.shape_cast %453 : vector<1x16x5xf32> to vector<16x5xf32>
    %455 = arith.addf %452, %454 : vector<16x5xf32>
    %cst_42 = arith.constant 5.000000e-01 : f32
    %456 = vector.broadcast %cst_42 : f32 to vector<16x5xf32>
    %457 = arith.mulf %455, %456 : vector<16x5xf32>
    %458 = vector.shape_cast %457 : vector<16x5xf32> to vector<1x16x5xf32>
    %459 = tpu.concatenate %426, %434, %442, %450, %458 in 0 : vector<1x16x5xf32>, vector<1x16x5xf32>, vector<1x16x5xf32>, vector<1x16x5xf32>, vector<1x16x5xf32> -> vector<5x16x5xf32>
    %460 = vector.extract_strided_slice %459 {offsets = [0, 0, 0], sizes = [1, 1, 5], strides = [1, 1, 1]} : vector<5x16x5xf32> to vector<1x1x5xf32>
    %461 = vector.shape_cast %460 : vector<1x1x5xf32> to vector<1x5xf32>
    %462 = vector.extract_strided_slice %459 {offsets = [0, 1, 0], sizes = [1, 1, 5], strides = [1, 1, 1]} : vector<5x16x5xf32> to vector<1x1x5xf32>
    %463 = vector.shape_cast %462 : vector<1x1x5xf32> to vector<1x5xf32>
    %464 = vector.extract_strided_slice %459 {offsets = [0, 2, 0], sizes = [1, 1, 5], strides = [1, 1, 1]} : vector<5x16x5xf32> to vector<1x1x5xf32>
    %465 = vector.shape_cast %464 : vector<1x1x5xf32> to vector<1x5xf32>
    %466 = vector.extract_strided_slice %459 {offsets = [0, 3, 0], sizes = [1, 1, 5], strides = [1, 1, 1]} : vector<5x16x5xf32> to vector<1x1x5xf32>
    %467 = vector.shape_cast %466 : vector<1x1x5xf32> to vector<1x5xf32>
    %468 = vector.extract_strided_slice %459 {offsets = [0, 4, 0], sizes = [1, 1, 5], strides = [1, 1, 1]} : vector<5x16x5xf32> to vector<1x1x5xf32>
    %469 = vector.shape_cast %468 : vector<1x1x5xf32> to vector<1x5xf32>
    %470 = vector.extract_strided_slice %459 {offsets = [0, 5, 0], sizes = [1, 1, 5], strides = [1, 1, 1]} : vector<5x16x5xf32> to vector<1x1x5xf32>
    %471 = vector.shape_cast %470 : vector<1x1x5xf32> to vector<1x5xf32>
    %472 = vector.extract_strided_slice %459 {offsets = [0, 6, 0], sizes = [1, 1, 5], strides = [1, 1, 1]} : vector<5x16x5xf32> to vector<1x1x5xf32>
    %473 = vector.shape_cast %472 : vector<1x1x5xf32> to vector<1x5xf32>
    %474 = vector.extract_strided_slice %459 {offsets = [0, 7, 0], sizes = [1, 1, 5], strides = [1, 1, 1]} : vector<5x16x5xf32> to vector<1x1x5xf32>
    %475 = vector.shape_cast %474 : vector<1x1x5xf32> to vector<1x5xf32>
    %476 = vector.extract_strided_slice %459 {offsets = [0, 8, 0], sizes = [1, 1, 5], strides = [1, 1, 1]} : vector<5x16x5xf32> to vector<1x1x5xf32>
    %477 = vector.shape_cast %476 : vector<1x1x5xf32> to vector<1x5xf32>
    %478 = vector.extract_strided_slice %459 {offsets = [0, 9, 0], sizes = [1, 1, 5], strides = [1, 1, 1]} : vector<5x16x5xf32> to vector<1x1x5xf32>
    %479 = vector.shape_cast %478 : vector<1x1x5xf32> to vector<1x5xf32>
    %480 = vector.extract_strided_slice %459 {offsets = [0, 10, 0], sizes = [1, 1, 5], strides = [1, 1, 1]} : vector<5x16x5xf32> to vector<1x1x5xf32>
    %481 = vector.shape_cast %480 : vector<1x1x5xf32> to vector<1x5xf32>
    %482 = vector.extract_strided_slice %459 {offsets = [0, 11, 0], sizes = [1, 1, 5], strides = [1, 1, 1]} : vector<5x16x5xf32> to vector<1x1x5xf32>
    %483 = vector.shape_cast %482 : vector<1x1x5xf32> to vector<1x5xf32>
    %484 = vector.extract_strided_slice %459 {offsets = [0, 12, 0], sizes = [1, 1, 5], strides = [1, 1, 1]} : vector<5x16x5xf32> to vector<1x1x5xf32>
    %485 = vector.shape_cast %484 : vector<1x1x5xf32> to vector<1x5xf32>
    %486 = vector.extract_strided_slice %459 {offsets = [0, 13, 0], sizes = [1, 1, 5], strides = [1, 1, 1]} : vector<5x16x5xf32> to vector<1x1x5xf32>
    %487 = vector.shape_cast %486 : vector<1x1x5xf32> to vector<1x5xf32>
    %488 = vector.extract_strided_slice %459 {offsets = [0, 14, 0], sizes = [1, 1, 5], strides = [1, 1, 1]} : vector<5x16x5xf32> to vector<1x1x5xf32>
    %489 = vector.shape_cast %488 : vector<1x1x5xf32> to vector<1x5xf32>
    %490 = vector.extract_strided_slice %459 {offsets = [0, 15, 0], sizes = [1, 1, 5], strides = [1, 1, 1]} : vector<5x16x5xf32> to vector<1x1x5xf32>
    %491 = vector.shape_cast %490 : vector<1x1x5xf32> to vector<1x5xf32>
    %492 = vector.extract_strided_slice %459 {offsets = [1, 0, 0], sizes = [1, 1, 5], strides = [1, 1, 1]} : vector<5x16x5xf32> to vector<1x1x5xf32>
    %493 = vector.shape_cast %492 : vector<1x1x5xf32> to vector<1x5xf32>
    %494 = vector.extract_strided_slice %459 {offsets = [1, 1, 0], sizes = [1, 1, 5], strides = [1, 1, 1]} : vector<5x16x5xf32> to vector<1x1x5xf32>
    %495 = vector.shape_cast %494 : vector<1x1x5xf32> to vector<1x5xf32>
    %496 = vector.extract_strided_slice %459 {offsets = [1, 2, 0], sizes = [1, 1, 5], strides = [1, 1, 1]} : vector<5x16x5xf32> to vector<1x1x5xf32>
    %497 = vector.shape_cast %496 : vector<1x1x5xf32> to vector<1x5xf32>
    %498 = vector.extract_strided_slice %459 {offsets = [1, 3, 0], sizes = [1, 1, 5], strides = [1, 1, 1]} : vector<5x16x5xf32> to vector<1x1x5xf32>
    %499 = vector.shape_cast %498 : vector<1x1x5xf32> to vector<1x5xf32>
    %500 = vector.extract_strided_slice %459 {offsets = [1, 4, 0], sizes = [1, 1, 5], strides = [1, 1, 1]} : vector<5x16x5xf32> to vector<1x1x5xf32>
    %501 = vector.shape_cast %500 : vector<1x1x5xf32> to vector<1x5xf32>
    %502 = vector.extract_strided_slice %459 {offsets = [1, 5, 0], sizes = [1, 1, 5], strides = [1, 1, 1]} : vector<5x16x5xf32> to vector<1x1x5xf32>
    %503 = vector.shape_cast %502 : vector<1x1x5xf32> to vector<1x5xf32>
    %504 = vector.extract_strided_slice %459 {offsets = [1, 6, 0], sizes = [1, 1, 5], strides = [1, 1, 1]} : vector<5x16x5xf32> to vector<1x1x5xf32>
    %505 = vector.shape_cast %504 : vector<1x1x5xf32> to vector<1x5xf32>
    %506 = vector.extract_strided_slice %459 {offsets = [1, 7, 0], sizes = [1, 1, 5], strides = [1, 1, 1]} : vector<5x16x5xf32> to vector<1x1x5xf32>
    %507 = vector.shape_cast %506 : vector<1x1x5xf32> to vector<1x5xf32>
    %508 = vector.extract_strided_slice %459 {offsets = [1, 8, 0], sizes = [1, 1, 5], strides = [1, 1, 1]} : vector<5x16x5xf32> to vector<1x1x5xf32>
    %509 = vector.shape_cast %508 : vector<1x1x5xf32> to vector<1x5xf32>
    %510 = vector.extract_strided_slice %459 {offsets = [1, 9, 0], sizes = [1, 1, 5], strides = [1, 1, 1]} : vector<5x16x5xf32> to vector<1x1x5xf32>
    %511 = vector.shape_cast %510 : vector<1x1x5xf32> to vector<1x5xf32>
    %512 = vector.extract_strided_slice %459 {offsets = [1, 10, 0], sizes = [1, 1, 5], strides = [1, 1, 1]} : vector<5x16x5xf32> to vector<1x1x5xf32>
    %513 = vector.shape_cast %512 : vector<1x1x5xf32> to vector<1x5xf32>
    %514 = vector.extract_strided_slice %459 {offsets = [1, 11, 0], sizes = [1, 1, 5], strides = [1, 1, 1]} : vector<5x16x5xf32> to vector<1x1x5xf32>
    %515 = vector.shape_cast %514 : vector<1x1x5xf32> to vector<1x5xf32>
    %516 = vector.extract_strided_slice %459 {offsets = [1, 12, 0], sizes = [1, 1, 5], strides = [1, 1, 1]} : vector<5x16x5xf32> to vector<1x1x5xf32>
    %517 = vector.shape_cast %516 : vector<1x1x5xf32> to vector<1x5xf32>
    %518 = vector.extract_strided_slice %459 {offsets = [1, 13, 0], sizes = [1, 1, 5], strides = [1, 1, 1]} : vector<5x16x5xf32> to vector<1x1x5xf32>
    %519 = vector.shape_cast %518 : vector<1x1x5xf32> to vector<1x5xf32>
    %520 = vector.extract_strided_slice %459 {offsets = [1, 14, 0], sizes = [1, 1, 5], strides = [1, 1, 1]} : vector<5x16x5xf32> to vector<1x1x5xf32>
    %521 = vector.shape_cast %520 : vector<1x1x5xf32> to vector<1x5xf32>
    %522 = vector.extract_strided_slice %459 {offsets = [1, 15, 0], sizes = [1, 1, 5], strides = [1, 1, 1]} : vector<5x16x5xf32> to vector<1x1x5xf32>
    %523 = vector.shape_cast %522 : vector<1x1x5xf32> to vector<1x5xf32>
    %524 = vector.extract_strided_slice %459 {offsets = [2, 0, 0], sizes = [1, 1, 5], strides = [1, 1, 1]} : vector<5x16x5xf32> to vector<1x1x5xf32>
    %525 = vector.shape_cast %524 : vector<1x1x5xf32> to vector<1x5xf32>
    %526 = vector.extract_strided_slice %459 {offsets = [2, 1, 0], sizes = [1, 1, 5], strides = [1, 1, 1]} : vector<5x16x5xf32> to vector<1x1x5xf32>
    %527 = vector.shape_cast %526 : vector<1x1x5xf32> to vector<1x5xf32>
    %528 = vector.extract_strided_slice %459 {offsets = [2, 2, 0], sizes = [1, 1, 5], strides = [1, 1, 1]} : vector<5x16x5xf32> to vector<1x1x5xf32>
    %529 = vector.shape_cast %528 : vector<1x1x5xf32> to vector<1x5xf32>
    %530 = vector.extract_strided_slice %459 {offsets = [2, 3, 0], sizes = [1, 1, 5], strides = [1, 1, 1]} : vector<5x16x5xf32> to vector<1x1x5xf32>
    %531 = vector.shape_cast %530 : vector<1x1x5xf32> to vector<1x5xf32>
    %532 = vector.extract_strided_slice %459 {offsets = [2, 4, 0], sizes = [1, 1, 5], strides = [1, 1, 1]} : vector<5x16x5xf32> to vector<1x1x5xf32>
    %533 = vector.shape_cast %532 : vector<1x1x5xf32> to vector<1x5xf32>
    %534 = vector.extract_strided_slice %459 {offsets = [2, 5, 0], sizes = [1, 1, 5], strides = [1, 1, 1]} : vector<5x16x5xf32> to vector<1x1x5xf32>
    %535 = vector.shape_cast %534 : vector<1x1x5xf32> to vector<1x5xf32>
    %536 = vector.extract_strided_slice %459 {offsets = [2, 6, 0], sizes = [1, 1, 5], strides = [1, 1, 1]} : vector<5x16x5xf32> to vector<1x1x5xf32>
    %537 = vector.shape_cast %536 : vector<1x1x5xf32> to vector<1x5xf32>
    %538 = vector.extract_strided_slice %459 {offsets = [2, 7, 0], sizes = [1, 1, 5], strides = [1, 1, 1]} : vector<5x16x5xf32> to vector<1x1x5xf32>
    %539 = vector.shape_cast %538 : vector<1x1x5xf32> to vector<1x5xf32>
    %540 = vector.extract_strided_slice %459 {offsets = [2, 8, 0], sizes = [1, 1, 5], strides = [1, 1, 1]} : vector<5x16x5xf32> to vector<1x1x5xf32>
    %541 = vector.shape_cast %540 : vector<1x1x5xf32> to vector<1x5xf32>
    %542 = vector.extract_strided_slice %459 {offsets = [2, 9, 0], sizes = [1, 1, 5], strides = [1, 1, 1]} : vector<5x16x5xf32> to vector<1x1x5xf32>
    %543 = vector.shape_cast %542 : vector<1x1x5xf32> to vector<1x5xf32>
    %544 = vector.extract_strided_slice %459 {offsets = [2, 10, 0], sizes = [1, 1, 5], strides = [1, 1, 1]} : vector<5x16x5xf32> to vector<1x1x5xf32>
    %545 = vector.shape_cast %544 : vector<1x1x5xf32> to vector<1x5xf32>
    %546 = vector.extract_strided_slice %459 {offsets = [2, 11, 0], sizes = [1, 1, 5], strides = [1, 1, 1]} : vector<5x16x5xf32> to vector<1x1x5xf32>
    %547 = vector.shape_cast %546 : vector<1x1x5xf32> to vector<1x5xf32>
    %548 = vector.extract_strided_slice %459 {offsets = [2, 12, 0], sizes = [1, 1, 5], strides = [1, 1, 1]} : vector<5x16x5xf32> to vector<1x1x5xf32>
    %549 = vector.shape_cast %548 : vector<1x1x5xf32> to vector<1x5xf32>
    %550 = vector.extract_strided_slice %459 {offsets = [2, 13, 0], sizes = [1, 1, 5], strides = [1, 1, 1]} : vector<5x16x5xf32> to vector<1x1x5xf32>
    %551 = vector.shape_cast %550 : vector<1x1x5xf32> to vector<1x5xf32>
    %552 = vector.extract_strided_slice %459 {offsets = [2, 14, 0], sizes = [1, 1, 5], strides = [1, 1, 1]} : vector<5x16x5xf32> to vector<1x1x5xf32>
    %553 = vector.shape_cast %552 : vector<1x1x5xf32> to vector<1x5xf32>
    %554 = vector.extract_strided_slice %459 {offsets = [2, 15, 0], sizes = [1, 1, 5], strides = [1, 1, 1]} : vector<5x16x5xf32> to vector<1x1x5xf32>
    %555 = vector.shape_cast %554 : vector<1x1x5xf32> to vector<1x5xf32>
    %556 = vector.extract_strided_slice %459 {offsets = [3, 0, 0], sizes = [1, 1, 5], strides = [1, 1, 1]} : vector<5x16x5xf32> to vector<1x1x5xf32>
    %557 = vector.shape_cast %556 : vector<1x1x5xf32> to vector<1x5xf32>
    %558 = vector.extract_strided_slice %459 {offsets = [3, 1, 0], sizes = [1, 1, 5], strides = [1, 1, 1]} : vector<5x16x5xf32> to vector<1x1x5xf32>
    %559 = vector.shape_cast %558 : vector<1x1x5xf32> to vector<1x5xf32>
    %560 = vector.extract_strided_slice %459 {offsets = [3, 2, 0], sizes = [1, 1, 5], strides = [1, 1, 1]} : vector<5x16x5xf32> to vector<1x1x5xf32>
    %561 = vector.shape_cast %560 : vector<1x1x5xf32> to vector<1x5xf32>
    %562 = vector.extract_strided_slice %459 {offsets = [3, 3, 0], sizes = [1, 1, 5], strides = [1, 1, 1]} : vector<5x16x5xf32> to vector<1x1x5xf32>
    %563 = vector.shape_cast %562 : vector<1x1x5xf32> to vector<1x5xf32>
    %564 = vector.extract_strided_slice %459 {offsets = [3, 4, 0], sizes = [1, 1, 5], strides = [1, 1, 1]} : vector<5x16x5xf32> to vector<1x1x5xf32>
    %565 = vector.shape_cast %564 : vector<1x1x5xf32> to vector<1x5xf32>
    %566 = vector.extract_strided_slice %459 {offsets = [3, 5, 0], sizes = [1, 1, 5], strides = [1, 1, 1]} : vector<5x16x5xf32> to vector<1x1x5xf32>
    %567 = vector.shape_cast %566 : vector<1x1x5xf32> to vector<1x5xf32>
    %568 = vector.extract_strided_slice %459 {offsets = [3, 6, 0], sizes = [1, 1, 5], strides = [1, 1, 1]} : vector<5x16x5xf32> to vector<1x1x5xf32>
    %569 = vector.shape_cast %568 : vector<1x1x5xf32> to vector<1x5xf32>
    %570 = vector.extract_strided_slice %459 {offsets = [3, 7, 0], sizes = [1, 1, 5], strides = [1, 1, 1]} : vector<5x16x5xf32> to vector<1x1x5xf32>
    %571 = vector.shape_cast %570 : vector<1x1x5xf32> to vector<1x5xf32>
    %572 = vector.extract_strided_slice %459 {offsets = [3, 8, 0], sizes = [1, 1, 5], strides = [1, 1, 1]} : vector<5x16x5xf32> to vector<1x1x5xf32>
    %573 = vector.shape_cast %572 : vector<1x1x5xf32> to vector<1x5xf32>
    %574 = vector.extract_strided_slice %459 {offsets = [3, 9, 0], sizes = [1, 1, 5], strides = [1, 1, 1]} : vector<5x16x5xf32> to vector<1x1x5xf32>
    %575 = vector.shape_cast %574 : vector<1x1x5xf32> to vector<1x5xf32>
    %576 = vector.extract_strided_slice %459 {offsets = [3, 10, 0], sizes = [1, 1, 5], strides = [1, 1, 1]} : vector<5x16x5xf32> to vector<1x1x5xf32>
    %577 = vector.shape_cast %576 : vector<1x1x5xf32> to vector<1x5xf32>
    %578 = vector.extract_strided_slice %459 {offsets = [3, 11, 0], sizes = [1, 1, 5], strides = [1, 1, 1]} : vector<5x16x5xf32> to vector<1x1x5xf32>
    %579 = vector.shape_cast %578 : vector<1x1x5xf32> to vector<1x5xf32>
    %580 = vector.extract_strided_slice %459 {offsets = [3, 12, 0], sizes = [1, 1, 5], strides = [1, 1, 1]} : vector<5x16x5xf32> to vector<1x1x5xf32>
    %581 = vector.shape_cast %580 : vector<1x1x5xf32> to vector<1x5xf32>
    %582 = vector.extract_strided_slice %459 {offsets = [3, 13, 0], sizes = [1, 1, 5], strides = [1, 1, 1]} : vector<5x16x5xf32> to vector<1x1x5xf32>
    %583 = vector.shape_cast %582 : vector<1x1x5xf32> to vector<1x5xf32>
    %584 = vector.extract_strided_slice %459 {offsets = [3, 14, 0], sizes = [1, 1, 5], strides = [1, 1, 1]} : vector<5x16x5xf32> to vector<1x1x5xf32>
    %585 = vector.shape_cast %584 : vector<1x1x5xf32> to vector<1x5xf32>
    %586 = vector.extract_strided_slice %459 {offsets = [3, 15, 0], sizes = [1, 1, 5], strides = [1, 1, 1]} : vector<5x16x5xf32> to vector<1x1x5xf32>
    %587 = vector.shape_cast %586 : vector<1x1x5xf32> to vector<1x5xf32>
    %588 = vector.extract_strided_slice %459 {offsets = [4, 0, 0], sizes = [1, 1, 5], strides = [1, 1, 1]} : vector<5x16x5xf32> to vector<1x1x5xf32>
    %589 = vector.shape_cast %588 : vector<1x1x5xf32> to vector<1x5xf32>
    %590 = vector.extract_strided_slice %459 {offsets = [4, 1, 0], sizes = [1, 1, 5], strides = [1, 1, 1]} : vector<5x16x5xf32> to vector<1x1x5xf32>
    %591 = vector.shape_cast %590 : vector<1x1x5xf32> to vector<1x5xf32>
    %592 = vector.extract_strided_slice %459 {offsets = [4, 2, 0], sizes = [1, 1, 5], strides = [1, 1, 1]} : vector<5x16x5xf32> to vector<1x1x5xf32>
    %593 = vector.shape_cast %592 : vector<1x1x5xf32> to vector<1x5xf32>
    %594 = vector.extract_strided_slice %459 {offsets = [4, 3, 0], sizes = [1, 1, 5], strides = [1, 1, 1]} : vector<5x16x5xf32> to vector<1x1x5xf32>
    %595 = vector.shape_cast %594 : vector<1x1x5xf32> to vector<1x5xf32>
    %596 = vector.extract_strided_slice %459 {offsets = [4, 4, 0], sizes = [1, 1, 5], strides = [1, 1, 1]} : vector<5x16x5xf32> to vector<1x1x5xf32>
    %597 = vector.shape_cast %596 : vector<1x1x5xf32> to vector<1x5xf32>
    %598 = vector.extract_strided_slice %459 {offsets = [4, 5, 0], sizes = [1, 1, 5], strides = [1, 1, 1]} : vector<5x16x5xf32> to vector<1x1x5xf32>
    %599 = vector.shape_cast %598 : vector<1x1x5xf32> to vector<1x5xf32>
    %600 = vector.extract_strided_slice %459 {offsets = [4, 6, 0], sizes = [1, 1, 5], strides = [1, 1, 1]} : vector<5x16x5xf32> to vector<1x1x5xf32>
    %601 = vector.shape_cast %600 : vector<1x1x5xf32> to vector<1x5xf32>
    %602 = vector.extract_strided_slice %459 {offsets = [4, 7, 0], sizes = [1, 1, 5], strides = [1, 1, 1]} : vector<5x16x5xf32> to vector<1x1x5xf32>
    %603 = vector.shape_cast %602 : vector<1x1x5xf32> to vector<1x5xf32>
    %604 = vector.extract_strided_slice %459 {offsets = [4, 8, 0], sizes = [1, 1, 5], strides = [1, 1, 1]} : vector<5x16x5xf32> to vector<1x1x5xf32>
    %605 = vector.shape_cast %604 : vector<1x1x5xf32> to vector<1x5xf32>
    %606 = vector.extract_strided_slice %459 {offsets = [4, 9, 0], sizes = [1, 1, 5], strides = [1, 1, 1]} : vector<5x16x5xf32> to vector<1x1x5xf32>
    %607 = vector.shape_cast %606 : vector<1x1x5xf32> to vector<1x5xf32>
    %608 = vector.extract_strided_slice %459 {offsets = [4, 10, 0], sizes = [1, 1, 5], strides = [1, 1, 1]} : vector<5x16x5xf32> to vector<1x1x5xf32>
    %609 = vector.shape_cast %608 : vector<1x1x5xf32> to vector<1x5xf32>
    %610 = vector.extract_strided_slice %459 {offsets = [4, 11, 0], sizes = [1, 1, 5], strides = [1, 1, 1]} : vector<5x16x5xf32> to vector<1x1x5xf32>
    %611 = vector.shape_cast %610 : vector<1x1x5xf32> to vector<1x5xf32>
    %612 = vector.extract_strided_slice %459 {offsets = [4, 12, 0], sizes = [1, 1, 5], strides = [1, 1, 1]} : vector<5x16x5xf32> to vector<1x1x5xf32>
    %613 = vector.shape_cast %612 : vector<1x1x5xf32> to vector<1x5xf32>
    %614 = vector.extract_strided_slice %459 {offsets = [4, 13, 0], sizes = [1, 1, 5], strides = [1, 1, 1]} : vector<5x16x5xf32> to vector<1x1x5xf32>
    %615 = vector.shape_cast %614 : vector<1x1x5xf32> to vector<1x5xf32>
    %616 = vector.extract_strided_slice %459 {offsets = [4, 14, 0], sizes = [1, 1, 5], strides = [1, 1, 1]} : vector<5x16x5xf32> to vector<1x1x5xf32>
    %617 = vector.shape_cast %616 : vector<1x1x5xf32> to vector<1x5xf32>
    %618 = vector.extract_strided_slice %459 {offsets = [4, 15, 0], sizes = [1, 1, 5], strides = [1, 1, 1]} : vector<5x16x5xf32> to vector<1x1x5xf32>
    %619 = vector.shape_cast %618 : vector<1x1x5xf32> to vector<1x5xf32>
    %620 = tpu.concatenate %461, %463, %465, %467, %469, %471, %473, %475, %477, %479, %481, %483, %485, %487, %489, %491 in 1 : vector<1x5xf32>, vector<1x5xf32>, vector<1x5xf32>, vector<1x5xf32>, vector<1x5xf32>, vector<1x5xf32>, vector<1x5xf32>, vector<1x5xf32>, vector<1x5xf32>, vector<1x5xf32>, vector<1x5xf32>, vector<1x5xf32>, vector<1x5xf32>, vector<1x5xf32>, vector<1x5xf32>, vector<1x5xf32> -> vector<1x80xf32>
    %621 = tpu.concatenate %493, %495, %497, %499, %501, %503, %505, %507, %509, %511, %513, %515, %517, %519, %521, %523 in 1 : vector<1x5xf32>, vector<1x5xf32>, vector<1x5xf32>, vector<1x5xf32>, vector<1x5xf32>, vector<1x5xf32>, vector<1x5xf32>, vector<1x5xf32>, vector<1x5xf32>, vector<1x5xf32>, vector<1x5xf32>, vector<1x5xf32>, vector<1x5xf32>, vector<1x5xf32>, vector<1x5xf32>, vector<1x5xf32> -> vector<1x80xf32>
    %622 = tpu.concatenate %525, %527, %529, %531, %533, %535, %537, %539, %541, %543, %545, %547, %549, %551, %553, %555 in 1 : vector<1x5xf32>, vector<1x5xf32>, vector<1x5xf32>, vector<1x5xf32>, vector<1x5xf32>, vector<1x5xf32>, vector<1x5xf32>, vector<1x5xf32>, vector<1x5xf32>, vector<1x5xf32>, vector<1x5xf32>, vector<1x5xf32>, vector<1x5xf32>, vector<1x5xf32>, vector<1x5xf32>, vector<1x5xf32> -> vector<1x80xf32>
    %623 = tpu.concatenate %557, %559, %561, %563, %565, %567, %569, %571, %573, %575, %577, %579, %581, %583, %585, %587 in 1 : vector<1x5xf32>, vector<1x5xf32>, vector<1x5xf32>, vector<1x5xf32>, vector<1x5xf32>, vector<1x5xf32>, vector<1x5xf32>, vector<1x5xf32>, vector<1x5xf32>, vector<1x5xf32>, vector<1x5xf32>, vector<1x5xf32>, vector<1x5xf32>, vector<1x5xf32>, vector<1x5xf32>, vector<1x5xf32> -> vector<1x80xf32>
    %624 = tpu.concatenate %589, %591, %593, %595, %597, %599, %601, %603, %605, %607, %609, %611, %613, %615, %617, %619 in 1 : vector<1x5xf32>, vector<1x5xf32>, vector<1x5xf32>, vector<1x5xf32>, vector<1x5xf32>, vector<1x5xf32>, vector<1x5xf32>, vector<1x5xf32>, vector<1x5xf32>, vector<1x5xf32>, vector<1x5xf32>, vector<1x5xf32>, vector<1x5xf32>, vector<1x5xf32>, vector<1x5xf32>, vector<1x5xf32> -> vector<1x80xf32>
    %625 = tpu.concatenate %620, %621, %622, %623, %624 in 1 : vector<1x80xf32>, vector<1x80xf32>, vector<1x80xf32>, vector<1x80xf32>, vector<1x80xf32> -> vector<1x400xf32>
    %c0_43 = arith.constant 0 : index
    %c0_44 = arith.constant 0 : index
    %626 = vector.load %arg6[%c0_43, %c0_44] : memref<400x120xf32, #tpu.memory_space<vmem>>, vector<400x120xf32>
    %cst_45 = arith.constant dense<0.000000e+00> : vector<1x120xf32>
    %627 = tpu.matmul %625, %626, %cst_45 {dimension_numbers = #tpu.dot_dimension_numbers<[1], [0], [0], [1], [0, 0, 1, 1], [], []>} : vector<1x400xf32>, vector<400x120xf32>, vector<1x120xf32> -> vector<1x120xf32>
    %c0_46 = arith.constant 0 : index
    %c0_47 = arith.constant 0 : index
    %628 = vector.load %arg7[%c0_46, %c0_47] : memref<1x120xf32, #tpu.memory_space<vmem>>, vector<1x120xf32>
    %629 = arith.addf %627, %628 : vector<1x120xf32>
    %630 = arith.negf %629 : vector<1x120xf32>
    %631 = math.exp %630 : vector<1x120xf32>
    %cst_48 = arith.constant 1.000000e+00 : f32
    %632 = vector.broadcast %cst_48 : f32 to vector<1x120xf32>
    %633 = arith.addf %632, %631 : vector<1x120xf32>
    %634 = arith.divf %632, %633 : vector<1x120xf32>
    %c0_49 = arith.constant 0 : index
    %c0_50 = arith.constant 0 : index
    %635 = vector.load %arg8[%c0_49, %c0_50] : memref<120x84xf32, #tpu.memory_space<vmem>>, vector<120x84xf32>
    %cst_51 = arith.constant dense<0.000000e+00> : vector<1x84xf32>
    %636 = tpu.matmul %634, %635, %cst_51 {dimension_numbers = #tpu.dot_dimension_numbers<[1], [0], [0], [1], [0, 0, 1, 1], [], []>} : vector<1x120xf32>, vector<120x84xf32>, vector<1x84xf32> -> vector<1x84xf32>
    %c0_52 = arith.constant 0 : index
    %c0_53 = arith.constant 0 : index
    %637 = vector.load %arg9[%c0_52, %c0_53] : memref<1x84xf32, #tpu.memory_space<vmem>>, vector<1x84xf32>
    %638 = arith.addf %636, %637 : vector<1x84xf32>
    %639 = arith.negf %638 : vector<1x84xf32>
    %640 = math.exp %639 : vector<1x84xf32>
    %cst_54 = arith.constant 1.000000e+00 : f32
    %641 = vector.broadcast %cst_54 : f32 to vector<1x84xf32>
    %642 = arith.addf %641, %640 : vector<1x84xf32>
    %643 = arith.divf %641, %642 : vector<1x84xf32>
    %c0_55 = arith.constant 0 : index
    %c0_56 = arith.constant 0 : index
    %644 = vector.load %arg10[%c0_55, %c0_56] : memref<84x10xf32, #tpu.memory_space<vmem>>, vector<84x10xf32>
    %cst_57 = arith.constant dense<0.000000e+00> : vector<1x10xf32>
    %645 = tpu.matmul %643, %644, %cst_57 {dimension_numbers = #tpu.dot_dimension_numbers<[1], [0], [0], [1], [0, 0, 1, 1], [], []>} : vector<1x84xf32>, vector<84x10xf32>, vector<1x10xf32> -> vector<1x10xf32>
    %c0_58 = arith.constant 0 : index
    %c0_59 = arith.constant 0 : index
    %646 = vector.load %arg11[%c0_58, %c0_59] : memref<1x10xf32, #tpu.memory_space<vmem>>, vector<1x10xf32>
    %647 = arith.addf %645, %646 : vector<1x10xf32>
    %c0_60 = arith.constant 0 : index
    %c0_61 = arith.constant 0 : index
    %c0_62 = arith.constant 0 : index
    %648 = vector.load %arg14[%c0_60, %c0_61, %c0_62] : memref<1x1x10xf32, #tpu.memory_space<vmem>>, vector<1x1x10xf32>
    %649 = vector.shape_cast %648 : vector<1x1x10xf32> to vector<1x10xf32>
    %650 = vector.shape_cast %647 : vector<1x10xf32> to vector<1x1x10xf32>
    tpu.vector_store %arg14[%c0_60, %c0_61, %c0_62], %650 {strides = array<i32>} : memref<1x1x10xf32, #tpu.memory_space<vmem>>, vector<1x1x10xf32>,
    return
  }
  func.func @transform_0(%arg0: i32) -> (i32, i32, i32, i32) {
    %c0_i32 = arith.constant 0 : i32
    %c0_i32_0 = arith.constant 0 : i32
    %c0_i32_1 = arith.constant 0 : i32
    %c0_i32_2 = arith.constant 0 : i32
    return %arg0, %c0_i32, %c0_i32_0, %c0_i32_1 : i32, i32, i32, i32
  }
  func.func @transform_1(%arg0: i32) -> (i32, i32) {
    %c0_i32 = arith.constant 0 : i32
    %c0_i32_0 = arith.constant 0 : i32
    %c0_i32_1 = arith.constant 0 : i32
    return %c0_i32, %c0_i32_0 : i32, i32
  }
  func.func @transform_2(%arg0: i32) -> (i32, i32, i32) {
    %c0_i32 = arith.constant 0 : i32
    %c0_i32_0 = arith.constant 0 : i32
    %c0_i32_1 = arith.constant 0 : i32
    %c0_i32_2 = arith.constant 0 : i32
    return %c0_i32, %c0_i32_0, %c0_i32_1 : i32, i32, i32
  }
  func.func @transform_3(%arg0: i32) -> (i32, i32) {
    %c0_i32 = arith.constant 0 : i32
    %c0_i32_0 = arith.constant 0 : i32
    %c0_i32_1 = arith.constant 0 : i32
    return %c0_i32, %c0_i32_0 : i32, i32
  }
  func.func @transform_4(%arg0: i32) -> (i32, i32, i32) {
    %c0_i32 = arith.constant 0 : i32
    %c0_i32_0 = arith.constant 0 : i32
    %c0_i32_1 = arith.constant 0 : i32
    %c0_i32_2 = arith.constant 0 : i32
    return %c0_i32, %c0_i32_0, %c0_i32_1 : i32, i32, i32
  }
  func.func @transform_5(%arg0: i32) -> (i32, i32) {
    %c0_i32 = arith.constant 0 : i32
    %c0_i32_0 = arith.constant 0 : i32
    %c0_i32_1 = arith.constant 0 : i32
    return %c0_i32, %c0_i32_0 : i32, i32
  }
  func.func @transform_6(%arg0: i32) -> (i32, i32) {
    %c0_i32 = arith.constant 0 : i32
    %c0_i32_0 = arith.constant 0 : i32
    %c0_i32_1 = arith.constant 0 : i32
    return %c0_i32, %c0_i32_0 : i32, i32
  }
  func.func @transform_7(%arg0: i32) -> (i32, i32) {
    %c0_i32 = arith.constant 0 : i32
    %c0_i32_0 = arith.constant 0 : i32
    %c0_i32_1 = arith.constant 0 : i32
    return %c0_i32, %c0_i32_0 : i32, i32
  }
  func.func @transform_8(%arg0: i32) -> (i32, i32) {
    %c0_i32 = arith.constant 0 : i32
    %c0_i32_0 = arith.constant 0 : i32
    %c0_i32_1 = arith.constant 0 : i32
    return %c0_i32, %c0_i32_0 : i32, i32
  }
  func.func @transform_9(%arg0: i32) -> (i32, i32) {
    %c0_i32 = arith.constant 0 : i32
    %c0_i32_0 = arith.constant 0 : i32
    %c0_i32_1 = arith.constant 0 : i32
    return %c0_i32, %c0_i32_0 : i32, i32
  }
  func.func @transform_10(%arg0: i32) -> (i32, i32) {
    %c0_i32 = arith.constant 0 : i32
    %c0_i32_0 = arith.constant 0 : i32
    %c0_i32_1 = arith.constant 0 : i32
    return %c0_i32, %c0_i32_0 : i32, i32
  }
  func.func @transform_11(%arg0: i32) -> (i32, i32) {
    %c0_i32 = arith.constant 0 : i32
    %c0_i32_0 = arith.constant 0 : i32
    %c0_i32_1 = arith.constant 0 : i32
    return %c0_i32, %c0_i32_0 : i32, i32
  }
  func.func @transform_12(%arg0: i32) -> (i32, i32) {
    %c0_i32 = arith.constant 0 : i32
    %c0_i32_0 = arith.constant 0 : i32
    %c0_i32_1 = arith.constant 0 : i32
    return %c0_i32, %c0_i32_0 : i32, i32
  }
  func.func @transform_13(%arg0: i32) -> (i32, i32, i32) {
    %c0_i32 = arith.constant 0 : i32
    %c0_i32_0 = arith.constant 0 : i32
    %c0_i32_1 = arith.constant 0 : i32
    return %arg0, %c0_i32, %c0_i32_0 : i32, i32, i32
  }
}

</mosaic_0001>

<llo_original>
// kernel: lenet_forward.1
$region0: #{lenet_forward.1}
  #allocation0 [shape = 'u32[]', space=smem, size = 0x4, offset = 0x4, fixed_abs, tag = 'smem constant byte address 0x4 - core index']
  #allocation1 [shape = 'u32[72,128]{1,0:T(1,128)}', space=vmem, size = 0x9000, scoped, tag = 'internal scratch']
  %s0 = inlined_call_operand.vmem [shape: f32[2,1,28,28], index: 0, kind: input, shape index: {}]
  %s1 = inlined_call_operand.vmem [shape: f32[6,25], index: 1, kind: input, shape index: {}]
  %s2 = inlined_call_operand.vmem [shape: f32[1,6,1], index: 2, kind: input, shape index: {}]
  %s3 = inlined_call_operand.vmem [shape: f32[16,150], index: 3, kind: input, shape index: {}]
  %s4 = inlined_call_operand.vmem [shape: f32[1,16,1], index: 4, kind: input, shape index: {}]
  %s5 = inlined_call_operand.vmem [shape: f32[400,120], index: 5, kind: input, shape index: {}]
  %s6 = inlined_call_operand.vmem [shape: f32[1,120], index: 6, kind: input, shape index: {}]
  %s7 = inlined_call_operand.vmem [shape: f32[120,84], index: 7, kind: input, shape index: {}]
  %s8 = inlined_call_operand.vmem [shape: f32[1,84], index: 8, kind: input, shape index: {}]
  %s9 = inlined_call_operand.vmem [shape: f32[84,10], index: 9, kind: input, shape index: {}]
  %s10 = inlined_call_operand.vmem [shape: f32[1,10], index: 10, kind: input, shape index: {}]
  %s11 = inlined_call_operand.vmem [shape: f32[28,14], index: 11, kind: input, shape index: {}]
  %s12 = inlined_call_operand.vmem [shape: f32[10,5], index: 12, kind: input, shape index: {}]
  %s13 = inlined_call_operand.hbm [shape: f32[2,1,10], index: 13, kind: output, shape index: {}]
  %s14 = sld [smem:[#allocation0]]
  $region85: #{lenet_forward.1} parent=0
    _
  %s16 = ssub.s32 1, %s14
  %s17 = scalar_select 0, %s16, %s14
  $region1: #{lenet_forward.1} parent=0
    #allocation2 [shape = 'u8[1024]{0}', space=vmem, size = 0x400, scoped, tag = 'output window, operand 0']
    #allocation3 [shape = 's32[2]{0}', space=sflag, size = 0x8, scoped, tag = 'scoped memory for lenet_forward.1']
    %18 = vsyncpa [#allocation3], 0
    %s19 = scalar_lea.sflag [#allocation3], 1
    %20 = vsyncpa %s19, 0
    loop: start=0, step=1, limit=4
    $region2: #{lenet_forward.1} parent=1 // loop_pre_header
      _
    $region3: #{lenet_forward.1} parent=1 // loop_header
      %s22 = sphi 0, %s26
      %p23 = scmp.ge.s32.totalorder %s22, 4
      %s32 = sphi 0, %s34
      %s35 = sphi 0, %s32
      %s36 = sphi 0, %s35
      %s52 = sphi 0, %s36
      %s56 = sphi 0, %s56
      %s58 = sphi 0, %s56
      %s59 = sphi 0, %s58
      %s73 = sphi 0, %s59
      %s77 = sphi 0, %s77
      %s79 = sphi 0, %s77
      %s80 = sphi 0, %s79
      %s94 = sphi 0, %s80
      %s98 = sphi 0, %s98
      %s100 = sphi 0, %s98
      %s101 = sphi 0, %s100
      %s115 = sphi 0, %s101
      %s119 = sphi 0, %s119
      %s121 = sphi 0, %s119
      %s122 = sphi 0, %s121
      %s136 = sphi 0, %s122
      %s140 = sphi 0, %s140
      %s142 = sphi 0, %s140
      %s143 = sphi 0, %s142
      %s157 = sphi 0, %s143
      %s161 = sphi 0, %s161
      %s163 = sphi 0, %s161
      %s164 = sphi 0, %s163
      %s178 = sphi 0, %s164
      %s182 = sphi 0, %s182
      %s184 = sphi 0, %s182
      %s185 = sphi 0, %s184
      %s199 = sphi 0, %s185
      %s203 = sphi 0, %s203
      %s205 = sphi 0, %s203
      %s206 = sphi 0, %s205
      %s220 = sphi 0, %s206
      %s224 = sphi 0, %s224
      %s226 = sphi 0, %s224
      %s227 = sphi 0, %s226
      %s241 = sphi 0, %s227
      %s245 = sphi 0, %s245
      %s247 = sphi 0, %s245
      %s248 = sphi 0, %s247
      %s262 = sphi 0, %s248
      %s266 = sphi 0, %s266
      %s268 = sphi 0, %s266
      %s269 = sphi 0, %s268
      %s283 = sphi 0, %s269
      %s287 = sphi 0, %s287
      %s289 = sphi 0, %s287
      %s290 = sphi 0, %s289
      %s304 = sphi 0, %s290
      %s310 = sphi 0, %s312
      %s313 = sphi 0, %s310
      %s314 = sphi 0, %s313
      %s330 = sphi 0, %s314
    $region4: #{lenet_forward.1} parent=1 // loop_header_branch
      %25 = sbr.rel (%p23) target = $region8
    $region5: #{lenet_forward.1} parent=1 // loop_body
      %s27 = ssub.s32 %s22, 1
      %s28 = ssub.s32 %s22, 2
      %s29 = sadd.s32 %s22, 1
      %s30 = ssub.s32 %s22, %s29
      %p31 = scmp.eq.s32.totalorder %s30, 0
      %s33 = sadd.s32 %s32, 1
      %s34 = scalar_select %p31, %s32, %s33
      %p37 = pneg %p31
      %p38 = scmp.eq.s32.totalorder %s22, 1
      %p39 = por %p37, %p38
      %p40 = scmp.ne.s32.totalorder %s32, %s35
      %p41 = scmp.eq.s32.totalorder %s22, 0
      %p42 = por %p40, %p41
      %p43 = scmp.ne.s32.totalorder %s32, %s35
      %p44 = scmp.eq.s32.totalorder %s27, 1
      %p45 = por %p43, %p44
      %p46 = scmp.ne.s32.totalorder %s35, %s36
      %p47 = scmp.eq.s32.totalorder %s27, 0
      %p48 = por %p46, %p47
      %p49 = scmp.ne.s32.totalorder %s35, %s36
      %p50 = scmp.eq.s32.totalorder %s28, 1
      %p51 = por %p49, %p50
      %p53 = scmp.ne.s32.totalorder %s36, %s52
      %p54 = scmp.eq.s32.totalorder %s28, 0
      %p55 = por %p53, %p54
      %s57 = sadd.s32 %s56, 1
      %p60 = scmp.eq.s32.totalorder %s22, 1
      %p61 = scmp.ne.s32.totalorder %s56, %s58
      %p62 = scmp.eq.s32.totalorder %s22, 0
      %p63 = por %p61, %p62
      %p64 = scmp.ne.s32.totalorder %s56, %s58
      %p65 = scmp.eq.s32.totalorder %s27, 1
      %p66 = por %p64, %p65
      %p67 = scmp.ne.s32.totalorder %s58, %s59
      %p68 = scmp.eq.s32.totalorder %s27, 0
      %p69 = por %p67, %p68
      %p70 = scmp.ne.s32.totalorder %s58, %s59
      %p71 = scmp.eq.s32.totalorder %s28, 1
      %p72 = por %p70, %p71
      %p74 = scmp.ne.s32.totalorder %s59, %s73
      %p75 = scmp.eq.s32.totalorder %s28, 0
      %p76 = por %p74, %p75
      %s78 = sadd.s32 %s77, 1
      %p81 = scmp.eq.s32.totalorder %s22, 1
      %p82 = scmp.ne.s32.totalorder %s77, %s79
      %p83 = scmp.eq.s32.totalorder %s22, 0
      %p84 = por %p82, %p83
      %p85 = scmp.ne.s32.totalorder %s77, %s79
      %p86 = scmp.eq.s32.totalorder %s27, 1
      %p87 = por %p85, %p86
      %p88 = scmp.ne.s32.totalorder %s79, %s80
      %p89 = scmp.eq.s32.totalorder %s27, 0
      %p90 = por %p88, %p89
      %p91 = scmp.ne.s32.totalorder %s79, %s80
      %p92 = scmp.eq.s32.totalorder %s28, 1
      %p93 = por %p91, %p92
      %p95 = scmp.ne.s32.totalorder %s80, %s94
      %p96 = scmp.eq.s32.totalorder %s28, 0
      %p97 = por %p95, %p96
      %s99 = sadd.s32 %s98, 1
      %p102 = scmp.eq.s32.totalorder %s22, 1
      %p103 = scmp.ne.s32.totalorder %s98, %s100
      %p104 = scmp.eq.s32.totalorder %s22, 0
      %p105 = por %p103, %p104
      %p106 = scmp.ne.s32.totalorder %s98, %s100
      %p107 = scmp.eq.s32.totalorder %s27, 1
      %p108 = por %p106, %p107
      %p109 = scmp.ne.s32.totalorder %s100, %s101
      %p110 = scmp.eq.s32.totalorder %s27, 0
      %p111 = por %p109, %p110
      %p112 = scmp.ne.s32.totalorder %s100, %s101
      %p113 = scmp.eq.s32.totalorder %s28, 1
      %p114 = por %p112, %p113
      %p116 = scmp.ne.s32.totalorder %s101, %s115
      %p117 = scmp.eq.s32.totalorder %s28, 0
      %p118 = por %p116, %p117
      %s120 = sadd.s32 %s119, 1
      %p123 = scmp.eq.s32.totalorder %s22, 1
      %p124 = scmp.ne.s32.totalorder %s119, %s121
      %p125 = scmp.eq.s32.totalorder %s22, 0
      %p126 = por %p124, %p125
      %p127 = scmp.ne.s32.totalorder %s119, %s121
      %p128 = scmp.eq.s32.totalorder %s27, 1
      %p129 = por %p127, %p128
      %p130 = scmp.ne.s32.totalorder %s121, %s122
      %p131 = scmp.eq.s32.totalorder %s27, 0
      %p132 = por %p130, %p131
      %p133 = scmp.ne.s32.totalorder %s121, %s122
      %p134 = scmp.eq.s32.totalorder %s28, 1
      %p135 = por %p133, %p134
      %p137 = scmp.ne.s32.totalorder %s122, %s136
      %p138 = scmp.eq.s32.totalorder %s28, 0
      %p139 = por %p137, %p138
      %s141 = sadd.s32 %s140, 1
      %p144 = scmp.eq.s32.totalorder %s22, 1
      %p145 = scmp.ne.s32.totalorder %s140, %s142
      %p146 = scmp.eq.s32.totalorder %s22, 0
      %p147 = por %p145, %p146
      %p148 = scmp.ne.s32.totalorder %s140, %s142
      %p149 = scmp.eq.s32.totalorder %s27, 1
      %p150 = por %p148, %p149
      %p151 = scmp.ne.s32.totalorder %s142, %s143
      %p152 = scmp.eq.s32.totalorder %s27, 0
      %p153 = por %p151, %p152
      %p154 = scmp.ne.s32.totalorder %s142, %s143
      %p155 = scmp.eq.s32.totalorder %s28, 1
      %p156 = por %p154, %p155
      %p158 = scmp.ne.s32.totalorder %s143, %s157
      %p159 = scmp.eq.s32.totalorder %s28, 0
      %p160 = por %p158, %p159
      %s162 = sadd.s32 %s161, 1
      %p165 = scmp.eq.s32.totalorder %s22, 1
      %p166 = scmp.ne.s32.totalorder %s161, %s163
      %p167 = scmp.eq.s32.totalorder %s22, 0
      %p168 = por %p166, %p167
      %p169 = scmp.ne.s32.totalorder %s161, %s163
      %p170 = scmp.eq.s32.totalorder %s27, 1
      %p171 = por %p169, %p170
      %p172 = scmp.ne.s32.totalorder %s163, %s164
      %p173 = scmp.eq.s32.totalorder %s27, 0
      %p174 = por %p172, %p173
      %p175 = scmp.ne.s32.totalorder %s163, %s164
      %p176 = scmp.eq.s32.totalorder %s28, 1
      %p177 = por %p175, %p176
      %p179 = scmp.ne.s32.totalorder %s164, %s178
      %p180 = scmp.eq.s32.totalorder %s28, 0
      %p181 = por %p179, %p180
      %s183 = sadd.s32 %s182, 1
      %p186 = scmp.eq.s32.totalorder %s22, 1
      %p187 = scmp.ne.s32.totalorder %s182, %s184
      %p188 = scmp.eq.s32.totalorder %s22, 0
      %p189 = por %p187, %p188
      %p190 = scmp.ne.s32.totalorder %s182, %s184
      %p191 = scmp.eq.s32.totalorder %s27, 1
      %p192 = por %p190, %p191
      %p193 = scmp.ne.s32.totalorder %s184, %s185
      %p194 = scmp.eq.s32.totalorder %s27, 0
      %p195 = por %p193, %p194
      %p196 = scmp.ne.s32.totalorder %s184, %s185
      %p197 = scmp.eq.s32.totalorder %s28, 1
      %p198 = por %p196, %p197
      %p200 = scmp.ne.s32.totalorder %s185, %s199
      %p201 = scmp.eq.s32.totalorder %s28, 0
      %p202 = por %p200, %p201
      %s204 = sadd.s32 %s203, 1
      %p207 = scmp.eq.s32.totalorder %s22, 1
      %p208 = scmp.ne.s32.totalorder %s203, %s205
      %p209 = scmp.eq.s32.totalorder %s22, 0
      %p210 = por %p208, %p209
      %p211 = scmp.ne.s32.totalorder %s203, %s205
      %p212 = scmp.eq.s32.totalorder %s27, 1
      %p213 = por %p211, %p212
      %p214 = scmp.ne.s32.totalorder %s205, %s206
      %p215 = scmp.eq.s32.totalorder %s27, 0
      %p216 = por %p214, %p215
      %p217 = scmp.ne.s32.totalorder %s205, %s206
      %p218 = scmp.eq.s32.totalorder %s28, 1
      %p219 = por %p217, %p218
      %p221 = scmp.ne.s32.totalorder %s206, %s220
      %p222 = scmp.eq.s32.totalorder %s28, 0
      %p223 = por %p221, %p222
      %s225 = sadd.s32 %s224, 1
      %p228 = scmp.eq.s32.totalorder %s22, 1
      %p229 = scmp.ne.s32.totalorder %s224, %s226
      %p230 = scmp.eq.s32.totalorder %s22, 0
      %p231 = por %p229, %p230
      %p232 = scmp.ne.s32.totalorder %s224, %s226
      %p233 = scmp.eq.s32.totalorder %s27, 1
      %p234 = por %p232, %p233
      %p235 = scmp.ne.s32.totalorder %s226, %s227
      %p236 = scmp.eq.s32.totalorder %s27, 0
      %p237 = por %p235, %p236
      %p238 = scmp.ne.s32.totalorder %s226, %s227
      %p239 = scmp.eq.s32.totalorder %s28, 1
      %p240 = por %p238, %p239
      %p242 = scmp.ne.s32.totalorder %s227, %s241
      %p243 = scmp.eq.s32.totalorder %s28, 0
      %p244 = por %p242, %p243
      %s246 = sadd.s32 %s245, 1
      %p249 = scmp.eq.s32.totalorder %s22, 1
      %p250 = scmp.ne.s32.totalorder %s245, %s247
      %p251 = scmp.eq.s32.totalorder %s22, 0
      %p252 = por %p250, %p251
      %p253 = scmp.ne.s32.totalorder %s245, %s247
      %p254 = scmp.eq.s32.totalorder %s27, 1
      %p255 = por %p253, %p254
      %p256 = scmp.ne.s32.totalorder %s247, %s248
      %p257 = scmp.eq.s32.totalorder %s27, 0
      %p258 = por %p256, %p257
      %p259 = scmp.ne.s32.totalorder %s247, %s248
      %p260 = scmp.eq.s32.totalorder %s28, 1
      %p261 = por %p259, %p260
      %p263 = scmp.ne.s32.totalorder %s248, %s262
      %p264 = scmp.eq.s32.totalorder %s28, 0
      %p265 = por %p263, %p264
      %s267 = sadd.s32 %s266, 1
      %p270 = scmp.eq.s32.totalorder %s22, 1
      %p271 = scmp.ne.s32.totalorder %s266, %s268
      %p272 = scmp.eq.s32.totalorder %s22, 0
      %p273 = por %p271, %p272
      %p274 = scmp.ne.s32.totalorder %s266, %s268
      %p275 = scmp.eq.s32.totalorder %s27, 1
      %p276 = por %p274, %p275
      %p277 = scmp.ne.s32.totalorder %s268, %s269
      %p278 = scmp.eq.s32.totalorder %s27, 0
      %p279 = por %p277, %p278
      %p280 = scmp.ne.s32.totalorder %s268, %s269
      %p281 = scmp.eq.s32.totalorder %s28, 1
      %p282 = por %p280, %p281
      %p284 = scmp.ne.s32.totalorder %s269, %s283
      %p285 = scmp.eq.s32.totalorder %s28, 0
      %p286 = por %p284, %p285
      %s288 = sadd.s32 %s287, 1
      %p291 = scmp.eq.s32.totalorder %s22, 1
      %p292 = scmp.ne.s32.totalorder %s287, %s289
      %p293 = scmp.eq.s32.totalorder %s22, 0
      %p294 = por %p292, %p293
      %p295 = scmp.ne.s32.totalorder %s287, %s289
      %p296 = scmp.eq.s32.totalorder %s27, 1
      %p297 = por %p295, %p296
      %p298 = scmp.ne.s32.totalorder %s289, %s290
      %p299 = scmp.eq.s32.totalorder %s27, 0
      %p300 = por %p298, %p299
      %p301 = scmp.ne.s32.totalorder %s289, %s290
      %p302 = scmp.eq.s32.totalorder %s28, 1
      %p303 = por %p301, %p302
      %p305 = scmp.ne.s32.totalorder %s290, %s304
      %p306 = scmp.eq.s32.totalorder %s28, 0
      %p307 = por %p305, %p306
      %s308 = ssub.s32 %s22, %s29
      %p309 = scmp.eq.s32.totalorder %s308, 0
      %s311 = sadd.s32 %s310, 1
      %s312 = scalar_select %p309, %s310, %s311
      %p315 = pneg %p309
      %p316 = scmp.eq.s32.totalorder %s22, 1
      %p317 = por %p315, %p316
      %p318 = scmp.ne.s32.totalorder %s310, %s313
      %p319 = scmp.eq.s32.totalorder %s22, 0
      %p320 = por %p318, %p319
      %p321 = scmp.ne.s32.totalorder %s310, %s313
      %p322 = scmp.eq.s32.totalorder %s27, 1
      %p323 = por %p321, %p322
      %p324 = scmp.ne.s32.totalorder %s313, %s314
      %p325 = scmp.eq.s32.totalorder %s27, 0
      %p326 = por %p324, %p325
      %p327 = scmp.ne.s32.totalorder %s313, %s314
      %p328 = scmp.eq.s32.totalorder %s28, 1
      %p329 = por %p327, %p328
      %p331 = scmp.ne.s32.totalorder %s314, %s330
      %p332 = scmp.eq.s32.totalorder %s28, 0
      %p333 = por %p331, %p332
      %p334 = scmp.le.s32.totalorder 1, %s22
      %p335 = scmp.lt.s32.totalorder %s22, 3
      %p336 = pnand %p334, %p335
      %p337 = pneg %p336
      // Predicated region
      $region9: #{lenet_forward.1} parent=5 // pred_check
        _
      $region10: #{lenet_forward.1} parent=5 // pred_check_branch
        %339 = sbr.rel (%p336) target = $region12
      $region11: #{lenet_forward.1} parent=5 // pred_region
        %s340 = ssub.s32 %s22, 1
        // Predicated region
        $region13: #{lenet_forward.1} parent=11 // pred_check
          %p341 = pneg %p69
        $region14: #{lenet_forward.1} parent=11 // pred_check_branch
          %343 = sbr.rel (%p341) target = $region16
        $region15: #{lenet_forward.1} parent=11 // pred_region
          _
        $region16: #{lenet_forward.1} parent=11 // pred_fallthru
          _
        // Predicated region
        $region17: #{lenet_forward.1} parent=11 // pred_check
          %p344 = pneg %p90
        $region18: #{lenet_forward.1} parent=11 // pred_check_branch
          %346 = sbr.rel (%p344) target = $region20
        $region19: #{lenet_forward.1} parent=11 // pred_region
          _
        $region20: #{lenet_forward.1} parent=11 // pred_fallthru
          _
        // Predicated region
        $region21: #{lenet_forward.1} parent=11 // pred_check
          %p347 = pneg %p111
        $region22: #{lenet_forward.1} parent=11 // pred_check_branch
          %349 = sbr.rel (%p347) target = $region24
        $region23: #{lenet_forward.1} parent=11 // pred_region
          _
        $region24: #{lenet_forward.1} parent=11 // pred_fallthru
          _
        // Predicated region
        $region25: #{lenet_forward.1} parent=11 // pred_check
          %p350 = pneg %p132
        $region26: #{lenet_forward.1} parent=11 // pred_check_branch
          %352 = sbr.rel (%p350) target = $region28
        $region27: #{lenet_forward.1} parent=11 // pred_region
          _
        $region28: #{lenet_forward.1} parent=11 // pred_fallthru
          _
        // Predicated region
        $region29: #{lenet_forward.1} parent=11 // pred_check
          %p353 = pneg %p153
        $region30: #{lenet_forward.1} parent=11 // pred_check_branch
          %355 = sbr.rel (%p353) target = $region32
        $region31: #{lenet_forward.1} parent=11 // pred_region
          _
        $region32: #{lenet_forward.1} parent=11 // pred_fallthru
          _
        // Predicated region
        $region33: #{lenet_forward.1} parent=11 // pred_check
          %p356 = pneg %p174
        $region34: #{lenet_forward.1} parent=11 // pred_check_branch
          %358 = sbr.rel (%p356) target = $region36
        $region35: #{lenet_forward.1} parent=11 // pred_region
          _
        $region36: #{lenet_forward.1} parent=11 // pred_fallthru
          _
        // Predicated region
        $region37: #{lenet_forward.1} parent=11 // pred_check
          %p359 = pneg %p195
        $region38: #{lenet_forward.1} parent=11 // pred_check_branch
          %361 = sbr.rel (%p359) target = $region40
        $region39: #{lenet_forward.1} parent=11 // pred_region
          _
        $region40: #{lenet_forward.1} parent=11 // pred_fallthru
          _
        // Predicated region
        $region41: #{lenet_forward.1} parent=11 // pred_check
          %p362 = pneg %p216
        $region42: #{lenet_forward.1} parent=11 // pred_check_branch
          %364 = sbr.rel (%p362) target = $region44
        $region43: #{lenet_forward.1} parent=11 // pred_region
          _
        $region44: #{lenet_forward.1} parent=11 // pred_fallthru
          _
        // Predicated region
        $region45: #{lenet_forward.1} parent=11 // pred_check
          %p365 = pneg %p237
        $region46: #{lenet_forward.1} parent=11 // pred_check_branch
          %367 = sbr.rel (%p365) target = $region48
        $region47: #{lenet_forward.1} parent=11 // pred_region
          _
        $region48: #{lenet_forward.1} parent=11 // pred_fallthru
          _
        // Predicated region
        $region49: #{lenet_forward.1} parent=11 // pred_check
          %p368 = pneg %p258
        $region50: #{lenet_forward.1} parent=11 // pred_check_branch
          %370 = sbr.rel (%p368) target = $region52
        $region51: #{lenet_forward.1} parent=11 // pred_region
          _
        $region52: #{lenet_forward.1} parent=11 // pred_fallthru
          _
        // Predicated region
        $region53: #{lenet_forward.1} parent=11 // pred_check
          %p371 = pneg %p279
        $region54: #{lenet_forward.1} parent=11 // pred_check_branch
          %373 = sbr.rel (%p371) target = $region56
        $region55: #{lenet_forward.1} parent=11 // pred_region
          _
        $region56: #{lenet_forward.1} parent=11 // pred_fallthru
          _
        // Predicated region
        $region57: #{lenet_forward.1} parent=11 // pred_check
          %p374 = pneg %p300
        $region58: #{lenet_forward.1} parent=11 // pred_check_branch
          %376 = sbr.rel (%p374) target = $region60
        $region59: #{lenet_forward.1} parent=11 // pred_region
          _
        $region60: #{lenet_forward.1} parent=11 // pred_fallthru
          _
      $region12: #{lenet_forward.1} parent=5 // pred_fallthru
        _
      %p377 = scmp.lt.s32.totalorder %s22, 2
      // Predicated region
      $region61: #{lenet_forward.1} parent=5 // pred_check
        %p378 = pneg %p377
      $region62: #{lenet_forward.1} parent=5 // pred_check_branch
        %380 = sbr.rel (%p378) target = $region64
      $region63: #{lenet_forward.1} parent=5 // pred_region
        // Predicated region
        $region65: #{lenet_forward.1} parent=63 // pred_check
          %p381 = pneg %p42
        $region66: #{lenet_forward.1} parent=63 // pred_check_branch
          %383 = sbr.rel (%p381) target = $region68
        $region67: #{lenet_forward.1} parent=63 // pred_region
          %p384 = scmp.lt.s32.totalorder %s22, 1
          %s385 = scalar_select %p384, %s22, 1
          %s386 = smul.addr %s385, 4
          %s387 = smul.addr %s386, 8
          %s388 = scalar_lea.vmem %s0, %s387
        $region68: #{lenet_forward.1} parent=63 // pred_fallthru
          _
      $region64: #{lenet_forward.1} parent=5 // pred_fallthru
        _
      %p389 = scmp.le.s32.totalorder 1, %s22
      %p390 = scmp.lt.s32.totalorder %s22, 3
      %p391 = pnand %p389, %p390
      %p392 = pneg %p391
      // Predicated region
      $region69: #{lenet_forward.1} parent=5 // pred_check
        _
      $region70: #{lenet_forward.1} parent=5 // pred_check_branch
        %394 = sbr.rel (%p391) target = $region72
      $region71: #{lenet_forward.1} parent=5 // pred_region
        %s395 = ssub.s32 %s22, 1
        %p396 = scmp.lt.s32.totalorder %s27, 1
        %s397 = scalar_select %p396, %s27, 1
        %s398 = smul.addr %s397, 4
        %s399 = smul.addr %s398, 8
        %s400 = scalar_lea.vmem %s0, %s399
        %p401 = pneg %p48
        %p402 = pneg %p45
        %p403 = pneg %p69
        %p404 = pneg %p66
        %p405 = pneg %p90
        %p406 = pneg %p87
        %p407 = pneg %p111
        %p408 = pneg %p108
        %p409 = pneg %p132
        %p410 = pneg %p129
        %p411 = pneg %p153
        %p412 = pneg %p150
        %p413 = pneg %p174
        %p414 = pneg %p171
        %p415 = pneg %p195
        %p416 = pneg %p192
        %p417 = pneg %p216
        %p418 = pneg %p213
        %p419 = pneg %p237
        %p420 = pneg %p234
        %p421 = pneg %p258
        %p422 = pneg %p255
        %p423 = pneg %p279
        %p424 = pneg %p276
        %p425 = pneg %p300
        %p426 = pneg %p297
        %p427 = pneg %p326
        %p428 = pneg %p323
        %s429 = sand.u32 %s313, 1
        %s430 = scalar_lea.sflag [#allocation3], %s429
        %s431 = sand.u32 %s313, 1
        %s432 = scalar_lea.vmem [#allocation2], %s431
        %p433 = scmp.lt.s32.totalorder %s27, 1
        %s434 = scalar_select %p433, %s27, 1
        %s435 = smul.addr %s434, 4
        %s436 = smul.addr %s435, 8
        %s437 = scalar_lea.vmem %s0, %s436
        %v438 = vld [vmem:[%s437] sm:$0xff]
        %v439 = vld [vmem:[%s437 + $0x8] sm:$0xff]
        %v440 = vld [vmem:[%s437 + $0x10] sm:$0xff]
        %v441 = vld [vmem:[%s437 + $0x18] sm:$0xf]
        %446 = vrot.lane.b32.xlu0 %v438, 2
        %v447 = vpop.permute.xlu0 %446
        %448 = vrot.lane.b32.xlu0 %v439, 2
        %v449 = vpop.permute.xlu0 %448
        %450 = vrot.lane.b32.xlu0 %v440, 2
        %v451 = vpop.permute.xlu0 %450
        %452 = vrot.lane.b32.xlu0 %v441, 2
        %v453 = vpop.permute.xlu0 %452
        %vm458 = vcmask 15360
        %v459 = vsel %vm458, 0.0, %v447
        %v460 = vsel %vm458, 0.0, %v449
        %v461 = vsel %vm458, 0.0, %v451
        %v462 = vsel %vm458, 0.0, %v453
        %vm463 = vcmask 244736
        %v464 = vsel %vm463, %v459, 0.0
        %v465 = vsel %vm463, %v460, 0.0
        %v466 = vsel %vm463, %v461, 0.0
        %v467 = vsel %vm463, %v462, 0.0
        %vm472 = vcmask 1041408
        %v473 = vrot.slane %v464, 6
        %v474 = vrot.slane %v465, 6
        %v475 = vsel %vm472, %v473, %v474
        %v476 = vrot.slane %v466, 6
        %v477 = vsel %vm472, %v474, %v476
        %v478 = vrot.slane %v467, 6
        %v479 = vsel %vm472, %v476, %v478
        %v484 = vsel %vm472, 0.0, %v473
        %vm485 = vcmask 1045504
        %v486 = vsel %vm485, %v479, 0.0
        %v488 = vrot.slane %v484, 1
        %v490 = vrot.slane %v484, 2
        %v492 = vrot.slane %v484, 3
        %v494 = vrot.slane %v484, 4
        %v496 = vrot.slane %v484, 5
        %v498 = vrot.slane %v484, 6
        %v500 = vrot.slane %v484, 7
        %v502 = vrot.slane %v475, 1
        %v504 = vrot.slane %v475, 2
        %v506 = vrot.slane %v475, 3
        %v508 = vrot.slane %v475, 4
        %v510 = vrot.slane %v475, 5
        %v512 = vrot.slane %v475, 6
        %v514 = vrot.slane %v475, 7
        %v516 = vrot.slane %v477, 1
        %v518 = vrot.slane %v477, 2
        %v520 = vrot.slane %v477, 3
        %v522 = vrot.slane %v477, 4
        %v524 = vrot.slane %v477, 5
        %v526 = vrot.slane %v477, 6
        %v528 = vrot.slane %v477, 7
        %v531 = vrot.slane %v486, 1
        %v533 = vrot.slane %v486, 2
        %v535 = vrot.slane %v486, 3
        %v537 = vrot.slane %v486, 4
        %v539 = vrot.slane %v486, 5
        %v541 = vrot.slane %v486, 6
        %v543 = vrot.slane %v486, 7
        %v544 = vrot.slane %v488, 7
        %v545 = vrot.slane %v490, 7
        %v546 = vrot.slane %v492, 7
        %v547 = vrot.slane %v494, 7
        %v548 = vrot.slane %v496, 7
        %v549 = vrot.slane %v498, 7
        %v550 = vrot.slane %v500, 7
        %v551 = vrot.slane %v502, 7
        %v552 = vrot.slane %v504, 7
        %v553 = vrot.slane %v506, 7
        %v554 = vrot.slane %v508, 7
        %v555 = vrot.slane %v510, 7
        %v556 = vrot.slane %v512, 7
        %v557 = vrot.slane %v514, 7
        %v558 = vrot.slane %v516, 7
        %v559 = vrot.slane %v518, 7
        %v560 = vrot.slane %v520, 7
        %v561 = vrot.slane %v522, 7
        %v562 = vrot.slane %v524, 7
        %v563 = vrot.slane %v526, 7
        %v564 = vrot.slane %v528, 7
        %v565 = vrot.slane %v531, 7
        %v566 = vrot.slane %v533, 7
        %v567 = vrot.slane %v535, 7
        %568 = vrot.lane.b32.xlu0 %v500, 127
        %v569 = vpop.permute.xlu0 %568
        %570 = vrot.lane.b32.xlu0 %v544, 127
        %v571 = vpop.permute.xlu0 %570
        %572 = vrot.lane.b32.xlu0 %v545, 127
        %v573 = vpop.permute.xlu0 %572
        %574 = vrot.lane.b32.xlu0 %v546, 127
        %v575 = vpop.permute.xlu0 %574
        %576 = vrot.lane.b32.xlu0 %v547, 127
        %v577 = vpop.permute.xlu0 %576
        %578 = vrot.lane.b32.xlu0 %v548, 127
        %v579 = vpop.permute.xlu0 %578
        %580 = vrot.lane.b32.xlu0 %v549, 127
        %v581 = vpop.permute.xlu0 %580
        %582 = vrot.lane.b32.xlu0 %v550, 127
        %v583 = vpop.permute.xlu0 %582
        %584 = vrot.lane.b32.xlu0 %v514, 127
        %v585 = vpop.permute.xlu0 %584
        %586 = vrot.lane.b32.xlu0 %v551, 127
        %v587 = vpop.permute.xlu0 %586
        %588 = vrot.lane.b32.xlu0 %v552, 127
        %v589 = vpop.permute.xlu0 %588
        %590 = vrot.lane.b32.xlu0 %v553, 127
        %v591 = vpop.permute.xlu0 %590
        %592 = vrot.lane.b32.xlu0 %v554, 127
        %v593 = vpop.permute.xlu0 %592
        %594 = vrot.lane.b32.xlu0 %v555, 127
        %v595 = vpop.permute.xlu0 %594
        %596 = vrot.lane.b32.xlu0 %v556, 127
        %v597 = vpop.permute.xlu0 %596
        %598 = vrot.lane.b32.xlu0 %v557, 127
        %v599 = vpop.permute.xlu0 %598
        %600 = vrot.lane.b32.xlu0 %v528, 127
        %v601 = vpop.permute.xlu0 %600
        %602 = vrot.lane.b32.xlu0 %v558, 127
        %v603 = vpop.permute.xlu0 %602
        %604 = vrot.lane.b32.xlu0 %v559, 127
        %v605 = vpop.permute.xlu0 %604
        %606 = vrot.lane.b32.xlu0 %v560, 127
        %v607 = vpop.permute.xlu0 %606
        %608 = vrot.lane.b32.xlu0 %v561, 127
        %v609 = vpop.permute.xlu0 %608
        %610 = vrot.lane.b32.xlu0 %v562, 127
        %v611 = vpop.permute.xlu0 %610
        %612 = vrot.lane.b32.xlu0 %v563, 127
        %v613 = vpop.permute.xlu0 %612
        %614 = vrot.lane.b32.xlu0 %v564, 127
        %v615 = vpop.permute.xlu0 %614
        %616 = vrot.lane.b32.xlu0 %v543, 127
        %v617 = vpop.permute.xlu0 %616
        %618 = vrot.lane.b32.xlu0 %v565, 127
        %v619 = vpop.permute.xlu0 %618
        %620 = vrot.lane.b32.xlu0 %v566, 127
        %v621 = vpop.permute.xlu0 %620
        %622 = vrot.lane.b32.xlu0 %v567, 127
        %v623 = vpop.permute.xlu0 %622
        %v652 = vrot.slane %v488, 6
        %v653 = vrot.slane %v490, 6
        %v654 = vrot.slane %v492, 6
        %v655 = vrot.slane %v494, 6
        %v656 = vrot.slane %v496, 6
        %v657 = vrot.slane %v498, 6
        %v658 = vrot.slane %v500, 6
        %v659 = vrot.slane %v502, 6
        %v660 = vrot.slane %v504, 6
        %v661 = vrot.slane %v506, 6
        %v662 = vrot.slane %v508, 6
        %v663 = vrot.slane %v510, 6
        %v664 = vrot.slane %v512, 6
        %v665 = vrot.slane %v514, 6
        %v666 = vrot.slane %v516, 6
        %v667 = vrot.slane %v518, 6
        %v668 = vrot.slane %v520, 6
        %v669 = vrot.slane %v522, 6
        %v670 = vrot.slane %v524, 6
        %v671 = vrot.slane %v526, 6
        %v672 = vrot.slane %v528, 6
        %v673 = vrot.slane %v531, 6
        %v674 = vrot.slane %v533, 6
        %v675 = vrot.slane %v535, 6
        %676 = vrot.lane.b32.xlu0 %v498, 126
        %v677 = vpop.permute.xlu0 %676
        %678 = vrot.lane.b32.xlu0 %v652, 126
        %v679 = vpop.permute.xlu0 %678
        %680 = vrot.lane.b32.xlu0 %v653, 126
        %v681 = vpop.permute.xlu0 %680
        %682 = vrot.lane.b32.xlu0 %v654, 126
        %v683 = vpop.permute.xlu0 %682
        %684 = vrot.lane.b32.xlu0 %v655, 126
        %v685 = vpop.permute.xlu0 %684
        %686 = vrot.lane.b32.xlu0 %v656, 126
        %v687 = vpop.permute.xlu0 %686
        %688 = vrot.lane.b32.xlu0 %v657, 126
        %v689 = vpop.permute.xlu0 %688
        %690 = vrot.lane.b32.xlu0 %v658, 126
        %v691 = vpop.permute.xlu0 %690
        %692 = vrot.lane.b32.xlu0 %v512, 126
        %v693 = vpop.permute.xlu0 %692
        %694 = vrot.lane.b32.xlu0 %v659, 126
        %v695 = vpop.permute.xlu0 %694
        %696 = vrot.lane.b32.xlu0 %v660, 126
        %v697 = vpop.permute.xlu0 %696
        %698 = vrot.lane.b32.xlu0 %v661, 126
        %v699 = vpop.permute.xlu0 %698
        %700 = vrot.lane.b32.xlu0 %v662, 126
        %v701 = vpop.permute.xlu0 %700
        %702 = vrot.lane.b32.xlu0 %v663, 126
        %v703 = vpop.permute.xlu0 %702
        %704 = vrot.lane.b32.xlu0 %v664, 126
        %v705 = vpop.permute.xlu0 %704
        %706 = vrot.lane.b32.xlu0 %v665, 126
        %v707 = vpop.permute.xlu0 %706
        %708 = vrot.lane.b32.xlu0 %v526, 126
        %v709 = vpop.permute.xlu0 %708
        %710 = vrot.lane.b32.xlu0 %v666, 126
        %v711 = vpop.permute.xlu0 %710
        %712 = vrot.lane.b32.xlu0 %v667, 126
        %v713 = vpop.permute.xlu0 %712
        %714 = vrot.lane.b32.xlu0 %v668, 126
        %v715 = vpop.permute.xlu0 %714
        %716 = vrot.lane.b32.xlu0 %v669, 126
        %v717 = vpop.permute.xlu0 %716
        %718 = vrot.lane.b32.xlu0 %v670, 126
        %v719 = vpop.permute.xlu0 %718
        %720 = vrot.lane.b32.xlu0 %v671, 126
        %v721 = vpop.permute.xlu0 %720
        %722 = vrot.lane.b32.xlu0 %v672, 126
        %v723 = vpop.permute.xlu0 %722
        %724 = vrot.lane.b32.xlu0 %v541, 126
        %v725 = vpop.permute.xlu0 %724
        %726 = vrot.lane.b32.xlu0 %v673, 126
        %v727 = vpop.permute.xlu0 %726
        %728 = vrot.lane.b32.xlu0 %v674, 126
        %v729 = vpop.permute.xlu0 %728
        %730 = vrot.lane.b32.xlu0 %v675, 126
        %v731 = vpop.permute.xlu0 %730
        %v760 = vrot.slane %v488, 5
        %v761 = vrot.slane %v490, 5
        %v762 = vrot.slane %v492, 5
        %v763 = vrot.slane %v494, 5
        %v764 = vrot.slane %v496, 5
        %v765 = vrot.slane %v498, 5
        %v766 = vrot.slane %v500, 5
        %v767 = vrot.slane %v502, 5
        %v768 = vrot.slane %v504, 5
        %v769 = vrot.slane %v506, 5
        %v770 = vrot.slane %v508, 5
        %v771 = vrot.slane %v510, 5
        %v772 = vrot.slane %v512, 5
        %v773 = vrot.slane %v514, 5
        %v774 = vrot.slane %v516, 5
        %v775 = vrot.slane %v518, 5
        %v776 = vrot.slane %v520, 5
        %v777 = vrot.slane %v522, 5
        %v778 = vrot.slane %v524, 5
        %v779 = vrot.slane %v526, 5
        %v780 = vrot.slane %v528, 5
        %v781 = vrot.slane %v531, 5
        %v782 = vrot.slane %v533, 5
        %v783 = vrot.slane %v535, 5
        %784 = vrot.lane.b32.xlu0 %v496, 125
        %v785 = vpop.permute.xlu0 %784
        %786 = vrot.lane.b32.xlu0 %v760, 125
        %v787 = vpop.permute.xlu0 %786
        %788 = vrot.lane.b32.xlu0 %v761, 125
        %v789 = vpop.permute.xlu0 %788
        %790 = vrot.lane.b32.xlu0 %v762, 125
        %v791 = vpop.permute.xlu0 %790
        %792 = vrot.lane.b32.xlu0 %v763, 125
        %v793 = vpop.permute.xlu0 %792
        %794 = vrot.lane.b32.xlu0 %v764, 125
        %v795 = vpop.permute.xlu0 %794
        %796 = vrot.lane.b32.xlu0 %v765, 125
        %v797 = vpop.permute.xlu0 %796
        %798 = vrot.lane.b32.xlu0 %v766, 125
        %v799 = vpop.permute.xlu0 %798
        %800 = vrot.lane.b32.xlu0 %v510, 125
        %v801 = vpop.permute.xlu0 %800
        %802 = vrot.lane.b32.xlu0 %v767, 125
        %v803 = vpop.permute.xlu0 %802
        %804 = vrot.lane.b32.xlu0 %v768, 125
        %v805 = vpop.permute.xlu0 %804
        %806 = vrot.lane.b32.xlu0 %v769, 125
        %v807 = vpop.permute.xlu0 %806
        %808 = vrot.lane.b32.xlu0 %v770, 125
        %v809 = vpop.permute.xlu0 %808
        %810 = vrot.lane.b32.xlu0 %v771, 125
        %v811 = vpop.permute.xlu0 %810
        %812 = vrot.lane.b32.xlu0 %v772, 125
        %v813 = vpop.permute.xlu0 %812
        %814 = vrot.lane.b32.xlu0 %v773, 125
        %v815 = vpop.permute.xlu0 %814
        %816 = vrot.lane.b32.xlu0 %v524, 125
        %v817 = vpop.permute.xlu0 %816
        %818 = vrot.lane.b32.xlu0 %v774, 125
        %v819 = vpop.permute.xlu0 %818
        %820 = vrot.lane.b32.xlu0 %v775, 125
        %v821 = vpop.permute.xlu0 %820
        %822 = vrot.lane.b32.xlu0 %v776, 125
        %v823 = vpop.permute.xlu0 %822
        %824 = vrot.lane.b32.xlu0 %v777, 125
        %v825 = vpop.permute.xlu0 %824
        %826 = vrot.lane.b32.xlu0 %v778, 125
        %v827 = vpop.permute.xlu0 %826
        %828 = vrot.lane.b32.xlu0 %v779, 125
        %v829 = vpop.permute.xlu0 %828
        %830 = vrot.lane.b32.xlu0 %v780, 125
        %v831 = vpop.permute.xlu0 %830
        %832 = vrot.lane.b32.xlu0 %v539, 125
        %v833 = vpop.permute.xlu0 %832
        %834 = vrot.lane.b32.xlu0 %v781, 125
        %v835 = vpop.permute.xlu0 %834
        %836 = vrot.lane.b32.xlu0 %v782, 125
        %v837 = vpop.permute.xlu0 %836
        %838 = vrot.lane.b32.xlu0 %v783, 125
        %v839 = vpop.permute.xlu0 %838
        %v868 = vrot.slane %v488, 4
        %v869 = vrot.slane %v490, 4
        %v870 = vrot.slane %v492, 4
        %v871 = vrot.slane %v494, 4
        %v872 = vrot.slane %v496, 4
        %v873 = vrot.slane %v498, 4
        %v874 = vrot.slane %v500, 4
        %v875 = vrot.slane %v502, 4
        %v876 = vrot.slane %v504, 4
        %v877 = vrot.slane %v506, 4
        %v878 = vrot.slane %v508, 4
        %v879 = vrot.slane %v510, 4
        %v880 = vrot.slane %v512, 4
        %v881 = vrot.slane %v514, 4
        %v882 = vrot.slane %v516, 4
        %v883 = vrot.slane %v518, 4
        %v884 = vrot.slane %v520, 4
        %v885 = vrot.slane %v522, 4
        %v886 = vrot.slane %v524, 4
        %v887 = vrot.slane %v526, 4
        %v888 = vrot.slane %v528, 4
        %v889 = vrot.slane %v531, 4
        %v890 = vrot.slane %v533, 4
        %v891 = vrot.slane %v535, 4
        %892 = vrot.lane.b32.xlu0 %v494, 124
        %v893 = vpop.permute.xlu0 %892
        %894 = vrot.lane.b32.xlu0 %v868, 124
        %v895 = vpop.permute.xlu0 %894
        %896 = vrot.lane.b32.xlu0 %v869, 124
        %v897 = vpop.permute.xlu0 %896
        %898 = vrot.lane.b32.xlu0 %v870, 124
        %v899 = vpop.permute.xlu0 %898
        %900 = vrot.lane.b32.xlu0 %v871, 124
        %v901 = vpop.permute.xlu0 %900
        %902 = vrot.lane.b32.xlu0 %v872, 124
        %v903 = vpop.permute.xlu0 %902
        %904 = vrot.lane.b32.xlu0 %v873, 124
        %v905 = vpop.permute.xlu0 %904
        %906 = vrot.lane.b32.xlu0 %v874, 124
        %v907 = vpop.permute.xlu0 %906
        %908 = vrot.lane.b32.xlu0 %v508, 124
        %v909 = vpop.permute.xlu0 %908
        %910 = vrot.lane.b32.xlu0 %v875, 124
        %v911 = vpop.permute.xlu0 %910
        %912 = vrot.lane.b32.xlu0 %v876, 124
        %v913 = vpop.permute.xlu0 %912
        %914 = vrot.lane.b32.xlu0 %v877, 124
        %v915 = vpop.permute.xlu0 %914
        %916 = vrot.lane.b32.xlu0 %v878, 124
        %v917 = vpop.permute.xlu0 %916
        %918 = vrot.lane.b32.xlu0 %v879, 124
        %v919 = vpop.permute.xlu0 %918
        %920 = vrot.lane.b32.xlu0 %v880, 124
        %v921 = vpop.permute.xlu0 %920
        %922 = vrot.lane.b32.xlu0 %v881, 124
        %v923 = vpop.permute.xlu0 %922
        %924 = vrot.lane.b32.xlu0 %v522, 124
        %v925 = vpop.permute.xlu0 %924
        %926 = vrot.lane.b32.xlu0 %v882, 124
        %v927 = vpop.permute.xlu0 %926
        %928 = vrot.lane.b32.xlu0 %v883, 124
        %v929 = vpop.permute.xlu0 %928
        %930 = vrot.lane.b32.xlu0 %v884, 124
        %v931 = vpop.permute.xlu0 %930
        %932 = vrot.lane.b32.xlu0 %v885, 124
        %v933 = vpop.permute.xlu0 %932
        %934 = vrot.lane.b32.xlu0 %v886, 124
        %v935 = vpop.permute.xlu0 %934
        %936 = vrot.lane.b32.xlu0 %v887, 124
        %v937 = vpop.permute.xlu0 %936
        %938 = vrot.lane.b32.xlu0 %v888, 124
        %v939 = vpop.permute.xlu0 %938
        %940 = vrot.lane.b32.xlu0 %v537, 124
        %v941 = vpop.permute.xlu0 %940
        %942 = vrot.lane.b32.xlu0 %v889, 124
        %v943 = vpop.permute.xlu0 %942
        %944 = vrot.lane.b32.xlu0 %v890, 124
        %v945 = vpop.permute.xlu0 %944
        %946 = vrot.lane.b32.xlu0 %v891, 124
        %v947 = vpop.permute.xlu0 %946
        %v976 = vrot.slane %v488, 3
        %v977 = vrot.slane %v490, 3
        %v978 = vrot.slane %v492, 3
        %v979 = vrot.slane %v494, 3
        %v980 = vrot.slane %v496, 3
        %v981 = vrot.slane %v498, 3
        %v982 = vrot.slane %v500, 3
        %v983 = vrot.slane %v502, 3
        %v984 = vrot.slane %v504, 3
        %v985 = vrot.slane %v506, 3
        %v986 = vrot.slane %v508, 3
        %v987 = vrot.slane %v510, 3
        %v988 = vrot.slane %v512, 3
        %v989 = vrot.slane %v514, 3
        %v990 = vrot.slane %v516, 3
        %v991 = vrot.slane %v518, 3
        %v992 = vrot.slane %v520, 3
        %v993 = vrot.slane %v522, 3
        %v994 = vrot.slane %v524, 3
        %v995 = vrot.slane %v526, 3
        %v996 = vrot.slane %v528, 3
        %v997 = vrot.slane %v531, 3
        %v998 = vrot.slane %v533, 3
        %v999 = vrot.slane %v535, 3
        %v1000 = vrot.slane %v537, 3
        %v1026 = vrot.slane %v488, 2
        %v1027 = vrot.slane %v490, 2
        %v1028 = vrot.slane %v492, 2
        %v1029 = vrot.slane %v494, 2
        %v1030 = vrot.slane %v496, 2
        %v1031 = vrot.slane %v498, 2
        %v1032 = vrot.slane %v500, 2
        %v1033 = vrot.slane %v502, 2
        %v1034 = vrot.slane %v504, 2
        %v1035 = vrot.slane %v506, 2
        %v1036 = vrot.slane %v508, 2
        %v1037 = vrot.slane %v510, 2
        %v1038 = vrot.slane %v512, 2
        %v1039 = vrot.slane %v514, 2
        %v1040 = vrot.slane %v516, 2
        %v1041 = vrot.slane %v518, 2
        %v1042 = vrot.slane %v520, 2
        %v1043 = vrot.slane %v522, 2
        %v1044 = vrot.slane %v524, 2
        %v1045 = vrot.slane %v526, 2
        %v1046 = vrot.slane %v528, 2
        %v1047 = vrot.slane %v531, 2
        %v1048 = vrot.slane %v533, 2
        %v1049 = vrot.slane %v535, 2
        %v1050 = vrot.slane %v537, 2
        %1051 = vrot.lane.b32.xlu0 %v1026, 127
        %v1052 = vpop.permute.xlu0 %1051
        %1053 = vrot.lane.b32.xlu0 %v1027, 127
        %v1054 = vpop.permute.xlu0 %1053
        %1055 = vrot.lane.b32.xlu0 %v1028, 127
        %v1056 = vpop.permute.xlu0 %1055
        %1057 = vrot.lane.b32.xlu0 %v1029, 127
        %v1058 = vpop.permute.xlu0 %1057
        %1059 = vrot.lane.b32.xlu0 %v1030, 127
        %v1060 = vpop.permute.xlu0 %1059
        %1061 = vrot.lane.b32.xlu0 %v1031, 127
        %v1062 = vpop.permute.xlu0 %1061
        %1063 = vrot.lane.b32.xlu0 %v1032, 127
        %v1064 = vpop.permute.xlu0 %1063
        %1065 = vrot.lane.b32.xlu0 %v504, 127
        %v1066 = vpop.permute.xlu0 %1065
        %1067 = vrot.lane.b32.xlu0 %v1033, 127
        %v1068 = vpop.permute.xlu0 %1067
        %1069 = vrot.lane.b32.xlu0 %v1034, 127
        %v1070 = vpop.permute.xlu0 %1069
        %1071 = vrot.lane.b32.xlu0 %v1035, 127
        %v1072 = vpop.permute.xlu0 %1071
        %1073 = vrot.lane.b32.xlu0 %v1036, 127
        %v1074 = vpop.permute.xlu0 %1073
        %1075 = vrot.lane.b32.xlu0 %v1037, 127
        %v1076 = vpop.permute.xlu0 %1075
        %1077 = vrot.lane.b32.xlu0 %v1038, 127
        %v1078 = vpop.permute.xlu0 %1077
        %1079 = vrot.lane.b32.xlu0 %v1039, 127
        %v1080 = vpop.permute.xlu0 %1079
        %1081 = vrot.lane.b32.xlu0 %v518, 127
        %v1082 = vpop.permute.xlu0 %1081
        %1083 = vrot.lane.b32.xlu0 %v1040, 127
        %v1084 = vpop.permute.xlu0 %1083
        %1085 = vrot.lane.b32.xlu0 %v1041, 127
        %v1086 = vpop.permute.xlu0 %1085
        %1087 = vrot.lane.b32.xlu0 %v1042, 127
        %v1088 = vpop.permute.xlu0 %1087
        %1089 = vrot.lane.b32.xlu0 %v1043, 127
        %v1090 = vpop.permute.xlu0 %1089
        %1091 = vrot.lane.b32.xlu0 %v1044, 127
        %v1092 = vpop.permute.xlu0 %1091
        %1093 = vrot.lane.b32.xlu0 %v1045, 127
        %v1094 = vpop.permute.xlu0 %1093
        %1095 = vrot.lane.b32.xlu0 %v1046, 127
        %v1096 = vpop.permute.xlu0 %1095
        %1097 = vrot.lane.b32.xlu0 %v533, 127
        %v1098 = vpop.permute.xlu0 %1097
        %1099 = vrot.lane.b32.xlu0 %v1047, 127
        %v1100 = vpop.permute.xlu0 %1099
        %1101 = vrot.lane.b32.xlu0 %v1048, 127
        %v1102 = vpop.permute.xlu0 %1101
        %1103 = vrot.lane.b32.xlu0 %v1049, 127
        %v1104 = vpop.permute.xlu0 %1103
        %1105 = vrot.lane.b32.xlu0 %v1050, 127
        %v1106 = vpop.permute.xlu0 %1105
        %v1135 = vrot.slane %v488, 1
        %v1136 = vrot.slane %v490, 1
        %v1137 = vrot.slane %v492, 1
        %v1138 = vrot.slane %v494, 1
        %v1139 = vrot.slane %v496, 1
        %v1140 = vrot.slane %v498, 1
        %v1141 = vrot.slane %v500, 1
        %v1142 = vrot.slane %v502, 1
        %v1143 = vrot.slane %v504, 1
        %v1144 = vrot.slane %v506, 1
        %v1145 = vrot.slane %v508, 1
        %v1146 = vrot.slane %v510, 1
        %v1147 = vrot.slane %v512, 1
        %v1148 = vrot.slane %v514, 1
        %v1149 = vrot.slane %v516, 1
        %v1150 = vrot.slane %v518, 1
        %v1151 = vrot.slane %v520, 1
        %v1152 = vrot.slane %v522, 1
        %v1153 = vrot.slane %v524, 1
        %v1154 = vrot.slane %v526, 1
        %v1155 = vrot.slane %v528, 1
        %v1156 = vrot.slane %v531, 1
        %v1157 = vrot.slane %v533, 1
        %v1158 = vrot.slane %v535, 1
        %v1159 = vrot.slane %v537, 1
        %1160 = vrot.lane.b32.xlu0 %v1135, 126
        %v1161 = vpop.permute.xlu0 %1160
        %1162 = vrot.lane.b32.xlu0 %v1136, 126
        %v1163 = vpop.permute.xlu0 %1162
        %1164 = vrot.lane.b32.xlu0 %v1137, 126
        %v1165 = vpop.permute.xlu0 %1164
        %1166 = vrot.lane.b32.xlu0 %v1138, 126
        %v1167 = vpop.permute.xlu0 %1166
        %1168 = vrot.lane.b32.xlu0 %v1139, 126
        %v1169 = vpop.permute.xlu0 %1168
        %1170 = vrot.lane.b32.xlu0 %v1140, 126
        %v1171 = vpop.permute.xlu0 %1170
        %1172 = vrot.lane.b32.xlu0 %v1141, 126
        %v1173 = vpop.permute.xlu0 %1172
        %1174 = vrot.lane.b32.xlu0 %v502, 126
        %v1175 = vpop.permute.xlu0 %1174
        %1176 = vrot.lane.b32.xlu0 %v1142, 126
        %v1177 = vpop.permute.xlu0 %1176
        %1178 = vrot.lane.b32.xlu0 %v1143, 126
        %v1179 = vpop.permute.xlu0 %1178
        %1180 = vrot.lane.b32.xlu0 %v1144, 126
        %v1181 = vpop.permute.xlu0 %1180
        %1182 = vrot.lane.b32.xlu0 %v1145, 126
        %v1183 = vpop.permute.xlu0 %1182
        %1184 = vrot.lane.b32.xlu0 %v1146, 126
        %v1185 = vpop.permute.xlu0 %1184
        %1186 = vrot.lane.b32.xlu0 %v1147, 126
        %v1187 = vpop.permute.xlu0 %1186
        %1188 = vrot.lane.b32.xlu0 %v1148, 126
        %v1189 = vpop.permute.xlu0 %1188
        %1190 = vrot.lane.b32.xlu0 %v516, 126
        %v1191 = vpop.permute.xlu0 %1190
        %1192 = vrot.lane.b32.xlu0 %v1149, 126
        %v1193 = vpop.permute.xlu0 %1192
        %1194 = vrot.lane.b32.xlu0 %v1150, 126
        %v1195 = vpop.permute.xlu0 %1194
        %1196 = vrot.lane.b32.xlu0 %v1151, 126
        %v1197 = vpop.permute.xlu0 %1196
        %1198 = vrot.lane.b32.xlu0 %v1152, 126
        %v1199 = vpop.permute.xlu0 %1198
        %1200 = vrot.lane.b32.xlu0 %v1153, 126
        %v1201 = vpop.permute.xlu0 %1200
        %1202 = vrot.lane.b32.xlu0 %v1154, 126
        %v1203 = vpop.permute.xlu0 %1202
        %1204 = vrot.lane.b32.xlu0 %v1155, 126
        %v1205 = vpop.permute.xlu0 %1204
        %1206 = vrot.lane.b32.xlu0 %v531, 126
        %v1207 = vpop.permute.xlu0 %1206
        %1208 = vrot.lane.b32.xlu0 %v1156, 126
        %v1209 = vpop.permute.xlu0 %1208
        %1210 = vrot.lane.b32.xlu0 %v1157, 126
        %v1211 = vpop.permute.xlu0 %1210
        %1212 = vrot.lane.b32.xlu0 %v1158, 126
        %v1213 = vpop.permute.xlu0 %1212
        %1214 = vrot.lane.b32.xlu0 %v1159, 126
        %v1215 = vpop.permute.xlu0 %1214
        %1244 = vrot.lane.b32.xlu0 %v488, 125
        %v1245 = vpop.permute.xlu0 %1244
        %1246 = vrot.lane.b32.xlu0 %v490, 125
        %v1247 = vpop.permute.xlu0 %1246
        %1248 = vrot.lane.b32.xlu0 %v492, 125
        %v1249 = vpop.permute.xlu0 %1248
        %1250 = vrot.lane.b32.xlu0 %v494, 125
        %v1251 = vpop.permute.xlu0 %1250
        %1252 = vrot.lane.b32.xlu0 %v498, 125
        %v1253 = vpop.permute.xlu0 %1252
        %1254 = vrot.lane.b32.xlu0 %v500, 125
        %v1255 = vpop.permute.xlu0 %1254
        %1256 = vrot.lane.b32.xlu0 %v475, 125
        %v1257 = vpop.permute.xlu0 %1256
        %1258 = vrot.lane.b32.xlu0 %v502, 125
        %v1259 = vpop.permute.xlu0 %1258
        %1260 = vrot.lane.b32.xlu0 %v504, 125
        %v1261 = vpop.permute.xlu0 %1260
        %1262 = vrot.lane.b32.xlu0 %v506, 125
        %v1263 = vpop.permute.xlu0 %1262
        %1264 = vrot.lane.b32.xlu0 %v508, 125
        %v1265 = vpop.permute.xlu0 %1264
        %1266 = vrot.lane.b32.xlu0 %v512, 125
        %v1267 = vpop.permute.xlu0 %1266
        %1268 = vrot.lane.b32.xlu0 %v514, 125
        %v1269 = vpop.permute.xlu0 %1268
        %1270 = vrot.lane.b32.xlu0 %v477, 125
        %v1271 = vpop.permute.xlu0 %1270
        %1272 = vrot.lane.b32.xlu0 %v516, 125
        %v1273 = vpop.permute.xlu0 %1272
        %1274 = vrot.lane.b32.xlu0 %v518, 125
        %v1275 = vpop.permute.xlu0 %1274
        %1276 = vrot.lane.b32.xlu0 %v520, 125
        %v1277 = vpop.permute.xlu0 %1276
        %1278 = vrot.lane.b32.xlu0 %v522, 125
        %v1279 = vpop.permute.xlu0 %1278
        %1280 = vrot.lane.b32.xlu0 %v526, 125
        %v1281 = vpop.permute.xlu0 %1280
        %1282 = vrot.lane.b32.xlu0 %v528, 125
        %v1283 = vpop.permute.xlu0 %1282
        %1284 = vrot.lane.b32.xlu0 %v486, 125
        %v1285 = vpop.permute.xlu0 %1284
        %1286 = vrot.lane.b32.xlu0 %v531, 125
        %v1287 = vpop.permute.xlu0 %1286
        %1288 = vrot.lane.b32.xlu0 %v533, 125
        %v1289 = vpop.permute.xlu0 %1288
        %1290 = vrot.lane.b32.xlu0 %v535, 125
        %v1291 = vpop.permute.xlu0 %1290
        %1292 = vrot.lane.b32.xlu0 %v537, 125
        %v1293 = vpop.permute.xlu0 %1292
        %v1319 = vrot.slane %v537, 7
        %1320 = vrot.lane.b32.xlu0 %v544, 124
        %v1321 = vpop.permute.xlu0 %1320
        %1322 = vrot.lane.b32.xlu0 %v545, 124
        %v1323 = vpop.permute.xlu0 %1322
        %1324 = vrot.lane.b32.xlu0 %v546, 124
        %v1325 = vpop.permute.xlu0 %1324
        %1326 = vrot.lane.b32.xlu0 %v547, 124
        %v1327 = vpop.permute.xlu0 %1326
        %1328 = vrot.lane.b32.xlu0 %v548, 124
        %v1329 = vpop.permute.xlu0 %1328
        %1330 = vrot.lane.b32.xlu0 %v549, 124
        %v1331 = vpop.permute.xlu0 %1330
        %1332 = vrot.lane.b32.xlu0 %v550, 124
        %v1333 = vpop.permute.xlu0 %1332
        %1334 = vrot.lane.b32.xlu0 %v514, 124
        %v1335 = vpop.permute.xlu0 %1334
        %1336 = vrot.lane.b32.xlu0 %v551, 124
        %v1337 = vpop.permute.xlu0 %1336
        %1338 = vrot.lane.b32.xlu0 %v552, 124
        %v1339 = vpop.permute.xlu0 %1338
        %1340 = vrot.lane.b32.xlu0 %v553, 124
        %v1341 = vpop.permute.xlu0 %1340
        %1342 = vrot.lane.b32.xlu0 %v554, 124
        %v1343 = vpop.permute.xlu0 %1342
        %1344 = vrot.lane.b32.xlu0 %v555, 124
        %v1345 = vpop.permute.xlu0 %1344
        %1346 = vrot.lane.b32.xlu0 %v556, 124
        %v1347 = vpop.permute.xlu0 %1346
        %1348 = vrot.lane.b32.xlu0 %v557, 124
        %v1349 = vpop.permute.xlu0 %1348
        %1350 = vrot.lane.b32.xlu0 %v528, 124
        %v1351 = vpop.permute.xlu0 %1350
        %1352 = vrot.lane.b32.xlu0 %v558, 124
        %v1353 = vpop.permute.xlu0 %1352
        %1354 = vrot.lane.b32.xlu0 %v559, 124
        %v1355 = vpop.permute.xlu0 %1354
        %1356 = vrot.lane.b32.xlu0 %v560, 124
        %v1357 = vpop.permute.xlu0 %1356
        %1358 = vrot.lane.b32.xlu0 %v561, 124
        %v1359 = vpop.permute.xlu0 %1358
        %1360 = vrot.lane.b32.xlu0 %v562, 124
        %v1361 = vpop.permute.xlu0 %1360
        %1362 = vrot.lane.b32.xlu0 %v563, 124
        %v1363 = vpop.permute.xlu0 %1362
        %1364 = vrot.lane.b32.xlu0 %v564, 124
        %v1365 = vpop.permute.xlu0 %1364
        %1366 = vrot.lane.b32.xlu0 %v543, 124
        %v1367 = vpop.permute.xlu0 %1366
        %1368 = vrot.lane.b32.xlu0 %v565, 124
        %v1369 = vpop.permute.xlu0 %1368
        %1370 = vrot.lane.b32.xlu0 %v566, 124
        %v1371 = vpop.permute.xlu0 %1370
        %1372 = vrot.lane.b32.xlu0 %v567, 124
        %v1373 = vpop.permute.xlu0 %1372
        %1374 = vrot.lane.b32.xlu0 %v1319, 124
        %v1375 = vpop.permute.xlu0 %1374
        %v1404 = vrot.slane %v537, 6
        %v1405 = vrot.slane %v539, 6
        %v1431 = vrot.slane %v537, 5
        %v1432 = vrot.slane %v539, 5
        %1433 = vrot.lane.b32.xlu0 %v761, 127
        %v1434 = vpop.permute.xlu0 %1433
        %1435 = vrot.lane.b32.xlu0 %v762, 127
        %v1436 = vpop.permute.xlu0 %1435
        %1437 = vrot.lane.b32.xlu0 %v763, 127
        %v1438 = vpop.permute.xlu0 %1437
        %1439 = vrot.lane.b32.xlu0 %v764, 127
        %v1440 = vpop.permute.xlu0 %1439
        %1441 = vrot.lane.b32.xlu0 %v765, 127
        %v1442 = vpop.permute.xlu0 %1441
        %1443 = vrot.lane.b32.xlu0 %v766, 127
        %v1444 = vpop.permute.xlu0 %1443
        %1445 = vrot.lane.b32.xlu0 %v510, 127
        %v1446 = vpop.permute.xlu0 %1445
        %1447 = vrot.lane.b32.xlu0 %v767, 127
        %v1448 = vpop.permute.xlu0 %1447
        %1449 = vrot.lane.b32.xlu0 %v768, 127
        %v1450 = vpop.permute.xlu0 %1449
        %1451 = vrot.lane.b32.xlu0 %v769, 127
        %v1452 = vpop.permute.xlu0 %1451
        %1453 = vrot.lane.b32.xlu0 %v770, 127
        %v1454 = vpop.permute.xlu0 %1453
        %1455 = vrot.lane.b32.xlu0 %v771, 127
        %v1456 = vpop.permute.xlu0 %1455
        %1457 = vrot.lane.b32.xlu0 %v772, 127
        %v1458 = vpop.permute.xlu0 %1457
        %1459 = vrot.lane.b32.xlu0 %v773, 127
        %v1460 = vpop.permute.xlu0 %1459
        %1461 = vrot.lane.b32.xlu0 %v524, 127
        %v1462 = vpop.permute.xlu0 %1461
        %1463 = vrot.lane.b32.xlu0 %v774, 127
        %v1464 = vpop.permute.xlu0 %1463
        %1465 = vrot.lane.b32.xlu0 %v775, 127
        %v1466 = vpop.permute.xlu0 %1465
        %1467 = vrot.lane.b32.xlu0 %v776, 127
        %v1468 = vpop.permute.xlu0 %1467
        %1469 = vrot.lane.b32.xlu0 %v777, 127
        %v1470 = vpop.permute.xlu0 %1469
        %1471 = vrot.lane.b32.xlu0 %v778, 127
        %v1472 = vpop.permute.xlu0 %1471
        %1473 = vrot.lane.b32.xlu0 %v779, 127
        %v1474 = vpop.permute.xlu0 %1473
        %1475 = vrot.lane.b32.xlu0 %v780, 127
        %v1476 = vpop.permute.xlu0 %1475
        %1477 = vrot.lane.b32.xlu0 %v539, 127
        %v1478 = vpop.permute.xlu0 %1477
        %1479 = vrot.lane.b32.xlu0 %v781, 127
        %v1480 = vpop.permute.xlu0 %1479
        %1481 = vrot.lane.b32.xlu0 %v782, 127
        %v1482 = vpop.permute.xlu0 %1481
        %1483 = vrot.lane.b32.xlu0 %v783, 127
        %v1484 = vpop.permute.xlu0 %1483
        %1485 = vrot.lane.b32.xlu0 %v1431, 127
        %v1486 = vpop.permute.xlu0 %1485
        %1487 = vrot.lane.b32.xlu0 %v1432, 127
        %v1488 = vpop.permute.xlu0 %1487
        %v1517 = vrot.slane %v537, 4
        %v1518 = vrot.slane %v539, 4
        %1519 = vrot.lane.b32.xlu0 %v869, 126
        %v1520 = vpop.permute.xlu0 %1519
        %1521 = vrot.lane.b32.xlu0 %v870, 126
        %v1522 = vpop.permute.xlu0 %1521
        %1523 = vrot.lane.b32.xlu0 %v871, 126
        %v1524 = vpop.permute.xlu0 %1523
        %1525 = vrot.lane.b32.xlu0 %v872, 126
        %v1526 = vpop.permute.xlu0 %1525
        %1527 = vrot.lane.b32.xlu0 %v873, 126
        %v1528 = vpop.permute.xlu0 %1527
        %1529 = vrot.lane.b32.xlu0 %v874, 126
        %v1530 = vpop.permute.xlu0 %1529
        %1531 = vrot.lane.b32.xlu0 %v508, 126
        %v1532 = vpop.permute.xlu0 %1531
        %1533 = vrot.lane.b32.xlu0 %v875, 126
        %v1534 = vpop.permute.xlu0 %1533
        %1535 = vrot.lane.b32.xlu0 %v876, 126
        %v1536 = vpop.permute.xlu0 %1535
        %1537 = vrot.lane.b32.xlu0 %v877, 126
        %v1538 = vpop.permute.xlu0 %1537
        %1539 = vrot.lane.b32.xlu0 %v878, 126
        %v1540 = vpop.permute.xlu0 %1539
        %1541 = vrot.lane.b32.xlu0 %v879, 126
        %v1542 = vpop.permute.xlu0 %1541
        %1543 = vrot.lane.b32.xlu0 %v880, 126
        %v1544 = vpop.permute.xlu0 %1543
        %1545 = vrot.lane.b32.xlu0 %v881, 126
        %v1546 = vpop.permute.xlu0 %1545
        %1547 = vrot.lane.b32.xlu0 %v522, 126
        %v1548 = vpop.permute.xlu0 %1547
        %1549 = vrot.lane.b32.xlu0 %v882, 126
        %v1550 = vpop.permute.xlu0 %1549
        %1551 = vrot.lane.b32.xlu0 %v883, 126
        %v1552 = vpop.permute.xlu0 %1551
        %1553 = vrot.lane.b32.xlu0 %v884, 126
        %v1554 = vpop.permute.xlu0 %1553
        %1555 = vrot.lane.b32.xlu0 %v885, 126
        %v1556 = vpop.permute.xlu0 %1555
        %1557 = vrot.lane.b32.xlu0 %v886, 126
        %v1558 = vpop.permute.xlu0 %1557
        %1559 = vrot.lane.b32.xlu0 %v887, 126
        %v1560 = vpop.permute.xlu0 %1559
        %1561 = vrot.lane.b32.xlu0 %v888, 126
        %v1562 = vpop.permute.xlu0 %1561
        %1563 = vrot.lane.b32.xlu0 %v537, 126
        %v1564 = vpop.permute.xlu0 %1563
        %1565 = vrot.lane.b32.xlu0 %v889, 126
        %v1566 = vpop.permute.xlu0 %1565
        %1567 = vrot.lane.b32.xlu0 %v890, 126
        %v1568 = vpop.permute.xlu0 %1567
        %1569 = vrot.lane.b32.xlu0 %v891, 126
        %v1570 = vpop.permute.xlu0 %1569
        %1571 = vrot.lane.b32.xlu0 %v1517, 126
        %v1572 = vpop.permute.xlu0 %1571
        %1573 = vrot.lane.b32.xlu0 %v1518, 126
        %v1574 = vpop.permute.xlu0 %1573
        %v1603 = vrot.slane %v539, 3
        %1604 = vrot.lane.b32.xlu0 %v977, 125
        %v1605 = vpop.permute.xlu0 %1604
        %1606 = vrot.lane.b32.xlu0 %v978, 125
        %v1607 = vpop.permute.xlu0 %1606
        %1608 = vrot.lane.b32.xlu0 %v979, 125
        %v1609 = vpop.permute.xlu0 %1608
        %1610 = vrot.lane.b32.xlu0 %v980, 125
        %v1611 = vpop.permute.xlu0 %1610
        %1612 = vrot.lane.b32.xlu0 %v981, 125
        %v1613 = vpop.permute.xlu0 %1612
        %1614 = vrot.lane.b32.xlu0 %v982, 125
        %v1615 = vpop.permute.xlu0 %1614
        %1616 = vrot.lane.b32.xlu0 %v983, 125
        %v1617 = vpop.permute.xlu0 %1616
        %1618 = vrot.lane.b32.xlu0 %v984, 125
        %v1619 = vpop.permute.xlu0 %1618
        %1620 = vrot.lane.b32.xlu0 %v985, 125
        %v1621 = vpop.permute.xlu0 %1620
        %1622 = vrot.lane.b32.xlu0 %v986, 125
        %v1623 = vpop.permute.xlu0 %1622
        %1624 = vrot.lane.b32.xlu0 %v987, 125
        %v1625 = vpop.permute.xlu0 %1624
        %1626 = vrot.lane.b32.xlu0 %v988, 125
        %v1627 = vpop.permute.xlu0 %1626
        %1628 = vrot.lane.b32.xlu0 %v989, 125
        %v1629 = vpop.permute.xlu0 %1628
        %1630 = vrot.lane.b32.xlu0 %v990, 125
        %v1631 = vpop.permute.xlu0 %1630
        %1632 = vrot.lane.b32.xlu0 %v991, 125
        %v1633 = vpop.permute.xlu0 %1632
        %1634 = vrot.lane.b32.xlu0 %v992, 125
        %v1635 = vpop.permute.xlu0 %1634
        %1636 = vrot.lane.b32.xlu0 %v993, 125
        %v1637 = vpop.permute.xlu0 %1636
        %1638 = vrot.lane.b32.xlu0 %v994, 125
        %v1639 = vpop.permute.xlu0 %1638
        %1640 = vrot.lane.b32.xlu0 %v995, 125
        %v1641 = vpop.permute.xlu0 %1640
        %1642 = vrot.lane.b32.xlu0 %v996, 125
        %v1643 = vpop.permute.xlu0 %1642
        %1644 = vrot.lane.b32.xlu0 %v997, 125
        %v1645 = vpop.permute.xlu0 %1644
        %1646 = vrot.lane.b32.xlu0 %v998, 125
        %v1647 = vpop.permute.xlu0 %1646
        %1648 = vrot.lane.b32.xlu0 %v999, 125
        %v1649 = vpop.permute.xlu0 %1648
        %1650 = vrot.lane.b32.xlu0 %v1000, 125
        %v1651 = vpop.permute.xlu0 %1650
        %1652 = vrot.lane.b32.xlu0 %v1603, 125
        %v1653 = vpop.permute.xlu0 %1652
        %v1679 = vrot.slane %v539, 2
        %1680 = vrot.lane.b32.xlu0 %v1027, 124
        %v1681 = vpop.permute.xlu0 %1680
        %1682 = vrot.lane.b32.xlu0 %v1028, 124
        %v1683 = vpop.permute.xlu0 %1682
        %1684 = vrot.lane.b32.xlu0 %v1029, 124
        %v1685 = vpop.permute.xlu0 %1684
        %1686 = vrot.lane.b32.xlu0 %v1030, 124
        %v1687 = vpop.permute.xlu0 %1686
        %1688 = vrot.lane.b32.xlu0 %v1031, 124
        %v1689 = vpop.permute.xlu0 %1688
        %1690 = vrot.lane.b32.xlu0 %v1032, 124
        %v1691 = vpop.permute.xlu0 %1690
        %1692 = vrot.lane.b32.xlu0 %v504, 124
        %v1693 = vpop.permute.xlu0 %1692
        %1694 = vrot.lane.b32.xlu0 %v1033, 124
        %v1695 = vpop.permute.xlu0 %1694
        %1696 = vrot.lane.b32.xlu0 %v1034, 124
        %v1697 = vpop.permute.xlu0 %1696
        %1698 = vrot.lane.b32.xlu0 %v1035, 124
        %v1699 = vpop.permute.xlu0 %1698
        %1700 = vrot.lane.b32.xlu0 %v1036, 124
        %v1701 = vpop.permute.xlu0 %1700
        %1702 = vrot.lane.b32.xlu0 %v1037, 124
        %v1703 = vpop.permute.xlu0 %1702
        %1704 = vrot.lane.b32.xlu0 %v1038, 124
        %v1705 = vpop.permute.xlu0 %1704
        %1706 = vrot.lane.b32.xlu0 %v1039, 124
        %v1707 = vpop.permute.xlu0 %1706
        %1708 = vrot.lane.b32.xlu0 %v518, 124
        %v1709 = vpop.permute.xlu0 %1708
        %1710 = vrot.lane.b32.xlu0 %v1040, 124
        %v1711 = vpop.permute.xlu0 %1710
        %1712 = vrot.lane.b32.xlu0 %v1041, 124
        %v1713 = vpop.permute.xlu0 %1712
        %1714 = vrot.lane.b32.xlu0 %v1042, 124
        %v1715 = vpop.permute.xlu0 %1714
        %1716 = vrot.lane.b32.xlu0 %v1043, 124
        %v1717 = vpop.permute.xlu0 %1716
        %1718 = vrot.lane.b32.xlu0 %v1044, 124
        %v1719 = vpop.permute.xlu0 %1718
        %1720 = vrot.lane.b32.xlu0 %v1045, 124
        %v1721 = vpop.permute.xlu0 %1720
        %1722 = vrot.lane.b32.xlu0 %v1046, 124
        %v1723 = vpop.permute.xlu0 %1722
        %1724 = vrot.lane.b32.xlu0 %v533, 124
        %v1725 = vpop.permute.xlu0 %1724
        %1726 = vrot.lane.b32.xlu0 %v1047, 124
        %v1727 = vpop.permute.xlu0 %1726
        %1728 = vrot.lane.b32.xlu0 %v1048, 124
        %v1729 = vpop.permute.xlu0 %1728
        %1730 = vrot.lane.b32.xlu0 %v1049, 124
        %v1731 = vpop.permute.xlu0 %1730
        %1732 = vrot.lane.b32.xlu0 %v1050, 124
        %v1733 = vpop.permute.xlu0 %1732
        %1734 = vrot.lane.b32.xlu0 %v1679, 124
        %v1735 = vpop.permute.xlu0 %1734
        %v1764 = vrot.slane %v539, 1
        %v1765 = vrot.slane %v541, 1
        %vm1791 = vcmask 1040384
        %v1792 = vsel %vm1791, %v484, %v569
        %v1793 = vsel %vm1791, %v488, %v571
        %v1794 = vsel %vm1791, %v490, %v573
        %v1795 = vsel %vm1791, %v492, %v575
        %v1796 = vsel %vm1791, %v494, %v577
        %v1797 = vsel %vm1791, %v496, %v579
        %v1798 = vsel %vm1791, %v498, %v581
        %v1799 = vsel %vm1791, %v500, %v583
        %v1800 = vsel %vm1791, %v475, %v585
        %v1801 = vsel %vm1791, %v502, %v587
        %v1802 = vsel %vm1791, %v504, %v589
        %v1803 = vsel %vm1791, %v506, %v591
        %v1804 = vsel %vm1791, %v508, %v593
        %v1805 = vsel %vm1791, %v510, %v595
        %v1806 = vsel %vm1791, %v512, %v597
        %v1807 = vsel %vm1791, %v514, %v599
        %v1808 = vsel %vm1791, %v477, %v601
        %v1809 = vsel %vm1791, %v516, %v603
        %v1810 = vsel %vm1791, %v518, %v605
        %v1811 = vsel %vm1791, %v520, %v607
        %v1812 = vsel %vm1791, %v522, %v609
        %v1813 = vsel %vm1791, %v524, %v611
        %v1814 = vsel %vm1791, %v526, %v613
        %v1815 = vsel %vm1791, %v528, %v615
        %v1816 = vsel %vm1791, %v486, %v617
        %v1817 = vsel %vm1791, %v531, %v619
        %v1818 = vsel %vm1791, %v533, %v621
        %v1819 = vsel %vm1791, %v535, %v623
        %v1820 = vsel %vm472, %v1792, %v677
        %v1821 = vsel %vm472, %v1793, %v679
        %v1822 = vsel %vm472, %v1794, %v681
        %v1823 = vsel %vm472, %v1795, %v683
        %v1824 = vsel %vm472, %v1796, %v685
        %v1825 = vsel %vm472, %v1797, %v687
        %v1826 = vsel %vm472, %v1798, %v689
        %v1827 = vsel %vm472, %v1799, %v691
        %v1828 = vsel %vm472, %v1800, %v693
        %v1829 = vsel %vm472, %v1801, %v695
        %v1830 = vsel %vm472, %v1802, %v697
        %v1831 = vsel %vm472, %v1803, %v699
        %v1832 = vsel %vm472, %v1804, %v701
        %v1833 = vsel %vm472, %v1805, %v703
        %v1834 = vsel %vm472, %v1806, %v705
        %v1835 = vsel %vm472, %v1807, %v707
        %v1836 = vsel %vm472, %v1808, %v709
        %v1837 = vsel %vm472, %v1809, %v711
        %v1838 = vsel %vm472, %v1810, %v713
        %v1839 = vsel %vm472, %v1811, %v715
        %v1840 = vsel %vm472, %v1812, %v717
        %v1841 = vsel %vm472, %v1813, %v719
        %v1842 = vsel %vm472, %v1814, %v721
        %v1843 = vsel %vm472, %v1815, %v723
        %v1844 = vsel %vm472, %v1816, %v725
        %v1845 = vsel %vm472, %v1817, %v727
        %v1846 = vsel %vm472, %v1818, %v729
        %v1847 = vsel %vm472, %v1819, %v731
        %vm1848 = vcmask 1042432
        %v1849 = vsel %vm1848, %v1820, %v785
        %v1850 = vsel %vm1848, %v1821, %v787
        %v1851 = vsel %vm1848, %v1822, %v789
        %v1852 = vsel %vm1848, %v1823, %v791
        %v1853 = vsel %vm1848, %v1824, %v793
        %v1854 = vsel %vm1848, %v1825, %v795
        %v1855 = vsel %vm1848, %v1826, %v797
        %v1856 = vsel %vm1848, %v1827, %v799
        %v1857 = vsel %vm1848, %v1828, %v801
        %v1858 = vsel %vm1848, %v1829, %v803
        %v1859 = vsel %vm1848, %v1830, %v805
        %v1860 = vsel %vm1848, %v1831, %v807
        %v1861 = vsel %vm1848, %v1832, %v809
        %v1862 = vsel %vm1848, %v1833, %v811
        %v1863 = vsel %vm1848, %v1834, %v813
        %v1864 = vsel %vm1848, %v1835, %v815
        %v1865 = vsel %vm1848, %v1836, %v817
        %v1866 = vsel %vm1848, %v1837, %v819
        %v1867 = vsel %vm1848, %v1838, %v821
        %v1868 = vsel %vm1848, %v1839, %v823
        %v1869 = vsel %vm1848, %v1840, %v825
        %v1870 = vsel %vm1848, %v1841, %v827
        %v1871 = vsel %vm1848, %v1842, %v829
        %v1872 = vsel %vm1848, %v1843, %v831
        %v1873 = vsel %vm1848, %v1844, %v833
        %v1874 = vsel %vm1848, %v1845, %v835
        %v1875 = vsel %vm1848, %v1846, %v837
        %v1876 = vsel %vm1848, %v1847, %v839
        %vm1877 = vcmask 1043456
        %v1878 = vsel %vm1877, %v1849, %v893
        %v1879 = vsel %vm1877, %v1850, %v895
        %v1880 = vsel %vm1877, %v1851, %v897
        %v1881 = vsel %vm1877, %v1852, %v899
        %v1882 = vsel %vm1877, %v1853, %v901
        %v1883 = vsel %vm1877, %v1854, %v903
        %v1884 = vsel %vm1877, %v1855, %v905
        %v1885 = vsel %vm1877, %v1856, %v907
        %v1886 = vsel %vm1877, %v1857, %v909
        %v1887 = vsel %vm1877, %v1858, %v911
        %v1888 = vsel %vm1877, %v1859, %v913
        %v1889 = vsel %vm1877, %v1860, %v915
        %v1890 = vsel %vm1877, %v1861, %v917
        %v1891 = vsel %vm1877, %v1862, %v919
        %v1892 = vsel %vm1877, %v1863, %v921
        %v1893 = vsel %vm1877, %v1864, %v923
        %v1894 = vsel %vm1877, %v1865, %v925
        %v1895 = vsel %vm1877, %v1866, %v927
        %v1896 = vsel %vm1877, %v1867, %v929
        %v1897 = vsel %vm1877, %v1868, %v931
        %v1898 = vsel %vm1877, %v1869, %v933
        %v1899 = vsel %vm1877, %v1870, %v935
        %v1900 = vsel %vm1877, %v1871, %v937
        %v1901 = vsel %vm1877, %v1872, %v939
        %v1902 = vsel %vm1877, %v1873, %v941
        %v1903 = vsel %vm1877, %v1874, %v943
        %v1904 = vsel %vm1877, %v1875, %v945
        %v1905 = vsel %vm1877, %v1876, %v947
        %vm1906 = vcmask 1044480
        %v1907 = vsel %vm1906, %v1878, %v976
        %v1908 = vsel %vm1906, %v1879, %v977
        %v1909 = vsel %vm1906, %v1880, %v978
        %v1910 = vsel %vm1906, %v1881, %v979
        %v1911 = vsel %vm1906, %v1882, %v980
        %v1912 = vsel %vm1906, %v1883, %v981
        %v1913 = vsel %vm1906, %v1884, %v982
        %v1914 = vsel %vm1906, %v1885, %v506
        %v1915 = vsel %vm1906, %v1886, %v983
        %v1916 = vsel %vm1906, %v1887, %v984
        %v1917 = vsel %vm1906, %v1888, %v985
        %v1918 = vsel %vm1906, %v1889, %v986
        %v1919 = vsel %vm1906, %v1890, %v987
        %v1920 = vsel %vm1906, %v1891, %v988
        %v1921 = vsel %vm1906, %v1892, %v989
        %v1922 = vsel %vm1906, %v1893, %v520
        %v1923 = vsel %vm1906, %v1894, %v990
        %v1924 = vsel %vm1906, %v1895, %v991
        %v1925 = vsel %vm1906, %v1896, %v992
        %v1926 = vsel %vm1906, %v1897, %v993
        %v1927 = vsel %vm1906, %v1898, %v994
        %v1928 = vsel %vm1906, %v1899, %v995
        %v1929 = vsel %vm1906, %v1900, %v996
        %v1930 = vsel %vm1906, %v1901, %v535
        %v1931 = vsel %vm1906, %v1902, %v997
        %v1932 = vsel %vm1906, %v1903, %v998
        %v1933 = vsel %vm1906, %v1904, %v999
        %v1934 = vsel %vm1906, %v1905, %v1000
        %v1935 = vsel %vm485, %v1907, %v1052
        %v1936 = vsel %vm485, %v1908, %v1054
        %v1937 = vsel %vm485, %v1909, %v1056
        %v1938 = vsel %vm485, %v1910, %v1058
        %v1939 = vsel %vm485, %v1911, %v1060
        %v1940 = vsel %vm485, %v1912, %v1062
        %v1941 = vsel %vm485, %v1913, %v1064
        %v1942 = vsel %vm485, %v1914, %v1066
        %v1943 = vsel %vm485, %v1915, %v1068
        %v1944 = vsel %vm485, %v1916, %v1070
        %v1945 = vsel %vm485, %v1917, %v1072
        %v1946 = vsel %vm485, %v1918, %v1074
        %v1947 = vsel %vm485, %v1919, %v1076
        %v1948 = vsel %vm485, %v1920, %v1078
        %v1949 = vsel %vm485, %v1921, %v1080
        %v1950 = vsel %vm485, %v1922, %v1082
        %v1951 = vsel %vm485, %v1923, %v1084
        %v1952 = vsel %vm485, %v1924, %v1086
        %v1953 = vsel %vm485, %v1925, %v1088
        %v1954 = vsel %vm485, %v1926, %v1090
        %v1955 = vsel %vm485, %v1927, %v1092
        %v1956 = vsel %vm485, %v1928, %v1094
        %v1957 = vsel %vm485, %v1929, %v1096
        %v1958 = vsel %vm485, %v1930, %v1098
        %v1959 = vsel %vm485, %v1931, %v1100
        %v1960 = vsel %vm485, %v1932, %v1102
        %v1961 = vsel %vm485, %v1933, %v1104
        %v1962 = vsel %vm485, %v1934, %v1106
        %vm1963 = vcmask 1046528
        %v1964 = vsel %vm1963, %v1935, %v1161
        %v1965 = vsel %vm1963, %v1936, %v1163
        %v1966 = vsel %vm1963, %v1937, %v1165
        %v1967 = vsel %vm1963, %v1938, %v1167
        %v1968 = vsel %vm1963, %v1939, %v1169
        %v1969 = vsel %vm1963, %v1940, %v1171
        %v1970 = vsel %vm1963, %v1941, %v1173
        %v1971 = vsel %vm1963, %v1942, %v1175
        %v1972 = vsel %vm1963, %v1943, %v1177
        %v1973 = vsel %vm1963, %v1944, %v1179
        %v1974 = vsel %vm1963, %v1945, %v1181
        %v1975 = vsel %vm1963, %v1946, %v1183
        %v1976 = vsel %vm1963, %v1947, %v1185
        %v1977 = vsel %vm1963, %v1948, %v1187
        %v1978 = vsel %vm1963, %v1949, %v1189
        %v1979 = vsel %vm1963, %v1950, %v1191
        %v1980 = vsel %vm1963, %v1951, %v1193
        %v1981 = vsel %vm1963, %v1952, %v1195
        %v1982 = vsel %vm1963, %v1953, %v1197
        %v1983 = vsel %vm1963, %v1954, %v1199
        %v1984 = vsel %vm1963, %v1955, %v1201
        %v1985 = vsel %vm1963, %v1956, %v1203
        %v1986 = vsel %vm1963, %v1957, %v1205
        %v1987 = vsel %vm1963, %v1958, %v1207
        %v1988 = vsel %vm1963, %v1959, %v1209
        %v1989 = vsel %vm1963, %v1960, %v1211
        %v1990 = vsel %vm1963, %v1961, %v1213
        %v1991 = vsel %vm1963, %v1962, %v1215
        %v1992 = vsel %vm1791, %v1245, %v1321
        %v1993 = vsel %vm1791, %v1247, %v1323
        %v1994 = vsel %vm1791, %v1249, %v1325
        %v1995 = vsel %vm1791, %v1251, %v1327
        %v1996 = vsel %vm1791, %v785, %v1329
        %v1997 = vsel %vm1791, %v1253, %v1331
        %v1998 = vsel %vm1791, %v1255, %v1333
        %v1999 = vsel %vm1791, %v1257, %v1335
        %v2000 = vsel %vm1791, %v1259, %v1337
        %v2001 = vsel %vm1791, %v1261, %v1339
        %v2002 = vsel %vm1791, %v1263, %v1341
        %v2003 = vsel %vm1791, %v1265, %v1343
        %v2004 = vsel %vm1791, %v801, %v1345
        %v2005 = vsel %vm1791, %v1267, %v1347
        %v2006 = vsel %vm1791, %v1269, %v1349
        %v2007 = vsel %vm1791, %v1271, %v1351
        %v2008 = vsel %vm1791, %v1273, %v1353
        %v2009 = vsel %vm1791, %v1275, %v1355
        %v2010 = vsel %vm1791, %v1277, %v1357
        %v2011 = vsel %vm1791, %v1279, %v1359
        %v2012 = vsel %vm1791, %v817, %v1361
        %v2013 = vsel %vm1791, %v1281, %v1363
        %v2014 = vsel %vm1791, %v1283, %v1365
        %v2015 = vsel %vm1791, %v1285, %v1367
        %v2016 = vsel %vm1791, %v1287, %v1369
        %v2017 = vsel %vm1791, %v1289, %v1371
        %v2018 = vsel %vm1791, %v1291, %v1373
        %v2019 = vsel %vm1791, %v1293, %v1375
        %v2020 = vsel %vm472, %v1992, %v653
        %v2021 = vsel %vm472, %v1993, %v654
        %v2022 = vsel %vm472, %v1994, %v655
        %v2023 = vsel %vm472, %v1995, %v656
        %v2024 = vsel %vm472, %v1996, %v657
        %v2025 = vsel %vm472, %v1997, %v658
        %v2026 = vsel %vm472, %v1998, %v512
        %v2027 = vsel %vm472, %v1999, %v659
        %v2028 = vsel %vm472, %v2000, %v660
        %v2029 = vsel %vm472, %v2001, %v661
        %v2030 = vsel %vm472, %v2002, %v662
        %v2031 = vsel %vm472, %v2003, %v663
        %v2032 = vsel %vm472, %v2004, %v664
        %v2033 = vsel %vm472, %v2005, %v665
        %v2034 = vsel %vm472, %v2006, %v526
        %v2035 = vsel %vm472, %v2007, %v666
        %v2036 = vsel %vm472, %v2008, %v667
        %v2037 = vsel %vm472, %v2009, %v668
        %v2038 = vsel %vm472, %v2010, %v669
        %v2039 = vsel %vm472, %v2011, %v670
        %v2040 = vsel %vm472, %v2012, %v671
        %v2041 = vsel %vm472, %v2013, %v672
        %v2042 = vsel %vm472, %v2014, %v541
        %v2043 = vsel %vm472, %v2015, %v673
        %v2044 = vsel %vm472, %v2016, %v674
        %v2045 = vsel %vm472, %v2017, %v675
        %v2046 = vsel %vm472, %v2018, %v1404
        %v2047 = vsel %vm472, %v2019, %v1405
        %v2048 = vsel %vm1848, %v2020, %v1434
        %v2049 = vsel %vm1848, %v2021, %v1436
        %v2050 = vsel %vm1848, %v2022, %v1438
        %v2051 = vsel %vm1848, %v2023, %v1440
        %v2052 = vsel %vm1848, %v2024, %v1442
        %v2053 = vsel %vm1848, %v2025, %v1444
        %v2054 = vsel %vm1848, %v2026, %v1446
        %v2055 = vsel %vm1848, %v2027, %v1448
        %v2056 = vsel %vm1848, %v2028, %v1450
        %v2057 = vsel %vm1848, %v2029, %v1452
        %v2058 = vsel %vm1848, %v2030, %v1454
        %v2059 = vsel %vm1848, %v2031, %v1456
        %v2060 = vsel %vm1848, %v2032, %v1458
        %v2061 = vsel %vm1848, %v2033, %v1460
        %v2062 = vsel %vm1848, %v2034, %v1462
        %v2063 = vsel %vm1848, %v2035, %v1464
        %v2064 = vsel %vm1848, %v2036, %v1466
        %v2065 = vsel %vm1848, %v2037, %v1468
        %v2066 = vsel %vm1848, %v2038, %v1470
        %v2067 = vsel %vm1848, %v2039, %v1472
        %v2068 = vsel %vm1848, %v2040, %v1474
        %v2069 = vsel %vm1848, %v2041, %v1476
        %v2070 = vsel %vm1848, %v2042, %v1478
        %v2071 = vsel %vm1848, %v2043, %v1480
        %v2072 = vsel %vm1848, %v2044, %v1482
        %v2073 = vsel %vm1848, %v2045, %v1484
        %v2074 = vsel %vm1848, %v2046, %v1486
        %v2075 = vsel %vm1848, %v2047, %v1488
        %v2076 = vsel %vm1877, %v2048, %v1520
        %v2077 = vsel %vm1877, %v2049, %v1522
        %v2078 = vsel %vm1877, %v2050, %v1524
        %v2079 = vsel %vm1877, %v2051, %v1526
        %v2080 = vsel %vm1877, %v2052, %v1528
        %v2081 = vsel %vm1877, %v2053, %v1530
        %v2082 = vsel %vm1877, %v2054, %v1532
        %v2083 = vsel %vm1877, %v2055, %v1534
        %v2084 = vsel %vm1877, %v2056, %v1536
        %v2085 = vsel %vm1877, %v2057, %v1538
        %v2086 = vsel %vm1877, %v2058, %v1540
        %v2087 = vsel %vm1877, %v2059, %v1542
        %v2088 = vsel %vm1877, %v2060, %v1544
        %v2089 = vsel %vm1877, %v2061, %v1546
        %v2090 = vsel %vm1877, %v2062, %v1548
        %v2091 = vsel %vm1877, %v2063, %v1550
        %v2092 = vsel %vm1877, %v2064, %v1552
        %v2093 = vsel %vm1877, %v2065, %v1554
        %v2094 = vsel %vm1877, %v2066, %v1556
        %v2095 = vsel %vm1877, %v2067, %v1558
        %v2096 = vsel %vm1877, %v2068, %v1560
        %v2097 = vsel %vm1877, %v2069, %v1562
        %v2098 = vsel %vm1877, %v2070, %v1564
        %v2099 = vsel %vm1877, %v2071, %v1566
        %v2100 = vsel %vm1877, %v2072, %v1568
        %v2101 = vsel %vm1877, %v2073, %v1570
        %v2102 = vsel %vm1877, %v2074, %v1572
        %v2103 = vsel %vm1877, %v2075, %v1574
        %v2104 = vsel %vm1906, %v2076, %v1605
        %v2105 = vsel %vm1906, %v2077, %v1607
        %v2106 = vsel %vm1906, %v2078, %v1609
        %v2107 = vsel %vm1906, %v2079, %v1611
        %v2108 = vsel %vm1906, %v2080, %v1613
        %v2109 = vsel %vm1906, %v2081, %v1615
        %v2110 = vsel %vm1906, %v2082, %v1263
        %v2111 = vsel %vm1906, %v2083, %v1617
        %v2112 = vsel %vm1906, %v2084, %v1619
        %v2113 = vsel %vm1906, %v2085, %v1621
        %v2114 = vsel %vm1906, %v2086, %v1623
        %v2115 = vsel %vm1906, %v2087, %v1625
        %v2116 = vsel %vm1906, %v2088, %v1627
        %v2117 = vsel %vm1906, %v2089, %v1629
        %v2118 = vsel %vm1906, %v2090, %v1277
        %v2119 = vsel %vm1906, %v2091, %v1631
        %v2120 = vsel %vm1906, %v2092, %v1633
        %v2121 = vsel %vm1906, %v2093, %v1635
        %v2122 = vsel %vm1906, %v2094, %v1637
        %v2123 = vsel %vm1906, %v2095, %v1639
        %v2124 = vsel %vm1906, %v2096, %v1641
        %v2125 = vsel %vm1906, %v2097, %v1643
        %v2126 = vsel %vm1906, %v2098, %v1291
        %v2127 = vsel %vm1906, %v2099, %v1645
        %v2128 = vsel %vm1906, %v2100, %v1647
        %v2129 = vsel %vm1906, %v2101, %v1649
        %v2130 = vsel %vm1906, %v2102, %v1651
        %v2131 = vsel %vm1906, %v2103, %v1653
        %v2132 = vsel %vm485, %v2104, %v1681
        %v2133 = vsel %vm485, %v2105, %v1683
        %v2134 = vsel %vm485, %v2106, %v1685
        %v2135 = vsel %vm485, %v2107, %v1687
        %v2136 = vsel %vm485, %v2108, %v1689
        %v2137 = vsel %vm485, %v2109, %v1691
        %v2138 = vsel %vm485, %v2110, %v1693
        %v2139 = vsel %vm485, %v2111, %v1695
        %v2140 = vsel %vm485, %v2112, %v1697
        %v2141 = vsel %vm485, %v2113, %v1699
        %v2142 = vsel %vm485, %v2114, %v1701
        %v2143 = vsel %vm485, %v2115, %v1703
        %v2144 = vsel %vm485, %v2116, %v1705
        %v2145 = vsel %vm485, %v2117, %v1707
        %v2146 = vsel %vm485, %v2118, %v1709
        %v2147 = vsel %vm485, %v2119, %v1711
        %v2148 = vsel %vm485, %v2120, %v1713
        %v2149 = vsel %vm485, %v2121, %v1715
        %v2150 = vsel %vm485, %v2122, %v1717
        %v2151 = vsel %vm485, %v2123, %v1719
        %v2152 = vsel %vm485, %v2124, %v1721
        %v2153 = vsel %vm485, %v2125, %v1723
        %v2154 = vsel %vm485, %v2126, %v1725
        %v2155 = vsel %vm485, %v2127, %v1727
        %v2156 = vsel %vm485, %v2128, %v1729
        %v2157 = vsel %vm485, %v2129, %v1731
        %v2158 = vsel %vm485, %v2130, %v1733
        %v2159 = vsel %vm485, %v2131, %v1735
        %v2160 = vsel %vm1963, %v2132, %v1137
        %v2161 = vsel %vm1963, %v2133, %v1138
        %v2162 = vsel %vm1963, %v2134, %v1139
        %v2163 = vsel %vm1963, %v2135, %v1140
        %v2164 = vsel %vm1963, %v2136, %v1141
        %v2165 = vsel %vm1963, %v2137, %v502
        %v2166 = vsel %vm1963, %v2138, %v1142
        %v2167 = vsel %vm1963, %v2139, %v1143
        %v2168 = vsel %vm1963, %v2140, %v1144
        %v2169 = vsel %vm1963, %v2141, %v1145
        %v2170 = vsel %vm1963, %v2142, %v1146
        %v2171 = vsel %vm1963, %v2143, %v1147
        %v2172 = vsel %vm1963, %v2144, %v1148
        %v2173 = vsel %vm1963, %v2145, %v516
        %v2174 = vsel %vm1963, %v2146, %v1149
        %v2175 = vsel %vm1963, %v2147, %v1150
        %v2176 = vsel %vm1963, %v2148, %v1151
        %v2177 = vsel %vm1963, %v2149, %v1152
        %v2178 = vsel %vm1963, %v2150, %v1153
        %v2179 = vsel %vm1963, %v2151, %v1154
        %v2180 = vsel %vm1963, %v2152, %v1155
        %v2181 = vsel %vm1963, %v2153, %v531
        %v2182 = vsel %vm1963, %v2154, %v1156
        %v2183 = vsel %vm1963, %v2155, %v1157
        %v2184 = vsel %vm1963, %v2156, %v1158
        %v2185 = vsel %vm1963, %v2157, %v1159
        %v2186 = vsel %vm1963, %v2158, %v1764
        %v2187 = vsel %vm1963, %v2159, %v1765
        %v2188 = vrot.slane %v539, 7
        %v2189 = vrot.slane %v541, 7
        %2190 = vrot.lane.b32.xlu0 %v1319, 127
        %v2191 = vpop.permute.xlu0 %2190
        %2192 = vrot.lane.b32.xlu0 %v2188, 127
        %v2193 = vpop.permute.xlu0 %2192
        %2194 = vrot.lane.b32.xlu0 %v2189, 127
        %v2195 = vpop.permute.xlu0 %2194
        %v2199 = vrot.slane %v541, 6
        %2200 = vrot.lane.b32.xlu0 %v1404, 126
        %v2201 = vpop.permute.xlu0 %2200
        %2202 = vrot.lane.b32.xlu0 %v1405, 126
        %v2203 = vpop.permute.xlu0 %2202
        %2204 = vrot.lane.b32.xlu0 %v2199, 126
        %v2205 = vpop.permute.xlu0 %2204
        %v2209 = vrot.slane %v541, 5
        %2210 = vrot.lane.b32.xlu0 %v1431, 125
        %v2211 = vpop.permute.xlu0 %2210
        %2212 = vrot.lane.b32.xlu0 %v1432, 125
        %v2213 = vpop.permute.xlu0 %2212
        %2214 = vrot.lane.b32.xlu0 %v2209, 125
        %v2215 = vpop.permute.xlu0 %2214
        %v2219 = vrot.slane %v541, 4
        %v2220 = vrot.slane %v543, 4
        %2221 = vrot.lane.b32.xlu0 %v871, 1
        %v2222 = vpop.permute.xlu0 %2221
        %2223 = vrot.lane.b32.xlu0 %v872, 1
        %v2224 = vpop.permute.xlu0 %2223
        %2225 = vrot.lane.b32.xlu0 %v873, 1
        %v2226 = vpop.permute.xlu0 %2225
        %2227 = vrot.lane.b32.xlu0 %v874, 1
        %v2228 = vpop.permute.xlu0 %2227
        %2229 = vrot.lane.b32.xlu0 %v508, 1
        %v2230 = vpop.permute.xlu0 %2229
        %2231 = vrot.lane.b32.xlu0 %v875, 1
        %v2232 = vpop.permute.xlu0 %2231
        %2233 = vrot.lane.b32.xlu0 %v876, 1
        %v2234 = vpop.permute.xlu0 %2233
        %2235 = vrot.lane.b32.xlu0 %v877, 1
        %v2236 = vpop.permute.xlu0 %2235
        %2237 = vrot.lane.b32.xlu0 %v878, 1
        %v2238 = vpop.permute.xlu0 %2237
        %2239 = vrot.lane.b32.xlu0 %v879, 1
        %v2240 = vpop.permute.xlu0 %2239
        %2241 = vrot.lane.b32.xlu0 %v880, 1
        %v2242 = vpop.permute.xlu0 %2241
        %2243 = vrot.lane.b32.xlu0 %v881, 1
        %v2244 = vpop.permute.xlu0 %2243
        %2245 = vrot.lane.b32.xlu0 %v522, 1
        %v2246 = vpop.permute.xlu0 %2245
        %2247 = vrot.lane.b32.xlu0 %v882, 1
        %v2248 = vpop.permute.xlu0 %2247
        %2249 = vrot.lane.b32.xlu0 %v883, 1
        %v2250 = vpop.permute.xlu0 %2249
        %2251 = vrot.lane.b32.xlu0 %v884, 1
        %v2252 = vpop.permute.xlu0 %2251
        %2253 = vrot.lane.b32.xlu0 %v885, 1
        %v2254 = vpop.permute.xlu0 %2253
        %2255 = vrot.lane.b32.xlu0 %v886, 1
        %v2256 = vpop.permute.xlu0 %2255
        %2257 = vrot.lane.b32.xlu0 %v887, 1
        %v2258 = vpop.permute.xlu0 %2257
        %2259 = vrot.lane.b32.xlu0 %v888, 1
        %v2260 = vpop.permute.xlu0 %2259
        %2261 = vrot.lane.b32.xlu0 %v537, 1
        %v2262 = vpop.permute.xlu0 %2261
        %2263 = vrot.lane.b32.xlu0 %v889, 1
        %v2264 = vpop.permute.xlu0 %2263
        %2265 = vrot.lane.b32.xlu0 %v890, 1
        %v2266 = vpop.permute.xlu0 %2265
        %2267 = vrot.lane.b32.xlu0 %v891, 1
        %v2268 = vpop.permute.xlu0 %2267
        %2269 = vrot.lane.b32.xlu0 %v1517, 1
        %v2270 = vpop.permute.xlu0 %2269
        %2271 = vrot.lane.b32.xlu0 %v1518, 1
        %v2272 = vpop.permute.xlu0 %2271
        %2273 = vrot.lane.b32.xlu0 %v2219, 1
        %v2274 = vpop.permute.xlu0 %2273
        %2275 = vrot.lane.b32.xlu0 %v2220, 1
        %v2276 = vpop.permute.xlu0 %2275
        %v2305 = vrot.slane %v541, 3
        %v2306 = vrot.slane %v543, 3
        %v2310 = vrot.slane %v541, 2
        %v2311 = vrot.slane %v543, 2
        %2312 = vrot.lane.b32.xlu0 %v1679, 127
        %v2313 = vpop.permute.xlu0 %2312
        %2314 = vrot.lane.b32.xlu0 %v2310, 127
        %v2315 = vpop.permute.xlu0 %2314
        %2316 = vrot.lane.b32.xlu0 %v2311, 127
        %v2317 = vpop.permute.xlu0 %2316
        %v2321 = vrot.slane %v543, 1
        %2322 = vrot.lane.b32.xlu0 %v1764, 126
        %v2323 = vpop.permute.xlu0 %2322
        %2324 = vrot.lane.b32.xlu0 %v1765, 126
        %v2325 = vpop.permute.xlu0 %2324
        %2326 = vrot.lane.b32.xlu0 %v2321, 126
        %v2327 = vpop.permute.xlu0 %2326
        %2331 = vrot.lane.b32.xlu0 %v541, 125
        %v2332 = vpop.permute.xlu0 %2331
        %2333 = vrot.lane.b32.xlu0 %v543, 125
        %v2334 = vpop.permute.xlu0 %2333
        %v2335 = vsel %vm1791, %v537, %v2191
        %v2336 = vsel %vm1791, %v539, %v2193
        %v2337 = vsel %vm1791, %v541, %v2195
        %v2338 = vsel %vm472, %v2335, %v2201
        %v2339 = vsel %vm472, %v2336, %v2203
        %v2340 = vsel %vm472, %v2337, %v2205
        %v2341 = vsel %vm1848, %v2338, %v2211
        %v2342 = vsel %vm1848, %v2339, %v2213
        %v2343 = vsel %vm1848, %v2340, %v2215
        %v2344 = vsel %vm1877, %v1852, %v2222
        %v2345 = vsel %vm1877, %v1853, %v2224
        %v2346 = vsel %vm1877, %v1854, %v2226
        %v2347 = vsel %vm1877, %v1855, %v2228
        %v2348 = vsel %vm1877, %v1856, %v2230
        %v2349 = vsel %vm1877, %v1857, %v2232
        %v2350 = vsel %vm1877, %v1858, %v2234
        %v2351 = vsel %vm1877, %v1859, %v2236
        %v2352 = vsel %vm1877, %v1860, %v2238
        %v2353 = vsel %vm1877, %v1861, %v2240
        %v2354 = vsel %vm1877, %v1862, %v2242
        %v2355 = vsel %vm1877, %v1863, %v2244
        %v2356 = vsel %vm1877, %v1864, %v2246
        %v2357 = vsel %vm1877, %v1865, %v2248
        %v2358 = vsel %vm1877, %v1866, %v2250
        %v2359 = vsel %vm1877, %v1867, %v2252
        %v2360 = vsel %vm1877, %v1868, %v2254
        %v2361 = vsel %vm1877, %v1869, %v2256
        %v2362 = vsel %vm1877, %v1870, %v2258
        %v2363 = vsel %vm1877, %v1871, %v2260
        %v2364 = vsel %vm1877, %v1872, %v2262
        %v2365 = vsel %vm1877, %v1873, %v2264
        %v2366 = vsel %vm1877, %v1874, %v2266
        %v2367 = vsel %vm1877, %v1875, %v2268
        %v2368 = vsel %vm1877, %v1876, %v2270
        %v2369 = vsel %vm1877, %v2341, %v2272
        %v2370 = vsel %vm1877, %v2342, %v2274
        %v2371 = vsel %vm1877, %v2343, %v2276
        %v2372 = vsel %vm1906, %v2344, %v979
        %v2373 = vsel %vm1906, %v2345, %v980
        %v2374 = vsel %vm1906, %v2346, %v981
        %v2375 = vsel %vm1906, %v2347, %v982
        %v2376 = vsel %vm1906, %v2348, %v506
        %v2377 = vsel %vm1906, %v2349, %v983
        %v2378 = vsel %vm1906, %v2350, %v984
        %v2379 = vsel %vm1906, %v2351, %v985
        %v2380 = vsel %vm1906, %v2352, %v986
        %v2381 = vsel %vm1906, %v2353, %v987
        %v2382 = vsel %vm1906, %v2354, %v988
        %v2383 = vsel %vm1906, %v2355, %v989
        %v2384 = vsel %vm1906, %v2356, %v520
        %v2385 = vsel %vm1906, %v2357, %v990
        %v2386 = vsel %vm1906, %v2358, %v991
        %v2387 = vsel %vm1906, %v2359, %v992
        %v2388 = vsel %vm1906, %v2360, %v993
        %v2389 = vsel %vm1906, %v2361, %v994
        %v2390 = vsel %vm1906, %v2362, %v995
        %v2391 = vsel %vm1906, %v2363, %v996
        %v2392 = vsel %vm1906, %v2364, %v535
        %v2393 = vsel %vm1906, %v2365, %v997
        %v2394 = vsel %vm1906, %v2366, %v998
        %v2395 = vsel %vm1906, %v2367, %v999
        %v2396 = vsel %vm1906, %v2368, %v1000
        %v2397 = vsel %vm1906, %v2369, %v1603
        %v2398 = vsel %vm1906, %v2370, %v2305
        %v2399 = vsel %vm1906, %v2371, %v2306
        %v2400 = vsel %vm485, %v2372, %v1058
        %v2401 = vsel %vm485, %v2373, %v1060
        %v2402 = vsel %vm485, %v2374, %v1062
        %v2403 = vsel %vm485, %v2375, %v1064
        %v2404 = vsel %vm485, %v2376, %v1066
        %v2405 = vsel %vm485, %v2377, %v1068
        %v2406 = vsel %vm485, %v2378, %v1070
        %v2407 = vsel %vm485, %v2379, %v1072
        %v2408 = vsel %vm485, %v2380, %v1074
        %v2409 = vsel %vm485, %v2381, %v1076
        %v2410 = vsel %vm485, %v2382, %v1078
        %v2411 = vsel %vm485, %v2383, %v1080
        %v2412 = vsel %vm485, %v2384, %v1082
        %v2413 = vsel %vm485, %v2385, %v1084
        %v2414 = vsel %vm485, %v2386, %v1086
        %v2415 = vsel %vm485, %v2387, %v1088
        %v2416 = vsel %vm485, %v2388, %v1090
        %v2417 = vsel %vm485, %v2389, %v1092
        %v2418 = vsel %vm485, %v2390, %v1094
        %v2419 = vsel %vm485, %v2391, %v1096
        %v2420 = vsel %vm485, %v2392, %v1098
        %v2421 = vsel %vm485, %v2393, %v1100
        %v2422 = vsel %vm485, %v2394, %v1102
        %v2423 = vsel %vm485, %v2395, %v1104
        %v2424 = vsel %vm485, %v2396, %v1106
        %v2425 = vsel %vm485, %v2397, %v2313
        %v2426 = vsel %vm485, %v2398, %v2315
        %v2427 = vsel %vm485, %v2399, %v2317
        %v2428 = vsel %vm1963, %v2400, %v1167
        %v2429 = vsel %vm1963, %v2401, %v1169
        %v2430 = vsel %vm1963, %v2402, %v1171
        %v2431 = vsel %vm1963, %v2403, %v1173
        %v2432 = vsel %vm1963, %v2404, %v1175
        %v2433 = vsel %vm1963, %v2405, %v1177
        %v2434 = vsel %vm1963, %v2406, %v1179
        %v2435 = vsel %vm1963, %v2407, %v1181
        %v2436 = vsel %vm1963, %v2408, %v1183
        %v2437 = vsel %vm1963, %v2409, %v1185
        %v2438 = vsel %vm1963, %v2410, %v1187
        %v2439 = vsel %vm1963, %v2411, %v1189
        %v2440 = vsel %vm1963, %v2412, %v1191
        %v2441 = vsel %vm1963, %v2413, %v1193
        %v2442 = vsel %vm1963, %v2414, %v1195
        %v2443 = vsel %vm1963, %v2415, %v1197
        %v2444 = vsel %vm1963, %v2416, %v1199
        %v2445 = vsel %vm1963, %v2417, %v1201
        %v2446 = vsel %vm1963, %v2418, %v1203
        %v2447 = vsel %vm1963, %v2419, %v1205
        %v2448 = vsel %vm1963, %v2420, %v1207
        %v2449 = vsel %vm1963, %v2421, %v1209
        %v2450 = vsel %vm1963, %v2422, %v1211
        %v2451 = vsel %vm1963, %v2423, %v1213
        %v2452 = vsel %vm1963, %v2424, %v1215
        %v2453 = vsel %vm1963, %v2425, %v2323
        %v2454 = vsel %vm1963, %v2426, %v2325
        %v2455 = vsel %vm1963, %v2427, %v2327
        %2484 = vrot.lane.b32.xlu0 %v2428, 127
        %v2485 = vpop.permute.xlu0 %2484
        %2486 = vrot.lane.b32.xlu0 %v1251, 127
        %v2487 = vpop.permute.xlu0 %2486
        %2488 = vrot.lane.b32.xlu0 %v2429, 127
        %v2489 = vpop.permute.xlu0 %2488
        %2490 = vrot.lane.b32.xlu0 %v785, 127
        %v2491 = vpop.permute.xlu0 %2490
        %2492 = vrot.lane.b32.xlu0 %v2430, 127
        %v2493 = vpop.permute.xlu0 %2492
        %2494 = vrot.lane.b32.xlu0 %v1253, 127
        %v2495 = vpop.permute.xlu0 %2494
        %2496 = vrot.lane.b32.xlu0 %v2431, 127
        %v2497 = vpop.permute.xlu0 %2496
        %2498 = vrot.lane.b32.xlu0 %v1255, 127
        %v2499 = vpop.permute.xlu0 %2498
        %2500 = vrot.lane.b32.xlu0 %v2432, 127
        %v2501 = vpop.permute.xlu0 %2500
        %2502 = vrot.lane.b32.xlu0 %v1257, 127
        %v2503 = vpop.permute.xlu0 %2502
        %2504 = vrot.lane.b32.xlu0 %v2433, 127
        %v2505 = vpop.permute.xlu0 %2504
        %2506 = vrot.lane.b32.xlu0 %v1259, 127
        %v2507 = vpop.permute.xlu0 %2506
        %2508 = vrot.lane.b32.xlu0 %v2434, 127
        %v2509 = vpop.permute.xlu0 %2508
        %2510 = vrot.lane.b32.xlu0 %v1261, 127
        %v2511 = vpop.permute.xlu0 %2510
        %2512 = vrot.lane.b32.xlu0 %v2435, 127
        %v2513 = vpop.permute.xlu0 %2512
        %2514 = vrot.lane.b32.xlu0 %v1263, 127
        %v2515 = vpop.permute.xlu0 %2514
        %2516 = vrot.lane.b32.xlu0 %v2436, 127
        %v2517 = vpop.permute.xlu0 %2516
        %2518 = vrot.lane.b32.xlu0 %v1265, 127
        %v2519 = vpop.permute.xlu0 %2518
        %2520 = vrot.lane.b32.xlu0 %v2437, 127
        %v2521 = vpop.permute.xlu0 %2520
        %2522 = vrot.lane.b32.xlu0 %v801, 127
        %v2523 = vpop.permute.xlu0 %2522
        %2524 = vrot.lane.b32.xlu0 %v2438, 127
        %v2525 = vpop.permute.xlu0 %2524
        %2526 = vrot.lane.b32.xlu0 %v1267, 127
        %v2527 = vpop.permute.xlu0 %2526
        %2528 = vrot.lane.b32.xlu0 %v2439, 127
        %v2529 = vpop.permute.xlu0 %2528
        %2530 = vrot.lane.b32.xlu0 %v1269, 127
        %v2531 = vpop.permute.xlu0 %2530
        %2532 = vrot.lane.b32.xlu0 %v2440, 127
        %v2533 = vpop.permute.xlu0 %2532
        %2534 = vrot.lane.b32.xlu0 %v1271, 127
        %v2535 = vpop.permute.xlu0 %2534
        %2536 = vrot.lane.b32.xlu0 %v2441, 127
        %v2537 = vpop.permute.xlu0 %2536
        %2538 = vrot.lane.b32.xlu0 %v1273, 127
        %v2539 = vpop.permute.xlu0 %2538
        %2540 = vrot.lane.b32.xlu0 %v2442, 127
        %v2541 = vpop.permute.xlu0 %2540
        %2542 = vrot.lane.b32.xlu0 %v1275, 127
        %v2543 = vpop.permute.xlu0 %2542
        %2544 = vrot.lane.b32.xlu0 %v2443, 127
        %v2545 = vpop.permute.xlu0 %2544
        %2546 = vrot.lane.b32.xlu0 %v1277, 127
        %v2547 = vpop.permute.xlu0 %2546
        %2548 = vrot.lane.b32.xlu0 %v2444, 127
        %v2549 = vpop.permute.xlu0 %2548
        %2550 = vrot.lane.b32.xlu0 %v1279, 127
        %v2551 = vpop.permute.xlu0 %2550
        %2552 = vrot.lane.b32.xlu0 %v2445, 127
        %v2553 = vpop.permute.xlu0 %2552
        %2554 = vrot.lane.b32.xlu0 %v817, 127
        %v2555 = vpop.permute.xlu0 %2554
        %2556 = vrot.lane.b32.xlu0 %v2446, 127
        %v2557 = vpop.permute.xlu0 %2556
        %2558 = vrot.lane.b32.xlu0 %v1281, 127
        %v2559 = vpop.permute.xlu0 %2558
        %2560 = vrot.lane.b32.xlu0 %v2447, 127
        %v2561 = vpop.permute.xlu0 %2560
        %2562 = vrot.lane.b32.xlu0 %v1283, 127
        %v2563 = vpop.permute.xlu0 %2562
        %2564 = vrot.lane.b32.xlu0 %v2448, 127
        %v2565 = vpop.permute.xlu0 %2564
        %2566 = vrot.lane.b32.xlu0 %v1285, 127
        %v2567 = vpop.permute.xlu0 %2566
        %2568 = vrot.lane.b32.xlu0 %v2449, 127
        %v2569 = vpop.permute.xlu0 %2568
        %2570 = vrot.lane.b32.xlu0 %v1287, 127
        %v2571 = vpop.permute.xlu0 %2570
        %2572 = vrot.lane.b32.xlu0 %v2450, 127
        %v2573 = vpop.permute.xlu0 %2572
        %2574 = vrot.lane.b32.xlu0 %v1289, 127
        %v2575 = vpop.permute.xlu0 %2574
        %2576 = vrot.lane.b32.xlu0 %v2451, 127
        %v2577 = vpop.permute.xlu0 %2576
        %2578 = vrot.lane.b32.xlu0 %v1291, 127
        %v2579 = vpop.permute.xlu0 %2578
        %2580 = vrot.lane.b32.xlu0 %v2452, 127
        %v2581 = vpop.permute.xlu0 %2580
        %2582 = vrot.lane.b32.xlu0 %v1293, 127
        %v2583 = vpop.permute.xlu0 %2582
        %2584 = vrot.lane.b32.xlu0 %v2453, 127
        %v2585 = vpop.permute.xlu0 %2584
        %2586 = vrot.lane.b32.xlu0 %v833, 127
        %v2587 = vpop.permute.xlu0 %2586
        %2588 = vrot.lane.b32.xlu0 %v2454, 127
        %v2589 = vpop.permute.xlu0 %2588
        %2590 = vrot.lane.b32.xlu0 %v2332, 127
        %v2591 = vpop.permute.xlu0 %2590
        %2592 = vrot.lane.b32.xlu0 %v2455, 127
        %v2593 = vpop.permute.xlu0 %2592
        %2594 = vrot.lane.b32.xlu0 %v2334, 127
        %v2595 = vpop.permute.xlu0 %2594
        %v2624 = vld [vmem:[%s1] sm:$0x3f]
        %v2625 = vld [vmem:[%s2] sm:$0x3f]
        %2627 = vset.pattern.permute.xlu0 0
        %2628 = vperm.xlu0 %2627, %v2625
        %v2629 = vpop.permute.xlu0 %2628
        %vm2631 = vcmask 203776
        %v2633 = vsel %vm2631, %v2624, 0
        %v2635 = vsel %vm1791, %v2487, 0
        %2637 = vmatpush.msra.mxu0 0.0
        %2638 = vmatpush.msra.mxu0 0.0
        %2639 = vmatpush.msra.mxu0 0.0
        %2640 = vmatpush.msra.mxu0 0.0
        %2641 = vmatpush.msra.mxu0 0.0
        %2642 = vmatpush.msra.mxu0 0.0
        %2643 = vmatpush.msra.mxu0 0.0
        %2644 = vmatpush.msra.mxu0 0.0
        %2645 = vmatpush.msra.mxu0 0.0
        %2646 = vmatpush.msra.mxu0 0.0
        %2647 = vmatpush.msra.mxu0 0.0
        %2648 = vmatpush.msra.mxu0 0.0
        %2649 = vmatpush.msra.mxu0 %v2635
        %2650 = vmatpush.msra.mxu0 %v2485
        %2651 = vmatpush.msra.mxu0 %v2160
        %2652 = vmatpush.msra.mxu0 %v1964
        %2653 = vmatmul.f32.gmra.mxu0 %v2633
        %v2654 = vpop.f32.mrf.mxu0
        %v2655 = vadd.f32 %v2629, %v2654
        %2656 = vdwg.mxu0
        %v2657 = vsel %vm1791, %v2491, 0
        %2659 = vmatpush.msra.mxu0 0.0
        %2660 = vmatpush.msra.mxu0 0.0
        %2661 = vmatpush.msra.mxu0 0.0
        %2662 = vmatpush.msra.mxu0 0.0
        %2663 = vmatpush.msra.mxu0 0.0
        %2664 = vmatpush.msra.mxu0 0.0
        %2665 = vmatpush.msra.mxu0 0.0
        %2666 = vmatpush.msra.mxu0 0.0
        %2667 = vmatpush.msra.mxu0 0.0
        %2668 = vmatpush.msra.mxu0 0.0
        %2669 = vmatpush.msra.mxu0 0.0
        %2670 = vmatpush.msra.mxu0 0.0
        %2671 = vmatpush.msra.mxu0 %v2657
        %2672 = vmatpush.msra.mxu0 %v2489
        %2673 = vmatpush.msra.mxu0 %v2161
        %2674 = vmatpush.msra.mxu0 %v1965
        %2675 = vmatmul.f32.gmra.mxu0 %v2633
        %v2676 = vpop.f32.mrf.mxu0
        %v2677 = vadd.f32 %v2629, %v2676
        %2678 = vdwg.mxu0
        %v2679 = vsel %vm1791, %v2495, 0
        %2681 = vmatpush.msra.mxu0 0.0
        %2682 = vmatpush.msra.mxu0 0.0
        %2683 = vmatpush.msra.mxu0 0.0
        %2684 = vmatpush.msra.mxu0 0.0
        %2685 = vmatpush.msra.mxu0 0.0
        %2686 = vmatpush.msra.mxu0 0.0
        %2687 = vmatpush.msra.mxu0 0.0
        %2688 = vmatpush.msra.mxu0 0.0
        %2689 = vmatpush.msra.mxu0 0.0
        %2690 = vmatpush.msra.mxu0 0.0
        %2691 = vmatpush.msra.mxu0 0.0
        %2692 = vmatpush.msra.mxu0 0.0
        %2693 = vmatpush.msra.mxu0 %v2679
        %2694 = vmatpush.msra.mxu0 %v2493
        %2695 = vmatpush.msra.mxu0 %v2162
        %2696 = vmatpush.msra.mxu0 %v1966
        %2697 = vmatmul.f32.gmra.mxu0 %v2633
        %v2698 = vpop.f32.mrf.mxu0
        %v2699 = vadd.f32 %v2629, %v2698
        %2700 = vdwg.mxu0
        %v2701 = vsel %vm1791, %v2499, 0
        %2703 = vmatpush.msra.mxu0 0.0
        %2704 = vmatpush.msra.mxu0 0.0
        %2705 = vmatpush.msra.mxu0 0.0
        %2706 = vmatpush.msra.mxu0 0.0
        %2707 = vmatpush.msra.mxu0 0.0
        %2708 = vmatpush.msra.mxu0 0.0
        %2709 = vmatpush.msra.mxu0 0.0
        %2710 = vmatpush.msra.mxu0 0.0
        %2711 = vmatpush.msra.mxu0 0.0
        %2712 = vmatpush.msra.mxu0 0.0
        %2713 = vmatpush.msra.mxu0 0.0
        %2714 = vmatpush.msra.mxu0 0.0
        %2715 = vmatpush.msra.mxu0 %v2701
        %2716 = vmatpush.msra.mxu0 %v2497
        %2717 = vmatpush.msra.mxu0 %v2163
        %2718 = vmatpush.msra.mxu0 %v1967
        %2719 = vmatmul.f32.gmra.mxu0 %v2633
        %v2720 = vpop.f32.mrf.mxu0
        %v2721 = vadd.f32 %v2629, %v2720
        %2722 = vdwg.mxu0
        %v2723 = vsel %vm1791, %v2503, 0
        %2725 = vmatpush.msra.mxu0 0.0
        %2726 = vmatpush.msra.mxu0 0.0
        %2727 = vmatpush.msra.mxu0 0.0
        %2728 = vmatpush.msra.mxu0 0.0
        %2729 = vmatpush.msra.mxu0 0.0
        %2730 = vmatpush.msra.mxu0 0.0
        %2731 = vmatpush.msra.mxu0 0.0
        %2732 = vmatpush.msra.mxu0 0.0
        %2733 = vmatpush.msra.mxu0 0.0
        %2734 = vmatpush.msra.mxu0 0.0
        %2735 = vmatpush.msra.mxu0 0.0
        %2736 = vmatpush.msra.mxu0 0.0
        %2737 = vmatpush.msra.mxu0 %v2723
        %2738 = vmatpush.msra.mxu0 %v2501
        %2739 = vmatpush.msra.mxu0 %v2164
        %2740 = vmatpush.msra.mxu0 %v1968
        %2741 = vmatmul.f32.gmra.mxu0 %v2633
        %v2742 = vpop.f32.mrf.mxu0
        %v2743 = vadd.f32 %v2629, %v2742
        %2744 = vdwg.mxu0
        %v2745 = vsel %vm1791, %v2507, 0
        %2747 = vmatpush.msra.mxu0 0.0
        %2748 = vmatpush.msra.mxu0 0.0
        %2749 = vmatpush.msra.mxu0 0.0
        %2750 = vmatpush.msra.mxu0 0.0
        %2751 = vmatpush.msra.mxu0 0.0
        %2752 = vmatpush.msra.mxu0 0.0
        %2753 = vmatpush.msra.mxu0 0.0
        %2754 = vmatpush.msra.mxu0 0.0
        %2755 = vmatpush.msra.mxu0 0.0
        %2756 = vmatpush.msra.mxu0 0.0
        %2757 = vmatpush.msra.mxu0 0.0
        %2758 = vmatpush.msra.mxu0 0.0
        %2759 = vmatpush.msra.mxu0 %v2745
        %2760 = vmatpush.msra.mxu0 %v2505
        %2761 = vmatpush.msra.mxu0 %v2165
        %2762 = vmatpush.msra.mxu0 %v1969
        %2763 = vmatmul.f32.gmra.mxu0 %v2633
        %v2764 = vpop.f32.mrf.mxu0
        %v2765 = vadd.f32 %v2629, %v2764
        %2766 = vdwg.mxu0
        %v2767 = vsel %vm1791, %v2511, 0
        %2769 = vmatpush.msra.mxu0 0.0
        %2770 = vmatpush.msra.mxu0 0.0
        %2771 = vmatpush.msra.mxu0 0.0
        %2772 = vmatpush.msra.mxu0 0.0
        %2773 = vmatpush.msra.mxu0 0.0
        %2774 = vmatpush.msra.mxu0 0.0
        %2775 = vmatpush.msra.mxu0 0.0
        %2776 = vmatpush.msra.mxu0 0.0
        %2777 = vmatpush.msra.mxu0 0.0
        %2778 = vmatpush.msra.mxu0 0.0
        %2779 = vmatpush.msra.mxu0 0.0
        %2780 = vmatpush.msra.mxu0 0.0
        %2781 = vmatpush.msra.mxu0 %v2767
        %2782 = vmatpush.msra.mxu0 %v2509
        %2783 = vmatpush.msra.mxu0 %v2166
        %2784 = vmatpush.msra.mxu0 %v1970
        %2785 = vmatmul.f32.gmra.mxu0 %v2633
        %v2786 = vpop.f32.mrf.mxu0
        %v2787 = vadd.f32 %v2629, %v2786
        %2788 = vdwg.mxu0
        %v2789 = vsel %vm1791, %v2515, 0
        %2791 = vmatpush.msra.mxu0 0.0
        %2792 = vmatpush.msra.mxu0 0.0
        %2793 = vmatpush.msra.mxu0 0.0
        %2794 = vmatpush.msra.mxu0 0.0
        %2795 = vmatpush.msra.mxu0 0.0
        %2796 = vmatpush.msra.mxu0 0.0
        %2797 = vmatpush.msra.mxu0 0.0
        %2798 = vmatpush.msra.mxu0 0.0
        %2799 = vmatpush.msra.mxu0 0.0
        %2800 = vmatpush.msra.mxu0 0.0
        %2801 = vmatpush.msra.mxu0 0.0
        %2802 = vmatpush.msra.mxu0 0.0
        %2803 = vmatpush.msra.mxu0 %v2789
        %2804 = vmatpush.msra.mxu0 %v2513
        %2805 = vmatpush.msra.mxu0 %v2167
        %2806 = vmatpush.msra.mxu0 %v1971
        %2807 = vmatmul.f32.gmra.mxu0 %v2633
        %v2808 = vpop.f32.mrf.mxu0
        %v2809 = vadd.f32 %v2629, %v2808
        %2810 = vdwg.mxu0
        %v2811 = vsel %vm1791, %v2519, 0
        %2813 = vmatpush.msra.mxu0 0.0
        %2814 = vmatpush.msra.mxu0 0.0
        %2815 = vmatpush.msra.mxu0 0.0
        %2816 = vmatpush.msra.mxu0 0.0
        %2817 = vmatpush.msra.mxu0 0.0
        %2818 = vmatpush.msra.mxu0 0.0
        %2819 = vmatpush.msra.mxu0 0.0
        %2820 = vmatpush.msra.mxu0 0.0
        %2821 = vmatpush.msra.mxu0 0.0
        %2822 = vmatpush.msra.mxu0 0.0
        %2823 = vmatpush.msra.mxu0 0.0
        %2824 = vmatpush.msra.mxu0 0.0
        %2825 = vmatpush.msra.mxu0 %v2811
        %2826 = vmatpush.msra.mxu0 %v2517
        %2827 = vmatpush.msra.mxu0 %v2168
        %2828 = vmatpush.msra.mxu0 %v1972
        %2829 = vmatmul.f32.gmra.mxu0 %v2633
        %v2830 = vpop.f32.mrf.mxu0
        %v2831 = vadd.f32 %v2629, %v2830
        %2832 = vdwg.mxu0
        %v2833 = vsel %vm1791, %v2523, 0
        %2835 = vmatpush.msra.mxu0 0.0
        %2836 = vmatpush.msra.mxu0 0.0
        %2837 = vmatpush.msra.mxu0 0.0
        %2838 = vmatpush.msra.mxu0 0.0
        %2839 = vmatpush.msra.mxu0 0.0
        %2840 = vmatpush.msra.mxu0 0.0
        %2841 = vmatpush.msra.mxu0 0.0
        %2842 = vmatpush.msra.mxu0 0.0
        %2843 = vmatpush.msra.mxu0 0.0
        %2844 = vmatpush.msra.mxu0 0.0
        %2845 = vmatpush.msra.mxu0 0.0
        %2846 = vmatpush.msra.mxu0 0.0
        %2847 = vmatpush.msra.mxu0 %v2833
        %2848 = vmatpush.msra.mxu0 %v2521
        %2849 = vmatpush.msra.mxu0 %v2169
        %2850 = vmatpush.msra.mxu0 %v1973
        %2851 = vmatmul.f32.gmra.mxu0 %v2633
        %v2852 = vpop.f32.mrf.mxu0
        %v2853 = vadd.f32 %v2629, %v2852
        %2854 = vdwg.mxu0
        %v2855 = vsel %vm1791, %v2527, 0
        %2857 = vmatpush.msra.mxu0 0.0
        %2858 = vmatpush.msra.mxu0 0.0
        %2859 = vmatpush.msra.mxu0 0.0
        %2860 = vmatpush.msra.mxu0 0.0
        %2861 = vmatpush.msra.mxu0 0.0
        %2862 = vmatpush.msra.mxu0 0.0
        %2863 = vmatpush.msra.mxu0 0.0
        %2864 = vmatpush.msra.mxu0 0.0
        %2865 = vmatpush.msra.mxu0 0.0
        %2866 = vmatpush.msra.mxu0 0.0
        %2867 = vmatpush.msra.mxu0 0.0
        %2868 = vmatpush.msra.mxu0 0.0
        %2869 = vmatpush.msra.mxu0 %v2855
        %2870 = vmatpush.msra.mxu0 %v2525
        %2871 = vmatpush.msra.mxu0 %v2170
        %2872 = vmatpush.msra.mxu0 %v1974
        %2873 = vmatmul.f32.gmra.mxu0 %v2633
        %v2874 = vpop.f32.mrf.mxu0
        %v2875 = vadd.f32 %v2629, %v2874
        %2876 = vdwg.mxu0
        %v2877 = vsel %vm1791, %v2531, 0
        %2879 = vmatpush.msra.mxu0 0.0
        %2880 = vmatpush.msra.mxu0 0.0
        %2881 = vmatpush.msra.mxu0 0.0
        %2882 = vmatpush.msra.mxu0 0.0
        %2883 = vmatpush.msra.mxu0 0.0
        %2884 = vmatpush.msra.mxu0 0.0
        %2885 = vmatpush.msra.mxu0 0.0
        %2886 = vmatpush.msra.mxu0 0.0
        %2887 = vmatpush.msra.mxu0 0.0
        %2888 = vmatpush.msra.mxu0 0.0
        %2889 = vmatpush.msra.mxu0 0.0
        %2890 = vmatpush.msra.mxu0 0.0
        %2891 = vmatpush.msra.mxu0 %v2877
        %2892 = vmatpush.msra.mxu0 %v2529
        %2893 = vmatpush.msra.mxu0 %v2171
        %2894 = vmatpush.msra.mxu0 %v1975
        %2895 = vmatmul.f32.gmra.mxu0 %v2633
        %v2896 = vpop.f32.mrf.mxu0
        %v2897 = vadd.f32 %v2629, %v2896
        %2898 = vdwg.mxu0
        %v2899 = vsel %vm1791, %v2535, 0
        %2901 = vmatpush.msra.mxu0 0.0
        %2902 = vmatpush.msra.mxu0 0.0
        %2903 = vmatpush.msra.mxu0 0.0
        %2904 = vmatpush.msra.mxu0 0.0
        %2905 = vmatpush.msra.mxu0 0.0
        %2906 = vmatpush.msra.mxu0 0.0
        %2907 = vmatpush.msra.mxu0 0.0
        %2908 = vmatpush.msra.mxu0 0.0
        %2909 = vmatpush.msra.mxu0 0.0
        %2910 = vmatpush.msra.mxu0 0.0
        %2911 = vmatpush.msra.mxu0 0.0
        %2912 = vmatpush.msra.mxu0 0.0
        %2913 = vmatpush.msra.mxu0 %v2899
        %2914 = vmatpush.msra.mxu0 %v2533
        %2915 = vmatpush.msra.mxu0 %v2172
        %2916 = vmatpush.msra.mxu0 %v1976
        %2917 = vmatmul.f32.gmra.mxu0 %v2633
        %v2918 = vpop.f32.mrf.mxu0
        %v2919 = vadd.f32 %v2629, %v2918
        %2920 = vdwg.mxu0
        %v2921 = vsel %vm1791, %v2539, 0
        %2923 = vmatpush.msra.mxu0 0.0
        %2924 = vmatpush.msra.mxu0 0.0
        %2925 = vmatpush.msra.mxu0 0.0
        %2926 = vmatpush.msra.mxu0 0.0
        %2927 = vmatpush.msra.mxu0 0.0
        %2928 = vmatpush.msra.mxu0 0.0
        %2929 = vmatpush.msra.mxu0 0.0
        %2930 = vmatpush.msra.mxu0 0.0
        %2931 = vmatpush.msra.mxu0 0.0
        %2932 = vmatpush.msra.mxu0 0.0
        %2933 = vmatpush.msra.mxu0 0.0
        %2934 = vmatpush.msra.mxu0 0.0
        %2935 = vmatpush.msra.mxu0 %v2921
        %2936 = vmatpush.msra.mxu0 %v2537
        %2937 = vmatpush.msra.mxu0 %v2173
        %2938 = vmatpush.msra.mxu0 %v1977
        %2939 = vmatmul.f32.gmra.mxu0 %v2633
        %v2940 = vpop.f32.mrf.mxu0
        %v2941 = vadd.f32 %v2629, %v2940
        %2942 = vdwg.mxu0
        %v2943 = vsel %vm1791, %v2543, 0
        %2945 = vmatpush.msra.mxu0 0.0
        %2946 = vmatpush.msra.mxu0 0.0
        %2947 = vmatpush.msra.mxu0 0.0
        %2948 = vmatpush.msra.mxu0 0.0
        %2949 = vmatpush.msra.mxu0 0.0
        %2950 = vmatpush.msra.mxu0 0.0
        %2951 = vmatpush.msra.mxu0 0.0
        %2952 = vmatpush.msra.mxu0 0.0
        %2953 = vmatpush.msra.mxu0 0.0
        %2954 = vmatpush.msra.mxu0 0.0
        %2955 = vmatpush.msra.mxu0 0.0
        %2956 = vmatpush.msra.mxu0 0.0
        %2957 = vmatpush.msra.mxu0 %v2943
        %2958 = vmatpush.msra.mxu0 %v2541
        %2959 = vmatpush.msra.mxu0 %v2174
        %2960 = vmatpush.msra.mxu0 %v1978
        %2961 = vmatmul.f32.gmra.mxu0 %v2633
        %v2962 = vpop.f32.mrf.mxu0
        %v2963 = vadd.f32 %v2629, %v2962
        %2964 = vdwg.mxu0
        %v2965 = vsel %vm1791, %v2547, 0
        %2967 = vmatpush.msra.mxu0 0.0
        %2968 = vmatpush.msra.mxu0 0.0
        %2969 = vmatpush.msra.mxu0 0.0
        %2970 = vmatpush.msra.mxu0 0.0
        %2971 = vmatpush.msra.mxu0 0.0
        %2972 = vmatpush.msra.mxu0 0.0
        %2973 = vmatpush.msra.mxu0 0.0
        %2974 = vmatpush.msra.mxu0 0.0
        %2975 = vmatpush.msra.mxu0 0.0
        %2976 = vmatpush.msra.mxu0 0.0
        %2977 = vmatpush.msra.mxu0 0.0
        %2978 = vmatpush.msra.mxu0 0.0
        %2979 = vmatpush.msra.mxu0 %v2965
        %2980 = vmatpush.msra.mxu0 %v2545
        %2981 = vmatpush.msra.mxu0 %v2175
        %2982 = vmatpush.msra.mxu0 %v1979
        %2983 = vmatmul.f32.gmra.mxu0 %v2633
        %v2984 = vpop.f32.mrf.mxu0
        %v2985 = vadd.f32 %v2629, %v2984
        %2986 = vdwg.mxu0
        %v2987 = vsel %vm1791, %v2551, 0
        %2989 = vmatpush.msra.mxu0 0.0
        %2990 = vmatpush.msra.mxu0 0.0
        %2991 = vmatpush.msra.mxu0 0.0
        %2992 = vmatpush.msra.mxu0 0.0
        %2993 = vmatpush.msra.mxu0 0.0
        %2994 = vmatpush.msra.mxu0 0.0
        %2995 = vmatpush.msra.mxu0 0.0
        %2996 = vmatpush.msra.mxu0 0.0
        %2997 = vmatpush.msra.mxu0 0.0
        %2998 = vmatpush.msra.mxu0 0.0
        %2999 = vmatpush.msra.mxu0 0.0
        %3000 = vmatpush.msra.mxu0 0.0
        %3001 = vmatpush.msra.mxu0 %v2987
        %3002 = vmatpush.msra.mxu0 %v2549
        %3003 = vmatpush.msra.mxu0 %v2176
        %3004 = vmatpush.msra.mxu0 %v1980
        %3005 = vmatmul.f32.gmra.mxu0 %v2633
        %v3006 = vpop.f32.mrf.mxu0
        %v3007 = vadd.f32 %v2629, %v3006
        %3008 = vdwg.mxu0
        %v3009 = vsel %vm1791, %v2555, 0
        %3011 = vmatpush.msra.mxu0 0.0
        %3012 = vmatpush.msra.mxu0 0.0
        %3013 = vmatpush.msra.mxu0 0.0
        %3014 = vmatpush.msra.mxu0 0.0
        %3015 = vmatpush.msra.mxu0 0.0
        %3016 = vmatpush.msra.mxu0 0.0
        %3017 = vmatpush.msra.mxu0 0.0
        %3018 = vmatpush.msra.mxu0 0.0
        %3019 = vmatpush.msra.mxu0 0.0
        %3020 = vmatpush.msra.mxu0 0.0
        %3021 = vmatpush.msra.mxu0 0.0
        %3022 = vmatpush.msra.mxu0 0.0
        %3023 = vmatpush.msra.mxu0 %v3009
        %3024 = vmatpush.msra.mxu0 %v2553
        %3025 = vmatpush.msra.mxu0 %v2177
        %3026 = vmatpush.msra.mxu0 %v1981
        %3027 = vmatmul.f32.gmra.mxu0 %v2633
        %v3028 = vpop.f32.mrf.mxu0
        %v3029 = vadd.f32 %v2629, %v3028
        %3030 = vdwg.mxu0
        %v3031 = vsel %vm1791, %v2559, 0
        %3033 = vmatpush.msra.mxu0 0.0
        %3034 = vmatpush.msra.mxu0 0.0
        %3035 = vmatpush.msra.mxu0 0.0
        %3036 = vmatpush.msra.mxu0 0.0
        %3037 = vmatpush.msra.mxu0 0.0
        %3038 = vmatpush.msra.mxu0 0.0
        %3039 = vmatpush.msra.mxu0 0.0
        %3040 = vmatpush.msra.mxu0 0.0
        %3041 = vmatpush.msra.mxu0 0.0
        %3042 = vmatpush.msra.mxu0 0.0
        %3043 = vmatpush.msra.mxu0 0.0
        %3044 = vmatpush.msra.mxu0 0.0
        %3045 = vmatpush.msra.mxu0 %v3031
        %3046 = vmatpush.msra.mxu0 %v2557
        %3047 = vmatpush.msra.mxu0 %v2178
        %3048 = vmatpush.msra.mxu0 %v1982
        %3049 = vmatmul.f32.gmra.mxu0 %v2633
        %v3050 = vpop.f32.mrf.mxu0
        %v3051 = vadd.f32 %v2629, %v3050
        %3052 = vdwg.mxu0
        %v3053 = vsel %vm1791, %v2563, 0
        %3055 = vmatpush.msra.mxu0 0.0
        %3056 = vmatpush.msra.mxu0 0.0
        %3057 = vmatpush.msra.mxu0 0.0
        %3058 = vmatpush.msra.mxu0 0.0
        %3059 = vmatpush.msra.mxu0 0.0
        %3060 = vmatpush.msra.mxu0 0.0
        %3061 = vmatpush.msra.mxu0 0.0
        %3062 = vmatpush.msra.mxu0 0.0
        %3063 = vmatpush.msra.mxu0 0.0
        %3064 = vmatpush.msra.mxu0 0.0
        %3065 = vmatpush.msra.mxu0 0.0
        %3066 = vmatpush.msra.mxu0 0.0
        %3067 = vmatpush.msra.mxu0 %v3053
        %3068 = vmatpush.msra.mxu0 %v2561
        %3069 = vmatpush.msra.mxu0 %v2179
        %3070 = vmatpush.msra.mxu0 %v1983
        %3071 = vmatmul.f32.gmra.mxu0 %v2633
        %v3072 = vpop.f32.mrf.mxu0
        %v3073 = vadd.f32 %v2629, %v3072
        %3074 = vdwg.mxu0
        %v3075 = vsel %vm1791, %v2567, 0
        %3077 = vmatpush.msra.mxu0 0.0
        %3078 = vmatpush.msra.mxu0 0.0
        %3079 = vmatpush.msra.mxu0 0.0
        %3080 = vmatpush.msra.mxu0 0.0
        %3081 = vmatpush.msra.mxu0 0.0
        %3082 = vmatpush.msra.mxu0 0.0
        %3083 = vmatpush.msra.mxu0 0.0
        %3084 = vmatpush.msra.mxu0 0.0
        %3085 = vmatpush.msra.mxu0 0.0
        %3086 = vmatpush.msra.mxu0 0.0
        %3087 = vmatpush.msra.mxu0 0.0
        %3088 = vmatpush.msra.mxu0 0.0
        %3089 = vmatpush.msra.mxu0 %v3075
        %3090 = vmatpush.msra.mxu0 %v2565
        %3091 = vmatpush.msra.mxu0 %v2180
        %3092 = vmatpush.msra.mxu0 %v1984
        %3093 = vmatmul.f32.gmra.mxu0 %v2633
        %v3094 = vpop.f32.mrf.mxu0
        %v3095 = vadd.f32 %v2629, %v3094
        %3096 = vdwg.mxu0
        %v3097 = vsel %vm1791, %v2571, 0
        %3099 = vmatpush.msra.mxu0 0.0
        %3100 = vmatpush.msra.mxu0 0.0
        %3101 = vmatpush.msra.mxu0 0.0
        %3102 = vmatpush.msra.mxu0 0.0
        %3103 = vmatpush.msra.mxu0 0.0
        %3104 = vmatpush.msra.mxu0 0.0
        %3105 = vmatpush.msra.mxu0 0.0
        %3106 = vmatpush.msra.mxu0 0.0
        %3107 = vmatpush.msra.mxu0 0.0
        %3108 = vmatpush.msra.mxu0 0.0
        %3109 = vmatpush.msra.mxu0 0.0
        %3110 = vmatpush.msra.mxu0 0.0
        %3111 = vmatpush.msra.mxu0 %v3097
        %3112 = vmatpush.msra.mxu0 %v2569
        %3113 = vmatpush.msra.mxu0 %v2181
        %3114 = vmatpush.msra.mxu0 %v1985
        %3115 = vmatmul.f32.gmra.mxu0 %v2633
        %v3116 = vpop.f32.mrf.mxu0
        %v3117 = vadd.f32 %v2629, %v3116
        %3118 = vdwg.mxu0
        %v3119 = vsel %vm1791, %v2575, 0
        %3121 = vmatpush.msra.mxu0 0.0
        %3122 = vmatpush.msra.mxu0 0.0
        %3123 = vmatpush.msra.mxu0 0.0
        %3124 = vmatpush.msra.mxu0 0.0
        %3125 = vmatpush.msra.mxu0 0.0
        %3126 = vmatpush.msra.mxu0 0.0
        %3127 = vmatpush.msra.mxu0 0.0
        %3128 = vmatpush.msra.mxu0 0.0
        %3129 = vmatpush.msra.mxu0 0.0
        %3130 = vmatpush.msra.mxu0 0.0
        %3131 = vmatpush.msra.mxu0 0.0
        %3132 = vmatpush.msra.mxu0 0.0
        %3133 = vmatpush.msra.mxu0 %v3119
        %3134 = vmatpush.msra.mxu0 %v2573
        %3135 = vmatpush.msra.mxu0 %v2182
        %3136 = vmatpush.msra.mxu0 %v1986
        %3137 = vmatmul.f32.gmra.mxu0 %v2633
        %v3138 = vpop.f32.mrf.mxu0
        %v3139 = vadd.f32 %v2629, %v3138
        %3140 = vdwg.mxu0
        %v3141 = vsel %vm1791, %v2579, 0
        %3143 = vmatpush.msra.mxu0 0.0
        %3144 = vmatpush.msra.mxu0 0.0
        %3145 = vmatpush.msra.mxu0 0.0
        %3146 = vmatpush.msra.mxu0 0.0
        %3147 = vmatpush.msra.mxu0 0.0
        %3148 = vmatpush.msra.mxu0 0.0
        %3149 = vmatpush.msra.mxu0 0.0
        %3150 = vmatpush.msra.mxu0 0.0
        %3151 = vmatpush.msra.mxu0 0.0
        %3152 = vmatpush.msra.mxu0 0.0
        %3153 = vmatpush.msra.mxu0 0.0
        %3154 = vmatpush.msra.mxu0 0.0
        %3155 = vmatpush.msra.mxu0 %v3141
        %3156 = vmatpush.msra.mxu0 %v2577
        %3157 = vmatpush.msra.mxu0 %v2183
        %3158 = vmatpush.msra.mxu0 %v1987
        %3159 = vmatmul.f32.gmra.mxu0 %v2633
        %v3160 = vpop.f32.mrf.mxu0
        %v3161 = vadd.f32 %v2629, %v3160
        %3162 = vdwg.mxu0
        %v3163 = vsel %vm1791, %v2583, 0
        %3165 = vmatpush.msra.mxu0 0.0
        %3166 = vmatpush.msra.mxu0 0.0
        %3167 = vmatpush.msra.mxu0 0.0
        %3168 = vmatpush.msra.mxu0 0.0
        %3169 = vmatpush.msra.mxu0 0.0
        %3170 = vmatpush.msra.mxu0 0.0
        %3171 = vmatpush.msra.mxu0 0.0
        %3172 = vmatpush.msra.mxu0 0.0
        %3173 = vmatpush.msra.mxu0 0.0
        %3174 = vmatpush.msra.mxu0 0.0
        %3175 = vmatpush.msra.mxu0 0.0
        %3176 = vmatpush.msra.mxu0 0.0
        %3177 = vmatpush.msra.mxu0 %v3163
        %3178 = vmatpush.msra.mxu0 %v2581
        %3179 = vmatpush.msra.mxu0 %v2184
        %3180 = vmatpush.msra.mxu0 %v1988
        %3181 = vmatmul.f32.gmra.mxu0 %v2633
        %v3182 = vpop.f32.mrf.mxu0
        %v3183 = vadd.f32 %v2629, %v3182
        %3184 = vdwg.mxu0
        %v3185 = vsel %vm1791, %v2587, 0
        %3187 = vmatpush.msra.mxu0 0.0
        %3188 = vmatpush.msra.mxu0 0.0
        %3189 = vmatpush.msra.mxu0 0.0
        %3190 = vmatpush.msra.mxu0 0.0
        %3191 = vmatpush.msra.mxu0 0.0
        %3192 = vmatpush.msra.mxu0 0.0
        %3193 = vmatpush.msra.mxu0 0.0
        %3194 = vmatpush.msra.mxu0 0.0
        %3195 = vmatpush.msra.mxu0 0.0
        %3196 = vmatpush.msra.mxu0 0.0
        %3197 = vmatpush.msra.mxu0 0.0
        %3198 = vmatpush.msra.mxu0 0.0
        %3199 = vmatpush.msra.mxu0 %v3185
        %3200 = vmatpush.msra.mxu0 %v2585
        %3201 = vmatpush.msra.mxu0 %v2185
        %3202 = vmatpush.msra.mxu0 %v1989
        %3203 = vmatmul.f32.gmra.mxu0 %v2633
        %v3204 = vpop.f32.mrf.mxu0
        %v3205 = vadd.f32 %v2629, %v3204
        %3206 = vdwg.mxu0
        %v3207 = vsel %vm1791, %v2591, 0
        %3209 = vmatpush.msra.mxu0 0.0
        %3210 = vmatpush.msra.mxu0 0.0
        %3211 = vmatpush.msra.mxu0 0.0
        %3212 = vmatpush.msra.mxu0 0.0
        %3213 = vmatpush.msra.mxu0 0.0
        %3214 = vmatpush.msra.mxu0 0.0
        %3215 = vmatpush.msra.mxu0 0.0
        %3216 = vmatpush.msra.mxu0 0.0
        %3217 = vmatpush.msra.mxu0 0.0
        %3218 = vmatpush.msra.mxu0 0.0
        %3219 = vmatpush.msra.mxu0 0.0
        %3220 = vmatpush.msra.mxu0 0.0
        %3221 = vmatpush.msra.mxu0 %v3207
        %3222 = vmatpush.msra.mxu0 %v2589
        %3223 = vmatpush.msra.mxu0 %v2186
        %3224 = vmatpush.msra.mxu0 %v1990
        %3225 = vmatmul.f32.gmra.mxu0 %v2633
        %v3226 = vpop.f32.mrf.mxu0
        %v3227 = vadd.f32 %v2629, %v3226
        %3228 = vdwg.mxu0
        %v3229 = vsel %vm1791, %v2595, 0
        %3231 = vmatpush.msra.mxu0 0.0
        %3232 = vmatpush.msra.mxu0 0.0
        %3233 = vmatpush.msra.mxu0 0.0
        %3234 = vmatpush.msra.mxu0 0.0
        %3235 = vmatpush.msra.mxu0 0.0
        %3236 = vmatpush.msra.mxu0 0.0
        %3237 = vmatpush.msra.mxu0 0.0
        %3238 = vmatpush.msra.mxu0 0.0
        %3239 = vmatpush.msra.mxu0 0.0
        %3240 = vmatpush.msra.mxu0 0.0
        %3241 = vmatpush.msra.mxu0 0.0
        %3242 = vmatpush.msra.mxu0 0.0
        %3243 = vmatpush.msra.mxu0 %v3229
        %3244 = vmatpush.msra.mxu0 %v2593
        %3245 = vmatpush.msra.mxu0 %v2187
        %3246 = vmatpush.msra.mxu0 %v1991
        %3247 = vmatmul.f32.gmra.mxu0 %v2633
        %v3248 = vpop.f32.mrf.mxu0
        %v3249 = vadd.f32 %v2629, %v3248
        %3250 = vdwg.mxu0
        %v3251 = vxor.u32 %v2655, 2147483648
        %v3252 = vxor.u32 %v2677, 2147483648
        %v3253 = vxor.u32 %v2699, 2147483648
        %v3254 = vxor.u32 %v2721, 2147483648
        %v3255 = vxor.u32 %v2743, 2147483648
        %v3256 = vxor.u32 %v2765, 2147483648
        %v3257 = vxor.u32 %v2787, 2147483648
        %v3258 = vxor.u32 %v2809, 2147483648
        %v3259 = vxor.u32 %v2831, 2147483648
        %v3260 = vxor.u32 %v2853, 2147483648
        %v3261 = vxor.u32 %v2875, 2147483648
        %v3262 = vxor.u32 %v2897, 2147483648
        %v3263 = vxor.u32 %v2919, 2147483648
        %v3264 = vxor.u32 %v2941, 2147483648
        %v3265 = vxor.u32 %v2963, 2147483648
        %v3266 = vxor.u32 %v2985, 2147483648
        %v3267 = vxor.u32 %v3007, 2147483648
        %v3268 = vxor.u32 %v3029, 2147483648
        %v3269 = vxor.u32 %v3051, 2147483648
        %v3270 = vxor.u32 %v3073, 2147483648
        %v3271 = vxor.u32 %v3095, 2147483648
        %v3272 = vxor.u32 %v3117, 2147483648
        %v3273 = vxor.u32 %v3139, 2147483648
        %v3274 = vxor.u32 %v3161, 2147483648
        %v3275 = vxor.u32 %v3183, 2147483648
        %v3276 = vxor.u32 %v3205, 2147483648
        %v3277 = vxor.u32 %v3227, 2147483648
        %v3278 = vxor.u32 %v3249, 2147483648
        %v3279 = vmul.f32 %v3251, 1.442695
        %v3280 = vpow.pop %v3279
        %v3281 = vmul.f32 %v3252, 1.442695
        %v3282 = vpow.pop %v3281
        %v3283 = vmul.f32 %v3253, 1.442695
        %v3284 = vpow.pop %v3283
        %v3285 = vmul.f32 %v3254, 1.442695
        %v3286 = vpow.pop %v3285
        %v3287 = vmul.f32 %v3255, 1.442695
        %v3288 = vpow.pop %v3287
        %v3289 = vmul.f32 %v3256, 1.442695
        %v3290 = vpow.pop %v3289
        %v3291 = vmul.f32 %v3257, 1.442695
        %v3292 = vpow.pop %v3291
        %v3293 = vmul.f32 %v3258, 1.442695
        %v3294 = vpow.pop %v3293
        %v3295 = vmul.f32 %v3259, 1.442695
        %v3296 = vpow.pop %v3295
        %v3297 = vmul.f32 %v3260, 1.442695
        %v3298 = vpow.pop %v3297
        %v3299 = vmul.f32 %v3261, 1.442695
        %v3300 = vpow.pop %v3299
        %v3301 = vmul.f32 %v3262, 1.442695
        %v3302 = vpow.pop %v3301
        %v3303 = vmul.f32 %v3263, 1.442695
        %v3304 = vpow.pop %v3303
        %v3305 = vmul.f32 %v3264, 1.442695
        %v3306 = vpow.pop %v3305
        %v3307 = vmul.f32 %v3265, 1.442695
        %v3308 = vpow.pop %v3307
        %v3309 = vmul.f32 %v3266, 1.442695
        %v3310 = vpow.pop %v3309
        %v3311 = vmul.f32 %v3267, 1.442695
        %v3312 = vpow.pop %v3311
        %v3313 = vmul.f32 %v3268, 1.442695
        %v3314 = vpow.pop %v3313
        %v3315 = vmul.f32 %v3269, 1.442695
        %v3316 = vpow.pop %v3315
        %v3317 = vmul.f32 %v3270, 1.442695
        %v3318 = vpow.pop %v3317
        %v3319 = vmul.f32 %v3271, 1.442695
        %v3320 = vpow.pop %v3319
        %v3321 = vmul.f32 %v3272, 1.442695
        %v3322 = vpow.pop %v3321
        %v3323 = vmul.f32 %v3273, 1.442695
        %v3324 = vpow.pop %v3323
        %v3325 = vmul.f32 %v3274, 1.442695
        %v3326 = vpow.pop %v3325
        %v3327 = vmul.f32 %v3275, 1.442695
        %v3328 = vpow.pop %v3327
        %v3329 = vmul.f32 %v3276, 1.442695
        %v3330 = vpow.pop %v3329
        %v3331 = vmul.f32 %v3277, 1.442695
        %v3332 = vpow.pop %v3331
        %v3333 = vmul.f32 %v3278, 1.442695
        %v3334 = vpow.pop %v3333
        %v3335 = vadd.f32 %v3280, 1.0
        %v3336 = vadd.f32 %v3282, 1.0
        %v3337 = vadd.f32 %v3284, 1.0
        %v3338 = vadd.f32 %v3286, 1.0
        %v3339 = vadd.f32 %v3288, 1.0
        %v3340 = vadd.f32 %v3290, 1.0
        %v3341 = vadd.f32 %v3292, 1.0
        %v3342 = vadd.f32 %v3294, 1.0
        %v3343 = vadd.f32 %v3296, 1.0
        %v3344 = vadd.f32 %v3298, 1.0
        %v3345 = vadd.f32 %v3300, 1.0
        %v3346 = vadd.f32 %v3302, 1.0
        %v3347 = vadd.f32 %v3304, 1.0
        %v3348 = vadd.f32 %v3306, 1.0
        %v3349 = vadd.f32 %v3308, 1.0
        %v3350 = vadd.f32 %v3310, 1.0
        %v3351 = vadd.f32 %v3312, 1.0
        %v3352 = vadd.f32 %v3314, 1.0
        %v3353 = vadd.f32 %v3316, 1.0
        %v3354 = vadd.f32 %v3318, 1.0
        %v3355 = vadd.f32 %v3320, 1.0
        %v3356 = vadd.f32 %v3322, 1.0
        %v3357 = vadd.f32 %v3324, 1.0
        %v3358 = vadd.f32 %v3326, 1.0
        %v3359 = vadd.f32 %v3328, 1.0
        %v3360 = vadd.f32 %v3330, 1.0
        %v3361 = vadd.f32 %v3332, 1.0
        %v3362 = vadd.f32 %v3334, 1.0
        %v3363 = vrcp.pop %v3335
        %v3364 = vmul.f32 %v3335, %v3363
        %v3365 = vsub.f32 1.0, %v3364
        %v3366 = vmul.f32 %v3363, %v3365
        %v3367 = vadd.f32 %v3363, %v3366
        %vm3368 = vweird.f32 %v3335
        %vm3369 = vweird.f32 %v3363
        %vm3370 = vmor %vm3368, %vm3369
        %v3371 = vsel %vm3370, %v3363, %v3367
        %v3372 = vand.u32 2147483647, %v3335
        %vm3373 = vcmp.eq.f32.partialorder %v3372, 8.507059e+37
        %v3374 = vand.u32 %v3335, 2147483648
        %v3375 = vor.u32 1.1754944e-38, %v3374
        %v3376 = vsel %vm3373, %v3375, %v3371
        %v3377 = vmul.f32 1.0, %v3376
        %v3378 = vrcp.pop %v3336
        %v3379 = vmul.f32 %v3336, %v3378
        %v3380 = vsub.f32 1.0, %v3379
        %v3381 = vmul.f32 %v3378, %v3380
        %v3382 = vadd.f32 %v3378, %v3381
        %vm3383 = vweird.f32 %v3336
        %vm3384 = vweird.f32 %v3378
        %vm3385 = vmor %vm3383, %vm3384
        %v3386 = vsel %vm3385, %v3378, %v3382
        %v3387 = vand.u32 2147483647, %v3336
        %vm3388 = vcmp.eq.f32.partialorder %v3387, 8.507059e+37
        %v3389 = vand.u32 %v3336, 2147483648
        %v3390 = vor.u32 1.1754944e-38, %v3389
        %v3391 = vsel %vm3388, %v3390, %v3386
        %v3392 = vmul.f32 1.0, %v3391
        %v3393 = vrcp.pop %v3337
        %v3394 = vmul.f32 %v3337, %v3393
        %v3395 = vsub.f32 1.0, %v3394
        %v3396 = vmul.f32 %v3393, %v3395
        %v3397 = vadd.f32 %v3393, %v3396
        %vm3398 = vweird.f32 %v3337
        %vm3399 = vweird.f32 %v3393
        %vm3400 = vmor %vm3398, %vm3399
        %v3401 = vsel %vm3400, %v3393, %v3397
        %v3402 = vand.u32 2147483647, %v3337
        %vm3403 = vcmp.eq.f32.partialorder %v3402, 8.507059e+37
        %v3404 = vand.u32 %v3337, 2147483648
        %v3405 = vor.u32 1.1754944e-38, %v3404
        %v3406 = vsel %vm3403, %v3405, %v3401
        %v3407 = vmul.f32 1.0, %v3406
        %v3408 = vrcp.pop %v3338
        %v3409 = vmul.f32 %v3338, %v3408
        %v3410 = vsub.f32 1.0, %v3409
        %v3411 = vmul.f32 %v3408, %v3410
        %v3412 = vadd.f32 %v3408, %v3411
        %vm3413 = vweird.f32 %v3338
        %vm3414 = vweird.f32 %v3408
        %vm3415 = vmor %vm3413, %vm3414
        %v3416 = vsel %vm3415, %v3408, %v3412
        %v3417 = vand.u32 2147483647, %v3338
        %vm3418 = vcmp.eq.f32.partialorder %v3417, 8.507059e+37
        %v3419 = vand.u32 %v3338, 2147483648
        %v3420 = vor.u32 1.1754944e-38, %v3419
        %v3421 = vsel %vm3418, %v3420, %v3416
        %v3422 = vmul.f32 1.0, %v3421
        %v3423 = vrcp.pop %v3339
        %v3424 = vmul.f32 %v3339, %v3423
        %v3425 = vsub.f32 1.0, %v3424
        %v3426 = vmul.f32 %v3423, %v3425
        %v3427 = vadd.f32 %v3423, %v3426
        %vm3428 = vweird.f32 %v3339
        %vm3429 = vweird.f32 %v3423
        %vm3430 = vmor %vm3428, %vm3429
        %v3431 = vsel %vm3430, %v3423, %v3427
        %v3432 = vand.u32 2147483647, %v3339
        %vm3433 = vcmp.eq.f32.partialorder %v3432, 8.507059e+37
        %v3434 = vand.u32 %v3339, 2147483648
        %v3435 = vor.u32 1.1754944e-38, %v3434
        %v3436 = vsel %vm3433, %v3435, %v3431
        %v3437 = vmul.f32 1.0, %v3436
        %v3438 = vrcp.pop %v3340
        %v3439 = vmul.f32 %v3340, %v3438
        %v3440 = vsub.f32 1.0, %v3439
        %v3441 = vmul.f32 %v3438, %v3440
        %v3442 = vadd.f32 %v3438, %v3441
        %vm3443 = vweird.f32 %v3340
        %vm3444 = vweird.f32 %v3438
        %vm3445 = vmor %vm3443, %vm3444
        %v3446 = vsel %vm3445, %v3438, %v3442
        %v3447 = vand.u32 2147483647, %v3340
        %vm3448 = vcmp.eq.f32.partialorder %v3447, 8.507059e+37
        %v3449 = vand.u32 %v3340, 2147483648
        %v3450 = vor.u32 1.1754944e-38, %v3449
        %v3451 = vsel %vm3448, %v3450, %v3446
        %v3452 = vmul.f32 1.0, %v3451
        %v3453 = vrcp.pop %v3341
        %v3454 = vmul.f32 %v3341, %v3453
        %v3455 = vsub.f32 1.0, %v3454
        %v3456 = vmul.f32 %v3453, %v3455
        %v3457 = vadd.f32 %v3453, %v3456
        %vm3458 = vweird.f32 %v3341
        %vm3459 = vweird.f32 %v3453
        %vm3460 = vmor %vm3458, %vm3459
        %v3461 = vsel %vm3460, %v3453, %v3457
        %v3462 = vand.u32 2147483647, %v3341
        %vm3463 = vcmp.eq.f32.partialorder %v3462, 8.507059e+37
        %v3464 = vand.u32 %v3341, 2147483648
        %v3465 = vor.u32 1.1754944e-38, %v3464
        %v3466 = vsel %vm3463, %v3465, %v3461
        %v3467 = vmul.f32 1.0, %v3466
        %v3468 = vrcp.pop %v3342
        %v3469 = vmul.f32 %v3342, %v3468
        %v3470 = vsub.f32 1.0, %v3469
        %v3471 = vmul.f32 %v3468, %v3470
        %v3472 = vadd.f32 %v3468, %v3471
        %vm3473 = vweird.f32 %v3342
        %vm3474 = vweird.f32 %v3468
        %vm3475 = vmor %vm3473, %vm3474
        %v3476 = vsel %vm3475, %v3468, %v3472
        %v3477 = vand.u32 2147483647, %v3342
        %vm3478 = vcmp.eq.f32.partialorder %v3477, 8.507059e+37
        %v3479 = vand.u32 %v3342, 2147483648
        %v3480 = vor.u32 1.1754944e-38, %v3479
        %v3481 = vsel %vm3478, %v3480, %v3476
        %v3482 = vmul.f32 1.0, %v3481
        %v3483 = vrcp.pop %v3343
        %v3484 = vmul.f32 %v3343, %v3483
        %v3485 = vsub.f32 1.0, %v3484
        %v3486 = vmul.f32 %v3483, %v3485
        %v3487 = vadd.f32 %v3483, %v3486
        %vm3488 = vweird.f32 %v3343
        %vm3489 = vweird.f32 %v3483
        %vm3490 = vmor %vm3488, %vm3489
        %v3491 = vsel %vm3490, %v3483, %v3487
        %v3492 = vand.u32 2147483647, %v3343
        %vm3493 = vcmp.eq.f32.partialorder %v3492, 8.507059e+37
        %v3494 = vand.u32 %v3343, 2147483648
        %v3495 = vor.u32 1.1754944e-38, %v3494
        %v3496 = vsel %vm3493, %v3495, %v3491
        %v3497 = vmul.f32 1.0, %v3496
        %v3498 = vrcp.pop %v3344
        %v3499 = vmul.f32 %v3344, %v3498
        %v3500 = vsub.f32 1.0, %v3499
        %v3501 = vmul.f32 %v3498, %v3500
        %v3502 = vadd.f32 %v3498, %v3501
        %vm3503 = vweird.f32 %v3344
        %vm3504 = vweird.f32 %v3498
        %vm3505 = vmor %vm3503, %vm3504
        %v3506 = vsel %vm3505, %v3498, %v3502
        %v3507 = vand.u32 2147483647, %v3344
        %vm3508 = vcmp.eq.f32.partialorder %v3507, 8.507059e+37
        %v3509 = vand.u32 %v3344, 2147483648
        %v3510 = vor.u32 1.1754944e-38, %v3509
        %v3511 = vsel %vm3508, %v3510, %v3506
        %v3512 = vmul.f32 1.0, %v3511
        %v3513 = vrcp.pop %v3345
        %v3514 = vmul.f32 %v3345, %v3513
        %v3515 = vsub.f32 1.0, %v3514
        %v3516 = vmul.f32 %v3513, %v3515
        %v3517 = vadd.f32 %v3513, %v3516
        %vm3518 = vweird.f32 %v3345
        %vm3519 = vweird.f32 %v3513
        %vm3520 = vmor %vm3518, %vm3519
        %v3521 = vsel %vm3520, %v3513, %v3517
        %v3522 = vand.u32 2147483647, %v3345
        %vm3523 = vcmp.eq.f32.partialorder %v3522, 8.507059e+37
        %v3524 = vand.u32 %v3345, 2147483648
        %v3525 = vor.u32 1.1754944e-38, %v3524
        %v3526 = vsel %vm3523, %v3525, %v3521
        %v3527 = vmul.f32 1.0, %v3526
        %v3528 = vrcp.pop %v3346
        %v3529 = vmul.f32 %v3346, %v3528
        %v3530 = vsub.f32 1.0, %v3529
        %v3531 = vmul.f32 %v3528, %v3530
        %v3532 = vadd.f32 %v3528, %v3531
        %vm3533 = vweird.f32 %v3346
        %vm3534 = vweird.f32 %v3528
        %vm3535 = vmor %vm3533, %vm3534
        %v3536 = vsel %vm3535, %v3528, %v3532
        %v3537 = vand.u32 2147483647, %v3346
        %vm3538 = vcmp.eq.f32.partialorder %v3537, 8.507059e+37
        %v3539 = vand.u32 %v3346, 2147483648
        %v3540 = vor.u32 1.1754944e-38, %v3539
        %v3541 = vsel %vm3538, %v3540, %v3536
        %v3542 = vmul.f32 1.0, %v3541
        %v3543 = vrcp.pop %v3347
        %v3544 = vmul.f32 %v3347, %v3543
        %v3545 = vsub.f32 1.0, %v3544
        %v3546 = vmul.f32 %v3543, %v3545
        %v3547 = vadd.f32 %v3543, %v3546
        %vm3548 = vweird.f32 %v3347
        %vm3549 = vweird.f32 %v3543
        %vm3550 = vmor %vm3548, %vm3549
        %v3551 = vsel %vm3550, %v3543, %v3547
        %v3552 = vand.u32 2147483647, %v3347
        %vm3553 = vcmp.eq.f32.partialorder %v3552, 8.507059e+37
        %v3554 = vand.u32 %v3347, 2147483648
        %v3555 = vor.u32 1.1754944e-38, %v3554
        %v3556 = vsel %vm3553, %v3555, %v3551
        %v3557 = vmul.f32 1.0, %v3556
        %v3558 = vrcp.pop %v3348
        %v3559 = vmul.f32 %v3348, %v3558
        %v3560 = vsub.f32 1.0, %v3559
        %v3561 = vmul.f32 %v3558, %v3560
        %v3562 = vadd.f32 %v3558, %v3561
        %vm3563 = vweird.f32 %v3348
        %vm3564 = vweird.f32 %v3558
        %vm3565 = vmor %vm3563, %vm3564
        %v3566 = vsel %vm3565, %v3558, %v3562
        %v3567 = vand.u32 2147483647, %v3348
        %vm3568 = vcmp.eq.f32.partialorder %v3567, 8.507059e+37
        %v3569 = vand.u32 %v3348, 2147483648
        %v3570 = vor.u32 1.1754944e-38, %v3569
        %v3571 = vsel %vm3568, %v3570, %v3566
        %v3572 = vmul.f32 1.0, %v3571
        %v3573 = vrcp.pop %v3349
        %v3574 = vmul.f32 %v3349, %v3573
        %v3575 = vsub.f32 1.0, %v3574
        %v3576 = vmul.f32 %v3573, %v3575
        %v3577 = vadd.f32 %v3573, %v3576
        %vm3578 = vweird.f32 %v3349
        %vm3579 = vweird.f32 %v3573
        %vm3580 = vmor %vm3578, %vm3579
        %v3581 = vsel %vm3580, %v3573, %v3577
        %v3582 = vand.u32 2147483647, %v3349
        %vm3583 = vcmp.eq.f32.partialorder %v3582, 8.507059e+37
        %v3584 = vand.u32 %v3349, 2147483648
        %v3585 = vor.u32 1.1754944e-38, %v3584
        %v3586 = vsel %vm3583, %v3585, %v3581
        %v3587 = vmul.f32 1.0, %v3586
        %v3588 = vrcp.pop %v3350
        %v3589 = vmul.f32 %v3350, %v3588
        %v3590 = vsub.f32 1.0, %v3589
        %v3591 = vmul.f32 %v3588, %v3590
        %v3592 = vadd.f32 %v3588, %v3591
        %vm3593 = vweird.f32 %v3350
        %vm3594 = vweird.f32 %v3588
        %vm3595 = vmor %vm3593, %vm3594
        %v3596 = vsel %vm3595, %v3588, %v3592
        %v3597 = vand.u32 2147483647, %v3350
        %vm3598 = vcmp.eq.f32.partialorder %v3597, 8.507059e+37
        %v3599 = vand.u32 %v3350, 2147483648
        %v3600 = vor.u32 1.1754944e-38, %v3599
        %v3601 = vsel %vm3598, %v3600, %v3596
        %v3602 = vmul.f32 1.0, %v3601
        %v3603 = vrcp.pop %v3351
        %v3604 = vmul.f32 %v3351, %v3603
        %v3605 = vsub.f32 1.0, %v3604
        %v3606 = vmul.f32 %v3603, %v3605
        %v3607 = vadd.f32 %v3603, %v3606
        %vm3608 = vweird.f32 %v3351
        %vm3609 = vweird.f32 %v3603
        %vm3610 = vmor %vm3608, %vm3609
        %v3611 = vsel %vm3610, %v3603, %v3607
        %v3612 = vand.u32 2147483647, %v3351
        %vm3613 = vcmp.eq.f32.partialorder %v3612, 8.507059e+37
        %v3614 = vand.u32 %v3351, 2147483648
        %v3615 = vor.u32 1.1754944e-38, %v3614
        %v3616 = vsel %vm3613, %v3615, %v3611
        %v3617 = vmul.f32 1.0, %v3616
        %v3618 = vrcp.pop %v3352
        %v3619 = vmul.f32 %v3352, %v3618
        %v3620 = vsub.f32 1.0, %v3619
        %v3621 = vmul.f32 %v3618, %v3620
        %v3622 = vadd.f32 %v3618, %v3621
        %vm3623 = vweird.f32 %v3352
        %vm3624 = vweird.f32 %v3618
        %vm3625 = vmor %vm3623, %vm3624
        %v3626 = vsel %vm3625, %v3618, %v3622
        %v3627 = vand.u32 2147483647, %v3352
        %vm3628 = vcmp.eq.f32.partialorder %v3627, 8.507059e+37
        %v3629 = vand.u32 %v3352, 2147483648
        %v3630 = vor.u32 1.1754944e-38, %v3629
        %v3631 = vsel %vm3628, %v3630, %v3626
        %v3632 = vmul.f32 1.0, %v3631
        %v3633 = vrcp.pop %v3353
        %v3634 = vmul.f32 %v3353, %v3633
        %v3635 = vsub.f32 1.0, %v3634
        %v3636 = vmul.f32 %v3633, %v3635
        %v3637 = vadd.f32 %v3633, %v3636
        %vm3638 = vweird.f32 %v3353
        %vm3639 = vweird.f32 %v3633
        %vm3640 = vmor %vm3638, %vm3639
        %v3641 = vsel %vm3640, %v3633, %v3637
        %v3642 = vand.u32 2147483647, %v3353
        %vm3643 = vcmp.eq.f32.partialorder %v3642, 8.507059e+37
        %v3644 = vand.u32 %v3353, 2147483648
        %v3645 = vor.u32 1.1754944e-38, %v3644
        %v3646 = vsel %vm3643, %v3645, %v3641
        %v3647 = vmul.f32 1.0, %v3646
        %v3648 = vrcp.pop %v3354
        %v3649 = vmul.f32 %v3354, %v3648
        %v3650 = vsub.f32 1.0, %v3649
        %v3651 = vmul.f32 %v3648, %v3650
        %v3652 = vadd.f32 %v3648, %v3651
        %vm3653 = vweird.f32 %v3354
        %vm3654 = vweird.f32 %v3648
        %vm3655 = vmor %vm3653, %vm3654
        %v3656 = vsel %vm3655, %v3648, %v3652
        %v3657 = vand.u32 2147483647, %v3354
        %vm3658 = vcmp.eq.f32.partialorder %v3657, 8.507059e+37
        %v3659 = vand.u32 %v3354, 2147483648
        %v3660 = vor.u32 1.1754944e-38, %v3659
        %v3661 = vsel %vm3658, %v3660, %v3656
        %v3662 = vmul.f32 1.0, %v3661
        %v3663 = vrcp.pop %v3355
        %v3664 = vmul.f32 %v3355, %v3663
        %v3665 = vsub.f32 1.0, %v3664
        %v3666 = vmul.f32 %v3663, %v3665
        %v3667 = vadd.f32 %v3663, %v3666
        %vm3668 = vweird.f32 %v3355
        %vm3669 = vweird.f32 %v3663
        %vm3670 = vmor %vm3668, %vm3669
        %v3671 = vsel %vm3670, %v3663, %v3667
        %v3672 = vand.u32 2147483647, %v3355
        %vm3673 = vcmp.eq.f32.partialorder %v3672, 8.507059e+37
        %v3674 = vand.u32 %v3355, 2147483648
        %v3675 = vor.u32 1.1754944e-38, %v3674
        %v3676 = vsel %vm3673, %v3675, %v3671
        %v3677 = vmul.f32 1.0, %v3676
        %v3678 = vrcp.pop %v3356
        %v3679 = vmul.f32 %v3356, %v3678
        %v3680 = vsub.f32 1.0, %v3679
        %v3681 = vmul.f32 %v3678, %v3680
        %v3682 = vadd.f32 %v3678, %v3681
        %vm3683 = vweird.f32 %v3356
        %vm3684 = vweird.f32 %v3678
        %vm3685 = vmor %vm3683, %vm3684
        %v3686 = vsel %vm3685, %v3678, %v3682
        %v3687 = vand.u32 2147483647, %v3356
        %vm3688 = vcmp.eq.f32.partialorder %v3687, 8.507059e+37
        %v3689 = vand.u32 %v3356, 2147483648
        %v3690 = vor.u32 1.1754944e-38, %v3689
        %v3691 = vsel %vm3688, %v3690, %v3686
        %v3692 = vmul.f32 1.0, %v3691
        %v3693 = vrcp.pop %v3357
        %v3694 = vmul.f32 %v3357, %v3693
        %v3695 = vsub.f32 1.0, %v3694
        %v3696 = vmul.f32 %v3693, %v3695
        %v3697 = vadd.f32 %v3693, %v3696
        %vm3698 = vweird.f32 %v3357
        %vm3699 = vweird.f32 %v3693
        %vm3700 = vmor %vm3698, %vm3699
        %v3701 = vsel %vm3700, %v3693, %v3697
        %v3702 = vand.u32 2147483647, %v3357
        %vm3703 = vcmp.eq.f32.partialorder %v3702, 8.507059e+37
        %v3704 = vand.u32 %v3357, 2147483648
        %v3705 = vor.u32 1.1754944e-38, %v3704
        %v3706 = vsel %vm3703, %v3705, %v3701
        %v3707 = vmul.f32 1.0, %v3706
        %v3708 = vrcp.pop %v3358
        %v3709 = vmul.f32 %v3358, %v3708
        %v3710 = vsub.f32 1.0, %v3709
        %v3711 = vmul.f32 %v3708, %v3710
        %v3712 = vadd.f32 %v3708, %v3711
        %vm3713 = vweird.f32 %v3358
        %vm3714 = vweird.f32 %v3708
        %vm3715 = vmor %vm3713, %vm3714
        %v3716 = vsel %vm3715, %v3708, %v3712
        %v3717 = vand.u32 2147483647, %v3358
        %vm3718 = vcmp.eq.f32.partialorder %v3717, 8.507059e+37
        %v3719 = vand.u32 %v3358, 2147483648
        %v3720 = vor.u32 1.1754944e-38, %v3719
        %v3721 = vsel %vm3718, %v3720, %v3716
        %v3722 = vmul.f32 1.0, %v3721
        %v3723 = vrcp.pop %v3359
        %v3724 = vmul.f32 %v3359, %v3723
        %v3725 = vsub.f32 1.0, %v3724
        %v3726 = vmul.f32 %v3723, %v3725
        %v3727 = vadd.f32 %v3723, %v3726
        %vm3728 = vweird.f32 %v3359
        %vm3729 = vweird.f32 %v3723
        %vm3730 = vmor %vm3728, %vm3729
        %v3731 = vsel %vm3730, %v3723, %v3727
        %v3732 = vand.u32 2147483647, %v3359
        %vm3733 = vcmp.eq.f32.partialorder %v3732, 8.507059e+37
        %v3734 = vand.u32 %v3359, 2147483648
        %v3735 = vor.u32 1.1754944e-38, %v3734
        %v3736 = vsel %vm3733, %v3735, %v3731
        %v3737 = vmul.f32 1.0, %v3736
        %v3738 = vrcp.pop %v3360
        %v3739 = vmul.f32 %v3360, %v3738
        %v3740 = vsub.f32 1.0, %v3739
        %v3741 = vmul.f32 %v3738, %v3740
        %v3742 = vadd.f32 %v3738, %v3741
        %vm3743 = vweird.f32 %v3360
        %vm3744 = vweird.f32 %v3738
        %vm3745 = vmor %vm3743, %vm3744
        %v3746 = vsel %vm3745, %v3738, %v3742
        %v3747 = vand.u32 2147483647, %v3360
        %vm3748 = vcmp.eq.f32.partialorder %v3747, 8.507059e+37
        %v3749 = vand.u32 %v3360, 2147483648
        %v3750 = vor.u32 1.1754944e-38, %v3749
        %v3751 = vsel %vm3748, %v3750, %v3746
        %v3752 = vmul.f32 1.0, %v3751
        %v3753 = vrcp.pop %v3361
        %v3754 = vmul.f32 %v3361, %v3753
        %v3755 = vsub.f32 1.0, %v3754
        %v3756 = vmul.f32 %v3753, %v3755
        %v3757 = vadd.f32 %v3753, %v3756
        %vm3758 = vweird.f32 %v3361
        %vm3759 = vweird.f32 %v3753
        %vm3760 = vmor %vm3758, %vm3759
        %v3761 = vsel %vm3760, %v3753, %v3757
        %v3762 = vand.u32 2147483647, %v3361
        %vm3763 = vcmp.eq.f32.partialorder %v3762, 8.507059e+37
        %v3764 = vand.u32 %v3361, 2147483648
        %v3765 = vor.u32 1.1754944e-38, %v3764
        %v3766 = vsel %vm3763, %v3765, %v3761
        %v3767 = vmul.f32 1.0, %v3766
        %v3768 = vrcp.pop %v3362
        %v3769 = vmul.f32 %v3362, %v3768
        %v3770 = vsub.f32 1.0, %v3769
        %v3771 = vmul.f32 %v3768, %v3770
        %v3772 = vadd.f32 %v3768, %v3771
        %vm3773 = vweird.f32 %v3362
        %vm3774 = vweird.f32 %v3768
        %vm3775 = vmor %vm3773, %vm3774
        %v3776 = vsel %vm3775, %v3768, %v3772
        %v3777 = vand.u32 2147483647, %v3362
        %vm3778 = vcmp.eq.f32.partialorder %v3777, 8.507059e+37
        %v3779 = vand.u32 %v3362, 2147483648
        %v3780 = vor.u32 1.1754944e-38, %v3779
        %v3781 = vsel %vm3778, %v3780, %v3776
        %v3782 = vmul.f32 1.0, %v3781
        %v3783 = vld [vmem:[%s11] sm:$0xff]
        %v3784 = vld [vmem:[%s11 + $0x8] sm:$0xff]
        %v3785 = vld [vmem:[%s11 + $0x10] sm:$0xff]
        %v3786 = vld [vmem:[%s11 + $0x18] sm:$0xf]
        %vm3787 = vcmask 228352
        %v3789 = vsel %vm3787, %v3377, 0
        %v3792 = vsel %vm1877, %v3786, 0
        %3794 = vmatpush.msra.mxu0 0.0
        %3795 = vmatpush.msra.mxu0 0.0
        %3796 = vmatpush.msra.mxu0 0.0
        %3797 = vmatpush.msra.mxu0 0.0
        %3798 = vmatpush.msra.mxu0 0.0
        %3799 = vmatpush.msra.mxu0 0.0
        %3800 = vmatpush.msra.mxu0 0.0
        %3801 = vmatpush.msra.mxu0 0.0
        %3802 = vmatpush.msra.mxu0 0.0
        %3803 = vmatpush.msra.mxu0 0.0
        %3804 = vmatpush.msra.mxu0 0.0
        %3805 = vmatpush.msra.mxu0 0.0
        %3806 = vmatpush.msra.mxu0 %v3792
        %3807 = vmatpush.msra.mxu0 %v3785
        %3808 = vmatpush.msra.mxu0 %v3784
        %3809 = vmatpush.msra.mxu0 %v3783
        %3810 = vmatmul.f32.gmra.mxu0 %v3789
        %v3811 = vpop.f32.mrf.mxu0
        %v3812 = vadd.f32 0.0, %v3811
        %3813 = vdwg.mxu0
        %v3815 = vsel %vm3787, %v3392, 0
        %3817 = vmatpush.msra.mxu0 0.0
        %3818 = vmatpush.msra.mxu0 0.0
        %3819 = vmatpush.msra.mxu0 0.0
        %3820 = vmatpush.msra.mxu0 0.0
        %3821 = vmatpush.msra.mxu0 0.0
        %3822 = vmatpush.msra.mxu0 0.0
        %3823 = vmatpush.msra.mxu0 0.0
        %3824 = vmatpush.msra.mxu0 0.0
        %3825 = vmatpush.msra.mxu0 0.0
        %3826 = vmatpush.msra.mxu0 0.0
        %3827 = vmatpush.msra.mxu0 0.0
        %3828 = vmatpush.msra.mxu0 0.0
        %3829 = vmatpush.msra.mxu0 %v3792
        %3830 = vmatpush.msra.mxu0 %v3785
        %3831 = vmatpush.msra.mxu0 %v3784
        %3832 = vmatpush.msra.mxu0 %v3783
        %3833 = vmatmul.f32.gmra.mxu0 %v3815
        %v3834 = vpop.f32.mrf.mxu0
        %v3835 = vadd.f32 0.0, %v3834
        %3836 = vdwg.mxu0
        %v3838 = vsel %vm3787, %v3407, 0
        %3840 = vmatpush.msra.mxu0 0.0
        %3841 = vmatpush.msra.mxu0 0.0
        %3842 = vmatpush.msra.mxu0 0.0
        %3843 = vmatpush.msra.mxu0 0.0
        %3844 = vmatpush.msra.mxu0 0.0
        %3845 = vmatpush.msra.mxu0 0.0
        %3846 = vmatpush.msra.mxu0 0.0
        %3847 = vmatpush.msra.mxu0 0.0
        %3848 = vmatpush.msra.mxu0 0.0
        %3849 = vmatpush.msra.mxu0 0.0
        %3850 = vmatpush.msra.mxu0 0.0
        %3851 = vmatpush.msra.mxu0 0.0
        %3852 = vmatpush.msra.mxu0 %v3792
        %3853 = vmatpush.msra.mxu0 %v3785
        %3854 = vmatpush.msra.mxu0 %v3784
        %3855 = vmatpush.msra.mxu0 %v3783
        %3856 = vmatmul.f32.gmra.mxu0 %v3838
        %v3857 = vpop.f32.mrf.mxu0
        %v3858 = vadd.f32 0.0, %v3857
        %3859 = vdwg.mxu0
        %v3861 = vsel %vm3787, %v3422, 0
        %3863 = vmatpush.msra.mxu0 0.0
        %3864 = vmatpush.msra.mxu0 0.0
        %3865 = vmatpush.msra.mxu0 0.0
        %3866 = vmatpush.msra.mxu0 0.0
        %3867 = vmatpush.msra.mxu0 0.0
        %3868 = vmatpush.msra.mxu0 0.0
        %3869 = vmatpush.msra.mxu0 0.0
        %3870 = vmatpush.msra.mxu0 0.0
        %3871 = vmatpush.msra.mxu0 0.0
        %3872 = vmatpush.msra.mxu0 0.0
        %3873 = vmatpush.msra.mxu0 0.0
        %3874 = vmatpush.msra.mxu0 0.0
        %3875 = vmatpush.msra.mxu0 %v3792
        %3876 = vmatpush.msra.mxu0 %v3785
        %3877 = vmatpush.msra.mxu0 %v3784
        %3878 = vmatpush.msra.mxu0 %v3783
        %3879 = vmatmul.f32.gmra.mxu0 %v3861
        %v3880 = vpop.f32.mrf.mxu0
        %v3881 = vadd.f32 0.0, %v3880
        %3882 = vdwg.mxu0
        %v3884 = vsel %vm3787, %v3437, 0
        %3886 = vmatpush.msra.mxu0 0.0
        %3887 = vmatpush.msra.mxu0 0.0
        %3888 = vmatpush.msra.mxu0 0.0
        %3889 = vmatpush.msra.mxu0 0.0
        %3890 = vmatpush.msra.mxu0 0.0
        %3891 = vmatpush.msra.mxu0 0.0
        %3892 = vmatpush.msra.mxu0 0.0
        %3893 = vmatpush.msra.mxu0 0.0
        %3894 = vmatpush.msra.mxu0 0.0
        %3895 = vmatpush.msra.mxu0 0.0
        %3896 = vmatpush.msra.mxu0 0.0
        %3897 = vmatpush.msra.mxu0 0.0
        %3898 = vmatpush.msra.mxu0 %v3792
        %3899 = vmatpush.msra.mxu0 %v3785
        %3900 = vmatpush.msra.mxu0 %v3784
        %3901 = vmatpush.msra.mxu0 %v3783
        %3902 = vmatmul.f32.gmra.mxu0 %v3884
        %v3903 = vpop.f32.mrf.mxu0
        %v3904 = vadd.f32 0.0, %v3903
        %3905 = vdwg.mxu0
        %v3907 = vsel %vm3787, %v3452, 0
        %3909 = vmatpush.msra.mxu0 0.0
        %3910 = vmatpush.msra.mxu0 0.0
        %3911 = vmatpush.msra.mxu0 0.0
        %3912 = vmatpush.msra.mxu0 0.0
        %3913 = vmatpush.msra.mxu0 0.0
        %3914 = vmatpush.msra.mxu0 0.0
        %3915 = vmatpush.msra.mxu0 0.0
        %3916 = vmatpush.msra.mxu0 0.0
        %3917 = vmatpush.msra.mxu0 0.0
        %3918 = vmatpush.msra.mxu0 0.0
        %3919 = vmatpush.msra.mxu0 0.0
        %3920 = vmatpush.msra.mxu0 0.0
        %3921 = vmatpush.msra.mxu0 %v3792
        %3922 = vmatpush.msra.mxu0 %v3785
        %3923 = vmatpush.msra.mxu0 %v3784
        %3924 = vmatpush.msra.mxu0 %v3783
        %3925 = vmatmul.f32.gmra.mxu0 %v3907
        %v3926 = vpop.f32.mrf.mxu0
        %v3927 = vadd.f32 0.0, %v3926
        %3928 = vdwg.mxu0
        %v3930 = vsel %vm3787, %v3467, 0
        %3932 = vmatpush.msra.mxu0 0.0
        %3933 = vmatpush.msra.mxu0 0.0
        %3934 = vmatpush.msra.mxu0 0.0
        %3935 = vmatpush.msra.mxu0 0.0
        %3936 = vmatpush.msra.mxu0 0.0
        %3937 = vmatpush.msra.mxu0 0.0
        %3938 = vmatpush.msra.mxu0 0.0
        %3939 = vmatpush.msra.mxu0 0.0
        %3940 = vmatpush.msra.mxu0 0.0
        %3941 = vmatpush.msra.mxu0 0.0
        %3942 = vmatpush.msra.mxu0 0.0
        %3943 = vmatpush.msra.mxu0 0.0
        %3944 = vmatpush.msra.mxu0 %v3792
        %3945 = vmatpush.msra.mxu0 %v3785
        %3946 = vmatpush.msra.mxu0 %v3784
        %3947 = vmatpush.msra.mxu0 %v3783
        %3948 = vmatmul.f32.gmra.mxu0 %v3930
        %v3949 = vpop.f32.mrf.mxu0
        %v3950 = vadd.f32 0.0, %v3949
        %3951 = vdwg.mxu0
        %v3953 = vsel %vm3787, %v3482, 0
        %3955 = vmatpush.msra.mxu0 0.0
        %3956 = vmatpush.msra.mxu0 0.0
        %3957 = vmatpush.msra.mxu0 0.0
        %3958 = vmatpush.msra.mxu0 0.0
        %3959 = vmatpush.msra.mxu0 0.0
        %3960 = vmatpush.msra.mxu0 0.0
        %3961 = vmatpush.msra.mxu0 0.0
        %3962 = vmatpush.msra.mxu0 0.0
        %3963 = vmatpush.msra.mxu0 0.0
        %3964 = vmatpush.msra.mxu0 0.0
        %3965 = vmatpush.msra.mxu0 0.0
        %3966 = vmatpush.msra.mxu0 0.0
        %3967 = vmatpush.msra.mxu0 %v3792
        %3968 = vmatpush.msra.mxu0 %v3785
        %3969 = vmatpush.msra.mxu0 %v3784
        %3970 = vmatpush.msra.mxu0 %v3783
        %3971 = vmatmul.f32.gmra.mxu0 %v3953
        %v3972 = vpop.f32.mrf.mxu0
        %v3973 = vadd.f32 0.0, %v3972
        %3974 = vdwg.mxu0
        %v3976 = vsel %vm3787, %v3497, 0
        %3978 = vmatpush.msra.mxu0 0.0
        %3979 = vmatpush.msra.mxu0 0.0
        %3980 = vmatpush.msra.mxu0 0.0
        %3981 = vmatpush.msra.mxu0 0.0
        %3982 = vmatpush.msra.mxu0 0.0
        %3983 = vmatpush.msra.mxu0 0.0
        %3984 = vmatpush.msra.mxu0 0.0
        %3985 = vmatpush.msra.mxu0 0.0
        %3986 = vmatpush.msra.mxu0 0.0
        %3987 = vmatpush.msra.mxu0 0.0
        %3988 = vmatpush.msra.mxu0 0.0
        %3989 = vmatpush.msra.mxu0 0.0
        %3990 = vmatpush.msra.mxu0 %v3792
        %3991 = vmatpush.msra.mxu0 %v3785
        %3992 = vmatpush.msra.mxu0 %v3784
        %3993 = vmatpush.msra.mxu0 %v3783
        %3994 = vmatmul.f32.gmra.mxu0 %v3976
        %v3995 = vpop.f32.mrf.mxu0
        %v3996 = vadd.f32 0.0, %v3995
        %3997 = vdwg.mxu0
        %v3999 = vsel %vm3787, %v3512, 0
        %4001 = vmatpush.msra.mxu0 0.0
        %4002 = vmatpush.msra.mxu0 0.0
        %4003 = vmatpush.msra.mxu0 0.0
        %4004 = vmatpush.msra.mxu0 0.0
        %4005 = vmatpush.msra.mxu0 0.0
        %4006 = vmatpush.msra.mxu0 0.0
        %4007 = vmatpush.msra.mxu0 0.0
        %4008 = vmatpush.msra.mxu0 0.0
        %4009 = vmatpush.msra.mxu0 0.0
        %4010 = vmatpush.msra.mxu0 0.0
        %4011 = vmatpush.msra.mxu0 0.0
        %4012 = vmatpush.msra.mxu0 0.0
        %4013 = vmatpush.msra.mxu0 %v3792
        %4014 = vmatpush.msra.mxu0 %v3785
        %4015 = vmatpush.msra.mxu0 %v3784
        %4016 = vmatpush.msra.mxu0 %v3783
        %4017 = vmatmul.f32.gmra.mxu0 %v3999
        %v4018 = vpop.f32.mrf.mxu0
        %v4019 = vadd.f32 0.0, %v4018
        %4020 = vdwg.mxu0
        %v4022 = vsel %vm3787, %v3527, 0
        %4024 = vmatpush.msra.mxu0 0.0
        %4025 = vmatpush.msra.mxu0 0.0
        %4026 = vmatpush.msra.mxu0 0.0
        %4027 = vmatpush.msra.mxu0 0.0
        %4028 = vmatpush.msra.mxu0 0.0
        %4029 = vmatpush.msra.mxu0 0.0
        %4030 = vmatpush.msra.mxu0 0.0
        %4031 = vmatpush.msra.mxu0 0.0
        %4032 = vmatpush.msra.mxu0 0.0
        %4033 = vmatpush.msra.mxu0 0.0
        %4034 = vmatpush.msra.mxu0 0.0
        %4035 = vmatpush.msra.mxu0 0.0
        %4036 = vmatpush.msra.mxu0 %v3792
        %4037 = vmatpush.msra.mxu0 %v3785
        %4038 = vmatpush.msra.mxu0 %v3784
        %4039 = vmatpush.msra.mxu0 %v3783
        %4040 = vmatmul.f32.gmra.mxu0 %v4022
        %v4041 = vpop.f32.mrf.mxu0
        %v4042 = vadd.f32 0.0, %v4041
        %4043 = vdwg.mxu0
        %v4045 = vsel %vm3787, %v3542, 0
        %4047 = vmatpush.msra.mxu0 0.0
        %4048 = vmatpush.msra.mxu0 0.0
        %4049 = vmatpush.msra.mxu0 0.0
        %4050 = vmatpush.msra.mxu0 0.0
        %4051 = vmatpush.msra.mxu0 0.0
        %4052 = vmatpush.msra.mxu0 0.0
        %4053 = vmatpush.msra.mxu0 0.0
        %4054 = vmatpush.msra.mxu0 0.0
        %4055 = vmatpush.msra.mxu0 0.0
        %4056 = vmatpush.msra.mxu0 0.0
        %4057 = vmatpush.msra.mxu0 0.0
        %4058 = vmatpush.msra.mxu0 0.0
        %4059 = vmatpush.msra.mxu0 %v3792
        %4060 = vmatpush.msra.mxu0 %v3785
        %4061 = vmatpush.msra.mxu0 %v3784
        %4062 = vmatpush.msra.mxu0 %v3783
        %4063 = vmatmul.f32.gmra.mxu0 %v4045
        %v4064 = vpop.f32.mrf.mxu0
        %v4065 = vadd.f32 0.0, %v4064
        %4066 = vdwg.mxu0
        %v4068 = vsel %vm3787, %v3557, 0
        %4070 = vmatpush.msra.mxu0 0.0
        %4071 = vmatpush.msra.mxu0 0.0
        %4072 = vmatpush.msra.mxu0 0.0
        %4073 = vmatpush.msra.mxu0 0.0
        %4074 = vmatpush.msra.mxu0 0.0
        %4075 = vmatpush.msra.mxu0 0.0
        %4076 = vmatpush.msra.mxu0 0.0
        %4077 = vmatpush.msra.mxu0 0.0
        %4078 = vmatpush.msra.mxu0 0.0
        %4079 = vmatpush.msra.mxu0 0.0
        %4080 = vmatpush.msra.mxu0 0.0
        %4081 = vmatpush.msra.mxu0 0.0
        %4082 = vmatpush.msra.mxu0 %v3792
        %4083 = vmatpush.msra.mxu0 %v3785
        %4084 = vmatpush.msra.mxu0 %v3784
        %4085 = vmatpush.msra.mxu0 %v3783
        %4086 = vmatmul.f32.gmra.mxu0 %v4068
        %v4087 = vpop.f32.mrf.mxu0
        %v4088 = vadd.f32 0.0, %v4087
        %4089 = vdwg.mxu0
        %v4091 = vsel %vm3787, %v3572, 0
        %4093 = vmatpush.msra.mxu0 0.0
        %4094 = vmatpush.msra.mxu0 0.0
        %4095 = vmatpush.msra.mxu0 0.0
        %4096 = vmatpush.msra.mxu0 0.0
        %4097 = vmatpush.msra.mxu0 0.0
        %4098 = vmatpush.msra.mxu0 0.0
        %4099 = vmatpush.msra.mxu0 0.0
        %4100 = vmatpush.msra.mxu0 0.0
        %4101 = vmatpush.msra.mxu0 0.0
        %4102 = vmatpush.msra.mxu0 0.0
        %4103 = vmatpush.msra.mxu0 0.0
        %4104 = vmatpush.msra.mxu0 0.0
        %4105 = vmatpush.msra.mxu0 %v3792
        %4106 = vmatpush.msra.mxu0 %v3785
        %4107 = vmatpush.msra.mxu0 %v3784
        %4108 = vmatpush.msra.mxu0 %v3783
        %4109 = vmatmul.f32.gmra.mxu0 %v4091
        %v4110 = vpop.f32.mrf.mxu0
        %v4111 = vadd.f32 0.0, %v4110
        %4112 = vdwg.mxu0
        %v4114 = vsel %vm3787, %v3587, 0
        %4116 = vmatpush.msra.mxu0 0.0
        %4117 = vmatpush.msra.mxu0 0.0
        %4118 = vmatpush.msra.mxu0 0.0
        %4119 = vmatpush.msra.mxu0 0.0
        %4120 = vmatpush.msra.mxu0 0.0
        %4121 = vmatpush.msra.mxu0 0.0
        %4122 = vmatpush.msra.mxu0 0.0
        %4123 = vmatpush.msra.mxu0 0.0
        %4124 = vmatpush.msra.mxu0 0.0
        %4125 = vmatpush.msra.mxu0 0.0
        %4126 = vmatpush.msra.mxu0 0.0
        %4127 = vmatpush.msra.mxu0 0.0
        %4128 = vmatpush.msra.mxu0 %v3792
        %4129 = vmatpush.msra.mxu0 %v3785
        %4130 = vmatpush.msra.mxu0 %v3784
        %4131 = vmatpush.msra.mxu0 %v3783
        %4132 = vmatmul.f32.gmra.mxu0 %v4114
        %v4133 = vpop.f32.mrf.mxu0
        %v4134 = vadd.f32 0.0, %v4133
        %4135 = vdwg.mxu0
        %v4137 = vsel %vm3787, %v3602, 0
        %4139 = vmatpush.msra.mxu0 0.0
        %4140 = vmatpush.msra.mxu0 0.0
        %4141 = vmatpush.msra.mxu0 0.0
        %4142 = vmatpush.msra.mxu0 0.0
        %4143 = vmatpush.msra.mxu0 0.0
        %4144 = vmatpush.msra.mxu0 0.0
        %4145 = vmatpush.msra.mxu0 0.0
        %4146 = vmatpush.msra.mxu0 0.0
        %4147 = vmatpush.msra.mxu0 0.0
        %4148 = vmatpush.msra.mxu0 0.0
        %4149 = vmatpush.msra.mxu0 0.0
        %4150 = vmatpush.msra.mxu0 0.0
        %4151 = vmatpush.msra.mxu0 %v3792
        %4152 = vmatpush.msra.mxu0 %v3785
        %4153 = vmatpush.msra.mxu0 %v3784
        %4154 = vmatpush.msra.mxu0 %v3783
        %4155 = vmatmul.f32.gmra.mxu0 %v4137
        %v4156 = vpop.f32.mrf.mxu0
        %v4157 = vadd.f32 0.0, %v4156
        %4158 = vdwg.mxu0
        %v4160 = vsel %vm3787, %v3617, 0
        %4162 = vmatpush.msra.mxu0 0.0
        %4163 = vmatpush.msra.mxu0 0.0
        %4164 = vmatpush.msra.mxu0 0.0
        %4165 = vmatpush.msra.mxu0 0.0
        %4166 = vmatpush.msra.mxu0 0.0
        %4167 = vmatpush.msra.mxu0 0.0
        %4168 = vmatpush.msra.mxu0 0.0
        %4169 = vmatpush.msra.mxu0 0.0
        %4170 = vmatpush.msra.mxu0 0.0
        %4171 = vmatpush.msra.mxu0 0.0
        %4172 = vmatpush.msra.mxu0 0.0
        %4173 = vmatpush.msra.mxu0 0.0
        %4174 = vmatpush.msra.mxu0 %v3792
        %4175 = vmatpush.msra.mxu0 %v3785
        %4176 = vmatpush.msra.mxu0 %v3784
        %4177 = vmatpush.msra.mxu0 %v3783
        %4178 = vmatmul.f32.gmra.mxu0 %v4160
        %v4179 = vpop.f32.mrf.mxu0
        %v4180 = vadd.f32 0.0, %v4179
        %4181 = vdwg.mxu0
        %v4183 = vsel %vm3787, %v3632, 0
        %4185 = vmatpush.msra.mxu0 0.0
        %4186 = vmatpush.msra.mxu0 0.0
        %4187 = vmatpush.msra.mxu0 0.0
        %4188 = vmatpush.msra.mxu0 0.0
        %4189 = vmatpush.msra.mxu0 0.0
        %4190 = vmatpush.msra.mxu0 0.0
        %4191 = vmatpush.msra.mxu0 0.0
        %4192 = vmatpush.msra.mxu0 0.0
        %4193 = vmatpush.msra.mxu0 0.0
        %4194 = vmatpush.msra.mxu0 0.0
        %4195 = vmatpush.msra.mxu0 0.0
        %4196 = vmatpush.msra.mxu0 0.0
        %4197 = vmatpush.msra.mxu0 %v3792
        %4198 = vmatpush.msra.mxu0 %v3785
        %4199 = vmatpush.msra.mxu0 %v3784
        %4200 = vmatpush.msra.mxu0 %v3783
        %4201 = vmatmul.f32.gmra.mxu0 %v4183
        %v4202 = vpop.f32.mrf.mxu0
        %v4203 = vadd.f32 0.0, %v4202
        %4204 = vdwg.mxu0
        %v4206 = vsel %vm3787, %v3647, 0
        %4208 = vmatpush.msra.mxu0 0.0
        %4209 = vmatpush.msra.mxu0 0.0
        %4210 = vmatpush.msra.mxu0 0.0
        %4211 = vmatpush.msra.mxu0 0.0
        %4212 = vmatpush.msra.mxu0 0.0
        %4213 = vmatpush.msra.mxu0 0.0
        %4214 = vmatpush.msra.mxu0 0.0
        %4215 = vmatpush.msra.mxu0 0.0
        %4216 = vmatpush.msra.mxu0 0.0
        %4217 = vmatpush.msra.mxu0 0.0
        %4218 = vmatpush.msra.mxu0 0.0
        %4219 = vmatpush.msra.mxu0 0.0
        %4220 = vmatpush.msra.mxu0 %v3792
        %4221 = vmatpush.msra.mxu0 %v3785
        %4222 = vmatpush.msra.mxu0 %v3784
        %4223 = vmatpush.msra.mxu0 %v3783
        %4224 = vmatmul.f32.gmra.mxu0 %v4206
        %v4225 = vpop.f32.mrf.mxu0
        %v4226 = vadd.f32 0.0, %v4225
        %4227 = vdwg.mxu0
        %v4229 = vsel %vm3787, %v3662, 0
        %4231 = vmatpush.msra.mxu0 0.0
        %4232 = vmatpush.msra.mxu0 0.0
        %4233 = vmatpush.msra.mxu0 0.0
        %4234 = vmatpush.msra.mxu0 0.0
        %4235 = vmatpush.msra.mxu0 0.0
        %4236 = vmatpush.msra.mxu0 0.0
        %4237 = vmatpush.msra.mxu0 0.0
        %4238 = vmatpush.msra.mxu0 0.0
        %4239 = vmatpush.msra.mxu0 0.0
        %4240 = vmatpush.msra.mxu0 0.0
        %4241 = vmatpush.msra.mxu0 0.0
        %4242 = vmatpush.msra.mxu0 0.0
        %4243 = vmatpush.msra.mxu0 %v3792
        %4244 = vmatpush.msra.mxu0 %v3785
        %4245 = vmatpush.msra.mxu0 %v3784
        %4246 = vmatpush.msra.mxu0 %v3783
        %4247 = vmatmul.f32.gmra.mxu0 %v4229
        %v4248 = vpop.f32.mrf.mxu0
        %v4249 = vadd.f32 0.0, %v4248
        %4250 = vdwg.mxu0
        %v4252 = vsel %vm3787, %v3677, 0
        %4254 = vmatpush.msra.mxu0 0.0
        %4255 = vmatpush.msra.mxu0 0.0
        %4256 = vmatpush.msra.mxu0 0.0
        %4257 = vmatpush.msra.mxu0 0.0
        %4258 = vmatpush.msra.mxu0 0.0
        %4259 = vmatpush.msra.mxu0 0.0
        %4260 = vmatpush.msra.mxu0 0.0
        %4261 = vmatpush.msra.mxu0 0.0
        %4262 = vmatpush.msra.mxu0 0.0
        %4263 = vmatpush.msra.mxu0 0.0
        %4264 = vmatpush.msra.mxu0 0.0
        %4265 = vmatpush.msra.mxu0 0.0
        %4266 = vmatpush.msra.mxu0 %v3792
        %4267 = vmatpush.msra.mxu0 %v3785
        %4268 = vmatpush.msra.mxu0 %v3784
        %4269 = vmatpush.msra.mxu0 %v3783
        %4270 = vmatmul.f32.gmra.mxu0 %v4252
        %v4271 = vpop.f32.mrf.mxu0
        %v4272 = vadd.f32 0.0, %v4271
        %4273 = vdwg.mxu0
        %v4275 = vsel %vm3787, %v3692, 0
        %4277 = vmatpush.msra.mxu0 0.0
        %4278 = vmatpush.msra.mxu0 0.0
        %4279 = vmatpush.msra.mxu0 0.0
        %4280 = vmatpush.msra.mxu0 0.0
        %4281 = vmatpush.msra.mxu0 0.0
        %4282 = vmatpush.msra.mxu0 0.0
        %4283 = vmatpush.msra.mxu0 0.0
        %4284 = vmatpush.msra.mxu0 0.0
        %4285 = vmatpush.msra.mxu0 0.0
        %4286 = vmatpush.msra.mxu0 0.0
        %4287 = vmatpush.msra.mxu0 0.0
        %4288 = vmatpush.msra.mxu0 0.0
        %4289 = vmatpush.msra.mxu0 %v3792
        %4290 = vmatpush.msra.mxu0 %v3785
        %4291 = vmatpush.msra.mxu0 %v3784
        %4292 = vmatpush.msra.mxu0 %v3783
        %4293 = vmatmul.f32.gmra.mxu0 %v4275
        %v4294 = vpop.f32.mrf.mxu0
        %v4295 = vadd.f32 0.0, %v4294
        %4296 = vdwg.mxu0
        %v4298 = vsel %vm3787, %v3707, 0
        %4300 = vmatpush.msra.mxu0 0.0
        %4301 = vmatpush.msra.mxu0 0.0
        %4302 = vmatpush.msra.mxu0 0.0
        %4303 = vmatpush.msra.mxu0 0.0
        %4304 = vmatpush.msra.mxu0 0.0
        %4305 = vmatpush.msra.mxu0 0.0
        %4306 = vmatpush.msra.mxu0 0.0
        %4307 = vmatpush.msra.mxu0 0.0
        %4308 = vmatpush.msra.mxu0 0.0
        %4309 = vmatpush.msra.mxu0 0.0
        %4310 = vmatpush.msra.mxu0 0.0
        %4311 = vmatpush.msra.mxu0 0.0
        %4312 = vmatpush.msra.mxu0 %v3792
        %4313 = vmatpush.msra.mxu0 %v3785
        %4314 = vmatpush.msra.mxu0 %v3784
        %4315 = vmatpush.msra.mxu0 %v3783
        %4316 = vmatmul.f32.gmra.mxu0 %v4298
        %v4317 = vpop.f32.mrf.mxu0
        %v4318 = vadd.f32 0.0, %v4317
        %4319 = vdwg.mxu0
        %v4321 = vsel %vm3787, %v3722, 0
        %4323 = vmatpush.msra.mxu0 0.0
        %4324 = vmatpush.msra.mxu0 0.0
        %4325 = vmatpush.msra.mxu0 0.0
        %4326 = vmatpush.msra.mxu0 0.0
        %4327 = vmatpush.msra.mxu0 0.0
        %4328 = vmatpush.msra.mxu0 0.0
        %4329 = vmatpush.msra.mxu0 0.0
        %4330 = vmatpush.msra.mxu0 0.0
        %4331 = vmatpush.msra.mxu0 0.0
        %4332 = vmatpush.msra.mxu0 0.0
        %4333 = vmatpush.msra.mxu0 0.0
        %4334 = vmatpush.msra.mxu0 0.0
        %4335 = vmatpush.msra.mxu0 %v3792
        %4336 = vmatpush.msra.mxu0 %v3785
        %4337 = vmatpush.msra.mxu0 %v3784
        %4338 = vmatpush.msra.mxu0 %v3783
        %4339 = vmatmul.f32.gmra.mxu0 %v4321
        %v4340 = vpop.f32.mrf.mxu0
        %v4341 = vadd.f32 0.0, %v4340
        %4342 = vdwg.mxu0
        %v4344 = vsel %vm3787, %v3737, 0
        %4346 = vmatpush.msra.mxu0 0.0
        %4347 = vmatpush.msra.mxu0 0.0
        %4348 = vmatpush.msra.mxu0 0.0
        %4349 = vmatpush.msra.mxu0 0.0
        %4350 = vmatpush.msra.mxu0 0.0
        %4351 = vmatpush.msra.mxu0 0.0
        %4352 = vmatpush.msra.mxu0 0.0
        %4353 = vmatpush.msra.mxu0 0.0
        %4354 = vmatpush.msra.mxu0 0.0
        %4355 = vmatpush.msra.mxu0 0.0
        %4356 = vmatpush.msra.mxu0 0.0
        %4357 = vmatpush.msra.mxu0 0.0
        %4358 = vmatpush.msra.mxu0 %v3792
        %4359 = vmatpush.msra.mxu0 %v3785
        %4360 = vmatpush.msra.mxu0 %v3784
        %4361 = vmatpush.msra.mxu0 %v3783
        %4362 = vmatmul.f32.gmra.mxu0 %v4344
        %v4363 = vpop.f32.mrf.mxu0
        %v4364 = vadd.f32 0.0, %v4363
        %4365 = vdwg.mxu0
        %v4367 = vsel %vm3787, %v3752, 0
        %4369 = vmatpush.msra.mxu0 0.0
        %4370 = vmatpush.msra.mxu0 0.0
        %4371 = vmatpush.msra.mxu0 0.0
        %4372 = vmatpush.msra.mxu0 0.0
        %4373 = vmatpush.msra.mxu0 0.0
        %4374 = vmatpush.msra.mxu0 0.0
        %4375 = vmatpush.msra.mxu0 0.0
        %4376 = vmatpush.msra.mxu0 0.0
        %4377 = vmatpush.msra.mxu0 0.0
        %4378 = vmatpush.msra.mxu0 0.0
        %4379 = vmatpush.msra.mxu0 0.0
        %4380 = vmatpush.msra.mxu0 0.0
        %4381 = vmatpush.msra.mxu0 %v3792
        %4382 = vmatpush.msra.mxu0 %v3785
        %4383 = vmatpush.msra.mxu0 %v3784
        %4384 = vmatpush.msra.mxu0 %v3783
        %4385 = vmatmul.f32.gmra.mxu0 %v4367
        %v4386 = vpop.f32.mrf.mxu0
        %v4387 = vadd.f32 0.0, %v4386
        %4388 = vdwg.mxu0
        %v4390 = vsel %vm3787, %v3767, 0
        %4392 = vmatpush.msra.mxu0 0.0
        %4393 = vmatpush.msra.mxu0 0.0
        %4394 = vmatpush.msra.mxu0 0.0
        %4395 = vmatpush.msra.mxu0 0.0
        %4396 = vmatpush.msra.mxu0 0.0
        %4397 = vmatpush.msra.mxu0 0.0
        %4398 = vmatpush.msra.mxu0 0.0
        %4399 = vmatpush.msra.mxu0 0.0
        %4400 = vmatpush.msra.mxu0 0.0
        %4401 = vmatpush.msra.mxu0 0.0
        %4402 = vmatpush.msra.mxu0 0.0
        %4403 = vmatpush.msra.mxu0 0.0
        %4404 = vmatpush.msra.mxu0 %v3792
        %4405 = vmatpush.msra.mxu0 %v3785
        %4406 = vmatpush.msra.mxu0 %v3784
        %4407 = vmatpush.msra.mxu0 %v3783
        %4408 = vmatmul.f32.gmra.mxu0 %v4390
        %v4409 = vpop.f32.mrf.mxu0
        %v4410 = vadd.f32 0.0, %v4409
        %4411 = vdwg.mxu0
        %v4413 = vsel %vm3787, %v3782, 0
        %4415 = vmatpush.msra.mxu0 0.0
        %4416 = vmatpush.msra.mxu0 0.0
        %4417 = vmatpush.msra.mxu0 0.0
        %4418 = vmatpush.msra.mxu0 0.0
        %4419 = vmatpush.msra.mxu0 0.0
        %4420 = vmatpush.msra.mxu0 0.0
        %4421 = vmatpush.msra.mxu0 0.0
        %4422 = vmatpush.msra.mxu0 0.0
        %4423 = vmatpush.msra.mxu0 0.0
        %4424 = vmatpush.msra.mxu0 0.0
        %4425 = vmatpush.msra.mxu0 0.0
        %4426 = vmatpush.msra.mxu0 0.0
        %4427 = vmatpush.msra.mxu0 %v3792
        %4428 = vmatpush.msra.mxu0 %v3785
        %4429 = vmatpush.msra.mxu0 %v3784
        %4430 = vmatpush.msra.mxu0 %v3783
        %4431 = vmatmul.f32.gmra.mxu0 %v4413
        %v4432 = vpop.f32.mrf.mxu0
        %v4433 = vadd.f32 0.0, %v4432
        %4434 = vdwg.mxu0
        %v4435 = vadd.f32 %v3812, %v3835
        %v4436 = vmul.f32 %v4435, 0.5
        %v4437 = vadd.f32 %v3858, %v3881
        %v4438 = vmul.f32 %v4437, 0.5
        %v4439 = vadd.f32 %v3904, %v3927
        %v4440 = vmul.f32 %v4439, 0.5
        %v4441 = vadd.f32 %v3950, %v3973
        %v4442 = vmul.f32 %v4441, 0.5
        %v4443 = vadd.f32 %v3996, %v4019
        %v4444 = vmul.f32 %v4443, 0.5
        %v4445 = vadd.f32 %v4042, %v4065
        %v4446 = vmul.f32 %v4445, 0.5
        %v4447 = vadd.f32 %v4088, %v4111
        %v4448 = vmul.f32 %v4447, 0.5
        %v4449 = vadd.f32 %v4134, %v4157
        %v4450 = vmul.f32 %v4449, 0.5
        %v4451 = vadd.f32 %v4180, %v4203
        %v4452 = vmul.f32 %v4451, 0.5
        %v4453 = vadd.f32 %v4226, %v4249
        %v4454 = vmul.f32 %v4453, 0.5
        %v4455 = vadd.f32 %v4272, %v4295
        %v4456 = vmul.f32 %v4455, 0.5
        %v4457 = vadd.f32 %v4318, %v4341
        %v4458 = vmul.f32 %v4457, 0.5
        %v4459 = vadd.f32 %v4364, %v4387
        %v4460 = vmul.f32 %v4459, 0.5
        %v4461 = vadd.f32 %v4410, %v4433
        %v4462 = vmul.f32 %v4461, 0.5
        %v4473 = vrot.slane %v4436, 7
        %v4474 = vrot.slane %v4438, 7
        %v4475 = vrot.slane %v4440, 7
        %v4476 = vrot.slane %v4442, 7
        %v4477 = vrot.slane %v4444, 7
        %v4478 = vrot.slane %v4446, 7
        %v4479 = vrot.slane %v4448, 7
        %v4480 = vrot.slane %v4450, 7
        %v4481 = vrot.slane %v4452, 7
        %v4482 = vrot.slane %v4454, 7
        %4483 = vrot.lane.b32.xlu0 %v4473, 127
        %v4484 = vpop.permute.xlu0 %4483
        %4485 = vrot.lane.b32.xlu0 %v4474, 127
        %v4486 = vpop.permute.xlu0 %4485
        %4487 = vrot.lane.b32.xlu0 %v4475, 127
        %v4488 = vpop.permute.xlu0 %4487
        %4489 = vrot.lane.b32.xlu0 %v4476, 127
        %v4490 = vpop.permute.xlu0 %4489
        %4491 = vrot.lane.b32.xlu0 %v4477, 127
        %v4492 = vpop.permute.xlu0 %4491
        %4493 = vrot.lane.b32.xlu0 %v4478, 127
        %v4494 = vpop.permute.xlu0 %4493
        %4495 = vrot.lane.b32.xlu0 %v4479, 127
        %v4496 = vpop.permute.xlu0 %4495
        %4497 = vrot.lane.b32.xlu0 %v4480, 127
        %v4498 = vpop.permute.xlu0 %4497
        %4499 = vrot.lane.b32.xlu0 %v4481, 127
        %v4500 = vpop.permute.xlu0 %4499
        %4501 = vrot.lane.b32.xlu0 %v4482, 127
        %v4502 = vpop.permute.xlu0 %4501
        %v4513 = vrot.slane %v4436, 6
        %v4514 = vrot.slane %v4438, 6
        %v4515 = vrot.slane %v4440, 6
        %v4516 = vrot.slane %v4442, 6
        %v4517 = vrot.slane %v4444, 6
        %v4518 = vrot.slane %v4446, 6
        %v4519 = vrot.slane %v4448, 6
        %v4520 = vrot.slane %v4450, 6
        %v4521 = vrot.slane %v4452, 6
        %v4522 = vrot.slane %v4454, 6
        %4523 = vrot.lane.b32.xlu0 %v4513, 126
        %v4524 = vpop.permute.xlu0 %4523
        %4525 = vrot.lane.b32.xlu0 %v4514, 126
        %v4526 = vpop.permute.xlu0 %4525
        %4527 = vrot.lane.b32.xlu0 %v4515, 126
        %v4528 = vpop.permute.xlu0 %4527
        %4529 = vrot.lane.b32.xlu0 %v4516, 126
        %v4530 = vpop.permute.xlu0 %4529
        %4531 = vrot.lane.b32.xlu0 %v4517, 126
        %v4532 = vpop.permute.xlu0 %4531
        %4533 = vrot.lane.b32.xlu0 %v4518, 126
        %v4534 = vpop.permute.xlu0 %4533
        %4535 = vrot.lane.b32.xlu0 %v4519, 126
        %v4536 = vpop.permute.xlu0 %4535
        %4537 = vrot.lane.b32.xlu0 %v4520, 126
        %v4538 = vpop.permute.xlu0 %4537
        %4539 = vrot.lane.b32.xlu0 %v4521, 126
        %v4540 = vpop.permute.xlu0 %4539
        %4541 = vrot.lane.b32.xlu0 %v4522, 126
        %v4542 = vpop.permute.xlu0 %4541
        %v4553 = vrot.slane %v4436, 5
        %v4554 = vrot.slane %v4438, 5
        %v4555 = vrot.slane %v4440, 5
        %v4556 = vrot.slane %v4442, 5
        %v4557 = vrot.slane %v4444, 5
        %v4558 = vrot.slane %v4446, 5
        %v4559 = vrot.slane %v4448, 5
        %v4560 = vrot.slane %v4450, 5
        %v4561 = vrot.slane %v4452, 5
        %v4562 = vrot.slane %v4454, 5
        %4563 = vrot.lane.b32.xlu0 %v4553, 125
        %v4564 = vpop.permute.xlu0 %4563
        %4565 = vrot.lane.b32.xlu0 %v4554, 125
        %v4566 = vpop.permute.xlu0 %4565
        %4567 = vrot.lane.b32.xlu0 %v4555, 125
        %v4568 = vpop.permute.xlu0 %4567
        %4569 = vrot.lane.b32.xlu0 %v4556, 125
        %v4570 = vpop.permute.xlu0 %4569
        %4571 = vrot.lane.b32.xlu0 %v4557, 125
        %v4572 = vpop.permute.xlu0 %4571
        %4573 = vrot.lane.b32.xlu0 %v4558, 125
        %v4574 = vpop.permute.xlu0 %4573
        %4575 = vrot.lane.b32.xlu0 %v4559, 125
        %v4576 = vpop.permute.xlu0 %4575
        %4577 = vrot.lane.b32.xlu0 %v4560, 125
        %v4578 = vpop.permute.xlu0 %4577
        %4579 = vrot.lane.b32.xlu0 %v4561, 125
        %v4580 = vpop.permute.xlu0 %4579
        %4581 = vrot.lane.b32.xlu0 %v4562, 125
        %v4582 = vpop.permute.xlu0 %4581
        %v4593 = vrot.slane %v4436, 4
        %v4594 = vrot.slane %v4438, 4
        %v4595 = vrot.slane %v4440, 4
        %v4596 = vrot.slane %v4442, 4
        %v4597 = vrot.slane %v4444, 4
        %v4598 = vrot.slane %v4446, 4
        %v4599 = vrot.slane %v4448, 4
        %v4600 = vrot.slane %v4450, 4
        %v4601 = vrot.slane %v4452, 4
        %v4602 = vrot.slane %v4454, 4
        %4603 = vrot.lane.b32.xlu0 %v4593, 124
        %v4604 = vpop.permute.xlu0 %4603
        %4605 = vrot.lane.b32.xlu0 %v4594, 124
        %v4606 = vpop.permute.xlu0 %4605
        %4607 = vrot.lane.b32.xlu0 %v4595, 124
        %v4608 = vpop.permute.xlu0 %4607
        %4609 = vrot.lane.b32.xlu0 %v4596, 124
        %v4610 = vpop.permute.xlu0 %4609
        %4611 = vrot.lane.b32.xlu0 %v4597, 124
        %v4612 = vpop.permute.xlu0 %4611
        %4613 = vrot.lane.b32.xlu0 %v4598, 124
        %v4614 = vpop.permute.xlu0 %4613
        %4615 = vrot.lane.b32.xlu0 %v4599, 124
        %v4616 = vpop.permute.xlu0 %4615
        %4617 = vrot.lane.b32.xlu0 %v4600, 124
        %v4618 = vpop.permute.xlu0 %4617
        %4619 = vrot.lane.b32.xlu0 %v4601, 124
        %v4620 = vpop.permute.xlu0 %4619
        %4621 = vrot.lane.b32.xlu0 %v4602, 124
        %v4622 = vpop.permute.xlu0 %4621
        %v4634 = vrot.slane %v4438, 3
        %v4635 = vrot.slane %v4440, 3
        %v4636 = vrot.slane %v4442, 3
        %v4637 = vrot.slane %v4444, 3
        %v4638 = vrot.slane %v4446, 3
        %v4639 = vrot.slane %v4448, 3
        %v4640 = vrot.slane %v4450, 3
        %v4641 = vrot.slane %v4452, 3
        %v4642 = vrot.slane %v4454, 3
        %v4643 = vrot.slane %v4456, 3
        %v4654 = vrot.slane %v4438, 2
        %v4655 = vrot.slane %v4440, 2
        %v4656 = vrot.slane %v4442, 2
        %v4657 = vrot.slane %v4444, 2
        %v4658 = vrot.slane %v4446, 2
        %v4659 = vrot.slane %v4448, 2
        %v4660 = vrot.slane %v4450, 2
        %v4661 = vrot.slane %v4452, 2
        %v4662 = vrot.slane %v4454, 2
        %v4663 = vrot.slane %v4456, 2
        %4664 = vrot.lane.b32.xlu0 %v4654, 127
        %v4665 = vpop.permute.xlu0 %4664
        %4666 = vrot.lane.b32.xlu0 %v4655, 127
        %v4667 = vpop.permute.xlu0 %4666
        %4668 = vrot.lane.b32.xlu0 %v4656, 127
        %v4669 = vpop.permute.xlu0 %4668
        %4670 = vrot.lane.b32.xlu0 %v4657, 127
        %v4671 = vpop.permute.xlu0 %4670
        %4672 = vrot.lane.b32.xlu0 %v4658, 127
        %v4673 = vpop.permute.xlu0 %4672
        %4674 = vrot.lane.b32.xlu0 %v4659, 127
        %v4675 = vpop.permute.xlu0 %4674
        %4676 = vrot.lane.b32.xlu0 %v4660, 127
        %v4677 = vpop.permute.xlu0 %4676
        %4678 = vrot.lane.b32.xlu0 %v4661, 127
        %v4679 = vpop.permute.xlu0 %4678
        %4680 = vrot.lane.b32.xlu0 %v4662, 127
        %v4681 = vpop.permute.xlu0 %4680
        %4682 = vrot.lane.b32.xlu0 %v4663, 127
        %v4683 = vpop.permute.xlu0 %4682
        %v4694 = vrot.slane %v4438, 1
        %v4695 = vrot.slane %v4440, 1
        %v4696 = vrot.slane %v4442, 1
        %v4697 = vrot.slane %v4444, 1
        %v4698 = vrot.slane %v4446, 1
        %v4699 = vrot.slane %v4448, 1
        %v4700 = vrot.slane %v4450, 1
        %v4701 = vrot.slane %v4452, 1
        %v4702 = vrot.slane %v4454, 1
        %v4703 = vrot.slane %v4456, 1
        %4704 = vrot.lane.b32.xlu0 %v4694, 126
        %v4705 = vpop.permute.xlu0 %4704
        %4706 = vrot.lane.b32.xlu0 %v4695, 126
        %v4707 = vpop.permute.xlu0 %4706
        %4708 = vrot.lane.b32.xlu0 %v4696, 126
        %v4709 = vpop.permute.xlu0 %4708
        %4710 = vrot.lane.b32.xlu0 %v4697, 126
        %v4711 = vpop.permute.xlu0 %4710
        %4712 = vrot.lane.b32.xlu0 %v4698, 126
        %v4713 = vpop.permute.xlu0 %4712
        %4714 = vrot.lane.b32.xlu0 %v4699, 126
        %v4715 = vpop.permute.xlu0 %4714
        %4716 = vrot.lane.b32.xlu0 %v4700, 126
        %v4717 = vpop.permute.xlu0 %4716
        %4718 = vrot.lane.b32.xlu0 %v4701, 126
        %v4719 = vpop.permute.xlu0 %4718
        %4720 = vrot.lane.b32.xlu0 %v4702, 126
        %v4721 = vpop.permute.xlu0 %4720
        %4722 = vrot.lane.b32.xlu0 %v4703, 126
        %v4723 = vpop.permute.xlu0 %4722
        %4734 = vrot.lane.b32.xlu0 %v4438, 125
        %v4735 = vpop.permute.xlu0 %4734
        %4736 = vrot.lane.b32.xlu0 %v4440, 125
        %v4737 = vpop.permute.xlu0 %4736
        %4738 = vrot.lane.b32.xlu0 %v4442, 125
        %v4739 = vpop.permute.xlu0 %4738
        %4740 = vrot.lane.b32.xlu0 %v4444, 125
        %v4741 = vpop.permute.xlu0 %4740
        %4742 = vrot.lane.b32.xlu0 %v4446, 125
        %v4743 = vpop.permute.xlu0 %4742
        %4744 = vrot.lane.b32.xlu0 %v4448, 125
        %v4745 = vpop.permute.xlu0 %4744
        %4746 = vrot.lane.b32.xlu0 %v4450, 125
        %v4747 = vpop.permute.xlu0 %4746
        %4748 = vrot.lane.b32.xlu0 %v4452, 125
        %v4749 = vpop.permute.xlu0 %4748
        %4750 = vrot.lane.b32.xlu0 %v4454, 125
        %v4751 = vpop.permute.xlu0 %4750
        %4752 = vrot.lane.b32.xlu0 %v4456, 125
        %v4753 = vpop.permute.xlu0 %4752
        %v4764 = vrot.slane %v4456, 7
        %4765 = vrot.lane.b32.xlu0 %v4474, 124
        %v4766 = vpop.permute.xlu0 %4765
        %4767 = vrot.lane.b32.xlu0 %v4475, 124
        %v4768 = vpop.permute.xlu0 %4767
        %4769 = vrot.lane.b32.xlu0 %v4476, 124
        %v4770 = vpop.permute.xlu0 %4769
        %4771 = vrot.lane.b32.xlu0 %v4477, 124
        %v4772 = vpop.permute.xlu0 %4771
        %4773 = vrot.lane.b32.xlu0 %v4478, 124
        %v4774 = vpop.permute.xlu0 %4773
        %4775 = vrot.lane.b32.xlu0 %v4479, 124
        %v4776 = vpop.permute.xlu0 %4775
        %4777 = vrot.lane.b32.xlu0 %v4480, 124
        %v4778 = vpop.permute.xlu0 %4777
        %4779 = vrot.lane.b32.xlu0 %v4481, 124
        %v4780 = vpop.permute.xlu0 %4779
        %4781 = vrot.lane.b32.xlu0 %v4482, 124
        %v4782 = vpop.permute.xlu0 %4781
        %4783 = vrot.lane.b32.xlu0 %v4764, 124
        %v4784 = vpop.permute.xlu0 %4783
        %v4796 = vrot.slane %v4456, 6
        %v4797 = vrot.slane %v4458, 6
        %v4808 = vrot.slane %v4456, 5
        %v4809 = vrot.slane %v4458, 5
        %4810 = vrot.lane.b32.xlu0 %v4555, 127
        %v4811 = vpop.permute.xlu0 %4810
        %4812 = vrot.lane.b32.xlu0 %v4556, 127
        %v4813 = vpop.permute.xlu0 %4812
        %4814 = vrot.lane.b32.xlu0 %v4557, 127
        %v4815 = vpop.permute.xlu0 %4814
        %4816 = vrot.lane.b32.xlu0 %v4558, 127
        %v4817 = vpop.permute.xlu0 %4816
        %4818 = vrot.lane.b32.xlu0 %v4559, 127
        %v4819 = vpop.permute.xlu0 %4818
        %4820 = vrot.lane.b32.xlu0 %v4560, 127
        %v4821 = vpop.permute.xlu0 %4820
        %4822 = vrot.lane.b32.xlu0 %v4561, 127
        %v4823 = vpop.permute.xlu0 %4822
        %4824 = vrot.lane.b32.xlu0 %v4562, 127
        %v4825 = vpop.permute.xlu0 %4824
        %4826 = vrot.lane.b32.xlu0 %v4808, 127
        %v4827 = vpop.permute.xlu0 %4826
        %4828 = vrot.lane.b32.xlu0 %v4809, 127
        %v4829 = vpop.permute.xlu0 %4828
        %v4840 = vrot.slane %v4456, 4
        %v4841 = vrot.slane %v4458, 4
        %4842 = vrot.lane.b32.xlu0 %v4595, 126
        %v4843 = vpop.permute.xlu0 %4842
        %4844 = vrot.lane.b32.xlu0 %v4596, 126
        %v4845 = vpop.permute.xlu0 %4844
        %4846 = vrot.lane.b32.xlu0 %v4597, 126
        %v4847 = vpop.permute.xlu0 %4846
        %4848 = vrot.lane.b32.xlu0 %v4598, 126
        %v4849 = vpop.permute.xlu0 %4848
        %4850 = vrot.lane.b32.xlu0 %v4599, 126
        %v4851 = vpop.permute.xlu0 %4850
        %4852 = vrot.lane.b32.xlu0 %v4600, 126
        %v4853 = vpop.permute.xlu0 %4852
        %4854 = vrot.lane.b32.xlu0 %v4601, 126
        %v4855 = vpop.permute.xlu0 %4854
        %4856 = vrot.lane.b32.xlu0 %v4602, 126
        %v4857 = vpop.permute.xlu0 %4856
        %4858 = vrot.lane.b32.xlu0 %v4840, 126
        %v4859 = vpop.permute.xlu0 %4858
        %4860 = vrot.lane.b32.xlu0 %v4841, 126
        %v4861 = vpop.permute.xlu0 %4860
        %v4872 = vrot.slane %v4458, 3
        %4873 = vrot.lane.b32.xlu0 %v4635, 125
        %v4874 = vpop.permute.xlu0 %4873
        %4875 = vrot.lane.b32.xlu0 %v4636, 125
        %v4876 = vpop.permute.xlu0 %4875
        %4877 = vrot.lane.b32.xlu0 %v4637, 125
        %v4878 = vpop.permute.xlu0 %4877
        %4879 = vrot.lane.b32.xlu0 %v4638, 125
        %v4880 = vpop.permute.xlu0 %4879
        %4881 = vrot.lane.b32.xlu0 %v4639, 125
        %v4882 = vpop.permute.xlu0 %4881
        %4883 = vrot.lane.b32.xlu0 %v4640, 125
        %v4884 = vpop.permute.xlu0 %4883
        %4885 = vrot.lane.b32.xlu0 %v4641, 125
        %v4886 = vpop.permute.xlu0 %4885
        %4887 = vrot.lane.b32.xlu0 %v4642, 125
        %v4888 = vpop.permute.xlu0 %4887
        %4889 = vrot.lane.b32.xlu0 %v4643, 125
        %v4890 = vpop.permute.xlu0 %4889
        %4891 = vrot.lane.b32.xlu0 %v4872, 125
        %v4892 = vpop.permute.xlu0 %4891
        %v4903 = vrot.slane %v4458, 2
        %4904 = vrot.lane.b32.xlu0 %v4655, 124
        %v4905 = vpop.permute.xlu0 %4904
        %4906 = vrot.lane.b32.xlu0 %v4656, 124
        %v4907 = vpop.permute.xlu0 %4906
        %4908 = vrot.lane.b32.xlu0 %v4657, 124
        %v4909 = vpop.permute.xlu0 %4908
        %4910 = vrot.lane.b32.xlu0 %v4658, 124
        %v4911 = vpop.permute.xlu0 %4910
        %4912 = vrot.lane.b32.xlu0 %v4659, 124
        %v4913 = vpop.permute.xlu0 %4912
        %4914 = vrot.lane.b32.xlu0 %v4660, 124
        %v4915 = vpop.permute.xlu0 %4914
        %4916 = vrot.lane.b32.xlu0 %v4661, 124
        %v4917 = vpop.permute.xlu0 %4916
        %4918 = vrot.lane.b32.xlu0 %v4662, 124
        %v4919 = vpop.permute.xlu0 %4918
        %4920 = vrot.lane.b32.xlu0 %v4663, 124
        %v4921 = vpop.permute.xlu0 %4920
        %4922 = vrot.lane.b32.xlu0 %v4903, 124
        %v4923 = vpop.permute.xlu0 %4922
        %v4935 = vrot.slane %v4458, 1
        %v4936 = vrot.slane %v4460, 1
        %v4947 = vsel %vm1791, %v4436, %v4484
        %v4948 = vsel %vm1791, %v4438, %v4486
        %v4949 = vsel %vm1791, %v4440, %v4488
        %v4950 = vsel %vm1791, %v4442, %v4490
        %v4951 = vsel %vm1791, %v4444, %v4492
        %v4952 = vsel %vm1791, %v4446, %v4494
        %v4953 = vsel %vm1791, %v4448, %v4496
        %v4954 = vsel %vm1791, %v4450, %v4498
        %v4955 = vsel %vm1791, %v4452, %v4500
        %v4956 = vsel %vm1791, %v4454, %v4502
        %v4957 = vsel %vm472, %v4947, %v4524
        %v4958 = vsel %vm472, %v4948, %v4526
        %v4959 = vsel %vm472, %v4949, %v4528
        %v4960 = vsel %vm472, %v4950, %v4530
        %v4961 = vsel %vm472, %v4951, %v4532
        %v4962 = vsel %vm472, %v4952, %v4534
        %v4963 = vsel %vm472, %v4953, %v4536
        %v4964 = vsel %vm472, %v4954, %v4538
        %v4965 = vsel %vm472, %v4955, %v4540
        %v4966 = vsel %vm472, %v4956, %v4542
        %v4967 = vsel %vm1848, %v4957, %v4564
        %v4968 = vsel %vm1848, %v4958, %v4566
        %v4969 = vsel %vm1848, %v4959, %v4568
        %v4970 = vsel %vm1848, %v4960, %v4570
        %v4971 = vsel %vm1848, %v4961, %v4572
        %v4972 = vsel %vm1848, %v4962, %v4574
        %v4973 = vsel %vm1848, %v4963, %v4576
        %v4974 = vsel %vm1848, %v4964, %v4578
        %v4975 = vsel %vm1848, %v4965, %v4580
        %v4976 = vsel %vm1848, %v4966, %v4582
        %v4977 = vsel %vm1877, %v4967, %v4604
        %v4978 = vsel %vm1877, %v4968, %v4606
        %v4979 = vsel %vm1877, %v4969, %v4608
        %v4980 = vsel %vm1877, %v4970, %v4610
        %v4981 = vsel %vm1877, %v4971, %v4612
        %v4982 = vsel %vm1877, %v4972, %v4614
        %v4983 = vsel %vm1877, %v4973, %v4616
        %v4984 = vsel %vm1877, %v4974, %v4618
        %v4985 = vsel %vm1877, %v4975, %v4620
        %v4986 = vsel %vm1877, %v4976, %v4622
        %v4987 = vsel %vm1906, %v4977, %v4634
        %v4988 = vsel %vm1906, %v4978, %v4635
        %v4989 = vsel %vm1906, %v4979, %v4636
        %v4990 = vsel %vm1906, %v4980, %v4637
        %v4991 = vsel %vm1906, %v4981, %v4638
        %v4992 = vsel %vm1906, %v4982, %v4639
        %v4993 = vsel %vm1906, %v4983, %v4640
        %v4994 = vsel %vm1906, %v4984, %v4641
        %v4995 = vsel %vm1906, %v4985, %v4642
        %v4996 = vsel %vm1906, %v4986, %v4643
        %v4997 = vsel %vm485, %v4987, %v4665
        %v4998 = vsel %vm485, %v4988, %v4667
        %v4999 = vsel %vm485, %v4989, %v4669
        %v5000 = vsel %vm485, %v4990, %v4671
        %v5001 = vsel %vm485, %v4991, %v4673
        %v5002 = vsel %vm485, %v4992, %v4675
        %v5003 = vsel %vm485, %v4993, %v4677
        %v5004 = vsel %vm485, %v4994, %v4679
        %v5005 = vsel %vm485, %v4995, %v4681
        %v5006 = vsel %vm485, %v4996, %v4683
        %v5007 = vsel %vm1963, %v4997, %v4705
        %v5008 = vsel %vm1963, %v4998, %v4707
        %v5009 = vsel %vm1963, %v4999, %v4709
        %v5010 = vsel %vm1963, %v5000, %v4711
        %v5011 = vsel %vm1963, %v5001, %v4713
        %v5012 = vsel %vm1963, %v5002, %v4715
        %v5013 = vsel %vm1963, %v5003, %v4717
        %v5014 = vsel %vm1963, %v5004, %v4719
        %v5015 = vsel %vm1963, %v5005, %v4721
        %v5016 = vsel %vm1963, %v5006, %v4723
        %v5017 = vsel %vm1791, %v4735, %v4766
        %v5018 = vsel %vm1791, %v4737, %v4768
        %v5019 = vsel %vm1791, %v4739, %v4770
        %v5020 = vsel %vm1791, %v4741, %v4772
        %v5021 = vsel %vm1791, %v4743, %v4774
        %v5022 = vsel %vm1791, %v4745, %v4776
        %v5023 = vsel %vm1791, %v4747, %v4778
        %v5024 = vsel %vm1791, %v4749, %v4780
        %v5025 = vsel %vm1791, %v4751, %v4782
        %v5026 = vsel %vm1791, %v4753, %v4784
        %v5027 = vsel %vm472, %v5017, %v4515
        %v5028 = vsel %vm472, %v5018, %v4516
        %v5029 = vsel %vm472, %v5019, %v4517
        %v5030 = vsel %vm472, %v5020, %v4518
        %v5031 = vsel %vm472, %v5021, %v4519
        %v5032 = vsel %vm472, %v5022, %v4520
        %v5033 = vsel %vm472, %v5023, %v4521
        %v5034 = vsel %vm472, %v5024, %v4522
        %v5035 = vsel %vm472, %v5025, %v4796
        %v5036 = vsel %vm472, %v5026, %v4797
        %v5037 = vsel %vm1848, %v5027, %v4811
        %v5038 = vsel %vm1848, %v5028, %v4813
        %v5039 = vsel %vm1848, %v5029, %v4815
        %v5040 = vsel %vm1848, %v5030, %v4817
        %v5041 = vsel %vm1848, %v5031, %v4819
        %v5042 = vsel %vm1848, %v5032, %v4821
        %v5043 = vsel %vm1848, %v5033, %v4823
        %v5044 = vsel %vm1848, %v5034, %v4825
        %v5045 = vsel %vm1848, %v5035, %v4827
        %v5046 = vsel %vm1848, %v5036, %v4829
        %v5047 = vsel %vm1877, %v5037, %v4843
        %v5048 = vsel %vm1877, %v5038, %v4845
        %v5049 = vsel %vm1877, %v5039, %v4847
        %v5050 = vsel %vm1877, %v5040, %v4849
        %v5051 = vsel %vm1877, %v5041, %v4851
        %v5052 = vsel %vm1877, %v5042, %v4853
        %v5053 = vsel %vm1877, %v5043, %v4855
        %v5054 = vsel %vm1877, %v5044, %v4857
        %v5055 = vsel %vm1877, %v5045, %v4859
        %v5056 = vsel %vm1877, %v5046, %v4861
        %v5057 = vsel %vm1906, %v5047, %v4874
        %v5058 = vsel %vm1906, %v5048, %v4876
        %v5059 = vsel %vm1906, %v5049, %v4878
        %v5060 = vsel %vm1906, %v5050, %v4880
        %v5061 = vsel %vm1906, %v5051, %v4882
        %v5062 = vsel %vm1906, %v5052, %v4884
        %v5063 = vsel %vm1906, %v5053, %v4886
        %v5064 = vsel %vm1906, %v5054, %v4888
        %v5065 = vsel %vm1906, %v5055, %v4890
        %v5066 = vsel %vm1906, %v5056, %v4892
        %v5067 = vsel %vm485, %v5057, %v4905
        %v5068 = vsel %vm485, %v5058, %v4907
        %v5069 = vsel %vm485, %v5059, %v4909
        %v5070 = vsel %vm485, %v5060, %v4911
        %v5071 = vsel %vm485, %v5061, %v4913
        %v5072 = vsel %vm485, %v5062, %v4915
        %v5073 = vsel %vm485, %v5063, %v4917
        %v5074 = vsel %vm485, %v5064, %v4919
        %v5075 = vsel %vm485, %v5065, %v4921
        %v5076 = vsel %vm485, %v5066, %v4923
        %v5077 = vsel %vm1963, %v5067, %v4696
        %v5078 = vsel %vm1963, %v5068, %v4697
        %v5079 = vsel %vm1963, %v5069, %v4698
        %v5080 = vsel %vm1963, %v5070, %v4699
        %v5081 = vsel %vm1963, %v5071, %v4700
        %v5082 = vsel %vm1963, %v5072, %v4701
        %v5083 = vsel %vm1963, %v5073, %v4702
        %v5084 = vsel %vm1963, %v5074, %v4703
        %v5085 = vsel %vm1963, %v5075, %v4935
        %v5086 = vsel %vm1963, %v5076, %v4936
        %v5087 = vrot.slane %v4458, 7
        %v5088 = vrot.slane %v4460, 7
        %5089 = vrot.lane.b32.xlu0 %v4764, 127
        %v5090 = vpop.permute.xlu0 %5089
        %5091 = vrot.lane.b32.xlu0 %v5087, 127
        %v5092 = vpop.permute.xlu0 %5091
        %5093 = vrot.lane.b32.xlu0 %v5088, 127
        %v5094 = vpop.permute.xlu0 %5093
        %v5098 = vrot.slane %v4460, 6
        %5099 = vrot.lane.b32.xlu0 %v4796, 126
        %v5100 = vpop.permute.xlu0 %5099
        %5101 = vrot.lane.b32.xlu0 %v4797, 126
        %v5102 = vpop.permute.xlu0 %5101
        %5103 = vrot.lane.b32.xlu0 %v5098, 126
        %v5104 = vpop.permute.xlu0 %5103
        %v5108 = vrot.slane %v4460, 5
        %5109 = vrot.lane.b32.xlu0 %v4808, 125
        %v5110 = vpop.permute.xlu0 %5109
        %5111 = vrot.lane.b32.xlu0 %v4809, 125
        %v5112 = vpop.permute.xlu0 %5111
        %5113 = vrot.lane.b32.xlu0 %v5108, 125
        %v5114 = vpop.permute.xlu0 %5113
        %v5119 = vrot.slane %v4460, 4
        %v5120 = vrot.slane %v4462, 4
        %5121 = vrot.lane.b32.xlu0 %v4597, 1
        %v5122 = vpop.permute.xlu0 %5121
        %5123 = vrot.lane.b32.xlu0 %v4598, 1
        %v5124 = vpop.permute.xlu0 %5123
        %5125 = vrot.lane.b32.xlu0 %v4599, 1
        %v5126 = vpop.permute.xlu0 %5125
        %5127 = vrot.lane.b32.xlu0 %v4600, 1
        %v5128 = vpop.permute.xlu0 %5127
        %5129 = vrot.lane.b32.xlu0 %v4601, 1
        %v5130 = vpop.permute.xlu0 %5129
        %5131 = vrot.lane.b32.xlu0 %v4602, 1
        %v5132 = vpop.permute.xlu0 %5131
        %5133 = vrot.lane.b32.xlu0 %v4840, 1
        %v5134 = vpop.permute.xlu0 %5133
        %5135 = vrot.lane.b32.xlu0 %v4841, 1
        %v5136 = vpop.permute.xlu0 %5135
        %5137 = vrot.lane.b32.xlu0 %v5119, 1
        %v5138 = vpop.permute.xlu0 %5137
        %5139 = vrot.lane.b32.xlu0 %v5120, 1
        %v5140 = vpop.permute.xlu0 %5139
        %v5151 = vrot.slane %v4460, 3
        %v5152 = vrot.slane %v4462, 3
        %v5156 = vrot.slane %v4460, 2
        %v5157 = vrot.slane %v4462, 2
        %5158 = vrot.lane.b32.xlu0 %v4903, 127
        %v5159 = vpop.permute.xlu0 %5158
        %5160 = vrot.lane.b32.xlu0 %v5156, 127
        %v5161 = vpop.permute.xlu0 %5160
        %5162 = vrot.lane.b32.xlu0 %v5157, 127
        %v5163 = vpop.permute.xlu0 %5162
        %v5167 = vrot.slane %v4462, 1
        %5168 = vrot.lane.b32.xlu0 %v4935, 126
        %v5169 = vpop.permute.xlu0 %5168
        %5170 = vrot.lane.b32.xlu0 %v4936, 126
        %v5171 = vpop.permute.xlu0 %5170
        %5172 = vrot.lane.b32.xlu0 %v5167, 126
        %v5173 = vpop.permute.xlu0 %5172
        %5177 = vrot.lane.b32.xlu0 %v4458, 125
        %v5178 = vpop.permute.xlu0 %5177
        %5179 = vrot.lane.b32.xlu0 %v4460, 125
        %v5180 = vpop.permute.xlu0 %5179
        %5181 = vrot.lane.b32.xlu0 %v4462, 125
        %v5182 = vpop.permute.xlu0 %5181
        %v5183 = vsel %vm1791, %v4456, %v5090
        %v5184 = vsel %vm1791, %v4458, %v5092
        %v5185 = vsel %vm1791, %v4460, %v5094
        %v5186 = vsel %vm472, %v5183, %v5100
        %v5187 = vsel %vm472, %v5184, %v5102
        %v5188 = vsel %vm472, %v5185, %v5104
        %v5189 = vsel %vm1848, %v5186, %v5110
        %v5190 = vsel %vm1848, %v5187, %v5112
        %v5191 = vsel %vm1848, %v5188, %v5114
        %v5192 = vsel %vm1877, %v4970, %v5122
        %v5193 = vsel %vm1877, %v4971, %v5124
        %v5194 = vsel %vm1877, %v4972, %v5126
        %v5195 = vsel %vm1877, %v4973, %v5128
        %v5196 = vsel %vm1877, %v4974, %v5130
        %v5197 = vsel %vm1877, %v4975, %v5132
        %v5198 = vsel %vm1877, %v4976, %v5134
        %v5199 = vsel %vm1877, %v5189, %v5136
        %v5200 = vsel %vm1877, %v5190, %v5138
        %v5201 = vsel %vm1877, %v5191, %v5140
        %v5202 = vsel %vm1906, %v5192, %v4637
        %v5203 = vsel %vm1906, %v5193, %v4638
        %v5204 = vsel %vm1906, %v5194, %v4639
        %v5205 = vsel %vm1906, %v5195, %v4640
        %v5206 = vsel %vm1906, %v5196, %v4641
        %v5207 = vsel %vm1906, %v5197, %v4642
        %v5208 = vsel %vm1906, %v5198, %v4643
        %v5209 = vsel %vm1906, %v5199, %v4872
        %v5210 = vsel %vm1906, %v5200, %v5151
        %v5211 = vsel %vm1906, %v5201, %v5152
        %v5212 = vsel %vm485, %v5202, %v4671
        %v5213 = vsel %vm485, %v5203, %v4673
        %v5214 = vsel %vm485, %v5204, %v4675
        %v5215 = vsel %vm485, %v5205, %v4677
        %v5216 = vsel %vm485, %v5206, %v4679
        %v5217 = vsel %vm485, %v5207, %v4681
        %v5218 = vsel %vm485, %v5208, %v4683
        %v5219 = vsel %vm485, %v5209, %v5159
        %v5220 = vsel %vm485, %v5210, %v5161
        %v5221 = vsel %vm485, %v5211, %v5163
        %v5222 = vsel %vm1963, %v5212, %v4711
        %v5223 = vsel %vm1963, %v5213, %v4713
        %v5224 = vsel %vm1963, %v5214, %v4715
        %v5225 = vsel %vm1963, %v5215, %v4717
        %v5226 = vsel %vm1963, %v5216, %v4719
        %v5227 = vsel %vm1963, %v5217, %v4721
        %v5228 = vsel %vm1963, %v5218, %v4723
        %v5229 = vsel %vm1963, %v5219, %v5169
        %v5230 = vsel %vm1963, %v5220, %v5171
        %v5231 = vsel %vm1963, %v5221, %v5173
        %5242 = vrot.lane.b32.xlu0 %v5222, 127
        %v5243 = vpop.permute.xlu0 %5242
        %5244 = vrot.lane.b32.xlu0 %v4741, 127
        %v5245 = vpop.permute.xlu0 %5244
        %5246 = vrot.lane.b32.xlu0 %v5223, 127
        %v5247 = vpop.permute.xlu0 %5246
        %5248 = vrot.lane.b32.xlu0 %v4743, 127
        %v5249 = vpop.permute.xlu0 %5248
        %5250 = vrot.lane.b32.xlu0 %v5224, 127
        %v5251 = vpop.permute.xlu0 %5250
        %5252 = vrot.lane.b32.xlu0 %v4745, 127
        %v5253 = vpop.permute.xlu0 %5252
        %5254 = vrot.lane.b32.xlu0 %v5225, 127
        %v5255 = vpop.permute.xlu0 %5254
        %5256 = vrot.lane.b32.xlu0 %v4747, 127
        %v5257 = vpop.permute.xlu0 %5256
        %5258 = vrot.lane.b32.xlu0 %v5226, 127
        %v5259 = vpop.permute.xlu0 %5258
        %5260 = vrot.lane.b32.xlu0 %v4749, 127
        %v5261 = vpop.permute.xlu0 %5260
        %5262 = vrot.lane.b32.xlu0 %v5227, 127
        %v5263 = vpop.permute.xlu0 %5262
        %5264 = vrot.lane.b32.xlu0 %v4751, 127
        %v5265 = vpop.permute.xlu0 %5264
        %5266 = vrot.lane.b32.xlu0 %v5228, 127
        %v5267 = vpop.permute.xlu0 %5266
        %5268 = vrot.lane.b32.xlu0 %v4753, 127
        %v5269 = vpop.permute.xlu0 %5268
        %5270 = vrot.lane.b32.xlu0 %v5229, 127
        %v5271 = vpop.permute.xlu0 %5270
        %5272 = vrot.lane.b32.xlu0 %v5178, 127
        %v5273 = vpop.permute.xlu0 %5272
        %5274 = vrot.lane.b32.xlu0 %v5230, 127
        %v5275 = vpop.permute.xlu0 %5274
        %5276 = vrot.lane.b32.xlu0 %v5180, 127
        %v5277 = vpop.permute.xlu0 %5276
        %5278 = vrot.lane.b32.xlu0 %v5231, 127
        %v5279 = vpop.permute.xlu0 %5278
        %5280 = vrot.lane.b32.xlu0 %v5182, 127
        %v5281 = vpop.permute.xlu0 %5280
        %v5302 = vrot.slane %v4436, 1
        %5306 = vrot.lane.b32.xlu0 %v4436, 127
        %v5307 = vpop.permute.xlu0 %5306
        %5308 = vrot.lane.b32.xlu0 %v4438, 127
        %v5309 = vpop.permute.xlu0 %5308
        %5310 = vrot.lane.b32.xlu0 %v4440, 127
        %v5311 = vpop.permute.xlu0 %5310
        %5312 = vrot.lane.b32.xlu0 %v4442, 127
        %v5313 = vpop.permute.xlu0 %5312
        %5314 = vrot.lane.b32.xlu0 %v4444, 127
        %v5315 = vpop.permute.xlu0 %5314
        %5316 = vrot.lane.b32.xlu0 %v4446, 127
        %v5317 = vpop.permute.xlu0 %5316
        %5318 = vrot.lane.b32.xlu0 %v4448, 127
        %v5319 = vpop.permute.xlu0 %5318
        %5320 = vrot.lane.b32.xlu0 %v4450, 127
        %v5321 = vpop.permute.xlu0 %5320
        %5322 = vrot.lane.b32.xlu0 %v4452, 127
        %v5323 = vpop.permute.xlu0 %5322
        %5324 = vrot.lane.b32.xlu0 %v4454, 127
        %v5325 = vpop.permute.xlu0 %5324
        %5336 = vrot.lane.b32.xlu0 %v4473, 126
        %v5337 = vpop.permute.xlu0 %5336
        %5338 = vrot.lane.b32.xlu0 %v4474, 126
        %v5339 = vpop.permute.xlu0 %5338
        %5340 = vrot.lane.b32.xlu0 %v4475, 126
        %v5341 = vpop.permute.xlu0 %5340
        %5342 = vrot.lane.b32.xlu0 %v4476, 126
        %v5343 = vpop.permute.xlu0 %5342
        %5344 = vrot.lane.b32.xlu0 %v4477, 126
        %v5345 = vpop.permute.xlu0 %5344
        %5346 = vrot.lane.b32.xlu0 %v4478, 126
        %v5347 = vpop.permute.xlu0 %5346
        %5348 = vrot.lane.b32.xlu0 %v4479, 126
        %v5349 = vpop.permute.xlu0 %5348
        %5350 = vrot.lane.b32.xlu0 %v4480, 126
        %v5351 = vpop.permute.xlu0 %5350
        %5352 = vrot.lane.b32.xlu0 %v4481, 126
        %v5353 = vpop.permute.xlu0 %5352
        %5354 = vrot.lane.b32.xlu0 %v4482, 126
        %v5355 = vpop.permute.xlu0 %5354
        %5366 = vrot.lane.b32.xlu0 %v4513, 125
        %v5367 = vpop.permute.xlu0 %5366
        %5368 = vrot.lane.b32.xlu0 %v4514, 125
        %v5369 = vpop.permute.xlu0 %5368
        %5370 = vrot.lane.b32.xlu0 %v4515, 125
        %v5371 = vpop.permute.xlu0 %5370
        %5372 = vrot.lane.b32.xlu0 %v4516, 125
        %v5373 = vpop.permute.xlu0 %5372
        %5374 = vrot.lane.b32.xlu0 %v4517, 125
        %v5375 = vpop.permute.xlu0 %5374
        %5376 = vrot.lane.b32.xlu0 %v4518, 125
        %v5377 = vpop.permute.xlu0 %5376
        %5378 = vrot.lane.b32.xlu0 %v4519, 125
        %v5379 = vpop.permute.xlu0 %5378
        %5380 = vrot.lane.b32.xlu0 %v4520, 125
        %v5381 = vpop.permute.xlu0 %5380
        %5382 = vrot.lane.b32.xlu0 %v4521, 125
        %v5383 = vpop.permute.xlu0 %5382
        %5384 = vrot.lane.b32.xlu0 %v4522, 125
        %v5385 = vpop.permute.xlu0 %5384
        %5396 = vrot.lane.b32.xlu0 %v4553, 124
        %v5397 = vpop.permute.xlu0 %5396
        %5398 = vrot.lane.b32.xlu0 %v4554, 124
        %v5399 = vpop.permute.xlu0 %5398
        %5400 = vrot.lane.b32.xlu0 %v4555, 124
        %v5401 = vpop.permute.xlu0 %5400
        %5402 = vrot.lane.b32.xlu0 %v4556, 124
        %v5403 = vpop.permute.xlu0 %5402
        %5404 = vrot.lane.b32.xlu0 %v4557, 124
        %v5405 = vpop.permute.xlu0 %5404
        %5406 = vrot.lane.b32.xlu0 %v4558, 124
        %v5407 = vpop.permute.xlu0 %5406
        %5408 = vrot.lane.b32.xlu0 %v4559, 124
        %v5409 = vpop.permute.xlu0 %5408
        %5410 = vrot.lane.b32.xlu0 %v4560, 124
        %v5411 = vpop.permute.xlu0 %5410
        %5412 = vrot.lane.b32.xlu0 %v4561, 124
        %v5413 = vpop.permute.xlu0 %5412
        %5414 = vrot.lane.b32.xlu0 %v4562, 124
        %v5415 = vpop.permute.xlu0 %5414
        %5436 = vrot.lane.b32.xlu0 %v4634, 127
        %v5437 = vpop.permute.xlu0 %5436
        %5438 = vrot.lane.b32.xlu0 %v4635, 127
        %v5439 = vpop.permute.xlu0 %5438
        %5440 = vrot.lane.b32.xlu0 %v4636, 127
        %v5441 = vpop.permute.xlu0 %5440
        %5442 = vrot.lane.b32.xlu0 %v4637, 127
        %v5443 = vpop.permute.xlu0 %5442
        %5444 = vrot.lane.b32.xlu0 %v4638, 127
        %v5445 = vpop.permute.xlu0 %5444
        %5446 = vrot.lane.b32.xlu0 %v4639, 127
        %v5447 = vpop.permute.xlu0 %5446
        %5448 = vrot.lane.b32.xlu0 %v4640, 127
        %v5449 = vpop.permute.xlu0 %5448
        %5450 = vrot.lane.b32.xlu0 %v4641, 127
        %v5451 = vpop.permute.xlu0 %5450
        %5452 = vrot.lane.b32.xlu0 %v4642, 127
        %v5453 = vpop.permute.xlu0 %5452
        %5454 = vrot.lane.b32.xlu0 %v4643, 127
        %v5455 = vpop.permute.xlu0 %5454
        %5466 = vrot.lane.b32.xlu0 %v4654, 126
        %v5467 = vpop.permute.xlu0 %5466
        %5468 = vrot.lane.b32.xlu0 %v4655, 126
        %v5469 = vpop.permute.xlu0 %5468
        %5470 = vrot.lane.b32.xlu0 %v4656, 126
        %v5471 = vpop.permute.xlu0 %5470
        %5472 = vrot.lane.b32.xlu0 %v4657, 126
        %v5473 = vpop.permute.xlu0 %5472
        %5474 = vrot.lane.b32.xlu0 %v4658, 126
        %v5475 = vpop.permute.xlu0 %5474
        %5476 = vrot.lane.b32.xlu0 %v4659, 126
        %v5477 = vpop.permute.xlu0 %5476
        %5478 = vrot.lane.b32.xlu0 %v4660, 126
        %v5479 = vpop.permute.xlu0 %5478
        %5480 = vrot.lane.b32.xlu0 %v4661, 126
        %v5481 = vpop.permute.xlu0 %5480
        %5482 = vrot.lane.b32.xlu0 %v4662, 126
        %v5483 = vpop.permute.xlu0 %5482
        %5484 = vrot.lane.b32.xlu0 %v4663, 126
        %v5485 = vpop.permute.xlu0 %5484
        %5496 = vrot.lane.b32.xlu0 %v4694, 125
        %v5497 = vpop.permute.xlu0 %5496
        %5498 = vrot.lane.b32.xlu0 %v4695, 125
        %v5499 = vpop.permute.xlu0 %5498
        %5500 = vrot.lane.b32.xlu0 %v4696, 125
        %v5501 = vpop.permute.xlu0 %5500
        %5502 = vrot.lane.b32.xlu0 %v4697, 125
        %v5503 = vpop.permute.xlu0 %5502
        %5504 = vrot.lane.b32.xlu0 %v4698, 125
        %v5505 = vpop.permute.xlu0 %5504
        %5506 = vrot.lane.b32.xlu0 %v4699, 125
        %v5507 = vpop.permute.xlu0 %5506
        %5508 = vrot.lane.b32.xlu0 %v4700, 125
        %v5509 = vpop.permute.xlu0 %5508
        %5510 = vrot.lane.b32.xlu0 %v4701, 125
        %v5511 = vpop.permute.xlu0 %5510
        %5512 = vrot.lane.b32.xlu0 %v4702, 125
        %v5513 = vpop.permute.xlu0 %5512
        %5514 = vrot.lane.b32.xlu0 %v4703, 125
        %v5515 = vpop.permute.xlu0 %5514
        %5526 = vrot.lane.b32.xlu0 %v4438, 124
        %v5527 = vpop.permute.xlu0 %5526
        %5528 = vrot.lane.b32.xlu0 %v4440, 124
        %v5529 = vpop.permute.xlu0 %5528
        %5530 = vrot.lane.b32.xlu0 %v4442, 124
        %v5531 = vpop.permute.xlu0 %5530
        %5532 = vrot.lane.b32.xlu0 %v4444, 124
        %v5533 = vpop.permute.xlu0 %5532
        %5534 = vrot.lane.b32.xlu0 %v4446, 124
        %v5535 = vpop.permute.xlu0 %5534
        %5536 = vrot.lane.b32.xlu0 %v4448, 124
        %v5537 = vpop.permute.xlu0 %5536
        %5538 = vrot.lane.b32.xlu0 %v4450, 124
        %v5539 = vpop.permute.xlu0 %5538
        %5540 = vrot.lane.b32.xlu0 %v4452, 124
        %v5541 = vpop.permute.xlu0 %5540
        %5542 = vrot.lane.b32.xlu0 %v4454, 124
        %v5543 = vpop.permute.xlu0 %5542
        %5544 = vrot.lane.b32.xlu0 %v4456, 124
        %v5545 = vpop.permute.xlu0 %5544
        %5566 = vrot.lane.b32.xlu0 %v4515, 127
        %v5567 = vpop.permute.xlu0 %5566
        %5568 = vrot.lane.b32.xlu0 %v4516, 127
        %v5569 = vpop.permute.xlu0 %5568
        %5570 = vrot.lane.b32.xlu0 %v4517, 127
        %v5571 = vpop.permute.xlu0 %5570
        %5572 = vrot.lane.b32.xlu0 %v4518, 127
        %v5573 = vpop.permute.xlu0 %5572
        %5574 = vrot.lane.b32.xlu0 %v4519, 127
        %v5575 = vpop.permute.xlu0 %5574
        %5576 = vrot.lane.b32.xlu0 %v4520, 127
        %v5577 = vpop.permute.xlu0 %5576
        %5578 = vrot.lane.b32.xlu0 %v4521, 127
        %v5579 = vpop.permute.xlu0 %5578
        %5580 = vrot.lane.b32.xlu0 %v4522, 127
        %v5581 = vpop.permute.xlu0 %5580
        %5582 = vrot.lane.b32.xlu0 %v4796, 127
        %v5583 = vpop.permute.xlu0 %5582
        %5584 = vrot.lane.b32.xlu0 %v4797, 127
        %v5585 = vpop.permute.xlu0 %5584
        %5596 = vrot.lane.b32.xlu0 %v4555, 126
        %v5597 = vpop.permute.xlu0 %5596
        %5598 = vrot.lane.b32.xlu0 %v4556, 126
        %v5599 = vpop.permute.xlu0 %5598
        %5600 = vrot.lane.b32.xlu0 %v4557, 126
        %v5601 = vpop.permute.xlu0 %5600
        %5602 = vrot.lane.b32.xlu0 %v4558, 126
        %v5603 = vpop.permute.xlu0 %5602
        %5604 = vrot.lane.b32.xlu0 %v4559, 126
        %v5605 = vpop.permute.xlu0 %5604
        %5606 = vrot.lane.b32.xlu0 %v4560, 126
        %v5607 = vpop.permute.xlu0 %5606
        %5608 = vrot.lane.b32.xlu0 %v4561, 126
        %v5609 = vpop.permute.xlu0 %5608
        %5610 = vrot.lane.b32.xlu0 %v4562, 126
        %v5611 = vpop.permute.xlu0 %5610
        %5612 = vrot.lane.b32.xlu0 %v4808, 126
        %v5613 = vpop.permute.xlu0 %5612
        %5614 = vrot.lane.b32.xlu0 %v4809, 126
        %v5615 = vpop.permute.xlu0 %5614
        %5626 = vrot.lane.b32.xlu0 %v4595, 125
        %v5627 = vpop.permute.xlu0 %5626
        %5628 = vrot.lane.b32.xlu0 %v4596, 125
        %v5629 = vpop.permute.xlu0 %5628
        %5630 = vrot.lane.b32.xlu0 %v4597, 125
        %v5631 = vpop.permute.xlu0 %5630
        %5632 = vrot.lane.b32.xlu0 %v4598, 125
        %v5633 = vpop.permute.xlu0 %5632
        %5634 = vrot.lane.b32.xlu0 %v4599, 125
        %v5635 = vpop.permute.xlu0 %5634
        %5636 = vrot.lane.b32.xlu0 %v4600, 125
        %v5637 = vpop.permute.xlu0 %5636
        %5638 = vrot.lane.b32.xlu0 %v4601, 125
        %v5639 = vpop.permute.xlu0 %5638
        %5640 = vrot.lane.b32.xlu0 %v4602, 125
        %v5641 = vpop.permute.xlu0 %5640
        %5642 = vrot.lane.b32.xlu0 %v4840, 125
        %v5643 = vpop.permute.xlu0 %5642
        %5644 = vrot.lane.b32.xlu0 %v4841, 125
        %v5645 = vpop.permute.xlu0 %5644
        %5656 = vrot.lane.b32.xlu0 %v4635, 124
        %v5657 = vpop.permute.xlu0 %5656
        %5658 = vrot.lane.b32.xlu0 %v4636, 124
        %v5659 = vpop.permute.xlu0 %5658
        %5660 = vrot.lane.b32.xlu0 %v4637, 124
        %v5661 = vpop.permute.xlu0 %5660
        %5662 = vrot.lane.b32.xlu0 %v4638, 124
        %v5663 = vpop.permute.xlu0 %5662
        %5664 = vrot.lane.b32.xlu0 %v4639, 124
        %v5665 = vpop.permute.xlu0 %5664
        %5666 = vrot.lane.b32.xlu0 %v4640, 124
        %v5667 = vpop.permute.xlu0 %5666
        %5668 = vrot.lane.b32.xlu0 %v4641, 124
        %v5669 = vpop.permute.xlu0 %5668
        %5670 = vrot.lane.b32.xlu0 %v4642, 124
        %v5671 = vpop.permute.xlu0 %5670
        %5672 = vrot.lane.b32.xlu0 %v4643, 124
        %v5673 = vpop.permute.xlu0 %5672
        %5674 = vrot.lane.b32.xlu0 %v4872, 124
        %v5675 = vpop.permute.xlu0 %5674
        %v5696 = vsel %vm1791, %v5302, %v5307
        %v5697 = vsel %vm1791, %v4694, %v5309
        %v5698 = vsel %vm1791, %v4695, %v5311
        %v5699 = vsel %vm1791, %v4696, %v5313
        %v5700 = vsel %vm1791, %v4697, %v5315
        %v5701 = vsel %vm1791, %v4698, %v5317
        %v5702 = vsel %vm1791, %v4699, %v5319
        %v5703 = vsel %vm1791, %v4700, %v5321
        %v5704 = vsel %vm1791, %v4701, %v5323
        %v5705 = vsel %vm1791, %v4702, %v5325
        %v5706 = vsel %vm472, %v5696, %v5337
        %v5707 = vsel %vm472, %v5697, %v5339
        %v5708 = vsel %vm472, %v5698, %v5341
        %v5709 = vsel %vm472, %v5699, %v5343
        %v5710 = vsel %vm472, %v5700, %v5345
        %v5711 = vsel %vm472, %v5701, %v5347
        %v5712 = vsel %vm472, %v5702, %v5349
        %v5713 = vsel %vm472, %v5703, %v5351
        %v5714 = vsel %vm472, %v5704, %v5353
        %v5715 = vsel %vm472, %v5705, %v5355
        %v5716 = vsel %vm1848, %v5706, %v5367
        %v5717 = vsel %vm1848, %v5707, %v5369
        %v5718 = vsel %vm1848, %v5708, %v5371
        %v5719 = vsel %vm1848, %v5709, %v5373
        %v5720 = vsel %vm1848, %v5710, %v5375
        %v5721 = vsel %vm1848, %v5711, %v5377
        %v5722 = vsel %vm1848, %v5712, %v5379
        %v5723 = vsel %vm1848, %v5713, %v5381
        %v5724 = vsel %vm1848, %v5714, %v5383
        %v5725 = vsel %vm1848, %v5715, %v5385
        %v5726 = vsel %vm1877, %v5716, %v5397
        %v5727 = vsel %vm1877, %v5717, %v5399
        %v5728 = vsel %vm1877, %v5718, %v5401
        %v5729 = vsel %vm1877, %v5719, %v5403
        %v5730 = vsel %vm1877, %v5720, %v5405
        %v5731 = vsel %vm1877, %v5721, %v5407
        %v5732 = vsel %vm1877, %v5722, %v5409
        %v5733 = vsel %vm1877, %v5723, %v5411
        %v5734 = vsel %vm1877, %v5724, %v5413
        %v5735 = vsel %vm1877, %v5725, %v5415
        %v5736 = vsel %vm1906, %v5726, %v4594
        %v5737 = vsel %vm1906, %v5727, %v4595
        %v5738 = vsel %vm1906, %v5728, %v4596
        %v5739 = vsel %vm1906, %v5729, %v4597
        %v5740 = vsel %vm1906, %v5730, %v4598
        %v5741 = vsel %vm1906, %v5731, %v4599
        %v5742 = vsel %vm1906, %v5732, %v4600
        %v5743 = vsel %vm1906, %v5733, %v4601
        %v5744 = vsel %vm1906, %v5734, %v4602
        %v5745 = vsel %vm1906, %v5735, %v4840
        %v5746 = vsel %vm485, %v5736, %v5437
        %v5747 = vsel %vm485, %v5737, %v5439
        %v5748 = vsel %vm485, %v5738, %v5441
        %v5749 = vsel %vm485, %v5739, %v5443
        %v5750 = vsel %vm485, %v5740, %v5445
        %v5751 = vsel %vm485, %v5741, %v5447
        %v5752 = vsel %vm485, %v5742, %v5449
        %v5753 = vsel %vm485, %v5743, %v5451
        %v5754 = vsel %vm485, %v5744, %v5453
        %v5755 = vsel %vm485, %v5745, %v5455
        %v5756 = vsel %vm1963, %v5746, %v5467
        %v5757 = vsel %vm1963, %v5747, %v5469
        %v5758 = vsel %vm1963, %v5748, %v5471
        %v5759 = vsel %vm1963, %v5749, %v5473
        %v5760 = vsel %vm1963, %v5750, %v5475
        %v5761 = vsel %vm1963, %v5751, %v5477
        %v5762 = vsel %vm1963, %v5752, %v5479
        %v5763 = vsel %vm1963, %v5753, %v5481
        %v5764 = vsel %vm1963, %v5754, %v5483
        %v5765 = vsel %vm1963, %v5755, %v5485
        %v5766 = vsel %vm1791, %v5497, %v5527
        %v5767 = vsel %vm1791, %v5499, %v5529
        %v5768 = vsel %vm1791, %v5501, %v5531
        %v5769 = vsel %vm1791, %v5503, %v5533
        %v5770 = vsel %vm1791, %v5505, %v5535
        %v5771 = vsel %vm1791, %v5507, %v5537
        %v5772 = vsel %vm1791, %v5509, %v5539
        %v5773 = vsel %vm1791, %v5511, %v5541
        %v5774 = vsel %vm1791, %v5513, %v5543
        %v5775 = vsel %vm1791, %v5515, %v5545
        %v5776 = vsel %vm472, %v5766, %v4475
        %v5777 = vsel %vm472, %v5767, %v4476
        %v5778 = vsel %vm472, %v5768, %v4477
        %v5779 = vsel %vm472, %v5769, %v4478
        %v5780 = vsel %vm472, %v5770, %v4479
        %v5781 = vsel %vm472, %v5771, %v4480
        %v5782 = vsel %vm472, %v5772, %v4481
        %v5783 = vsel %vm472, %v5773, %v4482
        %v5784 = vsel %vm472, %v5774, %v4764
        %v5785 = vsel %vm472, %v5775, %v5087
        %v5786 = vsel %vm1848, %v5776, %v5567
        %v5787 = vsel %vm1848, %v5777, %v5569
        %v5788 = vsel %vm1848, %v5778, %v5571
        %v5789 = vsel %vm1848, %v5779, %v5573
        %v5790 = vsel %vm1848, %v5780, %v5575
        %v5791 = vsel %vm1848, %v5781, %v5577
        %v5792 = vsel %vm1848, %v5782, %v5579
        %v5793 = vsel %vm1848, %v5783, %v5581
        %v5794 = vsel %vm1848, %v5784, %v5583
        %v5795 = vsel %vm1848, %v5785, %v5585
        %v5796 = vsel %vm1877, %v5786, %v5597
        %v5797 = vsel %vm1877, %v5787, %v5599
        %v5798 = vsel %vm1877, %v5788, %v5601
        %v5799 = vsel %vm1877, %v5789, %v5603
        %v5800 = vsel %vm1877, %v5790, %v5605
        %v5801 = vsel %vm1877, %v5791, %v5607
        %v5802 = vsel %vm1877, %v5792, %v5609
        %v5803 = vsel %vm1877, %v5793, %v5611
        %v5804 = vsel %vm1877, %v5794, %v5613
        %v5805 = vsel %vm1877, %v5795, %v5615
        %v5806 = vsel %vm1906, %v5796, %v5627
        %v5807 = vsel %vm1906, %v5797, %v5629
        %v5808 = vsel %vm1906, %v5798, %v5631
        %v5809 = vsel %vm1906, %v5799, %v5633
        %v5810 = vsel %vm1906, %v5800, %v5635
        %v5811 = vsel %vm1906, %v5801, %v5637
        %v5812 = vsel %vm1906, %v5802, %v5639
        %v5813 = vsel %vm1906, %v5803, %v5641
        %v5814 = vsel %vm1906, %v5804, %v5643
        %v5815 = vsel %vm1906, %v5805, %v5645
        %v5816 = vsel %vm485, %v5806, %v5657
        %v5817 = vsel %vm485, %v5807, %v5659
        %v5818 = vsel %vm485, %v5808, %v5661
        %v5819 = vsel %vm485, %v5809, %v5663
        %v5820 = vsel %vm485, %v5810, %v5665
        %v5821 = vsel %vm485, %v5811, %v5667
        %v5822 = vsel %vm485, %v5812, %v5669
        %v5823 = vsel %vm485, %v5813, %v5671
        %v5824 = vsel %vm485, %v5814, %v5673
        %v5825 = vsel %vm485, %v5815, %v5675
        %v5826 = vsel %vm1963, %v5816, %v4656
        %v5827 = vsel %vm1963, %v5817, %v4657
        %v5828 = vsel %vm1963, %v5818, %v4658
        %v5829 = vsel %vm1963, %v5819, %v4659
        %v5830 = vsel %vm1963, %v5820, %v4660
        %v5831 = vsel %vm1963, %v5821, %v4661
        %v5832 = vsel %vm1963, %v5822, %v4662
        %v5833 = vsel %vm1963, %v5823, %v4663
        %v5834 = vsel %vm1963, %v5824, %v4903
        %v5835 = vsel %vm1963, %v5825, %v5156
        %5836 = vrot.lane.b32.xlu0 %v4456, 127
        %v5837 = vpop.permute.xlu0 %5836
        %5838 = vrot.lane.b32.xlu0 %v4458, 127
        %v5839 = vpop.permute.xlu0 %5838
        %5840 = vrot.lane.b32.xlu0 %v4460, 127
        %v5841 = vpop.permute.xlu0 %5840
        %5845 = vrot.lane.b32.xlu0 %v4764, 126
        %v5846 = vpop.permute.xlu0 %5845
        %5847 = vrot.lane.b32.xlu0 %v5087, 126
        %v5848 = vpop.permute.xlu0 %5847
        %5849 = vrot.lane.b32.xlu0 %v5088, 126
        %v5850 = vpop.permute.xlu0 %5849
        %5854 = vrot.lane.b32.xlu0 %v4796, 125
        %v5855 = vpop.permute.xlu0 %5854
        %5856 = vrot.lane.b32.xlu0 %v4797, 125
        %v5857 = vpop.permute.xlu0 %5856
        %5858 = vrot.lane.b32.xlu0 %v5098, 125
        %v5859 = vpop.permute.xlu0 %5858
        %v5863 = vrot.slane %v4462, 5
        %5864 = vrot.lane.b32.xlu0 %v4557, 1
        %v5865 = vpop.permute.xlu0 %5864
        %5866 = vrot.lane.b32.xlu0 %v4558, 1
        %v5867 = vpop.permute.xlu0 %5866
        %5868 = vrot.lane.b32.xlu0 %v4559, 1
        %v5869 = vpop.permute.xlu0 %5868
        %5870 = vrot.lane.b32.xlu0 %v4560, 1
        %v5871 = vpop.permute.xlu0 %5870
        %5872 = vrot.lane.b32.xlu0 %v4561, 1
        %v5873 = vpop.permute.xlu0 %5872
        %5874 = vrot.lane.b32.xlu0 %v4562, 1
        %v5875 = vpop.permute.xlu0 %5874
        %5876 = vrot.lane.b32.xlu0 %v4808, 1
        %v5877 = vpop.permute.xlu0 %5876
        %5878 = vrot.lane.b32.xlu0 %v4809, 1
        %v5879 = vpop.permute.xlu0 %5878
        %5880 = vrot.lane.b32.xlu0 %v5108, 1
        %v5881 = vpop.permute.xlu0 %5880
        %5882 = vrot.lane.b32.xlu0 %v5863, 1
        %v5883 = vpop.permute.xlu0 %5882
        %5897 = vrot.lane.b32.xlu0 %v4872, 127
        %v5898 = vpop.permute.xlu0 %5897
        %5899 = vrot.lane.b32.xlu0 %v5151, 127
        %v5900 = vpop.permute.xlu0 %5899
        %5901 = vrot.lane.b32.xlu0 %v5152, 127
        %v5902 = vpop.permute.xlu0 %5901
        %5906 = vrot.lane.b32.xlu0 %v4903, 126
        %v5907 = vpop.permute.xlu0 %5906
        %5908 = vrot.lane.b32.xlu0 %v5156, 126
        %v5909 = vpop.permute.xlu0 %5908
        %5910 = vrot.lane.b32.xlu0 %v5157, 126
        %v5911 = vpop.permute.xlu0 %5910
        %5915 = vrot.lane.b32.xlu0 %v4935, 125
        %v5916 = vpop.permute.xlu0 %5915
        %5917 = vrot.lane.b32.xlu0 %v4936, 125
        %v5918 = vpop.permute.xlu0 %5917
        %5919 = vrot.lane.b32.xlu0 %v5167, 125
        %v5920 = vpop.permute.xlu0 %5919
        %v5921 = vsel %vm1791, %v4703, %v5837
        %v5922 = vsel %vm1791, %v4935, %v5839
        %v5923 = vsel %vm1791, %v4936, %v5841
        %v5924 = vsel %vm472, %v5921, %v5846
        %v5925 = vsel %vm472, %v5922, %v5848
        %v5926 = vsel %vm472, %v5923, %v5850
        %v5927 = vsel %vm1848, %v5924, %v5855
        %v5928 = vsel %vm1848, %v5925, %v5857
        %v5929 = vsel %vm1848, %v5926, %v5859
        %v5930 = vsel %vm1877, %v5719, %v5865
        %v5931 = vsel %vm1877, %v5720, %v5867
        %v5932 = vsel %vm1877, %v5721, %v5869
        %v5933 = vsel %vm1877, %v5722, %v5871
        %v5934 = vsel %vm1877, %v5723, %v5873
        %v5935 = vsel %vm1877, %v5724, %v5875
        %v5936 = vsel %vm1877, %v5725, %v5877
        %v5937 = vsel %vm1877, %v5927, %v5879
        %v5938 = vsel %vm1877, %v5928, %v5881
        %v5939 = vsel %vm1877, %v5929, %v5883
        %v5940 = vsel %vm1906, %v5930, %v4597
        %v5941 = vsel %vm1906, %v5931, %v4598
        %v5942 = vsel %vm1906, %v5932, %v4599
        %v5943 = vsel %vm1906, %v5933, %v4600
        %v5944 = vsel %vm1906, %v5934, %v4601
        %v5945 = vsel %vm1906, %v5935, %v4602
        %v5946 = vsel %vm1906, %v5936, %v4840
        %v5947 = vsel %vm1906, %v5937, %v4841
        %v5948 = vsel %vm1906, %v5938, %v5119
        %v5949 = vsel %vm1906, %v5939, %v5120
        %v5950 = vsel %vm485, %v5940, %v5443
        %v5951 = vsel %vm485, %v5941, %v5445
        %v5952 = vsel %vm485, %v5942, %v5447
        %v5953 = vsel %vm485, %v5943, %v5449
        %v5954 = vsel %vm485, %v5944, %v5451
        %v5955 = vsel %vm485, %v5945, %v5453
        %v5956 = vsel %vm485, %v5946, %v5455
        %v5957 = vsel %vm485, %v5947, %v5898
        %v5958 = vsel %vm485, %v5948, %v5900
        %v5959 = vsel %vm485, %v5949, %v5902
        %v5960 = vsel %vm1963, %v5950, %v5473
        %v5961 = vsel %vm1963, %v5951, %v5475
        %v5962 = vsel %vm1963, %v5952, %v5477
        %v5963 = vsel %vm1963, %v5953, %v5479
        %v5964 = vsel %vm1963, %v5954, %v5481
        %v5965 = vsel %vm1963, %v5955, %v5483
        %v5966 = vsel %vm1963, %v5956, %v5485
        %v5967 = vsel %vm1963, %v5957, %v5907
        %v5968 = vsel %vm1963, %v5958, %v5909
        %v5969 = vsel %vm1963, %v5959, %v5911
        %5980 = vrot.lane.b32.xlu0 %v5960, 127
        %v5981 = vpop.permute.xlu0 %5980
        %5982 = vrot.lane.b32.xlu0 %v5503, 127
        %v5983 = vpop.permute.xlu0 %5982
        %5984 = vrot.lane.b32.xlu0 %v5961, 127
        %v5985 = vpop.permute.xlu0 %5984
        %5986 = vrot.lane.b32.xlu0 %v5505, 127
        %v5987 = vpop.permute.xlu0 %5986
        %5988 = vrot.lane.b32.xlu0 %v5962, 127
        %v5989 = vpop.permute.xlu0 %5988
        %5990 = vrot.lane.b32.xlu0 %v5507, 127
        %v5991 = vpop.permute.xlu0 %5990
        %5992 = vrot.lane.b32.xlu0 %v5963, 127
        %v5993 = vpop.permute.xlu0 %5992
        %5994 = vrot.lane.b32.xlu0 %v5509, 127
        %v5995 = vpop.permute.xlu0 %5994
        %5996 = vrot.lane.b32.xlu0 %v5964, 127
        %v5997 = vpop.permute.xlu0 %5996
        %5998 = vrot.lane.b32.xlu0 %v5511, 127
        %v5999 = vpop.permute.xlu0 %5998
        %6000 = vrot.lane.b32.xlu0 %v5965, 127
        %v6001 = vpop.permute.xlu0 %6000
        %6002 = vrot.lane.b32.xlu0 %v5513, 127
        %v6003 = vpop.permute.xlu0 %6002
        %6004 = vrot.lane.b32.xlu0 %v5966, 127
        %v6005 = vpop.permute.xlu0 %6004
        %6006 = vrot.lane.b32.xlu0 %v5515, 127
        %v6007 = vpop.permute.xlu0 %6006
        %6008 = vrot.lane.b32.xlu0 %v5967, 127
        %v6009 = vpop.permute.xlu0 %6008
        %6010 = vrot.lane.b32.xlu0 %v5916, 127
        %v6011 = vpop.permute.xlu0 %6010
        %6012 = vrot.lane.b32.xlu0 %v5968, 127
        %v6013 = vpop.permute.xlu0 %6012
        %6014 = vrot.lane.b32.xlu0 %v5918, 127
        %v6015 = vpop.permute.xlu0 %6014
        %6016 = vrot.lane.b32.xlu0 %v5969, 127
        %v6017 = vpop.permute.xlu0 %6016
        %6018 = vrot.lane.b32.xlu0 %v5920, 127
        %v6019 = vpop.permute.xlu0 %6018
        %v6020 = vrot.slane %v4436, 2
        %6024 = vrot.lane.b32.xlu0 %v5302, 127
        %v6025 = vpop.permute.xlu0 %6024
        %6026 = vrot.lane.b32.xlu0 %v4694, 127
        %v6027 = vpop.permute.xlu0 %6026
        %6028 = vrot.lane.b32.xlu0 %v4695, 127
        %v6029 = vpop.permute.xlu0 %6028
        %6030 = vrot.lane.b32.xlu0 %v4696, 127
        %v6031 = vpop.permute.xlu0 %6030
        %6032 = vrot.lane.b32.xlu0 %v4697, 127
        %v6033 = vpop.permute.xlu0 %6032
        %6034 = vrot.lane.b32.xlu0 %v4698, 127
        %v6035 = vpop.permute.xlu0 %6034
        %6036 = vrot.lane.b32.xlu0 %v4699, 127
        %v6037 = vpop.permute.xlu0 %6036
        %6038 = vrot.lane.b32.xlu0 %v4700, 127
        %v6039 = vpop.permute.xlu0 %6038
        %6040 = vrot.lane.b32.xlu0 %v4701, 127
        %v6041 = vpop.permute.xlu0 %6040
        %6042 = vrot.lane.b32.xlu0 %v4702, 127
        %v6043 = vpop.permute.xlu0 %6042
        %6054 = vrot.lane.b32.xlu0 %v4436, 126
        %v6055 = vpop.permute.xlu0 %6054
        %6056 = vrot.lane.b32.xlu0 %v4438, 126
        %v6057 = vpop.permute.xlu0 %6056
        %6058 = vrot.lane.b32.xlu0 %v4440, 126
        %v6059 = vpop.permute.xlu0 %6058
        %6060 = vrot.lane.b32.xlu0 %v4442, 126
        %v6061 = vpop.permute.xlu0 %6060
        %6062 = vrot.lane.b32.xlu0 %v4444, 126
        %v6063 = vpop.permute.xlu0 %6062
        %6064 = vrot.lane.b32.xlu0 %v4446, 126
        %v6065 = vpop.permute.xlu0 %6064
        %6066 = vrot.lane.b32.xlu0 %v4448, 126
        %v6067 = vpop.permute.xlu0 %6066
        %6068 = vrot.lane.b32.xlu0 %v4450, 126
        %v6069 = vpop.permute.xlu0 %6068
        %6070 = vrot.lane.b32.xlu0 %v4452, 126
        %v6071 = vpop.permute.xlu0 %6070
        %6072 = vrot.lane.b32.xlu0 %v4454, 126
        %v6073 = vpop.permute.xlu0 %6072
        %6084 = vrot.lane.b32.xlu0 %v4473, 125
        %v6085 = vpop.permute.xlu0 %6084
        %6086 = vrot.lane.b32.xlu0 %v4474, 125
        %v6087 = vpop.permute.xlu0 %6086
        %6088 = vrot.lane.b32.xlu0 %v4475, 125
        %v6089 = vpop.permute.xlu0 %6088
        %6090 = vrot.lane.b32.xlu0 %v4476, 125
        %v6091 = vpop.permute.xlu0 %6090
        %6092 = vrot.lane.b32.xlu0 %v4477, 125
        %v6093 = vpop.permute.xlu0 %6092
        %6094 = vrot.lane.b32.xlu0 %v4478, 125
        %v6095 = vpop.permute.xlu0 %6094
        %6096 = vrot.lane.b32.xlu0 %v4479, 125
        %v6097 = vpop.permute.xlu0 %6096
        %6098 = vrot.lane.b32.xlu0 %v4480, 125
        %v6099 = vpop.permute.xlu0 %6098
        %6100 = vrot.lane.b32.xlu0 %v4481, 125
        %v6101 = vpop.permute.xlu0 %6100
        %6102 = vrot.lane.b32.xlu0 %v4482, 125
        %v6103 = vpop.permute.xlu0 %6102
        %6114 = vrot.lane.b32.xlu0 %v4513, 124
        %v6115 = vpop.permute.xlu0 %6114
        %6116 = vrot.lane.b32.xlu0 %v4514, 124
        %v6117 = vpop.permute.xlu0 %6116
        %6118 = vrot.lane.b32.xlu0 %v4515, 124
        %v6119 = vpop.permute.xlu0 %6118
        %6120 = vrot.lane.b32.xlu0 %v4516, 124
        %v6121 = vpop.permute.xlu0 %6120
        %6122 = vrot.lane.b32.xlu0 %v4517, 124
        %v6123 = vpop.permute.xlu0 %6122
        %6124 = vrot.lane.b32.xlu0 %v4518, 124
        %v6125 = vpop.permute.xlu0 %6124
        %6126 = vrot.lane.b32.xlu0 %v4519, 124
        %v6127 = vpop.permute.xlu0 %6126
        %6128 = vrot.lane.b32.xlu0 %v4520, 124
        %v6129 = vpop.permute.xlu0 %6128
        %6130 = vrot.lane.b32.xlu0 %v4521, 124
        %v6131 = vpop.permute.xlu0 %6130
        %6132 = vrot.lane.b32.xlu0 %v4522, 124
        %v6133 = vpop.permute.xlu0 %6132
        %6154 = vrot.lane.b32.xlu0 %v4594, 127
        %v6155 = vpop.permute.xlu0 %6154
        %6156 = vrot.lane.b32.xlu0 %v4595, 127
        %v6157 = vpop.permute.xlu0 %6156
        %6158 = vrot.lane.b32.xlu0 %v4596, 127
        %v6159 = vpop.permute.xlu0 %6158
        %6160 = vrot.lane.b32.xlu0 %v4597, 127
        %v6161 = vpop.permute.xlu0 %6160
        %6162 = vrot.lane.b32.xlu0 %v4598, 127
        %v6163 = vpop.permute.xlu0 %6162
        %6164 = vrot.lane.b32.xlu0 %v4599, 127
        %v6165 = vpop.permute.xlu0 %6164
        %6166 = vrot.lane.b32.xlu0 %v4600, 127
        %v6167 = vpop.permute.xlu0 %6166
        %6168 = vrot.lane.b32.xlu0 %v4601, 127
        %v6169 = vpop.permute.xlu0 %6168
        %6170 = vrot.lane.b32.xlu0 %v4602, 127
        %v6171 = vpop.permute.xlu0 %6170
        %6172 = vrot.lane.b32.xlu0 %v4840, 127
        %v6173 = vpop.permute.xlu0 %6172
        %6184 = vrot.lane.b32.xlu0 %v4634, 126
        %v6185 = vpop.permute.xlu0 %6184
        %6186 = vrot.lane.b32.xlu0 %v4635, 126
        %v6187 = vpop.permute.xlu0 %6186
        %6188 = vrot.lane.b32.xlu0 %v4636, 126
        %v6189 = vpop.permute.xlu0 %6188
        %6190 = vrot.lane.b32.xlu0 %v4637, 126
        %v6191 = vpop.permute.xlu0 %6190
        %6192 = vrot.lane.b32.xlu0 %v4638, 126
        %v6193 = vpop.permute.xlu0 %6192
        %6194 = vrot.lane.b32.xlu0 %v4639, 126
        %v6195 = vpop.permute.xlu0 %6194
        %6196 = vrot.lane.b32.xlu0 %v4640, 126
        %v6197 = vpop.permute.xlu0 %6196
        %6198 = vrot.lane.b32.xlu0 %v4641, 126
        %v6199 = vpop.permute.xlu0 %6198
        %6200 = vrot.lane.b32.xlu0 %v4642, 126
        %v6201 = vpop.permute.xlu0 %6200
        %6202 = vrot.lane.b32.xlu0 %v4643, 126
        %v6203 = vpop.permute.xlu0 %6202
        %6214 = vrot.lane.b32.xlu0 %v4654, 125
        %v6215 = vpop.permute.xlu0 %6214
        %6216 = vrot.lane.b32.xlu0 %v4655, 125
        %v6217 = vpop.permute.xlu0 %6216
        %6218 = vrot.lane.b32.xlu0 %v4656, 125
        %v6219 = vpop.permute.xlu0 %6218
        %6220 = vrot.lane.b32.xlu0 %v4657, 125
        %v6221 = vpop.permute.xlu0 %6220
        %6222 = vrot.lane.b32.xlu0 %v4658, 125
        %v6223 = vpop.permute.xlu0 %6222
        %6224 = vrot.lane.b32.xlu0 %v4659, 125
        %v6225 = vpop.permute.xlu0 %6224
        %6226 = vrot.lane.b32.xlu0 %v4660, 125
        %v6227 = vpop.permute.xlu0 %6226
        %6228 = vrot.lane.b32.xlu0 %v4661, 125
        %v6229 = vpop.permute.xlu0 %6228
        %6230 = vrot.lane.b32.xlu0 %v4662, 125
        %v6231 = vpop.permute.xlu0 %6230
        %6232 = vrot.lane.b32.xlu0 %v4663, 125
        %v6233 = vpop.permute.xlu0 %6232
        %6244 = vrot.lane.b32.xlu0 %v4694, 124
        %v6245 = vpop.permute.xlu0 %6244
        %6246 = vrot.lane.b32.xlu0 %v4695, 124
        %v6247 = vpop.permute.xlu0 %6246
        %6248 = vrot.lane.b32.xlu0 %v4696, 124
        %v6249 = vpop.permute.xlu0 %6248
        %6250 = vrot.lane.b32.xlu0 %v4697, 124
        %v6251 = vpop.permute.xlu0 %6250
        %6252 = vrot.lane.b32.xlu0 %v4698, 124
        %v6253 = vpop.permute.xlu0 %6252
        %6254 = vrot.lane.b32.xlu0 %v4699, 124
        %v6255 = vpop.permute.xlu0 %6254
        %6256 = vrot.lane.b32.xlu0 %v4700, 124
        %v6257 = vpop.permute.xlu0 %6256
        %6258 = vrot.lane.b32.xlu0 %v4701, 124
        %v6259 = vpop.permute.xlu0 %6258
        %6260 = vrot.lane.b32.xlu0 %v4702, 124
        %v6261 = vpop.permute.xlu0 %6260
        %6262 = vrot.lane.b32.xlu0 %v4703, 124
        %v6263 = vpop.permute.xlu0 %6262
        %6274 = vrot.lane.b32.xlu0 %v4840, 124
        %v6275 = vpop.permute.xlu0 %6274
        %6276 = vrot.lane.b32.xlu0 %v4841, 124
        %v6277 = vpop.permute.xlu0 %6276
        %v6280 = vsel %vm1791, %v6020, %v6025
        %v6281 = vsel %vm1791, %v4654, %v6027
        %v6282 = vsel %vm1791, %v4655, %v6029
        %v6283 = vsel %vm1791, %v4656, %v6031
        %v6284 = vsel %vm1791, %v4657, %v6033
        %v6285 = vsel %vm1791, %v4658, %v6035
        %v6286 = vsel %vm1791, %v4659, %v6037
        %v6287 = vsel %vm1791, %v4660, %v6039
        %v6288 = vsel %vm1791, %v4661, %v6041
        %v6289 = vsel %vm1791, %v4662, %v6043
        %v6290 = vsel %vm472, %v6280, %v6055
        %v6291 = vsel %vm472, %v6281, %v6057
        %v6292 = vsel %vm472, %v6282, %v6059
        %v6293 = vsel %vm472, %v6283, %v6061
        %v6294 = vsel %vm472, %v6284, %v6063
        %v6295 = vsel %vm472, %v6285, %v6065
        %v6296 = vsel %vm472, %v6286, %v6067
        %v6297 = vsel %vm472, %v6287, %v6069
        %v6298 = vsel %vm472, %v6288, %v6071
        %v6299 = vsel %vm472, %v6289, %v6073
        %v6300 = vsel %vm1848, %v6290, %v6085
        %v6301 = vsel %vm1848, %v6291, %v6087
        %v6302 = vsel %vm1848, %v6292, %v6089
        %v6303 = vsel %vm1848, %v6293, %v6091
        %v6304 = vsel %vm1848, %v6294, %v6093
        %v6305 = vsel %vm1848, %v6295, %v6095
        %v6306 = vsel %vm1848, %v6296, %v6097
        %v6307 = vsel %vm1848, %v6297, %v6099
        %v6308 = vsel %vm1848, %v6298, %v6101
        %v6309 = vsel %vm1848, %v6299, %v6103
        %v6310 = vsel %vm1877, %v6300, %v6115
        %v6311 = vsel %vm1877, %v6301, %v6117
        %v6312 = vsel %vm1877, %v6302, %v6119
        %v6313 = vsel %vm1877, %v6303, %v6121
        %v6314 = vsel %vm1877, %v6304, %v6123
        %v6315 = vsel %vm1877, %v6305, %v6125
        %v6316 = vsel %vm1877, %v6306, %v6127
        %v6317 = vsel %vm1877, %v6307, %v6129
        %v6318 = vsel %vm1877, %v6308, %v6131
        %v6319 = vsel %vm1877, %v6309, %v6133
        %v6320 = vsel %vm1906, %v6310, %v4554
        %v6321 = vsel %vm1906, %v6311, %v4555
        %v6322 = vsel %vm1906, %v6312, %v4556
        %v6323 = vsel %vm1906, %v6313, %v4557
        %v6324 = vsel %vm1906, %v6314, %v4558
        %v6325 = vsel %vm1906, %v6315, %v4559
        %v6326 = vsel %vm1906, %v6316, %v4560
        %v6327 = vsel %vm1906, %v6317, %v4561
        %v6328 = vsel %vm1906, %v6318, %v4562
        %v6329 = vsel %vm1906, %v6319, %v4808
        %v6330 = vsel %vm485, %v6320, %v6155
        %v6331 = vsel %vm485, %v6321, %v6157
        %v6332 = vsel %vm485, %v6322, %v6159
        %v6333 = vsel %vm485, %v6323, %v6161
        %v6334 = vsel %vm485, %v6324, %v6163
        %v6335 = vsel %vm485, %v6325, %v6165
        %v6336 = vsel %vm485, %v6326, %v6167
        %v6337 = vsel %vm485, %v6327, %v6169
        %v6338 = vsel %vm485, %v6328, %v6171
        %v6339 = vsel %vm485, %v6329, %v6173
        %v6340 = vsel %vm1963, %v6330, %v6185
        %v6341 = vsel %vm1963, %v6331, %v6187
        %v6342 = vsel %vm1963, %v6332, %v6189
        %v6343 = vsel %vm1963, %v6333, %v6191
        %v6344 = vsel %vm1963, %v6334, %v6193
        %v6345 = vsel %vm1963, %v6335, %v6195
        %v6346 = vsel %vm1963, %v6336, %v6197
        %v6347 = vsel %vm1963, %v6337, %v6199
        %v6348 = vsel %vm1963, %v6338, %v6201
        %v6349 = vsel %vm1963, %v6339, %v6203
        %v6350 = vsel %vm1791, %v6215, %v6245
        %v6351 = vsel %vm1791, %v6217, %v6247
        %v6352 = vsel %vm1791, %v6219, %v6249
        %v6353 = vsel %vm1791, %v6221, %v6251
        %v6354 = vsel %vm1791, %v6223, %v6253
        %v6355 = vsel %vm1791, %v6225, %v6255
        %v6356 = vsel %vm1791, %v6227, %v6257
        %v6357 = vsel %vm1791, %v6229, %v6259
        %v6358 = vsel %vm1791, %v6231, %v6261
        %v6359 = vsel %vm1791, %v6233, %v6263
        %v6360 = vsel %vm472, %v6350, %v4440
        %v6361 = vsel %vm472, %v6351, %v4442
        %v6362 = vsel %vm472, %v6352, %v4444
        %v6363 = vsel %vm472, %v6353, %v4446
        %v6364 = vsel %vm472, %v6354, %v4448
        %v6365 = vsel %vm472, %v6355, %v4450
        %v6366 = vsel %vm472, %v6356, %v4452
        %v6367 = vsel %vm472, %v6357, %v4454
        %v6368 = vsel %vm472, %v6358, %v4456
        %v6369 = vsel %vm472, %v6359, %v4458
        %v6370 = vsel %vm1848, %v6360, %v4488
        %v6371 = vsel %vm1848, %v6361, %v4490
        %v6372 = vsel %vm1848, %v6362, %v4492
        %v6373 = vsel %vm1848, %v6363, %v4494
        %v6374 = vsel %vm1848, %v6364, %v4496
        %v6375 = vsel %vm1848, %v6365, %v4498
        %v6376 = vsel %vm1848, %v6366, %v4500
        %v6377 = vsel %vm1848, %v6367, %v4502
        %v6378 = vsel %vm1848, %v6368, %v5090
        %v6379 = vsel %vm1848, %v6369, %v5092
        %v6380 = vsel %vm1877, %v6370, %v4528
        %v6381 = vsel %vm1877, %v6371, %v4530
        %v6382 = vsel %vm1877, %v6372, %v4532
        %v6383 = vsel %vm1877, %v6373, %v4534
        %v6384 = vsel %vm1877, %v6374, %v4536
        %v6385 = vsel %vm1877, %v6375, %v4538
        %v6386 = vsel %vm1877, %v6376, %v4540
        %v6387 = vsel %vm1877, %v6377, %v4542
        %v6388 = vsel %vm1877, %v6378, %v5100
        %v6389 = vsel %vm1877, %v6379, %v5102
        %v6390 = vsel %vm1906, %v6380, %v4568
        %v6391 = vsel %vm1906, %v6381, %v4570
        %v6392 = vsel %vm1906, %v6382, %v4572
        %v6393 = vsel %vm1906, %v6383, %v4574
        %v6394 = vsel %vm1906, %v6384, %v4576
        %v6395 = vsel %vm1906, %v6385, %v4578
        %v6396 = vsel %vm1906, %v6386, %v4580
        %v6397 = vsel %vm1906, %v6387, %v4582
        %v6398 = vsel %vm1906, %v6388, %v5110
        %v6399 = vsel %vm1906, %v6389, %v5112
        %v6400 = vsel %vm485, %v6390, %v4608
        %v6401 = vsel %vm485, %v6391, %v4610
        %v6402 = vsel %vm485, %v6392, %v4612
        %v6403 = vsel %vm485, %v6393, %v4614
        %v6404 = vsel %vm485, %v6394, %v4616
        %v6405 = vsel %vm485, %v6395, %v4618
        %v6406 = vsel %vm485, %v6396, %v4620
        %v6407 = vsel %vm485, %v6397, %v4622
        %v6408 = vsel %vm485, %v6398, %v6275
        %v6409 = vsel %vm485, %v6399, %v6277
        %v6410 = vsel %vm1963, %v6400, %v4636
        %v6411 = vsel %vm1963, %v6401, %v4637
        %v6412 = vsel %vm1963, %v6402, %v4638
        %v6413 = vsel %vm1963, %v6403, %v4639
        %v6414 = vsel %vm1963, %v6404, %v4640
        %v6415 = vsel %vm1963, %v6405, %v4641
        %v6416 = vsel %vm1963, %v6406, %v4642
        %v6417 = vsel %vm1963, %v6407, %v4643
        %v6418 = vsel %vm1963, %v6408, %v4872
        %v6419 = vsel %vm1963, %v6409, %v5151
        %6420 = vrot.lane.b32.xlu0 %v4703, 127
        %v6421 = vpop.permute.xlu0 %6420
        %6422 = vrot.lane.b32.xlu0 %v4935, 127
        %v6423 = vpop.permute.xlu0 %6422
        %6424 = vrot.lane.b32.xlu0 %v4936, 127
        %v6425 = vpop.permute.xlu0 %6424
        %6429 = vrot.lane.b32.xlu0 %v4456, 126
        %v6430 = vpop.permute.xlu0 %6429
        %6431 = vrot.lane.b32.xlu0 %v4458, 126
        %v6432 = vpop.permute.xlu0 %6431
        %6433 = vrot.lane.b32.xlu0 %v4460, 126
        %v6434 = vpop.permute.xlu0 %6433
        %6438 = vrot.lane.b32.xlu0 %v4764, 125
        %v6439 = vpop.permute.xlu0 %6438
        %6440 = vrot.lane.b32.xlu0 %v5087, 125
        %v6441 = vpop.permute.xlu0 %6440
        %6442 = vrot.lane.b32.xlu0 %v5088, 125
        %v6443 = vpop.permute.xlu0 %6442
        %v6447 = vrot.slane %v4462, 6
        %6448 = vrot.lane.b32.xlu0 %v4517, 1
        %v6449 = vpop.permute.xlu0 %6448
        %6450 = vrot.lane.b32.xlu0 %v4518, 1
        %v6451 = vpop.permute.xlu0 %6450
        %6452 = vrot.lane.b32.xlu0 %v4519, 1
        %v6453 = vpop.permute.xlu0 %6452
        %6454 = vrot.lane.b32.xlu0 %v4520, 1
        %v6455 = vpop.permute.xlu0 %6454
        %6456 = vrot.lane.b32.xlu0 %v4521, 1
        %v6457 = vpop.permute.xlu0 %6456
        %6458 = vrot.lane.b32.xlu0 %v4522, 1
        %v6459 = vpop.permute.xlu0 %6458
        %6460 = vrot.lane.b32.xlu0 %v4796, 1
        %v6461 = vpop.permute.xlu0 %6460
        %6462 = vrot.lane.b32.xlu0 %v4797, 1
        %v6463 = vpop.permute.xlu0 %6462
        %6464 = vrot.lane.b32.xlu0 %v5098, 1
        %v6465 = vpop.permute.xlu0 %6464
        %6466 = vrot.lane.b32.xlu0 %v6447, 1
        %v6467 = vpop.permute.xlu0 %6466
        %6481 = vrot.lane.b32.xlu0 %v4841, 127
        %v6482 = vpop.permute.xlu0 %6481
        %6483 = vrot.lane.b32.xlu0 %v5119, 127
        %v6484 = vpop.permute.xlu0 %6483
        %6485 = vrot.lane.b32.xlu0 %v5120, 127
        %v6486 = vpop.permute.xlu0 %6485
        %6490 = vrot.lane.b32.xlu0 %v4872, 126
        %v6491 = vpop.permute.xlu0 %6490
        %6492 = vrot.lane.b32.xlu0 %v5151, 126
        %v6493 = vpop.permute.xlu0 %6492
        %6494 = vrot.lane.b32.xlu0 %v5152, 126
        %v6495 = vpop.permute.xlu0 %6494
        %6499 = vrot.lane.b32.xlu0 %v4903, 125
        %v6500 = vpop.permute.xlu0 %6499
        %6501 = vrot.lane.b32.xlu0 %v5156, 125
        %v6502 = vpop.permute.xlu0 %6501
        %6503 = vrot.lane.b32.xlu0 %v5157, 125
        %v6504 = vpop.permute.xlu0 %6503
        %v6505 = vsel %vm1791, %v4663, %v6421
        %v6506 = vsel %vm1791, %v4903, %v6423
        %v6507 = vsel %vm1791, %v5156, %v6425
        %v6508 = vsel %vm472, %v6505, %v6430
        %v6509 = vsel %vm472, %v6506, %v6432
        %v6510 = vsel %vm472, %v6507, %v6434
        %v6511 = vsel %vm1848, %v6508, %v6439
        %v6512 = vsel %vm1848, %v6509, %v6441
        %v6513 = vsel %vm1848, %v6510, %v6443
        %v6514 = vsel %vm1877, %v6303, %v6449
        %v6515 = vsel %vm1877, %v6304, %v6451
        %v6516 = vsel %vm1877, %v6305, %v6453
        %v6517 = vsel %vm1877, %v6306, %v6455
        %v6518 = vsel %vm1877, %v6307, %v6457
        %v6519 = vsel %vm1877, %v6308, %v6459
        %v6520 = vsel %vm1877, %v6309, %v6461
        %v6521 = vsel %vm1877, %v6511, %v6463
        %v6522 = vsel %vm1877, %v6512, %v6465
        %v6523 = vsel %vm1877, %v6513, %v6467
        %v6524 = vsel %vm1906, %v6514, %v4557
        %v6525 = vsel %vm1906, %v6515, %v4558
        %v6526 = vsel %vm1906, %v6516, %v4559
        %v6527 = vsel %vm1906, %v6517, %v4560
        %v6528 = vsel %vm1906, %v6518, %v4561
        %v6529 = vsel %vm1906, %v6519, %v4562
        %v6530 = vsel %vm1906, %v6520, %v4808
        %v6531 = vsel %vm1906, %v6521, %v4809
        %v6532 = vsel %vm1906, %v6522, %v5108
        %v6533 = vsel %vm1906, %v6523, %v5863
        %v6534 = vsel %vm485, %v6524, %v6161
        %v6535 = vsel %vm485, %v6525, %v6163
        %v6536 = vsel %vm485, %v6526, %v6165
        %v6537 = vsel %vm485, %v6527, %v6167
        %v6538 = vsel %vm485, %v6528, %v6169
        %v6539 = vsel %vm485, %v6529, %v6171
        %v6540 = vsel %vm485, %v6530, %v6173
        %v6541 = vsel %vm485, %v6531, %v6482
        %v6542 = vsel %vm485, %v6532, %v6484
        %v6543 = vsel %vm485, %v6533, %v6486
        %v6544 = vsel %vm1963, %v6534, %v6191
        %v6545 = vsel %vm1963, %v6535, %v6193
        %v6546 = vsel %vm1963, %v6536, %v6195
        %v6547 = vsel %vm1963, %v6537, %v6197
        %v6548 = vsel %vm1963, %v6538, %v6199
        %v6549 = vsel %vm1963, %v6539, %v6201
        %v6550 = vsel %vm1963, %v6540, %v6203
        %v6551 = vsel %vm1963, %v6541, %v6491
        %v6552 = vsel %vm1963, %v6542, %v6493
        %v6553 = vsel %vm1963, %v6543, %v6495
        %6564 = vrot.lane.b32.xlu0 %v6544, 127
        %v6565 = vpop.permute.xlu0 %6564
        %6566 = vrot.lane.b32.xlu0 %v6221, 127
        %v6567 = vpop.permute.xlu0 %6566
        %6568 = vrot.lane.b32.xlu0 %v6545, 127
        %v6569 = vpop.permute.xlu0 %6568
        %6570 = vrot.lane.b32.xlu0 %v6223, 127
        %v6571 = vpop.permute.xlu0 %6570
        %6572 = vrot.lane.b32.xlu0 %v6546, 127
        %v6573 = vpop.permute.xlu0 %6572
        %6574 = vrot.lane.b32.xlu0 %v6225, 127
        %v6575 = vpop.permute.xlu0 %6574
        %6576 = vrot.lane.b32.xlu0 %v6547, 127
        %v6577 = vpop.permute.xlu0 %6576
        %6578 = vrot.lane.b32.xlu0 %v6227, 127
        %v6579 = vpop.permute.xlu0 %6578
        %6580 = vrot.lane.b32.xlu0 %v6548, 127
        %v6581 = vpop.permute.xlu0 %6580
        %6582 = vrot.lane.b32.xlu0 %v6229, 127
        %v6583 = vpop.permute.xlu0 %6582
        %6584 = vrot.lane.b32.xlu0 %v6549, 127
        %v6585 = vpop.permute.xlu0 %6584
        %6586 = vrot.lane.b32.xlu0 %v6231, 127
        %v6587 = vpop.permute.xlu0 %6586
        %6588 = vrot.lane.b32.xlu0 %v6550, 127
        %v6589 = vpop.permute.xlu0 %6588
        %6590 = vrot.lane.b32.xlu0 %v6233, 127
        %v6591 = vpop.permute.xlu0 %6590
        %6592 = vrot.lane.b32.xlu0 %v6551, 127
        %v6593 = vpop.permute.xlu0 %6592
        %6594 = vrot.lane.b32.xlu0 %v6500, 127
        %v6595 = vpop.permute.xlu0 %6594
        %6596 = vrot.lane.b32.xlu0 %v6552, 127
        %v6597 = vpop.permute.xlu0 %6596
        %6598 = vrot.lane.b32.xlu0 %v6502, 127
        %v6599 = vpop.permute.xlu0 %6598
        %6600 = vrot.lane.b32.xlu0 %v6553, 127
        %v6601 = vpop.permute.xlu0 %6600
        %6602 = vrot.lane.b32.xlu0 %v6504, 127
        %v6603 = vpop.permute.xlu0 %6602
        %v6604 = vrot.slane %v4436, 3
        %6606 = vrot.lane.b32.xlu0 %v6020, 127
        %v6607 = vpop.permute.xlu0 %6606
        %6609 = vrot.lane.b32.xlu0 %v5302, 126
        %v6610 = vpop.permute.xlu0 %6609
        %6612 = vrot.lane.b32.xlu0 %v4436, 125
        %v6613 = vpop.permute.xlu0 %6612
        %6615 = vrot.lane.b32.xlu0 %v4473, 124
        %v6616 = vpop.permute.xlu0 %6615
        %6619 = vrot.lane.b32.xlu0 %v4554, 127
        %v6620 = vpop.permute.xlu0 %6619
        %6622 = vrot.lane.b32.xlu0 %v4594, 126
        %v6623 = vpop.permute.xlu0 %6622
        %6625 = vrot.lane.b32.xlu0 %v4634, 125
        %v6626 = vpop.permute.xlu0 %6625
        %6628 = vrot.lane.b32.xlu0 %v4654, 124
        %v6629 = vpop.permute.xlu0 %6628
        %6631 = vrot.lane.b32.xlu0 %v4808, 124
        %v6632 = vpop.permute.xlu0 %6631
        %6633 = vrot.lane.b32.xlu0 %v4809, 124
        %v6634 = vpop.permute.xlu0 %6633
        %v6637 = vsel %vm1791, %v6604, %v6607
        %v6638 = vsel %vm1791, %v4634, %v4665
        %v6639 = vsel %vm1791, %v4635, %v4667
        %v6640 = vsel %vm1791, %v4636, %v4669
        %v6641 = vsel %vm1791, %v4637, %v4671
        %v6642 = vsel %vm1791, %v4638, %v4673
        %v6643 = vsel %vm1791, %v4639, %v4675
        %v6644 = vsel %vm1791, %v4640, %v4677
        %v6645 = vsel %vm1791, %v4641, %v4679
        %v6646 = vsel %vm1791, %v4642, %v4681
        %v6647 = vsel %vm472, %v6637, %v6610
        %v6648 = vsel %vm472, %v6638, %v4705
        %v6649 = vsel %vm472, %v6639, %v4707
        %v6650 = vsel %vm472, %v6640, %v4709
        %v6651 = vsel %vm472, %v6641, %v4711
        %v6652 = vsel %vm472, %v6642, %v4713
        %v6653 = vsel %vm472, %v6643, %v4715
        %v6654 = vsel %vm472, %v6644, %v4717
        %v6655 = vsel %vm472, %v6645, %v4719
        %v6656 = vsel %vm472, %v6646, %v4721
        %v6657 = vsel %vm1848, %v6647, %v6613
        %v6658 = vsel %vm1848, %v6648, %v4735
        %v6659 = vsel %vm1848, %v6649, %v4737
        %v6660 = vsel %vm1848, %v6650, %v4739
        %v6661 = vsel %vm1848, %v6651, %v4741
        %v6662 = vsel %vm1848, %v6652, %v4743
        %v6663 = vsel %vm1848, %v6653, %v4745
        %v6664 = vsel %vm1848, %v6654, %v4747
        %v6665 = vsel %vm1848, %v6655, %v4749
        %v6666 = vsel %vm1848, %v6656, %v4751
        %v6667 = vsel %vm1877, %v6657, %v6616
        %v6668 = vsel %vm1877, %v6658, %v4766
        %v6669 = vsel %vm1877, %v6659, %v4768
        %v6670 = vsel %vm1877, %v6660, %v4770
        %v6671 = vsel %vm1877, %v6661, %v4772
        %v6672 = vsel %vm1877, %v6662, %v4774
        %v6673 = vsel %vm1877, %v6663, %v4776
        %v6674 = vsel %vm1877, %v6664, %v4778
        %v6675 = vsel %vm1877, %v6665, %v4780
        %v6676 = vsel %vm1877, %v6666, %v4782
        %v6677 = vsel %vm1906, %v6667, %v4514
        %v6678 = vsel %vm1906, %v6668, %v4515
        %v6679 = vsel %vm1906, %v6669, %v4516
        %v6680 = vsel %vm1906, %v6670, %v4517
        %v6681 = vsel %vm1906, %v6671, %v4518
        %v6682 = vsel %vm1906, %v6672, %v4519
        %v6683 = vsel %vm1906, %v6673, %v4520
        %v6684 = vsel %vm1906, %v6674, %v4521
        %v6685 = vsel %vm1906, %v6675, %v4522
        %v6686 = vsel %vm1906, %v6676, %v4796
        %v6687 = vsel %vm485, %v6677, %v6620
        %v6688 = vsel %vm485, %v6678, %v4811
        %v6689 = vsel %vm485, %v6679, %v4813
        %v6690 = vsel %vm485, %v6680, %v4815
        %v6691 = vsel %vm485, %v6681, %v4817
        %v6692 = vsel %vm485, %v6682, %v4819
        %v6693 = vsel %vm485, %v6683, %v4821
        %v6694 = vsel %vm485, %v6684, %v4823
        %v6695 = vsel %vm485, %v6685, %v4825
        %v6696 = vsel %vm485, %v6686, %v4827
        %v6697 = vsel %vm1963, %v6687, %v6623
        %v6698 = vsel %vm1963, %v6688, %v4843
        %v6699 = vsel %vm1963, %v6689, %v4845
        %v6700 = vsel %vm1963, %v6690, %v4847
        %v6701 = vsel %vm1963, %v6691, %v4849
        %v6702 = vsel %vm1963, %v6692, %v4851
        %v6703 = vsel %vm1963, %v6693, %v4853
        %v6704 = vsel %vm1963, %v6694, %v4855
        %v6705 = vsel %vm1963, %v6695, %v4857
        %v6706 = vsel %vm1963, %v6696, %v4859
        %v6707 = vsel %vm1791, %v6626, %v6629
        %v6708 = vsel %vm1791, %v4874, %v4905
        %v6709 = vsel %vm1791, %v4876, %v4907
        %v6710 = vsel %vm1791, %v4878, %v4909
        %v6711 = vsel %vm1791, %v4880, %v4911
        %v6712 = vsel %vm1791, %v4882, %v4913
        %v6713 = vsel %vm1791, %v4884, %v4915
        %v6714 = vsel %vm1791, %v4886, %v4917
        %v6715 = vsel %vm1791, %v4888, %v4919
        %v6716 = vsel %vm1791, %v4890, %v4921
        %v6717 = vsel %vm472, %v6707, %v4695
        %v6718 = vsel %vm472, %v6708, %v4696
        %v6719 = vsel %vm472, %v6709, %v4697
        %v6720 = vsel %vm472, %v6710, %v4698
        %v6721 = vsel %vm472, %v6711, %v4699
        %v6722 = vsel %vm472, %v6712, %v4700
        %v6723 = vsel %vm472, %v6713, %v4701
        %v6724 = vsel %vm472, %v6714, %v4702
        %v6725 = vsel %vm472, %v6715, %v4703
        %v6726 = vsel %vm472, %v6716, %v4935
        %v6727 = vsel %vm1848, %v6717, %v5311
        %v6728 = vsel %vm1848, %v6718, %v5313
        %v6729 = vsel %vm1848, %v6719, %v5315
        %v6730 = vsel %vm1848, %v6720, %v5317
        %v6731 = vsel %vm1848, %v6721, %v5319
        %v6732 = vsel %vm1848, %v6722, %v5321
        %v6733 = vsel %vm1848, %v6723, %v5323
        %v6734 = vsel %vm1848, %v6724, %v5325
        %v6735 = vsel %vm1848, %v6725, %v5837
        %v6736 = vsel %vm1848, %v6726, %v5839
        %v6737 = vsel %vm1877, %v6727, %v5341
        %v6738 = vsel %vm1877, %v6728, %v5343
        %v6739 = vsel %vm1877, %v6729, %v5345
        %v6740 = vsel %vm1877, %v6730, %v5347
        %v6741 = vsel %vm1877, %v6731, %v5349
        %v6742 = vsel %vm1877, %v6732, %v5351
        %v6743 = vsel %vm1877, %v6733, %v5353
        %v6744 = vsel %vm1877, %v6734, %v5355
        %v6745 = vsel %vm1877, %v6735, %v5846
        %v6746 = vsel %vm1877, %v6736, %v5848
        %v6747 = vsel %vm1906, %v6737, %v5371
        %v6748 = vsel %vm1906, %v6738, %v5373
        %v6749 = vsel %vm1906, %v6739, %v5375
        %v6750 = vsel %vm1906, %v6740, %v5377
        %v6751 = vsel %vm1906, %v6741, %v5379
        %v6752 = vsel %vm1906, %v6742, %v5381
        %v6753 = vsel %vm1906, %v6743, %v5383
        %v6754 = vsel %vm1906, %v6744, %v5385
        %v6755 = vsel %vm1906, %v6745, %v5855
        %v6756 = vsel %vm1906, %v6746, %v5857
        %v6757 = vsel %vm485, %v6747, %v5401
        %v6758 = vsel %vm485, %v6748, %v5403
        %v6759 = vsel %vm485, %v6749, %v5405
        %v6760 = vsel %vm485, %v6750, %v5407
        %v6761 = vsel %vm485, %v6751, %v5409
        %v6762 = vsel %vm485, %v6752, %v5411
        %v6763 = vsel %vm485, %v6753, %v5413
        %v6764 = vsel %vm485, %v6754, %v5415
        %v6765 = vsel %vm485, %v6755, %v6632
        %v6766 = vsel %vm485, %v6756, %v6634
        %v6767 = vsel %vm1963, %v6757, %v4596
        %v6768 = vsel %vm1963, %v6758, %v4597
        %v6769 = vsel %vm1963, %v6759, %v4598
        %v6770 = vsel %vm1963, %v6760, %v4599
        %v6771 = vsel %vm1963, %v6761, %v4600
        %v6772 = vsel %vm1963, %v6762, %v4601
        %v6773 = vsel %vm1963, %v6763, %v4602
        %v6774 = vsel %vm1963, %v6764, %v4840
        %v6775 = vsel %vm1963, %v6765, %v4841
        %v6776 = vsel %vm1963, %v6766, %v5119
        %v6779 = vrot.slane %v4462, 7
        %6780 = vrot.lane.b32.xlu0 %v4477, 1
        %v6781 = vpop.permute.xlu0 %6780
        %6782 = vrot.lane.b32.xlu0 %v4478, 1
        %v6783 = vpop.permute.xlu0 %6782
        %6784 = vrot.lane.b32.xlu0 %v4479, 1
        %v6785 = vpop.permute.xlu0 %6784
        %6786 = vrot.lane.b32.xlu0 %v4480, 1
        %v6787 = vpop.permute.xlu0 %6786
        %6788 = vrot.lane.b32.xlu0 %v4481, 1
        %v6789 = vpop.permute.xlu0 %6788
        %6790 = vrot.lane.b32.xlu0 %v4482, 1
        %v6791 = vpop.permute.xlu0 %6790
        %6792 = vrot.lane.b32.xlu0 %v4764, 1
        %v6793 = vpop.permute.xlu0 %6792
        %6794 = vrot.lane.b32.xlu0 %v5087, 1
        %v6795 = vpop.permute.xlu0 %6794
        %6796 = vrot.lane.b32.xlu0 %v5088, 1
        %v6797 = vpop.permute.xlu0 %6796
        %6798 = vrot.lane.b32.xlu0 %v6779, 1
        %v6799 = vpop.permute.xlu0 %6798
        %6812 = vrot.lane.b32.xlu0 %v5108, 127
        %v6813 = vpop.permute.xlu0 %6812
        %6814 = vrot.lane.b32.xlu0 %v5863, 127
        %v6815 = vpop.permute.xlu0 %6814
        %6818 = vrot.lane.b32.xlu0 %v5119, 126
        %v6819 = vpop.permute.xlu0 %6818
        %6820 = vrot.lane.b32.xlu0 %v5120, 126
        %v6821 = vpop.permute.xlu0 %6820
        %6824 = vrot.lane.b32.xlu0 %v5151, 125
        %v6825 = vpop.permute.xlu0 %6824
        %6826 = vrot.lane.b32.xlu0 %v5152, 125
        %v6827 = vpop.permute.xlu0 %6826
        %v6828 = vsel %vm1791, %v4643, %v4683
        %v6829 = vsel %vm1791, %v4872, %v5159
        %v6830 = vsel %vm1791, %v5151, %v5161
        %v6831 = vsel %vm472, %v6828, %v4723
        %v6832 = vsel %vm472, %v6829, %v5169
        %v6833 = vsel %vm472, %v6830, %v5171
        %v6834 = vsel %vm1848, %v6831, %v4753
        %v6835 = vsel %vm1848, %v6832, %v5178
        %v6836 = vsel %vm1848, %v6833, %v5180
        %v6837 = vsel %vm1877, %v6660, %v6781
        %v6838 = vsel %vm1877, %v6661, %v6783
        %v6839 = vsel %vm1877, %v6662, %v6785
        %v6840 = vsel %vm1877, %v6663, %v6787
        %v6841 = vsel %vm1877, %v6664, %v6789
        %v6842 = vsel %vm1877, %v6665, %v6791
        %v6843 = vsel %vm1877, %v6666, %v6793
        %v6844 = vsel %vm1877, %v6834, %v6795
        %v6845 = vsel %vm1877, %v6835, %v6797
        %v6846 = vsel %vm1877, %v6836, %v6799
        %v6847 = vsel %vm1906, %v6837, %v4517
        %v6848 = vsel %vm1906, %v6838, %v4518
        %v6849 = vsel %vm1906, %v6839, %v4519
        %v6850 = vsel %vm1906, %v6840, %v4520
        %v6851 = vsel %vm1906, %v6841, %v4521
        %v6852 = vsel %vm1906, %v6842, %v4522
        %v6853 = vsel %vm1906, %v6843, %v4796
        %v6854 = vsel %vm1906, %v6844, %v4797
        %v6855 = vsel %vm1906, %v6845, %v5098
        %v6856 = vsel %vm1906, %v6846, %v6447
        %v6857 = vsel %vm485, %v6847, %v4815
        %v6858 = vsel %vm485, %v6848, %v4817
        %v6859 = vsel %vm485, %v6849, %v4819
        %v6860 = vsel %vm485, %v6850, %v4821
        %v6861 = vsel %vm485, %v6851, %v4823
        %v6862 = vsel %vm485, %v6852, %v4825
        %v6863 = vsel %vm485, %v6853, %v4827
        %v6864 = vsel %vm485, %v6854, %v4829
        %v6865 = vsel %vm485, %v6855, %v6813
        %v6866 = vsel %vm485, %v6856, %v6815
        %v6867 = vsel %vm1963, %v6857, %v4847
        %v6868 = vsel %vm1963, %v6858, %v4849
        %v6869 = vsel %vm1963, %v6859, %v4851
        %v6870 = vsel %vm1963, %v6860, %v4853
        %v6871 = vsel %vm1963, %v6861, %v4855
        %v6872 = vsel %vm1963, %v6862, %v4857
        %v6873 = vsel %vm1963, %v6863, %v4859
        %v6874 = vsel %vm1963, %v6864, %v4861
        %v6875 = vsel %vm1963, %v6865, %v6819
        %v6876 = vsel %vm1963, %v6866, %v6821
        %6887 = vrot.lane.b32.xlu0 %v6867, 127
        %v6888 = vpop.permute.xlu0 %6887
        %6889 = vrot.lane.b32.xlu0 %v4878, 127
        %v6890 = vpop.permute.xlu0 %6889
        %6891 = vrot.lane.b32.xlu0 %v6868, 127
        %v6892 = vpop.permute.xlu0 %6891
        %6893 = vrot.lane.b32.xlu0 %v4880, 127
        %v6894 = vpop.permute.xlu0 %6893
        %6895 = vrot.lane.b32.xlu0 %v6869, 127
        %v6896 = vpop.permute.xlu0 %6895
        %6897 = vrot.lane.b32.xlu0 %v4882, 127
        %v6898 = vpop.permute.xlu0 %6897
        %6899 = vrot.lane.b32.xlu0 %v6870, 127
        %v6900 = vpop.permute.xlu0 %6899
        %6901 = vrot.lane.b32.xlu0 %v4884, 127
        %v6902 = vpop.permute.xlu0 %6901
        %6903 = vrot.lane.b32.xlu0 %v6871, 127
        %v6904 = vpop.permute.xlu0 %6903
        %6905 = vrot.lane.b32.xlu0 %v4886, 127
        %v6906 = vpop.permute.xlu0 %6905
        %6907 = vrot.lane.b32.xlu0 %v6872, 127
        %v6908 = vpop.permute.xlu0 %6907
        %6909 = vrot.lane.b32.xlu0 %v4888, 127
        %v6910 = vpop.permute.xlu0 %6909
        %6911 = vrot.lane.b32.xlu0 %v6873, 127
        %v6912 = vpop.permute.xlu0 %6911
        %6913 = vrot.lane.b32.xlu0 %v4890, 127
        %v6914 = vpop.permute.xlu0 %6913
        %6915 = vrot.lane.b32.xlu0 %v6874, 127
        %v6916 = vpop.permute.xlu0 %6915
        %6917 = vrot.lane.b32.xlu0 %v4892, 127
        %v6918 = vpop.permute.xlu0 %6917
        %6919 = vrot.lane.b32.xlu0 %v6875, 127
        %v6920 = vpop.permute.xlu0 %6919
        %6921 = vrot.lane.b32.xlu0 %v6825, 127
        %v6922 = vpop.permute.xlu0 %6921
        %6923 = vrot.lane.b32.xlu0 %v6876, 127
        %v6924 = vpop.permute.xlu0 %6923
        %6925 = vrot.lane.b32.xlu0 %v6827, 127
        %v6926 = vpop.permute.xlu0 %6925
        %6928 = vrot.lane.b32.xlu0 %v6604, 127
        %v6929 = vpop.permute.xlu0 %6928
        %6931 = vrot.lane.b32.xlu0 %v6020, 126
        %v6932 = vpop.permute.xlu0 %6931
        %6934 = vrot.lane.b32.xlu0 %v5302, 125
        %v6935 = vpop.permute.xlu0 %6934
        %6937 = vrot.lane.b32.xlu0 %v4436, 124
        %v6938 = vpop.permute.xlu0 %6937
        %6941 = vrot.lane.b32.xlu0 %v4514, 127
        %v6942 = vpop.permute.xlu0 %6941
        %6944 = vrot.lane.b32.xlu0 %v4554, 126
        %v6945 = vpop.permute.xlu0 %6944
        %6947 = vrot.lane.b32.xlu0 %v4594, 125
        %v6948 = vpop.permute.xlu0 %6947
        %6950 = vrot.lane.b32.xlu0 %v4634, 124
        %v6951 = vpop.permute.xlu0 %6950
        %6953 = vrot.lane.b32.xlu0 %v4796, 124
        %v6954 = vpop.permute.xlu0 %6953
        %6955 = vrot.lane.b32.xlu0 %v4797, 124
        %v6956 = vpop.permute.xlu0 %6955
        %v6959 = vsel %vm1791, %v4593, %v6929
        %v6960 = vsel %vm1791, %v4594, %v5437
        %v6961 = vsel %vm1791, %v4595, %v5439
        %v6962 = vsel %vm1791, %v4596, %v5441
        %v6963 = vsel %vm1791, %v4597, %v5443
        %v6964 = vsel %vm1791, %v4598, %v5445
        %v6965 = vsel %vm1791, %v4599, %v5447
        %v6966 = vsel %vm1791, %v4600, %v5449
        %v6967 = vsel %vm1791, %v4601, %v5451
        %v6968 = vsel %vm1791, %v4602, %v5453
        %v6969 = vsel %vm472, %v6959, %v6932
        %v6970 = vsel %vm472, %v6960, %v5467
        %v6971 = vsel %vm472, %v6961, %v5469
        %v6972 = vsel %vm472, %v6962, %v5471
        %v6973 = vsel %vm472, %v6963, %v5473
        %v6974 = vsel %vm472, %v6964, %v5475
        %v6975 = vsel %vm472, %v6965, %v5477
        %v6976 = vsel %vm472, %v6966, %v5479
        %v6977 = vsel %vm472, %v6967, %v5481
        %v6978 = vsel %vm472, %v6968, %v5483
        %v6979 = vsel %vm1848, %v6969, %v6935
        %v6980 = vsel %vm1848, %v6970, %v5497
        %v6981 = vsel %vm1848, %v6971, %v5499
        %v6982 = vsel %vm1848, %v6972, %v5501
        %v6983 = vsel %vm1848, %v6973, %v5503
        %v6984 = vsel %vm1848, %v6974, %v5505
        %v6985 = vsel %vm1848, %v6975, %v5507
        %v6986 = vsel %vm1848, %v6976, %v5509
        %v6987 = vsel %vm1848, %v6977, %v5511
        %v6988 = vsel %vm1848, %v6978, %v5513
        %v6989 = vsel %vm1877, %v6979, %v6938
        %v6990 = vsel %vm1877, %v6980, %v5527
        %v6991 = vsel %vm1877, %v6981, %v5529
        %v6992 = vsel %vm1877, %v6982, %v5531
        %v6993 = vsel %vm1877, %v6983, %v5533
        %v6994 = vsel %vm1877, %v6984, %v5535
        %v6995 = vsel %vm1877, %v6985, %v5537
        %v6996 = vsel %vm1877, %v6986, %v5539
        %v6997 = vsel %vm1877, %v6987, %v5541
        %v6998 = vsel %vm1877, %v6988, %v5543
        %v6999 = vsel %vm1906, %v6989, %v4474
        %v7000 = vsel %vm1906, %v6990, %v4475
        %v7001 = vsel %vm1906, %v6991, %v4476
        %v7002 = vsel %vm1906, %v6992, %v4477
        %v7003 = vsel %vm1906, %v6993, %v4478
        %v7004 = vsel %vm1906, %v6994, %v4479
        %v7005 = vsel %vm1906, %v6995, %v4480
        %v7006 = vsel %vm1906, %v6996, %v4481
        %v7007 = vsel %vm1906, %v6997, %v4482
        %v7008 = vsel %vm1906, %v6998, %v4764
        %v7009 = vsel %vm485, %v6999, %v6942
        %v7010 = vsel %vm485, %v7000, %v5567
        %v7011 = vsel %vm485, %v7001, %v5569
        %v7012 = vsel %vm485, %v7002, %v5571
        %v7013 = vsel %vm485, %v7003, %v5573
        %v7014 = vsel %vm485, %v7004, %v5575
        %v7015 = vsel %vm485, %v7005, %v5577
        %v7016 = vsel %vm485, %v7006, %v5579
        %v7017 = vsel %vm485, %v7007, %v5581
        %v7018 = vsel %vm485, %v7008, %v5583
        %v7019 = vsel %vm1963, %v7009, %v6945
        %v7020 = vsel %vm1963, %v7010, %v5597
        %v7021 = vsel %vm1963, %v7011, %v5599
        %v7022 = vsel %vm1963, %v7012, %v5601
        %v7023 = vsel %vm1963, %v7013, %v5603
        %v7024 = vsel %vm1963, %v7014, %v5605
        %v7025 = vsel %vm1963, %v7015, %v5607
        %v7026 = vsel %vm1963, %v7016, %v5609
        %v7027 = vsel %vm1963, %v7017, %v5611
        %v7028 = vsel %vm1963, %v7018, %v5613
        %v7029 = vsel %vm1791, %v6948, %v6951
        %v7030 = vsel %vm1791, %v5627, %v5657
        %v7031 = vsel %vm1791, %v5629, %v5659
        %v7032 = vsel %vm1791, %v5631, %v5661
        %v7033 = vsel %vm1791, %v5633, %v5663
        %v7034 = vsel %vm1791, %v5635, %v5665
        %v7035 = vsel %vm1791, %v5637, %v5667
        %v7036 = vsel %vm1791, %v5639, %v5669
        %v7037 = vsel %vm1791, %v5641, %v5671
        %v7038 = vsel %vm1791, %v5643, %v5673
        %v7039 = vsel %vm472, %v7029, %v4655
        %v7040 = vsel %vm472, %v7030, %v4656
        %v7041 = vsel %vm472, %v7031, %v4657
        %v7042 = vsel %vm472, %v7032, %v4658
        %v7043 = vsel %vm472, %v7033, %v4659
        %v7044 = vsel %vm472, %v7034, %v4660
        %v7045 = vsel %vm472, %v7035, %v4661
        %v7046 = vsel %vm472, %v7036, %v4662
        %v7047 = vsel %vm472, %v7037, %v4663
        %v7048 = vsel %vm472, %v7038, %v4903
        %v7049 = vsel %vm1848, %v7039, %v6029
        %v7050 = vsel %vm1848, %v7040, %v6031
        %v7051 = vsel %vm1848, %v7041, %v6033
        %v7052 = vsel %vm1848, %v7042, %v6035
        %v7053 = vsel %vm1848, %v7043, %v6037
        %v7054 = vsel %vm1848, %v7044, %v6039
        %v7055 = vsel %vm1848, %v7045, %v6041
        %v7056 = vsel %vm1848, %v7046, %v6043
        %v7057 = vsel %vm1848, %v7047, %v6421
        %v7058 = vsel %vm1848, %v7048, %v6423
        %v7059 = vsel %vm1877, %v7049, %v6059
        %v7060 = vsel %vm1877, %v7050, %v6061
        %v7061 = vsel %vm1877, %v7051, %v6063
        %v7062 = vsel %vm1877, %v7052, %v6065
        %v7063 = vsel %vm1877, %v7053, %v6067
        %v7064 = vsel %vm1877, %v7054, %v6069
        %v7065 = vsel %vm1877, %v7055, %v6071
        %v7066 = vsel %vm1877, %v7056, %v6073
        %v7067 = vsel %vm1877, %v7057, %v6430
        %v7068 = vsel %vm1877, %v7058, %v6432
        %v7069 = vsel %vm1906, %v7059, %v6089
        %v7070 = vsel %vm1906, %v7060, %v6091
        %v7071 = vsel %vm1906, %v7061, %v6093
        %v7072 = vsel %vm1906, %v7062, %v6095
        %v7073 = vsel %vm1906, %v7063, %v6097
        %v7074 = vsel %vm1906, %v7064, %v6099
        %v7075 = vsel %vm1906, %v7065, %v6101
        %v7076 = vsel %vm1906, %v7066, %v6103
        %v7077 = vsel %vm1906, %v7067, %v6439
        %v7078 = vsel %vm1906, %v7068, %v6441
        %v7079 = vsel %vm485, %v7069, %v6119
        %v7080 = vsel %vm485, %v7070, %v6121
        %v7081 = vsel %vm485, %v7071, %v6123
        %v7082 = vsel %vm485, %v7072, %v6125
        %v7083 = vsel %vm485, %v7073, %v6127
        %v7084 = vsel %vm485, %v7074, %v6129
        %v7085 = vsel %vm485, %v7075, %v6131
        %v7086 = vsel %vm485, %v7076, %v6133
        %v7087 = vsel %vm485, %v7077, %v6954
        %v7088 = vsel %vm485, %v7078, %v6956
        %v7089 = vsel %vm1963, %v7079, %v4556
        %v7090 = vsel %vm1963, %v7080, %v4557
        %v7091 = vsel %vm1963, %v7081, %v4558
        %v7092 = vsel %vm1963, %v7082, %v4559
        %v7093 = vsel %vm1963, %v7083, %v4560
        %v7094 = vsel %vm1963, %v7084, %v4561
        %v7095 = vsel %vm1963, %v7085, %v4562
        %v7096 = vsel %vm1963, %v7086, %v4808
        %v7097 = vsel %vm1963, %v7087, %v4809
        %v7098 = vsel %vm1963, %v7088, %v5108
        %7101 = vrot.lane.b32.xlu0 %v4444, 1
        %v7102 = vpop.permute.xlu0 %7101
        %7103 = vrot.lane.b32.xlu0 %v4446, 1
        %v7104 = vpop.permute.xlu0 %7103
        %7105 = vrot.lane.b32.xlu0 %v4448, 1
        %v7106 = vpop.permute.xlu0 %7105
        %7107 = vrot.lane.b32.xlu0 %v4450, 1
        %v7108 = vpop.permute.xlu0 %7107
        %7109 = vrot.lane.b32.xlu0 %v4452, 1
        %v7110 = vpop.permute.xlu0 %7109
        %7111 = vrot.lane.b32.xlu0 %v4454, 1
        %v7112 = vpop.permute.xlu0 %7111
        %7113 = vrot.lane.b32.xlu0 %v4456, 1
        %v7114 = vpop.permute.xlu0 %7113
        %7115 = vrot.lane.b32.xlu0 %v4458, 1
        %v7116 = vpop.permute.xlu0 %7115
        %7117 = vrot.lane.b32.xlu0 %v4460, 1
        %v7118 = vpop.permute.xlu0 %7117
        %7119 = vrot.lane.b32.xlu0 %v4462, 1
        %v7120 = vpop.permute.xlu0 %7119
        %7133 = vrot.lane.b32.xlu0 %v5098, 127
        %v7134 = vpop.permute.xlu0 %7133
        %7135 = vrot.lane.b32.xlu0 %v6447, 127
        %v7136 = vpop.permute.xlu0 %7135
        %7139 = vrot.lane.b32.xlu0 %v5108, 126
        %v7140 = vpop.permute.xlu0 %7139
        %7141 = vrot.lane.b32.xlu0 %v5863, 126
        %v7142 = vpop.permute.xlu0 %7141
        %7145 = vrot.lane.b32.xlu0 %v5119, 125
        %v7146 = vpop.permute.xlu0 %7145
        %7147 = vrot.lane.b32.xlu0 %v5120, 125
        %v7148 = vpop.permute.xlu0 %7147
        %v7149 = vsel %vm1791, %v4840, %v5455
        %v7150 = vsel %vm1791, %v4841, %v5898
        %v7151 = vsel %vm1791, %v5119, %v5900
        %v7152 = vsel %vm472, %v7149, %v5485
        %v7153 = vsel %vm472, %v7150, %v5907
        %v7154 = vsel %vm472, %v7151, %v5909
        %v7155 = vsel %vm1848, %v7152, %v5515
        %v7156 = vsel %vm1848, %v7153, %v5916
        %v7157 = vsel %vm1848, %v7154, %v5918
        %v7158 = vsel %vm1877, %v6982, %v7102
        %v7159 = vsel %vm1877, %v6983, %v7104
        %v7160 = vsel %vm1877, %v6984, %v7106
        %v7161 = vsel %vm1877, %v6985, %v7108
        %v7162 = vsel %vm1877, %v6986, %v7110
        %v7163 = vsel %vm1877, %v6987, %v7112
        %v7164 = vsel %vm1877, %v6988, %v7114
        %v7165 = vsel %vm1877, %v7155, %v7116
        %v7166 = vsel %vm1877, %v7156, %v7118
        %v7167 = vsel %vm1877, %v7157, %v7120
        %v7168 = vsel %vm1906, %v7158, %v4477
        %v7169 = vsel %vm1906, %v7159, %v4478
        %v7170 = vsel %vm1906, %v7160, %v4479
        %v7171 = vsel %vm1906, %v7161, %v4480
        %v7172 = vsel %vm1906, %v7162, %v4481
        %v7173 = vsel %vm1906, %v7163, %v4482
        %v7174 = vsel %vm1906, %v7164, %v4764
        %v7175 = vsel %vm1906, %v7165, %v5087
        %v7176 = vsel %vm1906, %v7166, %v5088
        %v7177 = vsel %vm1906, %v7167, %v6779
        %v7178 = vsel %vm485, %v7168, %v5571
        %v7179 = vsel %vm485, %v7169, %v5573
        %v7180 = vsel %vm485, %v7170, %v5575
        %v7181 = vsel %vm485, %v7171, %v5577
        %v7182 = vsel %vm485, %v7172, %v5579
        %v7183 = vsel %vm485, %v7173, %v5581
        %v7184 = vsel %vm485, %v7174, %v5583
        %v7185 = vsel %vm485, %v7175, %v5585
        %v7186 = vsel %vm485, %v7176, %v7134
        %v7187 = vsel %vm485, %v7177, %v7136
        %v7188 = vsel %vm1963, %v7178, %v5601
        %v7189 = vsel %vm1963, %v7179, %v5603
        %v7190 = vsel %vm1963, %v7180, %v5605
        %v7191 = vsel %vm1963, %v7181, %v5607
        %v7192 = vsel %vm1963, %v7182, %v5609
        %v7193 = vsel %vm1963, %v7183, %v5611
        %v7194 = vsel %vm1963, %v7184, %v5613
        %v7195 = vsel %vm1963, %v7185, %v5615
        %v7196 = vsel %vm1963, %v7186, %v7140
        %v7197 = vsel %vm1963, %v7187, %v7142
        %7208 = vrot.lane.b32.xlu0 %v7188, 127
        %v7209 = vpop.permute.xlu0 %7208
        %7210 = vrot.lane.b32.xlu0 %v5631, 127
        %v7211 = vpop.permute.xlu0 %7210
        %7212 = vrot.lane.b32.xlu0 %v7189, 127
        %v7213 = vpop.permute.xlu0 %7212
        %7214 = vrot.lane.b32.xlu0 %v5633, 127
        %v7215 = vpop.permute.xlu0 %7214
        %7216 = vrot.lane.b32.xlu0 %v7190, 127
        %v7217 = vpop.permute.xlu0 %7216
        %7218 = vrot.lane.b32.xlu0 %v5635, 127
        %v7219 = vpop.permute.xlu0 %7218
        %7220 = vrot.lane.b32.xlu0 %v7191, 127
        %v7221 = vpop.permute.xlu0 %7220
        %7222 = vrot.lane.b32.xlu0 %v5637, 127
        %v7223 = vpop.permute.xlu0 %7222
        %7224 = vrot.lane.b32.xlu0 %v7192, 127
        %v7225 = vpop.permute.xlu0 %7224
        %7226 = vrot.lane.b32.xlu0 %v5639, 127
        %v7227 = vpop.permute.xlu0 %7226
        %7228 = vrot.lane.b32.xlu0 %v7193, 127
        %v7229 = vpop.permute.xlu0 %7228
        %7230 = vrot.lane.b32.xlu0 %v5641, 127
        %v7231 = vpop.permute.xlu0 %7230
        %7232 = vrot.lane.b32.xlu0 %v7194, 127
        %v7233 = vpop.permute.xlu0 %7232
        %7234 = vrot.lane.b32.xlu0 %v5643, 127
        %v7235 = vpop.permute.xlu0 %7234
        %7236 = vrot.lane.b32.xlu0 %v7195, 127
        %v7237 = vpop.permute.xlu0 %7236
        %7238 = vrot.lane.b32.xlu0 %v5645, 127
        %v7239 = vpop.permute.xlu0 %7238
        %7240 = vrot.lane.b32.xlu0 %v7196, 127
        %v7241 = vpop.permute.xlu0 %7240
        %7242 = vrot.lane.b32.xlu0 %v7146, 127
        %v7243 = vpop.permute.xlu0 %7242
        %7244 = vrot.lane.b32.xlu0 %v7197, 127
        %v7245 = vpop.permute.xlu0 %7244
        %7246 = vrot.lane.b32.xlu0 %v7148, 127
        %v7247 = vpop.permute.xlu0 %7246
        %7249 = vrot.lane.b32.xlu0 %v4593, 127
        %v7250 = vpop.permute.xlu0 %7249
        %7252 = vrot.lane.b32.xlu0 %v6604, 126
        %v7253 = vpop.permute.xlu0 %7252
        %7255 = vrot.lane.b32.xlu0 %v6020, 125
        %v7256 = vpop.permute.xlu0 %7255
        %7258 = vrot.lane.b32.xlu0 %v5302, 124
        %v7259 = vpop.permute.xlu0 %7258
        %7261 = vrot.lane.b32.xlu0 %v5087, 124
        %v7262 = vpop.permute.xlu0 %7261
        %v7264 = vsel %vm1791, %v4553, %v7250
        %v7265 = vsel %vm1791, %v4554, %v6155
        %v7266 = vsel %vm1791, %v4555, %v6157
        %v7267 = vsel %vm1791, %v4556, %v6159
        %v7268 = vsel %vm1791, %v4557, %v6161
        %v7269 = vsel %vm1791, %v4558, %v6163
        %v7270 = vsel %vm1791, %v4559, %v6165
        %v7271 = vsel %vm1791, %v4560, %v6167
        %v7272 = vsel %vm1791, %v4561, %v6169
        %v7273 = vsel %vm1791, %v4562, %v6171
        %v7274 = vsel %vm472, %v7264, %v7253
        %v7275 = vsel %vm472, %v7265, %v6185
        %v7276 = vsel %vm472, %v7266, %v6187
        %v7277 = vsel %vm472, %v7267, %v6189
        %v7278 = vsel %vm472, %v7268, %v6191
        %v7279 = vsel %vm472, %v7269, %v6193
        %v7280 = vsel %vm472, %v7270, %v6195
        %v7281 = vsel %vm472, %v7271, %v6197
        %v7282 = vsel %vm472, %v7272, %v6199
        %v7283 = vsel %vm472, %v7273, %v6201
        %v7284 = vsel %vm1848, %v7274, %v7256
        %v7285 = vsel %vm1848, %v7275, %v6215
        %v7286 = vsel %vm1848, %v7276, %v6217
        %v7287 = vsel %vm1848, %v7277, %v6219
        %v7288 = vsel %vm1848, %v7278, %v6221
        %v7289 = vsel %vm1848, %v7279, %v6223
        %v7290 = vsel %vm1848, %v7280, %v6225
        %v7291 = vsel %vm1848, %v7281, %v6227
        %v7292 = vsel %vm1848, %v7282, %v6229
        %v7293 = vsel %vm1848, %v7283, %v6231
        %v7294 = vsel %vm1877, %v7284, %v7259
        %v7295 = vsel %vm1877, %v7285, %v6245
        %v7296 = vsel %vm1877, %v7286, %v6247
        %v7297 = vsel %vm1877, %v7287, %v6249
        %v7298 = vsel %vm1877, %v7288, %v6251
        %v7299 = vsel %vm1877, %v7289, %v6253
        %v7300 = vsel %vm1877, %v7290, %v6255
        %v7301 = vsel %vm1877, %v7291, %v6257
        %v7302 = vsel %vm1877, %v7292, %v6259
        %v7303 = vsel %vm1877, %v7293, %v6261
        %v7304 = vsel %vm1906, %v7294, %v4438
        %v7305 = vsel %vm1906, %v7295, %v4440
        %v7306 = vsel %vm1906, %v7296, %v4442
        %v7307 = vsel %vm1906, %v7297, %v4444
        %v7308 = vsel %vm1906, %v7298, %v4446
        %v7309 = vsel %vm1906, %v7299, %v4448
        %v7310 = vsel %vm1906, %v7300, %v4450
        %v7311 = vsel %vm1906, %v7301, %v4452
        %v7312 = vsel %vm1906, %v7302, %v4454
        %v7313 = vsel %vm1906, %v7303, %v4456
        %v7314 = vsel %vm485, %v7304, %v4486
        %v7315 = vsel %vm485, %v7305, %v4488
        %v7316 = vsel %vm485, %v7306, %v4490
        %v7317 = vsel %vm485, %v7307, %v4492
        %v7318 = vsel %vm485, %v7308, %v4494
        %v7319 = vsel %vm485, %v7309, %v4496
        %v7320 = vsel %vm485, %v7310, %v4498
        %v7321 = vsel %vm485, %v7311, %v4500
        %v7322 = vsel %vm485, %v7312, %v4502
        %v7323 = vsel %vm485, %v7313, %v5090
        %v7324 = vsel %vm1963, %v7314, %v4526
        %v7325 = vsel %vm1963, %v7315, %v4528
        %v7326 = vsel %vm1963, %v7316, %v4530
        %v7327 = vsel %vm1963, %v7317, %v4532
        %v7328 = vsel %vm1963, %v7318, %v4534
        %v7329 = vsel %vm1963, %v7319, %v4536
        %v7330 = vsel %vm1963, %v7320, %v4538
        %v7331 = vsel %vm1963, %v7321, %v4540
        %v7332 = vsel %vm1963, %v7322, %v4542
        %v7333 = vsel %vm1963, %v7323, %v5100
        %v7334 = vsel %vm1791, %v4566, %v4606
        %v7335 = vsel %vm1791, %v4568, %v4608
        %v7336 = vsel %vm1791, %v4570, %v4610
        %v7337 = vsel %vm1791, %v4572, %v4612
        %v7338 = vsel %vm1791, %v4574, %v4614
        %v7339 = vsel %vm1791, %v4576, %v4616
        %v7340 = vsel %vm1791, %v4578, %v4618
        %v7341 = vsel %vm1791, %v4580, %v4620
        %v7342 = vsel %vm1791, %v4582, %v4622
        %v7343 = vsel %vm1791, %v5110, %v6275
        %v7344 = vsel %vm472, %v7334, %v4635
        %v7345 = vsel %vm472, %v7335, %v4636
        %v7346 = vsel %vm472, %v7336, %v4637
        %v7347 = vsel %vm472, %v7337, %v4638
        %v7348 = vsel %vm472, %v7338, %v4639
        %v7349 = vsel %vm472, %v7339, %v4640
        %v7350 = vsel %vm472, %v7340, %v4641
        %v7351 = vsel %vm472, %v7341, %v4642
        %v7352 = vsel %vm472, %v7342, %v4643
        %v7353 = vsel %vm472, %v7343, %v4872
        %v7354 = vsel %vm1848, %v7344, %v4667
        %v7355 = vsel %vm1848, %v7345, %v4669
        %v7356 = vsel %vm1848, %v7346, %v4671
        %v7357 = vsel %vm1848, %v7347, %v4673
        %v7358 = vsel %vm1848, %v7348, %v4675
        %v7359 = vsel %vm1848, %v7349, %v4677
        %v7360 = vsel %vm1848, %v7350, %v4679
        %v7361 = vsel %vm1848, %v7351, %v4681
        %v7362 = vsel %vm1848, %v7352, %v4683
        %v7363 = vsel %vm1848, %v7353, %v5159
        %v7364 = vsel %vm1877, %v7354, %v4707
        %v7365 = vsel %vm1877, %v7355, %v4709
        %v7366 = vsel %vm1877, %v7356, %v4711
        %v7367 = vsel %vm1877, %v7357, %v4713
        %v7368 = vsel %vm1877, %v7358, %v4715
        %v7369 = vsel %vm1877, %v7359, %v4717
        %v7370 = vsel %vm1877, %v7360, %v4719
        %v7371 = vsel %vm1877, %v7361, %v4721
        %v7372 = vsel %vm1877, %v7362, %v4723
        %v7373 = vsel %vm1877, %v7363, %v5169
        %v7374 = vsel %vm1906, %v7364, %v4737
        %v7375 = vsel %vm1906, %v7365, %v4739
        %v7376 = vsel %vm1906, %v7366, %v4741
        %v7377 = vsel %vm1906, %v7367, %v4743
        %v7378 = vsel %vm1906, %v7368, %v4745
        %v7379 = vsel %vm1906, %v7369, %v4747
        %v7380 = vsel %vm1906, %v7370, %v4749
        %v7381 = vsel %vm1906, %v7371, %v4751
        %v7382 = vsel %vm1906, %v7372, %v4753
        %v7383 = vsel %vm1906, %v7373, %v5178
        %v7384 = vsel %vm485, %v7374, %v4768
        %v7385 = vsel %vm485, %v7375, %v4770
        %v7386 = vsel %vm485, %v7376, %v4772
        %v7387 = vsel %vm485, %v7377, %v4774
        %v7388 = vsel %vm485, %v7378, %v4776
        %v7389 = vsel %vm485, %v7379, %v4778
        %v7390 = vsel %vm485, %v7380, %v4780
        %v7391 = vsel %vm485, %v7381, %v4782
        %v7392 = vsel %vm485, %v7382, %v4784
        %v7393 = vsel %vm485, %v7383, %v7262
        %v7394 = vsel %vm1963, %v7384, %v4516
        %v7395 = vsel %vm1963, %v7385, %v4517
        %v7396 = vsel %vm1963, %v7386, %v4518
        %v7397 = vsel %vm1963, %v7387, %v4519
        %v7398 = vsel %vm1963, %v7388, %v4520
        %v7399 = vsel %vm1963, %v7389, %v4521
        %v7400 = vsel %vm1963, %v7390, %v4522
        %v7401 = vsel %vm1963, %v7391, %v4796
        %v7402 = vsel %vm1963, %v7392, %v4797
        %v7403 = vsel %vm1963, %v7393, %v5098
        %7406 = vrot.lane.b32.xlu0 %v4697, 1
        %v7407 = vpop.permute.xlu0 %7406
        %7408 = vrot.lane.b32.xlu0 %v4698, 1
        %v7409 = vpop.permute.xlu0 %7408
        %7410 = vrot.lane.b32.xlu0 %v4699, 1
        %v7411 = vpop.permute.xlu0 %7410
        %7412 = vrot.lane.b32.xlu0 %v4700, 1
        %v7413 = vpop.permute.xlu0 %7412
        %7414 = vrot.lane.b32.xlu0 %v4701, 1
        %v7415 = vpop.permute.xlu0 %7414
        %7416 = vrot.lane.b32.xlu0 %v4702, 1
        %v7417 = vpop.permute.xlu0 %7416
        %7418 = vrot.lane.b32.xlu0 %v4703, 1
        %v7419 = vpop.permute.xlu0 %7418
        %7420 = vrot.lane.b32.xlu0 %v4935, 1
        %v7421 = vpop.permute.xlu0 %7420
        %7422 = vrot.lane.b32.xlu0 %v4936, 1
        %v7423 = vpop.permute.xlu0 %7422
        %7424 = vrot.lane.b32.xlu0 %v5167, 1
        %v7425 = vpop.permute.xlu0 %7424
        %7436 = vrot.lane.b32.xlu0 %v6779, 127
        %v7437 = vpop.permute.xlu0 %7436
        %7439 = vrot.lane.b32.xlu0 %v6447, 126
        %v7440 = vpop.permute.xlu0 %7439
        %7442 = vrot.lane.b32.xlu0 %v5863, 125
        %v7443 = vpop.permute.xlu0 %7442
        %v7444 = vsel %vm1791, %v4808, %v6173
        %v7445 = vsel %vm1791, %v4809, %v6482
        %v7446 = vsel %vm1791, %v5108, %v6484
        %v7447 = vsel %vm472, %v7444, %v6203
        %v7448 = vsel %vm472, %v7445, %v6491
        %v7449 = vsel %vm472, %v7446, %v6493
        %v7450 = vsel %vm1848, %v7447, %v6233
        %v7451 = vsel %vm1848, %v7448, %v6500
        %v7452 = vsel %vm1848, %v7449, %v6502
        %v7453 = vsel %vm1877, %v7287, %v7407
        %v7454 = vsel %vm1877, %v7288, %v7409
        %v7455 = vsel %vm1877, %v7289, %v7411
        %v7456 = vsel %vm1877, %v7290, %v7413
        %v7457 = vsel %vm1877, %v7291, %v7415
        %v7458 = vsel %vm1877, %v7292, %v7417
        %v7459 = vsel %vm1877, %v7293, %v7419
        %v7460 = vsel %vm1877, %v7450, %v7421
        %v7461 = vsel %vm1877, %v7451, %v7423
        %v7462 = vsel %vm1877, %v7452, %v7425
        %v7463 = vsel %vm1906, %v7453, %v4444
        %v7464 = vsel %vm1906, %v7454, %v4446
        %v7465 = vsel %vm1906, %v7455, %v4448
        %v7466 = vsel %vm1906, %v7456, %v4450
        %v7467 = vsel %vm1906, %v7457, %v4452
        %v7468 = vsel %vm1906, %v7458, %v4454
        %v7469 = vsel %vm1906, %v7459, %v4456
        %v7470 = vsel %vm1906, %v7460, %v4458
        %v7471 = vsel %vm1906, %v7461, %v4460
        %v7472 = vsel %vm1906, %v7462, %v4462
        %v7473 = vsel %vm485, %v7463, %v4492
        %v7474 = vsel %vm485, %v7464, %v4494
        %v7475 = vsel %vm485, %v7465, %v4496
        %v7476 = vsel %vm485, %v7466, %v4498
        %v7477 = vsel %vm485, %v7467, %v4500
        %v7478 = vsel %vm485, %v7468, %v4502
        %v7479 = vsel %vm485, %v7469, %v5090
        %v7480 = vsel %vm485, %v7470, %v5092
        %v7481 = vsel %vm485, %v7471, %v5094
        %v7482 = vsel %vm485, %v7472, %v7437
        %v7483 = vsel %vm1963, %v7473, %v4532
        %v7484 = vsel %vm1963, %v7474, %v4534
        %v7485 = vsel %vm1963, %v7475, %v4536
        %v7486 = vsel %vm1963, %v7476, %v4538
        %v7487 = vsel %vm1963, %v7477, %v4540
        %v7488 = vsel %vm1963, %v7478, %v4542
        %v7489 = vsel %vm1963, %v7479, %v5100
        %v7490 = vsel %vm1963, %v7480, %v5102
        %v7491 = vsel %vm1963, %v7481, %v5104
        %v7492 = vsel %vm1963, %v7482, %v7440
        %7503 = vrot.lane.b32.xlu0 %v7483, 127
        %v7504 = vpop.permute.xlu0 %7503
        %7505 = vrot.lane.b32.xlu0 %v4572, 127
        %v7506 = vpop.permute.xlu0 %7505
        %7507 = vrot.lane.b32.xlu0 %v7484, 127
        %v7508 = vpop.permute.xlu0 %7507
        %7509 = vrot.lane.b32.xlu0 %v4574, 127
        %v7510 = vpop.permute.xlu0 %7509
        %7511 = vrot.lane.b32.xlu0 %v7485, 127
        %v7512 = vpop.permute.xlu0 %7511
        %7513 = vrot.lane.b32.xlu0 %v4576, 127
        %v7514 = vpop.permute.xlu0 %7513
        %7515 = vrot.lane.b32.xlu0 %v7486, 127
        %v7516 = vpop.permute.xlu0 %7515
        %7517 = vrot.lane.b32.xlu0 %v4578, 127
        %v7518 = vpop.permute.xlu0 %7517
        %7519 = vrot.lane.b32.xlu0 %v7487, 127
        %v7520 = vpop.permute.xlu0 %7519
        %7521 = vrot.lane.b32.xlu0 %v4580, 127
        %v7522 = vpop.permute.xlu0 %7521
        %7523 = vrot.lane.b32.xlu0 %v7488, 127
        %v7524 = vpop.permute.xlu0 %7523
        %7525 = vrot.lane.b32.xlu0 %v4582, 127
        %v7526 = vpop.permute.xlu0 %7525
        %7527 = vrot.lane.b32.xlu0 %v7489, 127
        %v7528 = vpop.permute.xlu0 %7527
        %7529 = vrot.lane.b32.xlu0 %v5110, 127
        %v7530 = vpop.permute.xlu0 %7529
        %7531 = vrot.lane.b32.xlu0 %v7490, 127
        %v7532 = vpop.permute.xlu0 %7531
        %7533 = vrot.lane.b32.xlu0 %v5112, 127
        %v7534 = vpop.permute.xlu0 %7533
        %7535 = vrot.lane.b32.xlu0 %v7491, 127
        %v7536 = vpop.permute.xlu0 %7535
        %7537 = vrot.lane.b32.xlu0 %v5114, 127
        %v7538 = vpop.permute.xlu0 %7537
        %7539 = vrot.lane.b32.xlu0 %v7492, 127
        %v7540 = vpop.permute.xlu0 %7539
        %7541 = vrot.lane.b32.xlu0 %v7443, 127
        %v7542 = vpop.permute.xlu0 %7541
        %v7563 = vrot.slane %v5756, 7
        %v7564 = vrot.slane %v5826, 7
        %v7565 = vsel %vm1791, %v7563, %v7564
        %v7566 = vrot.slane %v5981, 7
        %v7567 = vsel %vm1791, %v7564, %v7566
        %v7568 = vrot.slane %v5983, 7
        %v7569 = vsel %vm1791, %v7566, %v7568
        %v7570 = vrot.slane %v5757, 7
        %v7571 = vrot.slane %v5827, 7
        %v7572 = vsel %vm1791, %v7570, %v7571
        %v7573 = vrot.slane %v5985, 7
        %v7574 = vsel %vm1791, %v7571, %v7573
        %v7575 = vrot.slane %v5987, 7
        %v7576 = vsel %vm1791, %v7573, %v7575
        %v7577 = vrot.slane %v5758, 7
        %v7578 = vrot.slane %v5828, 7
        %v7579 = vsel %vm1791, %v7577, %v7578
        %v7580 = vrot.slane %v5989, 7
        %v7581 = vsel %vm1791, %v7578, %v7580
        %v7582 = vrot.slane %v5991, 7
        %v7583 = vsel %vm1791, %v7580, %v7582
        %v7584 = vrot.slane %v5759, 7
        %v7585 = vrot.slane %v5829, 7
        %v7586 = vsel %vm1791, %v7584, %v7585
        %v7587 = vrot.slane %v5993, 7
        %v7588 = vsel %vm1791, %v7585, %v7587
        %v7589 = vrot.slane %v5995, 7
        %v7590 = vsel %vm1791, %v7587, %v7589
        %v7591 = vrot.slane %v5760, 7
        %v7592 = vrot.slane %v5830, 7
        %v7593 = vsel %vm1791, %v7591, %v7592
        %v7594 = vrot.slane %v5997, 7
        %v7595 = vsel %vm1791, %v7592, %v7594
        %v7596 = vrot.slane %v5999, 7
        %v7597 = vsel %vm1791, %v7594, %v7596
        %v7598 = vrot.slane %v5761, 7
        %v7599 = vrot.slane %v5831, 7
        %v7600 = vsel %vm1791, %v7598, %v7599
        %v7601 = vrot.slane %v6001, 7
        %v7602 = vsel %vm1791, %v7599, %v7601
        %v7603 = vrot.slane %v6003, 7
        %v7604 = vsel %vm1791, %v7601, %v7603
        %v7605 = vrot.slane %v5762, 7
        %v7606 = vrot.slane %v5832, 7
        %v7607 = vsel %vm1791, %v7605, %v7606
        %v7608 = vrot.slane %v6005, 7
        %v7609 = vsel %vm1791, %v7606, %v7608
        %v7610 = vrot.slane %v6007, 7
        %v7611 = vsel %vm1791, %v7608, %v7610
        %v7612 = vrot.slane %v5763, 7
        %v7613 = vrot.slane %v5833, 7
        %v7614 = vsel %vm1791, %v7612, %v7613
        %v7615 = vrot.slane %v6009, 7
        %v7616 = vsel %vm1791, %v7613, %v7615
        %v7617 = vrot.slane %v6011, 7
        %v7618 = vsel %vm1791, %v7615, %v7617
        %v7619 = vrot.slane %v5764, 7
        %v7620 = vrot.slane %v5834, 7
        %v7621 = vsel %vm1791, %v7619, %v7620
        %v7622 = vrot.slane %v6013, 7
        %v7623 = vsel %vm1791, %v7620, %v7622
        %v7624 = vrot.slane %v6015, 7
        %v7625 = vsel %vm1791, %v7622, %v7624
        %v7626 = vrot.slane %v5765, 7
        %v7627 = vrot.slane %v5835, 7
        %v7628 = vsel %vm1791, %v7626, %v7627
        %v7629 = vrot.slane %v6017, 7
        %v7630 = vsel %vm1791, %v7627, %v7629
        %v7631 = vrot.slane %v6019, 7
        %v7632 = vsel %vm1791, %v7629, %v7631
        %v7693 = vrot.slane %v6340, 6
        %v7694 = vrot.slane %v6410, 6
        %v7695 = vsel %vm472, %v7693, %v7694
        %v7696 = vrot.slane %v6565, 6
        %v7697 = vsel %vm472, %v7694, %v7696
        %v7698 = vrot.slane %v6567, 6
        %v7699 = vsel %vm472, %v7696, %v7698
        %v7700 = vrot.slane %v6341, 6
        %v7701 = vrot.slane %v6411, 6
        %v7702 = vsel %vm472, %v7700, %v7701
        %v7703 = vrot.slane %v6569, 6
        %v7704 = vsel %vm472, %v7701, %v7703
        %v7705 = vrot.slane %v6571, 6
        %v7706 = vsel %vm472, %v7703, %v7705
        %v7707 = vrot.slane %v6342, 6
        %v7708 = vrot.slane %v6412, 6
        %v7709 = vsel %vm472, %v7707, %v7708
        %v7710 = vrot.slane %v6573, 6
        %v7711 = vsel %vm472, %v7708, %v7710
        %v7712 = vrot.slane %v6575, 6
        %v7713 = vsel %vm472, %v7710, %v7712
        %v7714 = vrot.slane %v6343, 6
        %v7715 = vrot.slane %v6413, 6
        %v7716 = vsel %vm472, %v7714, %v7715
        %v7717 = vrot.slane %v6577, 6
        %v7718 = vsel %vm472, %v7715, %v7717
        %v7719 = vrot.slane %v6579, 6
        %v7720 = vsel %vm472, %v7717, %v7719
        %v7721 = vrot.slane %v6344, 6
        %v7722 = vrot.slane %v6414, 6
        %v7723 = vsel %vm472, %v7721, %v7722
        %v7724 = vrot.slane %v6581, 6
        %v7725 = vsel %vm472, %v7722, %v7724
        %v7726 = vrot.slane %v6583, 6
        %v7727 = vsel %vm472, %v7724, %v7726
        %v7728 = vrot.slane %v6345, 6
        %v7729 = vrot.slane %v6415, 6
        %v7730 = vsel %vm472, %v7728, %v7729
        %v7731 = vrot.slane %v6585, 6
        %v7732 = vsel %vm472, %v7729, %v7731
        %v7733 = vrot.slane %v6587, 6
        %v7734 = vsel %vm472, %v7731, %v7733
        %v7735 = vrot.slane %v6346, 6
        %v7736 = vrot.slane %v6416, 6
        %v7737 = vsel %vm472, %v7735, %v7736
        %v7738 = vrot.slane %v6589, 6
        %v7739 = vsel %vm472, %v7736, %v7738
        %v7740 = vrot.slane %v6591, 6
        %v7741 = vsel %vm472, %v7738, %v7740
        %v7742 = vrot.slane %v6347, 6
        %v7743 = vrot.slane %v6417, 6
        %v7744 = vsel %vm472, %v7742, %v7743
        %v7745 = vrot.slane %v6593, 6
        %v7746 = vsel %vm472, %v7743, %v7745
        %v7747 = vrot.slane %v6595, 6
        %v7748 = vsel %vm472, %v7745, %v7747
        %v7749 = vrot.slane %v6348, 6
        %v7750 = vrot.slane %v6418, 6
        %v7751 = vsel %vm472, %v7749, %v7750
        %v7752 = vrot.slane %v6597, 6
        %v7753 = vsel %vm472, %v7750, %v7752
        %v7754 = vrot.slane %v6599, 6
        %v7755 = vsel %vm472, %v7752, %v7754
        %v7756 = vrot.slane %v6349, 6
        %v7757 = vrot.slane %v6419, 6
        %v7758 = vsel %vm472, %v7756, %v7757
        %v7759 = vrot.slane %v6601, 6
        %v7760 = vsel %vm472, %v7757, %v7759
        %v7761 = vrot.slane %v6603, 6
        %v7762 = vsel %vm472, %v7759, %v7761
        %v7823 = vrot.slane %v6697, 5
        %v7824 = vrot.slane %v6767, 5
        %v7825 = vsel %vm1848, %v7823, %v7824
        %v7826 = vrot.slane %v6888, 5
        %v7827 = vsel %vm1848, %v7824, %v7826
        %v7828 = vrot.slane %v6890, 5
        %v7829 = vsel %vm1848, %v7826, %v7828
        %v7830 = vrot.slane %v6698, 5
        %v7831 = vrot.slane %v6768, 5
        %v7832 = vsel %vm1848, %v7830, %v7831
        %v7833 = vrot.slane %v6892, 5
        %v7834 = vsel %vm1848, %v7831, %v7833
        %v7835 = vrot.slane %v6894, 5
        %v7836 = vsel %vm1848, %v7833, %v7835
        %v7837 = vrot.slane %v6699, 5
        %v7838 = vrot.slane %v6769, 5
        %v7839 = vsel %vm1848, %v7837, %v7838
        %v7840 = vrot.slane %v6896, 5
        %v7841 = vsel %vm1848, %v7838, %v7840
        %v7842 = vrot.slane %v6898, 5
        %v7843 = vsel %vm1848, %v7840, %v7842
        %v7844 = vrot.slane %v6700, 5
        %v7845 = vrot.slane %v6770, 5
        %v7846 = vsel %vm1848, %v7844, %v7845
        %v7847 = vrot.slane %v6900, 5
        %v7848 = vsel %vm1848, %v7845, %v7847
        %v7849 = vrot.slane %v6902, 5
        %v7850 = vsel %vm1848, %v7847, %v7849
        %v7851 = vrot.slane %v6701, 5
        %v7852 = vrot.slane %v6771, 5
        %v7853 = vsel %vm1848, %v7851, %v7852
        %v7854 = vrot.slane %v6904, 5
        %v7855 = vsel %vm1848, %v7852, %v7854
        %v7856 = vrot.slane %v6906, 5
        %v7857 = vsel %vm1848, %v7854, %v7856
        %v7858 = vrot.slane %v6702, 5
        %v7859 = vrot.slane %v6772, 5
        %v7860 = vsel %vm1848, %v7858, %v7859
        %v7861 = vrot.slane %v6908, 5
        %v7862 = vsel %vm1848, %v7859, %v7861
        %v7863 = vrot.slane %v6910, 5
        %v7864 = vsel %vm1848, %v7861, %v7863
        %v7865 = vrot.slane %v6703, 5
        %v7866 = vrot.slane %v6773, 5
        %v7867 = vsel %vm1848, %v7865, %v7866
        %v7868 = vrot.slane %v6912, 5
        %v7869 = vsel %vm1848, %v7866, %v7868
        %v7870 = vrot.slane %v6914, 5
        %v7871 = vsel %vm1848, %v7868, %v7870
        %v7872 = vrot.slane %v6704, 5
        %v7873 = vrot.slane %v6774, 5
        %v7874 = vsel %vm1848, %v7872, %v7873
        %v7875 = vrot.slane %v6916, 5
        %v7876 = vsel %vm1848, %v7873, %v7875
        %v7877 = vrot.slane %v6918, 5
        %v7878 = vsel %vm1848, %v7875, %v7877
        %v7879 = vrot.slane %v6705, 5
        %v7880 = vrot.slane %v6775, 5
        %v7881 = vsel %vm1848, %v7879, %v7880
        %v7882 = vrot.slane %v6920, 5
        %v7883 = vsel %vm1848, %v7880, %v7882
        %v7884 = vrot.slane %v6922, 5
        %v7885 = vsel %vm1848, %v7882, %v7884
        %v7886 = vrot.slane %v6706, 5
        %v7887 = vrot.slane %v6776, 5
        %v7888 = vsel %vm1848, %v7886, %v7887
        %v7889 = vrot.slane %v6924, 5
        %v7890 = vsel %vm1848, %v7887, %v7889
        %v7891 = vrot.slane %v6926, 5
        %v7892 = vsel %vm1848, %v7889, %v7891
        %v7953 = vrot.slane %v7019, 4
        %v7954 = vrot.slane %v7089, 4
        %v7955 = vsel %vm1877, %v7953, %v7954
        %v7956 = vrot.slane %v7209, 4
        %v7957 = vsel %vm1877, %v7954, %v7956
        %v7958 = vrot.slane %v7211, 4
        %v7959 = vsel %vm1877, %v7956, %v7958
        %v7960 = vrot.slane %v7020, 4
        %v7961 = vrot.slane %v7090, 4
        %v7962 = vsel %vm1877, %v7960, %v7961
        %v7963 = vrot.slane %v7213, 4
        %v7964 = vsel %vm1877, %v7961, %v7963
        %v7965 = vrot.slane %v7215, 4
        %v7966 = vsel %vm1877, %v7963, %v7965
        %v7967 = vrot.slane %v7021, 4
        %v7968 = vrot.slane %v7091, 4
        %v7969 = vsel %vm1877, %v7967, %v7968
        %v7970 = vrot.slane %v7217, 4
        %v7971 = vsel %vm1877, %v7968, %v7970
        %v7972 = vrot.slane %v7219, 4
        %v7973 = vsel %vm1877, %v7970, %v7972
        %v7974 = vrot.slane %v7022, 4
        %v7975 = vrot.slane %v7092, 4
        %v7976 = vsel %vm1877, %v7974, %v7975
        %v7977 = vrot.slane %v7221, 4
        %v7978 = vsel %vm1877, %v7975, %v7977
        %v7979 = vrot.slane %v7223, 4
        %v7980 = vsel %vm1877, %v7977, %v7979
        %v7981 = vrot.slane %v7023, 4
        %v7982 = vrot.slane %v7093, 4
        %v7983 = vsel %vm1877, %v7981, %v7982
        %v7984 = vrot.slane %v7225, 4
        %v7985 = vsel %vm1877, %v7982, %v7984
        %v7986 = vrot.slane %v7227, 4
        %v7987 = vsel %vm1877, %v7984, %v7986
        %v7988 = vrot.slane %v7024, 4
        %v7989 = vrot.slane %v7094, 4
        %v7990 = vsel %vm1877, %v7988, %v7989
        %v7991 = vrot.slane %v7229, 4
        %v7992 = vsel %vm1877, %v7989, %v7991
        %v7993 = vrot.slane %v7231, 4
        %v7994 = vsel %vm1877, %v7991, %v7993
        %v7995 = vrot.slane %v7025, 4
        %v7996 = vrot.slane %v7095, 4
        %v7997 = vsel %vm1877, %v7995, %v7996
        %v7998 = vrot.slane %v7233, 4
        %v7999 = vsel %vm1877, %v7996, %v7998
        %v8000 = vrot.slane %v7235, 4
        %v8001 = vsel %vm1877, %v7998, %v8000
        %v8002 = vrot.slane %v7026, 4
        %v8003 = vrot.slane %v7096, 4
        %v8004 = vsel %vm1877, %v8002, %v8003
        %v8005 = vrot.slane %v7237, 4
        %v8006 = vsel %vm1877, %v8003, %v8005
        %v8007 = vrot.slane %v7239, 4
        %v8008 = vsel %vm1877, %v8005, %v8007
        %v8009 = vrot.slane %v7027, 4
        %v8010 = vrot.slane %v7097, 4
        %v8011 = vsel %vm1877, %v8009, %v8010
        %v8012 = vrot.slane %v7241, 4
        %v8013 = vsel %vm1877, %v8010, %v8012
        %v8014 = vrot.slane %v7243, 4
        %v8015 = vsel %vm1877, %v8012, %v8014
        %v8016 = vrot.slane %v7028, 4
        %v8017 = vrot.slane %v7098, 4
        %v8018 = vsel %vm1877, %v8016, %v8017
        %v8019 = vrot.slane %v7245, 4
        %v8020 = vsel %vm1877, %v8017, %v8019
        %v8021 = vrot.slane %v7247, 4
        %v8022 = vsel %vm1877, %v8019, %v8021
        %v8083 = vrot.slane %v7324, 3
        %v8084 = vrot.slane %v7394, 3
        %v8085 = vsel %vm1906, %v8083, %v8084
        %v8086 = vrot.slane %v7504, 3
        %v8087 = vsel %vm1906, %v8084, %v8086
        %v8088 = vrot.slane %v7506, 3
        %v8089 = vsel %vm1906, %v8086, %v8088
        %v8090 = vrot.slane %v7325, 3
        %v8091 = vrot.slane %v7395, 3
        %v8092 = vsel %vm1906, %v8090, %v8091
        %v8093 = vrot.slane %v7508, 3
        %v8094 = vsel %vm1906, %v8091, %v8093
        %v8095 = vrot.slane %v7510, 3
        %v8096 = vsel %vm1906, %v8093, %v8095
        %v8097 = vrot.slane %v7326, 3
        %v8098 = vrot.slane %v7396, 3
        %v8099 = vsel %vm1906, %v8097, %v8098
        %v8100 = vrot.slane %v7512, 3
        %v8101 = vsel %vm1906, %v8098, %v8100
        %v8102 = vrot.slane %v7514, 3
        %v8103 = vsel %vm1906, %v8100, %v8102
        %v8104 = vrot.slane %v7327, 3
        %v8105 = vrot.slane %v7397, 3
        %v8106 = vsel %vm1906, %v8104, %v8105
        %v8107 = vrot.slane %v7516, 3
        %v8108 = vsel %vm1906, %v8105, %v8107
        %v8109 = vrot.slane %v7518, 3
        %v8110 = vsel %vm1906, %v8107, %v8109
        %v8111 = vrot.slane %v7328, 3
        %v8112 = vrot.slane %v7398, 3
        %v8113 = vsel %vm1906, %v8111, %v8112
        %v8114 = vrot.slane %v7520, 3
        %v8115 = vsel %vm1906, %v8112, %v8114
        %v8116 = vrot.slane %v7522, 3
        %v8117 = vsel %vm1906, %v8114, %v8116
        %v8118 = vrot.slane %v7329, 3
        %v8119 = vrot.slane %v7399, 3
        %v8120 = vsel %vm1906, %v8118, %v8119
        %v8121 = vrot.slane %v7524, 3
        %v8122 = vsel %vm1906, %v8119, %v8121
        %v8123 = vrot.slane %v7526, 3
        %v8124 = vsel %vm1906, %v8121, %v8123
        %v8125 = vrot.slane %v7330, 3
        %v8126 = vrot.slane %v7400, 3
        %v8127 = vsel %vm1906, %v8125, %v8126
        %v8128 = vrot.slane %v7528, 3
        %v8129 = vsel %vm1906, %v8126, %v8128
        %v8130 = vrot.slane %v7530, 3
        %v8131 = vsel %vm1906, %v8128, %v8130
        %v8132 = vrot.slane %v7331, 3
        %v8133 = vrot.slane %v7401, 3
        %v8134 = vsel %vm1906, %v8132, %v8133
        %v8135 = vrot.slane %v7532, 3
        %v8136 = vsel %vm1906, %v8133, %v8135
        %v8137 = vrot.slane %v7534, 3
        %v8138 = vsel %vm1906, %v8135, %v8137
        %v8139 = vrot.slane %v7332, 3
        %v8140 = vrot.slane %v7402, 3
        %v8141 = vsel %vm1906, %v8139, %v8140
        %v8142 = vrot.slane %v7536, 3
        %v8143 = vsel %vm1906, %v8140, %v8142
        %v8144 = vrot.slane %v7538, 3
        %v8145 = vsel %vm1906, %v8142, %v8144
        %v8146 = vrot.slane %v7333, 3
        %v8147 = vrot.slane %v7403, 3
        %v8148 = vsel %vm1906, %v8146, %v8147
        %v8149 = vrot.slane %v7540, 3
        %v8150 = vsel %vm1906, %v8147, %v8149
        %v8151 = vrot.slane %v7542, 3
        %v8152 = vsel %vm1906, %v8149, %v8151
        %v8183 = vsel %vm1791, %v5245, %v7563
        %v8184 = vsel %vm1791, %v5249, %v7570
        %v8185 = vsel %vm1791, %v5253, %v7577
        %v8186 = vsel %vm1791, %v5257, %v7584
        %v8187 = vsel %vm1791, %v5261, %v7591
        %v8188 = vsel %vm1791, %v5265, %v7598
        %v8189 = vsel %vm1791, %v5269, %v7605
        %v8190 = vsel %vm1791, %v5273, %v7612
        %v8191 = vsel %vm1791, %v5277, %v7619
        %v8192 = vsel %vm1791, %v5281, %v7626
        %v8193 = vsel %vm472, %v7569, %v7693
        %v8194 = vsel %vm472, %v7576, %v7700
        %v8195 = vsel %vm472, %v7583, %v7707
        %v8196 = vsel %vm472, %v7590, %v7714
        %v8197 = vsel %vm472, %v7597, %v7721
        %v8198 = vsel %vm472, %v7604, %v7728
        %v8199 = vsel %vm472, %v7611, %v7735
        %v8200 = vsel %vm472, %v7618, %v7742
        %v8201 = vsel %vm472, %v7625, %v7749
        %v8202 = vsel %vm472, %v7632, %v7756
        %v8203 = vsel %vm1848, %v7699, %v7823
        %v8204 = vsel %vm1848, %v7706, %v7830
        %v8205 = vsel %vm1848, %v7713, %v7837
        %v8206 = vsel %vm1848, %v7720, %v7844
        %v8207 = vsel %vm1848, %v7727, %v7851
        %v8208 = vsel %vm1848, %v7734, %v7858
        %v8209 = vsel %vm1848, %v7741, %v7865
        %v8210 = vsel %vm1848, %v7748, %v7872
        %v8211 = vsel %vm1848, %v7755, %v7879
        %v8212 = vsel %vm1848, %v7762, %v7886
        %v8213 = vsel %vm1877, %v7829, %v7953
        %v8214 = vsel %vm1877, %v7836, %v7960
        %v8215 = vsel %vm1877, %v7843, %v7967
        %v8216 = vsel %vm1877, %v7850, %v7974
        %v8217 = vsel %vm1877, %v7857, %v7981
        %v8218 = vsel %vm1877, %v7864, %v7988
        %v8219 = vsel %vm1877, %v7871, %v7995
        %v8220 = vsel %vm1877, %v7878, %v8002
        %v8221 = vsel %vm1877, %v7885, %v8009
        %v8222 = vsel %vm1877, %v7892, %v8016
        %v8223 = vsel %vm1906, %v7959, %v8083
        %v8224 = vsel %vm1906, %v7966, %v8090
        %v8225 = vsel %vm1906, %v7973, %v8097
        %v8226 = vsel %vm1906, %v7980, %v8104
        %v8227 = vsel %vm1906, %v7987, %v8111
        %v8228 = vsel %vm1906, %v7994, %v8118
        %v8229 = vsel %vm1906, %v8001, %v8125
        %v8230 = vsel %vm1906, %v8008, %v8132
        %v8231 = vsel %vm1906, %v8015, %v8139
        %v8232 = vsel %vm1906, %v8022, %v8146
        %v8233 = vld [vmem:[%s3] sm:$0xff]
        %v8234 = vld [vmem:[%s3 + $0x8] sm:$0xff]
        %v8235 = vld [vmem:[%s3 + $0x10] sm:$0xff]
        %v8236 = vld [vmem:[%s3 + $0x18] sm:$0xff]
        %v8237 = vld [vmem:[%s4] sm:$0xff]
        %v8238 = vld [vmem:[%s4 + $0x8] sm:$0xff]
        %8240 = vset.pattern.permute.xlu0 0
        %8241 = vperm.xlu0 %8240, %v8237
        %v8242 = vpop.permute.xlu0 %8241
        %8245 = vset.pattern.permute.xlu0 0
        %8246 = vperm.xlu0 %8245, %v8238
        %v8247 = vpop.permute.xlu0 %8246
        %vm8249 = vcmask 179200
        %v8251 = vsel %vm8249, %v8234, 0
        %v8254 = vsel %vm8249, %v8236, 0
        %v8256 = vsel %vm485, %v8089, 0
        %8258 = vmatpush.msra.mxu0 %v8223
        %8259 = vmatpush.msra.mxu0 %v7957
        %8260 = vmatpush.msra.mxu0 %v7955
        %8261 = vmatpush.msra.mxu0 %v8213
        %8262 = vmatpush.msra.mxu0 %v7827
        %8263 = vmatpush.msra.mxu0 %v7825
        %8264 = vmatpush.msra.mxu0 %v8203
        %8265 = vmatpush.msra.mxu0 %v7697
        %8266 = vmatpush.msra.mxu0 %v7695
        %8267 = vmatpush.msra.mxu0 %v8193
        %8268 = vmatpush.msra.mxu0 %v7567
        %8269 = vmatpush.msra.mxu0 %v7565
        %8270 = vmatpush.msra.mxu0 %v8183
        %8271 = vmatpush.msra.mxu0 %v5243
        %8272 = vmatpush.msra.mxu0 %v5077
        %8273 = vmatpush.msra.mxu0 %v5007
        %8274 = vmatmul.f32.gmra.mxu0 %v8233
        %v8275 = vpop.f32.mrf.mxu0
        %v8276 = vadd.f32 %v8242, %v8275
        %8277 = vmatmul.f32.gmra.mxu0 %v8235
        %v8278 = vpop.f32.mrf.mxu0
        %v8279 = vadd.f32 %v8247, %v8278
        %8280 = vdwg.mxu0
        %8281 = vmatpush.msra.mxu0 0.0
        %8282 = vmatpush.msra.mxu0 0.0
        %8283 = vmatpush.msra.mxu0 0.0
        %8284 = vmatpush.msra.mxu0 0.0
        %8285 = vmatpush.msra.mxu0 0.0
        %8286 = vmatpush.msra.mxu0 0.0
        %8287 = vmatpush.msra.mxu0 0.0
        %8288 = vmatpush.msra.mxu0 0.0
        %8289 = vmatpush.msra.mxu0 0.0
        %8290 = vmatpush.msra.mxu0 0.0
        %8291 = vmatpush.msra.mxu0 0.0
        %8292 = vmatpush.msra.mxu0 0.0
        %8293 = vmatpush.msra.mxu0 0.0
        %8294 = vmatpush.msra.mxu0 %v8256
        %8295 = vmatpush.msra.mxu0 %v8087
        %8296 = vmatpush.msra.mxu0 %v8085
        %8297 = vmatmul.f32.gmra.mxu0 %v8251
        %v8298 = vpop.f32.mrf.mxu0
        %v8299 = vadd.f32 %v8276, %v8298
        %8300 = vmatmul.f32.gmra.mxu0 %v8254
        %v8301 = vpop.f32.mrf.mxu0
        %v8302 = vadd.f32 %v8279, %v8301
        %8303 = vdwg.mxu0
        %v8304 = vsel %vm485, %v8096, 0
        %8306 = vmatpush.msra.mxu0 %v8224
        %8307 = vmatpush.msra.mxu0 %v7964
        %8308 = vmatpush.msra.mxu0 %v7962
        %8309 = vmatpush.msra.mxu0 %v8214
        %8310 = vmatpush.msra.mxu0 %v7834
        %8311 = vmatpush.msra.mxu0 %v7832
        %8312 = vmatpush.msra.mxu0 %v8204
        %8313 = vmatpush.msra.mxu0 %v7704
        %8314 = vmatpush.msra.mxu0 %v7702
        %8315 = vmatpush.msra.mxu0 %v8194
        %8316 = vmatpush.msra.mxu0 %v7574
        %8317 = vmatpush.msra.mxu0 %v7572
        %8318 = vmatpush.msra.mxu0 %v8184
        %8319 = vmatpush.msra.mxu0 %v5247
        %8320 = vmatpush.msra.mxu0 %v5078
        %8321 = vmatpush.msra.mxu0 %v5008
        %8322 = vmatmul.f32.gmra.mxu0 %v8233
        %v8323 = vpop.f32.mrf.mxu0
        %v8324 = vadd.f32 %v8242, %v8323
        %8325 = vmatmul.f32.gmra.mxu0 %v8235
        %v8326 = vpop.f32.mrf.mxu0
        %v8327 = vadd.f32 %v8247, %v8326
        %8328 = vdwg.mxu0
        %8329 = vmatpush.msra.mxu0 0.0
        %8330 = vmatpush.msra.mxu0 0.0
        %8331 = vmatpush.msra.mxu0 0.0
        %8332 = vmatpush.msra.mxu0 0.0
        %8333 = vmatpush.msra.mxu0 0.0
        %8334 = vmatpush.msra.mxu0 0.0
        %8335 = vmatpush.msra.mxu0 0.0
        %8336 = vmatpush.msra.mxu0 0.0
        %8337 = vmatpush.msra.mxu0 0.0
        %8338 = vmatpush.msra.mxu0 0.0
        %8339 = vmatpush.msra.mxu0 0.0
        %8340 = vmatpush.msra.mxu0 0.0
        %8341 = vmatpush.msra.mxu0 0.0
        %8342 = vmatpush.msra.mxu0 %v8304
        %8343 = vmatpush.msra.mxu0 %v8094
        %8344 = vmatpush.msra.mxu0 %v8092
        %8345 = vmatmul.f32.gmra.mxu0 %v8251
        %v8346 = vpop.f32.mrf.mxu0
        %v8347 = vadd.f32 %v8324, %v8346
        %8348 = vmatmul.f32.gmra.mxu0 %v8254
        %v8349 = vpop.f32.mrf.mxu0
        %v8350 = vadd.f32 %v8327, %v8349
        %8351 = vdwg.mxu0
        %v8352 = vsel %vm485, %v8103, 0
        %8354 = vmatpush.msra.mxu0 %v8225
        %8355 = vmatpush.msra.mxu0 %v7971
        %8356 = vmatpush.msra.mxu0 %v7969
        %8357 = vmatpush.msra.mxu0 %v8215
        %8358 = vmatpush.msra.mxu0 %v7841
        %8359 = vmatpush.msra.mxu0 %v7839
        %8360 = vmatpush.msra.mxu0 %v8205
        %8361 = vmatpush.msra.mxu0 %v7711
        %8362 = vmatpush.msra.mxu0 %v7709
        %8363 = vmatpush.msra.mxu0 %v8195
        %8364 = vmatpush.msra.mxu0 %v7581
        %8365 = vmatpush.msra.mxu0 %v7579
        %8366 = vmatpush.msra.mxu0 %v8185
        %8367 = vmatpush.msra.mxu0 %v5251
        %8368 = vmatpush.msra.mxu0 %v5079
        %8369 = vmatpush.msra.mxu0 %v5009
        %8370 = vmatmul.f32.gmra.mxu0 %v8233
        %v8371 = vpop.f32.mrf.mxu0
        %v8372 = vadd.f32 %v8242, %v8371
        %8373 = vmatmul.f32.gmra.mxu0 %v8235
        %v8374 = vpop.f32.mrf.mxu0
        %v8375 = vadd.f32 %v8247, %v8374
        %8376 = vdwg.mxu0
        %8377 = vmatpush.msra.mxu0 0.0
        %8378 = vmatpush.msra.mxu0 0.0
        %8379 = vmatpush.msra.mxu0 0.0
        %8380 = vmatpush.msra.mxu0 0.0
        %8381 = vmatpush.msra.mxu0 0.0
        %8382 = vmatpush.msra.mxu0 0.0
        %8383 = vmatpush.msra.mxu0 0.0
        %8384 = vmatpush.msra.mxu0 0.0
        %8385 = vmatpush.msra.mxu0 0.0
        %8386 = vmatpush.msra.mxu0 0.0
        %8387 = vmatpush.msra.mxu0 0.0
        %8388 = vmatpush.msra.mxu0 0.0
        %8389 = vmatpush.msra.mxu0 0.0
        %8390 = vmatpush.msra.mxu0 %v8352
        %8391 = vmatpush.msra.mxu0 %v8101
        %8392 = vmatpush.msra.mxu0 %v8099
        %8393 = vmatmul.f32.gmra.mxu0 %v8251
        %v8394 = vpop.f32.mrf.mxu0
        %v8395 = vadd.f32 %v8372, %v8394
        %8396 = vmatmul.f32.gmra.mxu0 %v8254
        %v8397 = vpop.f32.mrf.mxu0
        %v8398 = vadd.f32 %v8375, %v8397
        %8399 = vdwg.mxu0
        %v8400 = vsel %vm485, %v8110, 0
        %8402 = vmatpush.msra.mxu0 %v8226
        %8403 = vmatpush.msra.mxu0 %v7978
        %8404 = vmatpush.msra.mxu0 %v7976
        %8405 = vmatpush.msra.mxu0 %v8216
        %8406 = vmatpush.msra.mxu0 %v7848
        %8407 = vmatpush.msra.mxu0 %v7846
        %8408 = vmatpush.msra.mxu0 %v8206
        %8409 = vmatpush.msra.mxu0 %v7718
        %8410 = vmatpush.msra.mxu0 %v7716
        %8411 = vmatpush.msra.mxu0 %v8196
        %8412 = vmatpush.msra.mxu0 %v7588
        %8413 = vmatpush.msra.mxu0 %v7586
        %8414 = vmatpush.msra.mxu0 %v8186
        %8415 = vmatpush.msra.mxu0 %v5255
        %8416 = vmatpush.msra.mxu0 %v5080
        %8417 = vmatpush.msra.mxu0 %v5010
        %8418 = vmatmul.f32.gmra.mxu0 %v8233
        %v8419 = vpop.f32.mrf.mxu0
        %v8420 = vadd.f32 %v8242, %v8419
        %8421 = vmatmul.f32.gmra.mxu0 %v8235
        %v8422 = vpop.f32.mrf.mxu0
        %v8423 = vadd.f32 %v8247, %v8422
        %8424 = vdwg.mxu0
        %8425 = vmatpush.msra.mxu0 0.0
        %8426 = vmatpush.msra.mxu0 0.0
        %8427 = vmatpush.msra.mxu0 0.0
        %8428 = vmatpush.msra.mxu0 0.0
        %8429 = vmatpush.msra.mxu0 0.0
        %8430 = vmatpush.msra.mxu0 0.0
        %8431 = vmatpush.msra.mxu0 0.0
        %8432 = vmatpush.msra.mxu0 0.0
        %8433 = vmatpush.msra.mxu0 0.0
        %8434 = vmatpush.msra.mxu0 0.0
        %8435 = vmatpush.msra.mxu0 0.0
        %8436 = vmatpush.msra.mxu0 0.0
        %8437 = vmatpush.msra.mxu0 0.0
        %8438 = vmatpush.msra.mxu0 %v8400
        %8439 = vmatpush.msra.mxu0 %v8108
        %8440 = vmatpush.msra.mxu0 %v8106
        %8441 = vmatmul.f32.gmra.mxu0 %v8251
        %v8442 = vpop.f32.mrf.mxu0
        %v8443 = vadd.f32 %v8420, %v8442
        %8444 = vmatmul.f32.gmra.mxu0 %v8254
        %v8445 = vpop.f32.mrf.mxu0
        %v8446 = vadd.f32 %v8423, %v8445
        %8447 = vdwg.mxu0
        %v8448 = vsel %vm485, %v8117, 0
        %8450 = vmatpush.msra.mxu0 %v8227
        %8451 = vmatpush.msra.mxu0 %v7985
        %8452 = vmatpush.msra.mxu0 %v7983
        %8453 = vmatpush.msra.mxu0 %v8217
        %8454 = vmatpush.msra.mxu0 %v7855
        %8455 = vmatpush.msra.mxu0 %v7853
        %8456 = vmatpush.msra.mxu0 %v8207
        %8457 = vmatpush.msra.mxu0 %v7725
        %8458 = vmatpush.msra.mxu0 %v7723
        %8459 = vmatpush.msra.mxu0 %v8197
        %8460 = vmatpush.msra.mxu0 %v7595
        %8461 = vmatpush.msra.mxu0 %v7593
        %8462 = vmatpush.msra.mxu0 %v8187
        %8463 = vmatpush.msra.mxu0 %v5259
        %8464 = vmatpush.msra.mxu0 %v5081
        %8465 = vmatpush.msra.mxu0 %v5011
        %8466 = vmatmul.f32.gmra.mxu0 %v8233
        %v8467 = vpop.f32.mrf.mxu0
        %v8468 = vadd.f32 %v8242, %v8467
        %8469 = vmatmul.f32.gmra.mxu0 %v8235
        %v8470 = vpop.f32.mrf.mxu0
        %v8471 = vadd.f32 %v8247, %v8470
        %8472 = vdwg.mxu0
        %8473 = vmatpush.msra.mxu0 0.0
        %8474 = vmatpush.msra.mxu0 0.0
        %8475 = vmatpush.msra.mxu0 0.0
        %8476 = vmatpush.msra.mxu0 0.0
        %8477 = vmatpush.msra.mxu0 0.0
        %8478 = vmatpush.msra.mxu0 0.0
        %8479 = vmatpush.msra.mxu0 0.0
        %8480 = vmatpush.msra.mxu0 0.0
        %8481 = vmatpush.msra.mxu0 0.0
        %8482 = vmatpush.msra.mxu0 0.0
        %8483 = vmatpush.msra.mxu0 0.0
        %8484 = vmatpush.msra.mxu0 0.0
        %8485 = vmatpush.msra.mxu0 0.0
        %8486 = vmatpush.msra.mxu0 %v8448
        %8487 = vmatpush.msra.mxu0 %v8115
        %8488 = vmatpush.msra.mxu0 %v8113
        %8489 = vmatmul.f32.gmra.mxu0 %v8251
        %v8490 = vpop.f32.mrf.mxu0
        %v8491 = vadd.f32 %v8468, %v8490
        %8492 = vmatmul.f32.gmra.mxu0 %v8254
        %v8493 = vpop.f32.mrf.mxu0
        %v8494 = vadd.f32 %v8471, %v8493
        %8495 = vdwg.mxu0
        %v8496 = vsel %vm485, %v8124, 0
        %8498 = vmatpush.msra.mxu0 %v8228
        %8499 = vmatpush.msra.mxu0 %v7992
        %8500 = vmatpush.msra.mxu0 %v7990
        %8501 = vmatpush.msra.mxu0 %v8218
        %8502 = vmatpush.msra.mxu0 %v7862
        %8503 = vmatpush.msra.mxu0 %v7860
        %8504 = vmatpush.msra.mxu0 %v8208
        %8505 = vmatpush.msra.mxu0 %v7732
        %8506 = vmatpush.msra.mxu0 %v7730
        %8507 = vmatpush.msra.mxu0 %v8198
        %8508 = vmatpush.msra.mxu0 %v7602
        %8509 = vmatpush.msra.mxu0 %v7600
        %8510 = vmatpush.msra.mxu0 %v8188
        %8511 = vmatpush.msra.mxu0 %v5263
        %8512 = vmatpush.msra.mxu0 %v5082
        %8513 = vmatpush.msra.mxu0 %v5012
        %8514 = vmatmul.f32.gmra.mxu0 %v8233
        %v8515 = vpop.f32.mrf.mxu0
        %v8516 = vadd.f32 %v8242, %v8515
        %8517 = vmatmul.f32.gmra.mxu0 %v8235
        %v8518 = vpop.f32.mrf.mxu0
        %v8519 = vadd.f32 %v8247, %v8518
        %8520 = vdwg.mxu0
        %8521 = vmatpush.msra.mxu0 0.0
        %8522 = vmatpush.msra.mxu0 0.0
        %8523 = vmatpush.msra.mxu0 0.0
        %8524 = vmatpush.msra.mxu0 0.0
        %8525 = vmatpush.msra.mxu0 0.0
        %8526 = vmatpush.msra.mxu0 0.0
        %8527 = vmatpush.msra.mxu0 0.0
        %8528 = vmatpush.msra.mxu0 0.0
        %8529 = vmatpush.msra.mxu0 0.0
        %8530 = vmatpush.msra.mxu0 0.0
        %8531 = vmatpush.msra.mxu0 0.0
        %8532 = vmatpush.msra.mxu0 0.0
        %8533 = vmatpush.msra.mxu0 0.0
        %8534 = vmatpush.msra.mxu0 %v8496
        %8535 = vmatpush.msra.mxu0 %v8122
        %8536 = vmatpush.msra.mxu0 %v8120
        %8537 = vmatmul.f32.gmra.mxu0 %v8251
        %v8538 = vpop.f32.mrf.mxu0
        %v8539 = vadd.f32 %v8516, %v8538
        %8540 = vmatmul.f32.gmra.mxu0 %v8254
        %v8541 = vpop.f32.mrf.mxu0
        %v8542 = vadd.f32 %v8519, %v8541
        %8543 = vdwg.mxu0
        %v8544 = vsel %vm485, %v8131, 0
        %8546 = vmatpush.msra.mxu0 %v8229
        %8547 = vmatpush.msra.mxu0 %v7999
        %8548 = vmatpush.msra.mxu0 %v7997
        %8549 = vmatpush.msra.mxu0 %v8219
        %8550 = vmatpush.msra.mxu0 %v7869
        %8551 = vmatpush.msra.mxu0 %v7867
        %8552 = vmatpush.msra.mxu0 %v8209
        %8553 = vmatpush.msra.mxu0 %v7739
        %8554 = vmatpush.msra.mxu0 %v7737
        %8555 = vmatpush.msra.mxu0 %v8199
        %8556 = vmatpush.msra.mxu0 %v7609
        %8557 = vmatpush.msra.mxu0 %v7607
        %8558 = vmatpush.msra.mxu0 %v8189
        %8559 = vmatpush.msra.mxu0 %v5267
        %8560 = vmatpush.msra.mxu0 %v5083
        %8561 = vmatpush.msra.mxu0 %v5013
        %8562 = vmatmul.f32.gmra.mxu0 %v8233
        %v8563 = vpop.f32.mrf.mxu0
        %v8564 = vadd.f32 %v8242, %v8563
        %8565 = vmatmul.f32.gmra.mxu0 %v8235
        %v8566 = vpop.f32.mrf.mxu0
        %v8567 = vadd.f32 %v8247, %v8566
        %8568 = vdwg.mxu0
        %8569 = vmatpush.msra.mxu0 0.0
        %8570 = vmatpush.msra.mxu0 0.0
        %8571 = vmatpush.msra.mxu0 0.0
        %8572 = vmatpush.msra.mxu0 0.0
        %8573 = vmatpush.msra.mxu0 0.0
        %8574 = vmatpush.msra.mxu0 0.0
        %8575 = vmatpush.msra.mxu0 0.0
        %8576 = vmatpush.msra.mxu0 0.0
        %8577 = vmatpush.msra.mxu0 0.0
        %8578 = vmatpush.msra.mxu0 0.0
        %8579 = vmatpush.msra.mxu0 0.0
        %8580 = vmatpush.msra.mxu0 0.0
        %8581 = vmatpush.msra.mxu0 0.0
        %8582 = vmatpush.msra.mxu0 %v8544
        %8583 = vmatpush.msra.mxu0 %v8129
        %8584 = vmatpush.msra.mxu0 %v8127
        %8585 = vmatmul.f32.gmra.mxu0 %v8251
        %v8586 = vpop.f32.mrf.mxu0
        %v8587 = vadd.f32 %v8564, %v8586
        %8588 = vmatmul.f32.gmra.mxu0 %v8254
        %v8589 = vpop.f32.mrf.mxu0
        %v8590 = vadd.f32 %v8567, %v8589
        %8591 = vdwg.mxu0
        %v8592 = vsel %vm485, %v8138, 0
        %8594 = vmatpush.msra.mxu0 %v8230
        %8595 = vmatpush.msra.mxu0 %v8006
        %8596 = vmatpush.msra.mxu0 %v8004
        %8597 = vmatpush.msra.mxu0 %v8220
        %8598 = vmatpush.msra.mxu0 %v7876
        %8599 = vmatpush.msra.mxu0 %v7874
        %8600 = vmatpush.msra.mxu0 %v8210
        %8601 = vmatpush.msra.mxu0 %v7746
        %8602 = vmatpush.msra.mxu0 %v7744
        %8603 = vmatpush.msra.mxu0 %v8200
        %8604 = vmatpush.msra.mxu0 %v7616
        %8605 = vmatpush.msra.mxu0 %v7614
        %8606 = vmatpush.msra.mxu0 %v8190
        %8607 = vmatpush.msra.mxu0 %v5271
        %8608 = vmatpush.msra.mxu0 %v5084
        %8609 = vmatpush.msra.mxu0 %v5014
        %8610 = vmatmul.f32.gmra.mxu0 %v8233
        %v8611 = vpop.f32.mrf.mxu0
        %v8612 = vadd.f32 %v8242, %v8611
        %8613 = vmatmul.f32.gmra.mxu0 %v8235
        %v8614 = vpop.f32.mrf.mxu0
        %v8615 = vadd.f32 %v8247, %v8614
        %8616 = vdwg.mxu0
        %8617 = vmatpush.msra.mxu0 0.0
        %8618 = vmatpush.msra.mxu0 0.0
        %8619 = vmatpush.msra.mxu0 0.0
        %8620 = vmatpush.msra.mxu0 0.0
        %8621 = vmatpush.msra.mxu0 0.0
        %8622 = vmatpush.msra.mxu0 0.0
        %8623 = vmatpush.msra.mxu0 0.0
        %8624 = vmatpush.msra.mxu0 0.0
        %8625 = vmatpush.msra.mxu0 0.0
        %8626 = vmatpush.msra.mxu0 0.0
        %8627 = vmatpush.msra.mxu0 0.0
        %8628 = vmatpush.msra.mxu0 0.0
        %8629 = vmatpush.msra.mxu0 0.0
        %8630 = vmatpush.msra.mxu0 %v8592
        %8631 = vmatpush.msra.mxu0 %v8136
        %8632 = vmatpush.msra.mxu0 %v8134
        %8633 = vmatmul.f32.gmra.mxu0 %v8251
        %v8634 = vpop.f32.mrf.mxu0
        %v8635 = vadd.f32 %v8612, %v8634
        %8636 = vmatmul.f32.gmra.mxu0 %v8254
        %v8637 = vpop.f32.mrf.mxu0
        %v8638 = vadd.f32 %v8615, %v8637
        %8639 = vdwg.mxu0
        %v8640 = vsel %vm485, %v8145, 0
        %8642 = vmatpush.msra.mxu0 %v8231
        %8643 = vmatpush.msra.mxu0 %v8013
        %8644 = vmatpush.msra.mxu0 %v8011
        %8645 = vmatpush.msra.mxu0 %v8221
        %8646 = vmatpush.msra.mxu0 %v7883
        %8647 = vmatpush.msra.mxu0 %v7881
        %8648 = vmatpush.msra.mxu0 %v8211
        %8649 = vmatpush.msra.mxu0 %v7753
        %8650 = vmatpush.msra.mxu0 %v7751
        %8651 = vmatpush.msra.mxu0 %v8201
        %8652 = vmatpush.msra.mxu0 %v7623
        %8653 = vmatpush.msra.mxu0 %v7621
        %8654 = vmatpush.msra.mxu0 %v8191
        %8655 = vmatpush.msra.mxu0 %v5275
        %8656 = vmatpush.msra.mxu0 %v5085
        %8657 = vmatpush.msra.mxu0 %v5015
        %8658 = vmatmul.f32.gmra.mxu0 %v8233
        %v8659 = vpop.f32.mrf.mxu0
        %v8660 = vadd.f32 %v8242, %v8659
        %8661 = vmatmul.f32.gmra.mxu0 %v8235
        %v8662 = vpop.f32.mrf.mxu0
        %v8663 = vadd.f32 %v8247, %v8662
        %8664 = vdwg.mxu0
        %8665 = vmatpush.msra.mxu0 0.0
        %8666 = vmatpush.msra.mxu0 0.0
        %8667 = vmatpush.msra.mxu0 0.0
        %8668 = vmatpush.msra.mxu0 0.0
        %8669 = vmatpush.msra.mxu0 0.0
        %8670 = vmatpush.msra.mxu0 0.0
        %8671 = vmatpush.msra.mxu0 0.0
        %8672 = vmatpush.msra.mxu0 0.0
        %8673 = vmatpush.msra.mxu0 0.0
        %8674 = vmatpush.msra.mxu0 0.0
        %8675 = vmatpush.msra.mxu0 0.0
        %8676 = vmatpush.msra.mxu0 0.0
        %8677 = vmatpush.msra.mxu0 0.0
        %8678 = vmatpush.msra.mxu0 %v8640
        %8679 = vmatpush.msra.mxu0 %v8143
        %8680 = vmatpush.msra.mxu0 %v8141
        %8681 = vmatmul.f32.gmra.mxu0 %v8251
        %v8682 = vpop.f32.mrf.mxu0
        %v8683 = vadd.f32 %v8660, %v8682
        %8684 = vmatmul.f32.gmra.mxu0 %v8254
        %v8685 = vpop.f32.mrf.mxu0
        %v8686 = vadd.f32 %v8663, %v8685
        %8687 = vdwg.mxu0
        %v8688 = vsel %vm485, %v8152, 0
        %8690 = vmatpush.msra.mxu0 %v8232
        %8691 = vmatpush.msra.mxu0 %v8020
        %8692 = vmatpush.msra.mxu0 %v8018
        %8693 = vmatpush.msra.mxu0 %v8222
        %8694 = vmatpush.msra.mxu0 %v7890
        %8695 = vmatpush.msra.mxu0 %v7888
        %8696 = vmatpush.msra.mxu0 %v8212
        %8697 = vmatpush.msra.mxu0 %v7760
        %8698 = vmatpush.msra.mxu0 %v7758
        %8699 = vmatpush.msra.mxu0 %v8202
        %8700 = vmatpush.msra.mxu0 %v7630
        %8701 = vmatpush.msra.mxu0 %v7628
        %8702 = vmatpush.msra.mxu0 %v8192
        %8703 = vmatpush.msra.mxu0 %v5279
        %8704 = vmatpush.msra.mxu0 %v5086
        %8705 = vmatpush.msra.mxu0 %v5016
        %8706 = vmatmul.f32.gmra.mxu0 %v8233
        %v8707 = vpop.f32.mrf.mxu0
        %v8708 = vadd.f32 %v8242, %v8707
        %8709 = vmatmul.f32.gmra.mxu0 %v8235
        %v8710 = vpop.f32.mrf.mxu0
        %v8711 = vadd.f32 %v8247, %v8710
        %8712 = vdwg.mxu0
        %8713 = vmatpush.msra.mxu0 0.0
        %8714 = vmatpush.msra.mxu0 0.0
        %8715 = vmatpush.msra.mxu0 0.0
        %8716 = vmatpush.msra.mxu0 0.0
        %8717 = vmatpush.msra.mxu0 0.0
        %8718 = vmatpush.msra.mxu0 0.0
        %8719 = vmatpush.msra.mxu0 0.0
        %8720 = vmatpush.msra.mxu0 0.0
        %8721 = vmatpush.msra.mxu0 0.0
        %8722 = vmatpush.msra.mxu0 0.0
        %8723 = vmatpush.msra.mxu0 0.0
        %8724 = vmatpush.msra.mxu0 0.0
        %8725 = vmatpush.msra.mxu0 0.0
        %8726 = vmatpush.msra.mxu0 %v8688
        %8727 = vmatpush.msra.mxu0 %v8150
        %8728 = vmatpush.msra.mxu0 %v8148
        %8729 = vmatmul.f32.gmra.mxu0 %v8251
        %v8730 = vpop.f32.mrf.mxu0
        %v8731 = vadd.f32 %v8708, %v8730
        %8732 = vmatmul.f32.gmra.mxu0 %v8254
        %v8733 = vpop.f32.mrf.mxu0
        %v8734 = vadd.f32 %v8711, %v8733
        %8735 = vdwg.mxu0
        %v8736 = vxor.u32 %v8299, 2147483648
        %v8737 = vxor.u32 %v8302, 2147483648
        %v8738 = vxor.u32 %v8347, 2147483648
        %v8739 = vxor.u32 %v8350, 2147483648
        %v8740 = vxor.u32 %v8395, 2147483648
        %v8741 = vxor.u32 %v8398, 2147483648
        %v8742 = vxor.u32 %v8443, 2147483648
        %v8743 = vxor.u32 %v8446, 2147483648
        %v8744 = vxor.u32 %v8491, 2147483648
        %v8745 = vxor.u32 %v8494, 2147483648
        %v8746 = vxor.u32 %v8539, 2147483648
        %v8747 = vxor.u32 %v8542, 2147483648
        %v8748 = vxor.u32 %v8587, 2147483648
        %v8749 = vxor.u32 %v8590, 2147483648
        %v8750 = vxor.u32 %v8635, 2147483648
        %v8751 = vxor.u32 %v8638, 2147483648
        %v8752 = vxor.u32 %v8683, 2147483648
        %v8753 = vxor.u32 %v8686, 2147483648
        %v8754 = vxor.u32 %v8731, 2147483648
        %v8755 = vxor.u32 %v8734, 2147483648
        %v8756 = vmul.f32 %v8736, 1.442695
        %v8757 = vpow.pop %v8756
        %v8758 = vmul.f32 %v8737, 1.442695
        %v8759 = vpow.pop %v8758
        %v8760 = vmul.f32 %v8738, 1.442695
        %v8761 = vpow.pop %v8760
        %v8762 = vmul.f32 %v8739, 1.442695
        %v8763 = vpow.pop %v8762
        %v8764 = vmul.f32 %v8740, 1.442695
        %v8765 = vpow.pop %v8764
        %v8766 = vmul.f32 %v8741, 1.442695
        %v8767 = vpow.pop %v8766
        %v8768 = vmul.f32 %v8742, 1.442695
        %v8769 = vpow.pop %v8768
        %v8770 = vmul.f32 %v8743, 1.442695
        %v8771 = vpow.pop %v8770
        %v8772 = vmul.f32 %v8744, 1.442695
        %v8773 = vpow.pop %v8772
        %v8774 = vmul.f32 %v8745, 1.442695
        %v8775 = vpow.pop %v8774
        %v8776 = vmul.f32 %v8746, 1.442695
        %v8777 = vpow.pop %v8776
        %v8778 = vmul.f32 %v8747, 1.442695
        %v8779 = vpow.pop %v8778
        %v8780 = vmul.f32 %v8748, 1.442695
        %v8781 = vpow.pop %v8780
        %v8782 = vmul.f32 %v8749, 1.442695
        %v8783 = vpow.pop %v8782
        %v8784 = vmul.f32 %v8750, 1.442695
        %v8785 = vpow.pop %v8784
        %v8786 = vmul.f32 %v8751, 1.442695
        %v8787 = vpow.pop %v8786
        %v8788 = vmul.f32 %v8752, 1.442695
        %v8789 = vpow.pop %v8788
        %v8790 = vmul.f32 %v8753, 1.442695
        %v8791 = vpow.pop %v8790
        %v8792 = vmul.f32 %v8754, 1.442695
        %v8793 = vpow.pop %v8792
        %v8794 = vmul.f32 %v8755, 1.442695
        %v8795 = vpow.pop %v8794
        %v8796 = vadd.f32 %v8757, 1.0
        %v8797 = vadd.f32 %v8759, 1.0
        %v8798 = vadd.f32 %v8761, 1.0
        %v8799 = vadd.f32 %v8763, 1.0
        %v8800 = vadd.f32 %v8765, 1.0
        %v8801 = vadd.f32 %v8767, 1.0
        %v8802 = vadd.f32 %v8769, 1.0
        %v8803 = vadd.f32 %v8771, 1.0
        %v8804 = vadd.f32 %v8773, 1.0
        %v8805 = vadd.f32 %v8775, 1.0
        %v8806 = vadd.f32 %v8777, 1.0
        %v8807 = vadd.f32 %v8779, 1.0
        %v8808 = vadd.f32 %v8781, 1.0
        %v8809 = vadd.f32 %v8783, 1.0
        %v8810 = vadd.f32 %v8785, 1.0
        %v8811 = vadd.f32 %v8787, 1.0
        %v8812 = vadd.f32 %v8789, 1.0
        %v8813 = vadd.f32 %v8791, 1.0
        %v8814 = vadd.f32 %v8793, 1.0
        %v8815 = vadd.f32 %v8795, 1.0
        %v8816 = vrcp.pop %v8796
        %v8817 = vmul.f32 %v8796, %v8816
        %v8818 = vsub.f32 1.0, %v8817
        %v8819 = vmul.f32 %v8816, %v8818
        %v8820 = vadd.f32 %v8816, %v8819
        %vm8821 = vweird.f32 %v8796
        %vm8822 = vweird.f32 %v8816
        %vm8823 = vmor %vm8821, %vm8822
        %v8824 = vsel %vm8823, %v8816, %v8820
        %v8825 = vand.u32 2147483647, %v8796
        %vm8826 = vcmp.eq.f32.partialorder %v8825, 8.507059e+37
        %v8827 = vand.u32 %v8796, 2147483648
        %v8828 = vor.u32 1.1754944e-38, %v8827
        %v8829 = vsel %vm8826, %v8828, %v8824
        %v8830 = vmul.f32 1.0, %v8829
        %v8831 = vrcp.pop %v8797
        %v8832 = vmul.f32 %v8797, %v8831
        %v8833 = vsub.f32 1.0, %v8832
        %v8834 = vmul.f32 %v8831, %v8833
        %v8835 = vadd.f32 %v8831, %v8834
        %vm8836 = vweird.f32 %v8797
        %vm8837 = vweird.f32 %v8831
        %vm8838 = vmor %vm8836, %vm8837
        %v8839 = vsel %vm8838, %v8831, %v8835
        %v8840 = vand.u32 2147483647, %v8797
        %vm8841 = vcmp.eq.f32.partialorder %v8840, 8.507059e+37
        %v8842 = vand.u32 %v8797, 2147483648
        %v8843 = vor.u32 1.1754944e-38, %v8842
        %v8844 = vsel %vm8841, %v8843, %v8839
        %v8845 = vmul.f32 1.0, %v8844
        %v8846 = vrcp.pop %v8798
        %v8847 = vmul.f32 %v8798, %v8846
        %v8848 = vsub.f32 1.0, %v8847
        %v8849 = vmul.f32 %v8846, %v8848
        %v8850 = vadd.f32 %v8846, %v8849
        %vm8851 = vweird.f32 %v8798
        %vm8852 = vweird.f32 %v8846
        %vm8853 = vmor %vm8851, %vm8852
        %v8854 = vsel %vm8853, %v8846, %v8850
        %v8855 = vand.u32 2147483647, %v8798
        %vm8856 = vcmp.eq.f32.partialorder %v8855, 8.507059e+37
        %v8857 = vand.u32 %v8798, 2147483648
        %v8858 = vor.u32 1.1754944e-38, %v8857
        %v8859 = vsel %vm8856, %v8858, %v8854
        %v8860 = vmul.f32 1.0, %v8859
        %v8861 = vrcp.pop %v8799
        %v8862 = vmul.f32 %v8799, %v8861
        %v8863 = vsub.f32 1.0, %v8862
        %v8864 = vmul.f32 %v8861, %v8863
        %v8865 = vadd.f32 %v8861, %v8864
        %vm8866 = vweird.f32 %v8799
        %vm8867 = vweird.f32 %v8861
        %vm8868 = vmor %vm8866, %vm8867
        %v8869 = vsel %vm8868, %v8861, %v8865
        %v8870 = vand.u32 2147483647, %v8799
        %vm8871 = vcmp.eq.f32.partialorder %v8870, 8.507059e+37
        %v8872 = vand.u32 %v8799, 2147483648
        %v8873 = vor.u32 1.1754944e-38, %v8872
        %v8874 = vsel %vm8871, %v8873, %v8869
        %v8875 = vmul.f32 1.0, %v8874
        %v8876 = vrcp.pop %v8800
        %v8877 = vmul.f32 %v8800, %v8876
        %v8878 = vsub.f32 1.0, %v8877
        %v8879 = vmul.f32 %v8876, %v8878
        %v8880 = vadd.f32 %v8876, %v8879
        %vm8881 = vweird.f32 %v8800
        %vm8882 = vweird.f32 %v8876
        %vm8883 = vmor %vm8881, %vm8882
        %v8884 = vsel %vm8883, %v8876, %v8880
        %v8885 = vand.u32 2147483647, %v8800
        %vm8886 = vcmp.eq.f32.partialorder %v8885, 8.507059e+37
        %v8887 = vand.u32 %v8800, 2147483648
        %v8888 = vor.u32 1.1754944e-38, %v8887
        %v8889 = vsel %vm8886, %v8888, %v8884
        %v8890 = vmul.f32 1.0, %v8889
        %v8891 = vrcp.pop %v8801
        %v8892 = vmul.f32 %v8801, %v8891
        %v8893 = vsub.f32 1.0, %v8892
        %v8894 = vmul.f32 %v8891, %v8893
        %v8895 = vadd.f32 %v8891, %v8894
        %vm8896 = vweird.f32 %v8801
        %vm8897 = vweird.f32 %v8891
        %vm8898 = vmor %vm8896, %vm8897
        %v8899 = vsel %vm8898, %v8891, %v8895
        %v8900 = vand.u32 2147483647, %v8801
        %vm8901 = vcmp.eq.f32.partialorder %v8900, 8.507059e+37
        %v8902 = vand.u32 %v8801, 2147483648
        %v8903 = vor.u32 1.1754944e-38, %v8902
        %v8904 = vsel %vm8901, %v8903, %v8899
        %v8905 = vmul.f32 1.0, %v8904
        %v8906 = vrcp.pop %v8802
        %v8907 = vmul.f32 %v8802, %v8906
        %v8908 = vsub.f32 1.0, %v8907
        %v8909 = vmul.f32 %v8906, %v8908
        %v8910 = vadd.f32 %v8906, %v8909
        %vm8911 = vweird.f32 %v8802
        %vm8912 = vweird.f32 %v8906
        %vm8913 = vmor %vm8911, %vm8912
        %v8914 = vsel %vm8913, %v8906, %v8910
        %v8915 = vand.u32 2147483647, %v8802
        %vm8916 = vcmp.eq.f32.partialorder %v8915, 8.507059e+37
        %v8917 = vand.u32 %v8802, 2147483648
        %v8918 = vor.u32 1.1754944e-38, %v8917
        %v8919 = vsel %vm8916, %v8918, %v8914
        %v8920 = vmul.f32 1.0, %v8919
        %v8921 = vrcp.pop %v8803
        %v8922 = vmul.f32 %v8803, %v8921
        %v8923 = vsub.f32 1.0, %v8922
        %v8924 = vmul.f32 %v8921, %v8923
        %v8925 = vadd.f32 %v8921, %v8924
        %vm8926 = vweird.f32 %v8803
        %vm8927 = vweird.f32 %v8921
        %vm8928 = vmor %vm8926, %vm8927
        %v8929 = vsel %vm8928, %v8921, %v8925
        %v8930 = vand.u32 2147483647, %v8803
        %vm8931 = vcmp.eq.f32.partialorder %v8930, 8.507059e+37
        %v8932 = vand.u32 %v8803, 2147483648
        %v8933 = vor.u32 1.1754944e-38, %v8932
        %v8934 = vsel %vm8931, %v8933, %v8929
        %v8935 = vmul.f32 1.0, %v8934
        %v8936 = vrcp.pop %v8804
        %v8937 = vmul.f32 %v8804, %v8936
        %v8938 = vsub.f32 1.0, %v8937
        %v8939 = vmul.f32 %v8936, %v8938
        %v8940 = vadd.f32 %v8936, %v8939
        %vm8941 = vweird.f32 %v8804
        %vm8942 = vweird.f32 %v8936
        %vm8943 = vmor %vm8941, %vm8942
        %v8944 = vsel %vm8943, %v8936, %v8940
        %v8945 = vand.u32 2147483647, %v8804
        %vm8946 = vcmp.eq.f32.partialorder %v8945, 8.507059e+37
        %v8947 = vand.u32 %v8804, 2147483648
        %v8948 = vor.u32 1.1754944e-38, %v8947
        %v8949 = vsel %vm8946, %v8948, %v8944
        %v8950 = vmul.f32 1.0, %v8949
        %v8951 = vrcp.pop %v8805
        %v8952 = vmul.f32 %v8805, %v8951
        %v8953 = vsub.f32 1.0, %v8952
        %v8954 = vmul.f32 %v8951, %v8953
        %v8955 = vadd.f32 %v8951, %v8954
        %vm8956 = vweird.f32 %v8805
        %vm8957 = vweird.f32 %v8951
        %vm8958 = vmor %vm8956, %vm8957
        %v8959 = vsel %vm8958, %v8951, %v8955
        %v8960 = vand.u32 2147483647, %v8805
        %vm8961 = vcmp.eq.f32.partialorder %v8960, 8.507059e+37
        %v8962 = vand.u32 %v8805, 2147483648
        %v8963 = vor.u32 1.1754944e-38, %v8962
        %v8964 = vsel %vm8961, %v8963, %v8959
        %v8965 = vmul.f32 1.0, %v8964
        %v8966 = vrcp.pop %v8806
        %v8967 = vmul.f32 %v8806, %v8966
        %v8968 = vsub.f32 1.0, %v8967
        %v8969 = vmul.f32 %v8966, %v8968
        %v8970 = vadd.f32 %v8966, %v8969
        %vm8971 = vweird.f32 %v8806
        %vm8972 = vweird.f32 %v8966
        %vm8973 = vmor %vm8971, %vm8972
        %v8974 = vsel %vm8973, %v8966, %v8970
        %v8975 = vand.u32 2147483647, %v8806
        %vm8976 = vcmp.eq.f32.partialorder %v8975, 8.507059e+37
        %v8977 = vand.u32 %v8806, 2147483648
        %v8978 = vor.u32 1.1754944e-38, %v8977
        %v8979 = vsel %vm8976, %v8978, %v8974
        %v8980 = vmul.f32 1.0, %v8979
        %v8981 = vrcp.pop %v8807
        %v8982 = vmul.f32 %v8807, %v8981
        %v8983 = vsub.f32 1.0, %v8982
        %v8984 = vmul.f32 %v8981, %v8983
        %v8985 = vadd.f32 %v8981, %v8984
        %vm8986 = vweird.f32 %v8807
        %vm8987 = vweird.f32 %v8981
        %vm8988 = vmor %vm8986, %vm8987
        %v8989 = vsel %vm8988, %v8981, %v8985
        %v8990 = vand.u32 2147483647, %v8807
        %vm8991 = vcmp.eq.f32.partialorder %v8990, 8.507059e+37
        %v8992 = vand.u32 %v8807, 2147483648
        %v8993 = vor.u32 1.1754944e-38, %v8992
        %v8994 = vsel %vm8991, %v8993, %v8989
        %v8995 = vmul.f32 1.0, %v8994
        %v8996 = vrcp.pop %v8808
        %v8997 = vmul.f32 %v8808, %v8996
        %v8998 = vsub.f32 1.0, %v8997
        %v8999 = vmul.f32 %v8996, %v8998
        %v9000 = vadd.f32 %v8996, %v8999
        %vm9001 = vweird.f32 %v8808
        %vm9002 = vweird.f32 %v8996
        %vm9003 = vmor %vm9001, %vm9002
        %v9004 = vsel %vm9003, %v8996, %v9000
        %v9005 = vand.u32 2147483647, %v8808
        %vm9006 = vcmp.eq.f32.partialorder %v9005, 8.507059e+37
        %v9007 = vand.u32 %v8808, 2147483648
        %v9008 = vor.u32 1.1754944e-38, %v9007
        %v9009 = vsel %vm9006, %v9008, %v9004
        %v9010 = vmul.f32 1.0, %v9009
        %v9011 = vrcp.pop %v8809
        %v9012 = vmul.f32 %v8809, %v9011
        %v9013 = vsub.f32 1.0, %v9012
        %v9014 = vmul.f32 %v9011, %v9013
        %v9015 = vadd.f32 %v9011, %v9014
        %vm9016 = vweird.f32 %v8809
        %vm9017 = vweird.f32 %v9011
        %vm9018 = vmor %vm9016, %vm9017
        %v9019 = vsel %vm9018, %v9011, %v9015
        %v9020 = vand.u32 2147483647, %v8809
        %vm9021 = vcmp.eq.f32.partialorder %v9020, 8.507059e+37
        %v9022 = vand.u32 %v8809, 2147483648
        %v9023 = vor.u32 1.1754944e-38, %v9022
        %v9024 = vsel %vm9021, %v9023, %v9019
        %v9025 = vmul.f32 1.0, %v9024
        %v9026 = vrcp.pop %v8810
        %v9027 = vmul.f32 %v8810, %v9026
        %v9028 = vsub.f32 1.0, %v9027
        %v9029 = vmul.f32 %v9026, %v9028
        %v9030 = vadd.f32 %v9026, %v9029
        %vm9031 = vweird.f32 %v8810
        %vm9032 = vweird.f32 %v9026
        %vm9033 = vmor %vm9031, %vm9032
        %v9034 = vsel %vm9033, %v9026, %v9030
        %v9035 = vand.u32 2147483647, %v8810
        %vm9036 = vcmp.eq.f32.partialorder %v9035, 8.507059e+37
        %v9037 = vand.u32 %v8810, 2147483648
        %v9038 = vor.u32 1.1754944e-38, %v9037
        %v9039 = vsel %vm9036, %v9038, %v9034
        %v9040 = vmul.f32 1.0, %v9039
        %v9041 = vrcp.pop %v8811
        %v9042 = vmul.f32 %v8811, %v9041
        %v9043 = vsub.f32 1.0, %v9042
        %v9044 = vmul.f32 %v9041, %v9043
        %v9045 = vadd.f32 %v9041, %v9044
        %vm9046 = vweird.f32 %v8811
        %vm9047 = vweird.f32 %v9041
        %vm9048 = vmor %vm9046, %vm9047
        %v9049 = vsel %vm9048, %v9041, %v9045
        %v9050 = vand.u32 2147483647, %v8811
        %vm9051 = vcmp.eq.f32.partialorder %v9050, 8.507059e+37
        %v9052 = vand.u32 %v8811, 2147483648
        %v9053 = vor.u32 1.1754944e-38, %v9052
        %v9054 = vsel %vm9051, %v9053, %v9049
        %v9055 = vmul.f32 1.0, %v9054
        %v9056 = vrcp.pop %v8812
        %v9057 = vmul.f32 %v8812, %v9056
        %v9058 = vsub.f32 1.0, %v9057
        %v9059 = vmul.f32 %v9056, %v9058
        %v9060 = vadd.f32 %v9056, %v9059
        %vm9061 = vweird.f32 %v8812
        %vm9062 = vweird.f32 %v9056
        %vm9063 = vmor %vm9061, %vm9062
        %v9064 = vsel %vm9063, %v9056, %v9060
        %v9065 = vand.u32 2147483647, %v8812
        %vm9066 = vcmp.eq.f32.partialorder %v9065, 8.507059e+37
        %v9067 = vand.u32 %v8812, 2147483648
        %v9068 = vor.u32 1.1754944e-38, %v9067
        %v9069 = vsel %vm9066, %v9068, %v9064
        %v9070 = vmul.f32 1.0, %v9069
        %v9071 = vrcp.pop %v8813
        %v9072 = vmul.f32 %v8813, %v9071
        %v9073 = vsub.f32 1.0, %v9072
        %v9074 = vmul.f32 %v9071, %v9073
        %v9075 = vadd.f32 %v9071, %v9074
        %vm9076 = vweird.f32 %v8813
        %vm9077 = vweird.f32 %v9071
        %vm9078 = vmor %vm9076, %vm9077
        %v9079 = vsel %vm9078, %v9071, %v9075
        %v9080 = vand.u32 2147483647, %v8813
        %vm9081 = vcmp.eq.f32.partialorder %v9080, 8.507059e+37
        %v9082 = vand.u32 %v8813, 2147483648
        %v9083 = vor.u32 1.1754944e-38, %v9082
        %v9084 = vsel %vm9081, %v9083, %v9079
        %v9085 = vmul.f32 1.0, %v9084
        %v9086 = vrcp.pop %v8814
        %v9087 = vmul.f32 %v8814, %v9086
        %v9088 = vsub.f32 1.0, %v9087
        %v9089 = vmul.f32 %v9086, %v9088
        %v9090 = vadd.f32 %v9086, %v9089
        %vm9091 = vweird.f32 %v8814
        %vm9092 = vweird.f32 %v9086
        %vm9093 = vmor %vm9091, %vm9092
        %v9094 = vsel %vm9093, %v9086, %v9090
        %v9095 = vand.u32 2147483647, %v8814
        %vm9096 = vcmp.eq.f32.partialorder %v9095, 8.507059e+37
        %v9097 = vand.u32 %v8814, 2147483648
        %v9098 = vor.u32 1.1754944e-38, %v9097
        %v9099 = vsel %vm9096, %v9098, %v9094
        %v9100 = vmul.f32 1.0, %v9099
        %v9101 = vrcp.pop %v8815
        %v9102 = vmul.f32 %v8815, %v9101
        %v9103 = vsub.f32 1.0, %v9102
        %v9104 = vmul.f32 %v9101, %v9103
        %v9105 = vadd.f32 %v9101, %v9104
        %vm9106 = vweird.f32 %v8815
        %vm9107 = vweird.f32 %v9101
        %vm9108 = vmor %vm9106, %vm9107
        %v9109 = vsel %vm9108, %v9101, %v9105
        %v9110 = vand.u32 2147483647, %v8815
        %vm9111 = vcmp.eq.f32.partialorder %v9110, 8.507059e+37
        %v9112 = vand.u32 %v8815, 2147483648
        %v9113 = vor.u32 1.1754944e-38, %v9112
        %v9114 = vsel %vm9111, %v9113, %v9109
        %v9115 = vmul.f32 1.0, %v9114
        %v9116 = vld [vmem:[%s12] sm:$0xff]
        %v9117 = vld [vmem:[%s12 + $0x8] sm:$0x3]
        %vm9118 = vcmask 80896
        %v9120 = vsel %vm9118, %v8830, 0
        %v9123 = vsel %vm9118, %v8845, 0
        %v9126 = vsel %vm472, %v9117, 0
        %9128 = vmatpush.msra.mxu0 0.0
        %9129 = vmatpush.msra.mxu0 0.0
        %9130 = vmatpush.msra.mxu0 0.0
        %9131 = vmatpush.msra.mxu0 0.0
        %9132 = vmatpush.msra.mxu0 0.0
        %9133 = vmatpush.msra.mxu0 0.0
        %9134 = vmatpush.msra.mxu0 0.0
        %9135 = vmatpush.msra.mxu0 0.0
        %9136 = vmatpush.msra.mxu0 0.0
        %9137 = vmatpush.msra.mxu0 0.0
        %9138 = vmatpush.msra.mxu0 0.0
        %9139 = vmatpush.msra.mxu0 0.0
        %9140 = vmatpush.msra.mxu0 0.0
        %9141 = vmatpush.msra.mxu0 0.0
        %9142 = vmatpush.msra.mxu0 %v9126
        %9143 = vmatpush.msra.mxu0 %v9116
        %9144 = vmatmul.f32.gmra.mxu0 %v9120
        %v9145 = vpop.f32.mrf.mxu0
        %v9146 = vadd.f32 0.0, %v9145
        %9147 = vmatmul.f32.gmra.mxu0 %v9123
        %v9148 = vpop.f32.mrf.mxu0
        %v9149 = vadd.f32 0.0, %v9148
        %9150 = vdwg.mxu0
        %v9152 = vsel %vm9118, %v8860, 0
        %v9155 = vsel %vm9118, %v8875, 0
        %9157 = vmatpush.msra.mxu0 0.0
        %9158 = vmatpush.msra.mxu0 0.0
        %9159 = vmatpush.msra.mxu0 0.0
        %9160 = vmatpush.msra.mxu0 0.0
        %9161 = vmatpush.msra.mxu0 0.0
        %9162 = vmatpush.msra.mxu0 0.0
        %9163 = vmatpush.msra.mxu0 0.0
        %9164 = vmatpush.msra.mxu0 0.0
        %9165 = vmatpush.msra.mxu0 0.0
        %9166 = vmatpush.msra.mxu0 0.0
        %9167 = vmatpush.msra.mxu0 0.0
        %9168 = vmatpush.msra.mxu0 0.0
        %9169 = vmatpush.msra.mxu0 0.0
        %9170 = vmatpush.msra.mxu0 0.0
        %9171 = vmatpush.msra.mxu0 %v9126
        %9172 = vmatpush.msra.mxu0 %v9116
        %9173 = vmatmul.f32.gmra.mxu0 %v9152
        %v9174 = vpop.f32.mrf.mxu0
        %v9175 = vadd.f32 0.0, %v9174
        %9176 = vmatmul.f32.gmra.mxu0 %v9155
        %v9177 = vpop.f32.mrf.mxu0
        %v9178 = vadd.f32 0.0, %v9177
        %9179 = vdwg.mxu0
        %v9181 = vsel %vm9118, %v8890, 0
        %v9184 = vsel %vm9118, %v8905, 0
        %9186 = vmatpush.msra.mxu0 0.0
        %9187 = vmatpush.msra.mxu0 0.0
        %9188 = vmatpush.msra.mxu0 0.0
        %9189 = vmatpush.msra.mxu0 0.0
        %9190 = vmatpush.msra.mxu0 0.0
        %9191 = vmatpush.msra.mxu0 0.0
        %9192 = vmatpush.msra.mxu0 0.0
        %9193 = vmatpush.msra.mxu0 0.0
        %9194 = vmatpush.msra.mxu0 0.0
        %9195 = vmatpush.msra.mxu0 0.0
        %9196 = vmatpush.msra.mxu0 0.0
        %9197 = vmatpush.msra.mxu0 0.0
        %9198 = vmatpush.msra.mxu0 0.0
        %9199 = vmatpush.msra.mxu0 0.0
        %9200 = vmatpush.msra.mxu0 %v9126
        %9201 = vmatpush.msra.mxu0 %v9116
        %9202 = vmatmul.f32.gmra.mxu0 %v9181
        %v9203 = vpop.f32.mrf.mxu0
        %v9204 = vadd.f32 0.0, %v9203
        %9205 = vmatmul.f32.gmra.mxu0 %v9184
        %v9206 = vpop.f32.mrf.mxu0
        %v9207 = vadd.f32 0.0, %v9206
        %9208 = vdwg.mxu0
        %v9210 = vsel %vm9118, %v8920, 0
        %v9213 = vsel %vm9118, %v8935, 0
        %9215 = vmatpush.msra.mxu0 0.0
        %9216 = vmatpush.msra.mxu0 0.0
        %9217 = vmatpush.msra.mxu0 0.0
        %9218 = vmatpush.msra.mxu0 0.0
        %9219 = vmatpush.msra.mxu0 0.0
        %9220 = vmatpush.msra.mxu0 0.0
        %9221 = vmatpush.msra.mxu0 0.0
        %9222 = vmatpush.msra.mxu0 0.0
        %9223 = vmatpush.msra.mxu0 0.0
        %9224 = vmatpush.msra.mxu0 0.0
        %9225 = vmatpush.msra.mxu0 0.0
        %9226 = vmatpush.msra.mxu0 0.0
        %9227 = vmatpush.msra.mxu0 0.0
        %9228 = vmatpush.msra.mxu0 0.0
        %9229 = vmatpush.msra.mxu0 %v9126
        %9230 = vmatpush.msra.mxu0 %v9116
        %9231 = vmatmul.f32.gmra.mxu0 %v9210
        %v9232 = vpop.f32.mrf.mxu0
        %v9233 = vadd.f32 0.0, %v9232
        %9234 = vmatmul.f32.gmra.mxu0 %v9213
        %v9235 = vpop.f32.mrf.mxu0
        %v9236 = vadd.f32 0.0, %v9235
        %9237 = vdwg.mxu0
        %v9239 = vsel %vm9118, %v8950, 0
        %v9242 = vsel %vm9118, %v8965, 0
        %9244 = vmatpush.msra.mxu0 0.0
        %9245 = vmatpush.msra.mxu0 0.0
        %9246 = vmatpush.msra.mxu0 0.0
        %9247 = vmatpush.msra.mxu0 0.0
        %9248 = vmatpush.msra.mxu0 0.0
        %9249 = vmatpush.msra.mxu0 0.0
        %9250 = vmatpush.msra.mxu0 0.0
        %9251 = vmatpush.msra.mxu0 0.0
        %9252 = vmatpush.msra.mxu0 0.0
        %9253 = vmatpush.msra.mxu0 0.0
        %9254 = vmatpush.msra.mxu0 0.0
        %9255 = vmatpush.msra.mxu0 0.0
        %9256 = vmatpush.msra.mxu0 0.0
        %9257 = vmatpush.msra.mxu0 0.0
        %9258 = vmatpush.msra.mxu0 %v9126
        %9259 = vmatpush.msra.mxu0 %v9116
        %9260 = vmatmul.f32.gmra.mxu0 %v9239
        %v9261 = vpop.f32.mrf.mxu0
        %v9262 = vadd.f32 0.0, %v9261
        %9263 = vmatmul.f32.gmra.mxu0 %v9242
        %v9264 = vpop.f32.mrf.mxu0
        %v9265 = vadd.f32 0.0, %v9264
        %9266 = vdwg.mxu0
        %v9268 = vsel %vm9118, %v8980, 0
        %v9271 = vsel %vm9118, %v8995, 0
        %9273 = vmatpush.msra.mxu0 0.0
        %9274 = vmatpush.msra.mxu0 0.0
        %9275 = vmatpush.msra.mxu0 0.0
        %9276 = vmatpush.msra.mxu0 0.0
        %9277 = vmatpush.msra.mxu0 0.0
        %9278 = vmatpush.msra.mxu0 0.0
        %9279 = vmatpush.msra.mxu0 0.0
        %9280 = vmatpush.msra.mxu0 0.0
        %9281 = vmatpush.msra.mxu0 0.0
        %9282 = vmatpush.msra.mxu0 0.0
        %9283 = vmatpush.msra.mxu0 0.0
        %9284 = vmatpush.msra.mxu0 0.0
        %9285 = vmatpush.msra.mxu0 0.0
        %9286 = vmatpush.msra.mxu0 0.0
        %9287 = vmatpush.msra.mxu0 %v9126
        %9288 = vmatpush.msra.mxu0 %v9116
        %9289 = vmatmul.f32.gmra.mxu0 %v9268
        %v9290 = vpop.f32.mrf.mxu0
        %v9291 = vadd.f32 0.0, %v9290
        %9292 = vmatmul.f32.gmra.mxu0 %v9271
        %v9293 = vpop.f32.mrf.mxu0
        %v9294 = vadd.f32 0.0, %v9293
        %9295 = vdwg.mxu0
        %v9297 = vsel %vm9118, %v9010, 0
        %v9300 = vsel %vm9118, %v9025, 0
        %9302 = vmatpush.msra.mxu0 0.0
        %9303 = vmatpush.msra.mxu0 0.0
        %9304 = vmatpush.msra.mxu0 0.0
        %9305 = vmatpush.msra.mxu0 0.0
        %9306 = vmatpush.msra.mxu0 0.0
        %9307 = vmatpush.msra.mxu0 0.0
        %9308 = vmatpush.msra.mxu0 0.0
        %9309 = vmatpush.msra.mxu0 0.0
        %9310 = vmatpush.msra.mxu0 0.0
        %9311 = vmatpush.msra.mxu0 0.0
        %9312 = vmatpush.msra.mxu0 0.0
        %9313 = vmatpush.msra.mxu0 0.0
        %9314 = vmatpush.msra.mxu0 0.0
        %9315 = vmatpush.msra.mxu0 0.0
        %9316 = vmatpush.msra.mxu0 %v9126
        %9317 = vmatpush.msra.mxu0 %v9116
        %9318 = vmatmul.f32.gmra.mxu0 %v9297
        %v9319 = vpop.f32.mrf.mxu0
        %v9320 = vadd.f32 0.0, %v9319
        %9321 = vmatmul.f32.gmra.mxu0 %v9300
        %v9322 = vpop.f32.mrf.mxu0
        %v9323 = vadd.f32 0.0, %v9322
        %9324 = vdwg.mxu0
        %v9326 = vsel %vm9118, %v9040, 0
        %v9329 = vsel %vm9118, %v9055, 0
        %9331 = vmatpush.msra.mxu0 0.0
        %9332 = vmatpush.msra.mxu0 0.0
        %9333 = vmatpush.msra.mxu0 0.0
        %9334 = vmatpush.msra.mxu0 0.0
        %9335 = vmatpush.msra.mxu0 0.0
        %9336 = vmatpush.msra.mxu0 0.0
        %9337 = vmatpush.msra.mxu0 0.0
        %9338 = vmatpush.msra.mxu0 0.0
        %9339 = vmatpush.msra.mxu0 0.0
        %9340 = vmatpush.msra.mxu0 0.0
        %9341 = vmatpush.msra.mxu0 0.0
        %9342 = vmatpush.msra.mxu0 0.0
        %9343 = vmatpush.msra.mxu0 0.0
        %9344 = vmatpush.msra.mxu0 0.0
        %9345 = vmatpush.msra.mxu0 %v9126
        %9346 = vmatpush.msra.mxu0 %v9116
        %9347 = vmatmul.f32.gmra.mxu0 %v9326
        %v9348 = vpop.f32.mrf.mxu0
        %v9349 = vadd.f32 0.0, %v9348
        %9350 = vmatmul.f32.gmra.mxu0 %v9329
        %v9351 = vpop.f32.mrf.mxu0
        %v9352 = vadd.f32 0.0, %v9351
        %9353 = vdwg.mxu0
        %v9355 = vsel %vm9118, %v9070, 0
        %v9358 = vsel %vm9118, %v9085, 0
        %9360 = vmatpush.msra.mxu0 0.0
        %9361 = vmatpush.msra.mxu0 0.0
        %9362 = vmatpush.msra.mxu0 0.0
        %9363 = vmatpush.msra.mxu0 0.0
        %9364 = vmatpush.msra.mxu0 0.0
        %9365 = vmatpush.msra.mxu0 0.0
        %9366 = vmatpush.msra.mxu0 0.0
        %9367 = vmatpush.msra.mxu0 0.0
        %9368 = vmatpush.msra.mxu0 0.0
        %9369 = vmatpush.msra.mxu0 0.0
        %9370 = vmatpush.msra.mxu0 0.0
        %9371 = vmatpush.msra.mxu0 0.0
        %9372 = vmatpush.msra.mxu0 0.0
        %9373 = vmatpush.msra.mxu0 0.0
        %9374 = vmatpush.msra.mxu0 %v9126
        %9375 = vmatpush.msra.mxu0 %v9116
        %9376 = vmatmul.f32.gmra.mxu0 %v9355
        %v9377 = vpop.f32.mrf.mxu0
        %v9378 = vadd.f32 0.0, %v9377
        %9379 = vmatmul.f32.gmra.mxu0 %v9358
        %v9380 = vpop.f32.mrf.mxu0
        %v9381 = vadd.f32 0.0, %v9380
        %9382 = vdwg.mxu0
        %v9384 = vsel %vm9118, %v9100, 0
        %v9387 = vsel %vm9118, %v9115, 0
        %9389 = vmatpush.msra.mxu0 0.0
        %9390 = vmatpush.msra.mxu0 0.0
        %9391 = vmatpush.msra.mxu0 0.0
        %9392 = vmatpush.msra.mxu0 0.0
        %9393 = vmatpush.msra.mxu0 0.0
        %9394 = vmatpush.msra.mxu0 0.0
        %9395 = vmatpush.msra.mxu0 0.0
        %9396 = vmatpush.msra.mxu0 0.0
        %9397 = vmatpush.msra.mxu0 0.0
        %9398 = vmatpush.msra.mxu0 0.0
        %9399 = vmatpush.msra.mxu0 0.0
        %9400 = vmatpush.msra.mxu0 0.0
        %9401 = vmatpush.msra.mxu0 0.0
        %9402 = vmatpush.msra.mxu0 0.0
        %9403 = vmatpush.msra.mxu0 %v9126
        %9404 = vmatpush.msra.mxu0 %v9116
        %9405 = vmatmul.f32.gmra.mxu0 %v9384
        %v9406 = vpop.f32.mrf.mxu0
        %v9407 = vadd.f32 0.0, %v9406
        %9408 = vmatmul.f32.gmra.mxu0 %v9387
        %v9409 = vpop.f32.mrf.mxu0
        %v9410 = vadd.f32 0.0, %v9409
        %9411 = vdwg.mxu0
        %v9412 = vadd.f32 %v9146, %v9175
        %v9413 = vadd.f32 %v9149, %v9178
        %v9414 = vmul.f32 %v9412, 0.5
        %v9415 = vmul.f32 %v9413, 0.5
        %v9416 = vadd.f32 %v9204, %v9233
        %v9417 = vadd.f32 %v9207, %v9236
        %v9418 = vmul.f32 %v9416, 0.5
        %v9419 = vmul.f32 %v9417, 0.5
        %v9420 = vadd.f32 %v9262, %v9291
        %v9421 = vadd.f32 %v9265, %v9294
        %v9422 = vmul.f32 %v9420, 0.5
        %v9423 = vmul.f32 %v9421, 0.5
        %v9424 = vadd.f32 %v9320, %v9349
        %v9425 = vadd.f32 %v9323, %v9352
        %v9426 = vmul.f32 %v9424, 0.5
        %v9427 = vmul.f32 %v9425, 0.5
        %v9428 = vadd.f32 %v9378, %v9407
        %v9429 = vadd.f32 %v9381, %v9410
        %v9430 = vmul.f32 %v9428, 0.5
        %v9431 = vmul.f32 %v9429, 0.5
        %v9433 = vrot.slane %v9414, 1
        %9434 = vrot.lane.b32.xlu0 %v9433, 5
        %v9435 = vpop.permute.xlu0 %9434
        %v9437 = vrot.slane %v9414, 2
        %9438 = vrot.lane.b32.xlu0 %v9437, 10
        %v9439 = vpop.permute.xlu0 %9438
        %v9441 = vrot.slane %v9414, 3
        %9442 = vrot.lane.b32.xlu0 %v9441, 15
        %v9443 = vpop.permute.xlu0 %9442
        %v9445 = vrot.slane %v9414, 4
        %9446 = vrot.lane.b32.xlu0 %v9445, 20
        %v9447 = vpop.permute.xlu0 %9446
        %v9449 = vrot.slane %v9414, 5
        %9450 = vrot.lane.b32.xlu0 %v9449, 25
        %v9451 = vpop.permute.xlu0 %9450
        %v9453 = vrot.slane %v9414, 6
        %9454 = vrot.lane.b32.xlu0 %v9453, 30
        %v9455 = vpop.permute.xlu0 %9454
        %v9457 = vrot.slane %v9414, 7
        %9458 = vrot.lane.b32.xlu0 %v9457, 35
        %v9459 = vpop.permute.xlu0 %9458
        %9462 = vrot.lane.b32.xlu0 %v9415, 40
        %v9463 = vpop.permute.xlu0 %9462
        %v9465 = vrot.slane %v9415, 1
        %9466 = vrot.lane.b32.xlu0 %v9465, 45
        %v9467 = vpop.permute.xlu0 %9466
        %v9469 = vrot.slane %v9415, 2
        %9470 = vrot.lane.b32.xlu0 %v9469, 50
        %v9471 = vpop.permute.xlu0 %9470
        %v9473 = vrot.slane %v9415, 3
        %9474 = vrot.lane.b32.xlu0 %v9473, 55
        %v9475 = vpop.permute.xlu0 %9474
        %v9477 = vrot.slane %v9415, 4
        %9478 = vrot.lane.b32.xlu0 %v9477, 60
        %v9479 = vpop.permute.xlu0 %9478
        %v9481 = vrot.slane %v9415, 5
        %9482 = vrot.lane.b32.xlu0 %v9481, 65
        %v9483 = vpop.permute.xlu0 %9482
        %v9485 = vrot.slane %v9415, 6
        %9486 = vrot.lane.b32.xlu0 %v9485, 70
        %v9487 = vpop.permute.xlu0 %9486
        %v9489 = vrot.slane %v9415, 7
        %9490 = vrot.lane.b32.xlu0 %v9489, 75
        %v9491 = vpop.permute.xlu0 %9490
        %vm9493 = vcmask 39936
        %v9494 = vsel %vm9493, %v9414, %v9435
        %v9495 = vsel %vm9118, %v9494, %v9439
        %vm9496 = vcmask 121856
        %v9497 = vsel %vm9496, %v9495, %v9443
        %vm9498 = vcmask 162816
        %v9499 = vsel %vm9498, %v9497, %v9447
        %v9500 = vsel %vm2631, %v9499, %v9451
        %v9501 = vsel %vm463, %v9500, %v9455
        %vm9502 = vcmask 285696
        %v9503 = vsel %vm9502, %v9501, %v9459
        %vm9504 = vcmask 326656
        %v9505 = vsel %vm9504, %v9503, %v9463
        %vm9506 = vcmask 367616
        %v9507 = vsel %vm9506, %v9505, %v9467
        %vm9508 = vcmask 408576
        %v9509 = vsel %vm9508, %v9507, %v9471
        %vm9510 = vcmask 449536
        %v9511 = vsel %vm9510, %v9509, %v9475
        %vm9512 = vcmask 490496
        %v9513 = vsel %vm9512, %v9511, %v9479
        %vm9514 = vcmask 531456
        %v9515 = vsel %vm9514, %v9513, %v9483
        %vm9516 = vcmask 572416
        %v9517 = vsel %vm9516, %v9515, %v9487
        %vm9518 = vcmask 613376
        %v9519 = vsel %vm9518, %v9517, %v9491
        %v9521 = vrot.slane %v9418, 1
        %9522 = vrot.lane.b32.xlu0 %v9521, 5
        %v9523 = vpop.permute.xlu0 %9522
        %v9525 = vrot.slane %v9418, 2
        %9526 = vrot.lane.b32.xlu0 %v9525, 10
        %v9527 = vpop.permute.xlu0 %9526
        %v9529 = vrot.slane %v9418, 3
        %9530 = vrot.lane.b32.xlu0 %v9529, 15
        %v9531 = vpop.permute.xlu0 %9530
        %v9533 = vrot.slane %v9418, 4
        %9534 = vrot.lane.b32.xlu0 %v9533, 20
        %v9535 = vpop.permute.xlu0 %9534
        %v9537 = vrot.slane %v9418, 5
        %9538 = vrot.lane.b32.xlu0 %v9537, 25
        %v9539 = vpop.permute.xlu0 %9538
        %v9541 = vrot.slane %v9418, 6
        %9542 = vrot.lane.b32.xlu0 %v9541, 30
        %v9543 = vpop.permute.xlu0 %9542
        %v9545 = vrot.slane %v9418, 7
        %9546 = vrot.lane.b32.xlu0 %v9545, 35
        %v9547 = vpop.permute.xlu0 %9546
        %9550 = vrot.lane.b32.xlu0 %v9419, 40
        %v9551 = vpop.permute.xlu0 %9550
        %v9553 = vrot.slane %v9419, 1
        %9554 = vrot.lane.b32.xlu0 %v9553, 45
        %v9555 = vpop.permute.xlu0 %9554
        %v9557 = vrot.slane %v9419, 2
        %9558 = vrot.lane.b32.xlu0 %v9557, 50
        %v9559 = vpop.permute.xlu0 %9558
        %v9561 = vrot.slane %v9419, 3
        %9562 = vrot.lane.b32.xlu0 %v9561, 55
        %v9563 = vpop.permute.xlu0 %9562
        %v9565 = vrot.slane %v9419, 4
        %9566 = vrot.lane.b32.xlu0 %v9565, 60
        %v9567 = vpop.permute.xlu0 %9566
        %v9569 = vrot.slane %v9419, 5
        %9570 = vrot.lane.b32.xlu0 %v9569, 65
        %v9571 = vpop.permute.xlu0 %9570
        %v9573 = vrot.slane %v9419, 6
        %9574 = vrot.lane.b32.xlu0 %v9573, 70
        %v9575 = vpop.permute.xlu0 %9574
        %v9577 = vrot.slane %v9419, 7
        %9578 = vrot.lane.b32.xlu0 %v9577, 75
        %v9579 = vpop.permute.xlu0 %9578
        %v9581 = vsel %vm9493, %v9418, %v9523
        %v9582 = vsel %vm9118, %v9581, %v9527
        %v9583 = vsel %vm9496, %v9582, %v9531
        %v9584 = vsel %vm9498, %v9583, %v9535
        %v9585 = vsel %vm2631, %v9584, %v9539
        %v9586 = vsel %vm463, %v9585, %v9543
        %v9587 = vsel %vm9502, %v9586, %v9547
        %v9588 = vsel %vm9504, %v9587, %v9551
        %v9589 = vsel %vm9506, %v9588, %v9555
        %v9590 = vsel %vm9508, %v9589, %v9559
        %v9591 = vsel %vm9510, %v9590, %v9563
        %v9592 = vsel %vm9512, %v9591, %v9567
        %v9593 = vsel %vm9514, %v9592, %v9571
        %v9594 = vsel %vm9516, %v9593, %v9575
        %v9595 = vsel %vm9518, %v9594, %v9579
        %v9597 = vrot.slane %v9422, 1
        %9598 = vrot.lane.b32.xlu0 %v9597, 5
        %v9599 = vpop.permute.xlu0 %9598
        %v9601 = vrot.slane %v9422, 2
        %9602 = vrot.lane.b32.xlu0 %v9601, 10
        %v9603 = vpop.permute.xlu0 %9602
        %v9605 = vrot.slane %v9422, 3
        %9606 = vrot.lane.b32.xlu0 %v9605, 15
        %v9607 = vpop.permute.xlu0 %9606
        %v9609 = vrot.slane %v9422, 4
        %9610 = vrot.lane.b32.xlu0 %v9609, 20
        %v9611 = vpop.permute.xlu0 %9610
        %v9613 = vrot.slane %v9422, 5
        %9614 = vrot.lane.b32.xlu0 %v9613, 25
        %v9615 = vpop.permute.xlu0 %9614
        %v9617 = vrot.slane %v9422, 6
        %9618 = vrot.lane.b32.xlu0 %v9617, 30
        %v9619 = vpop.permute.xlu0 %9618
        %v9621 = vrot.slane %v9422, 7
        %9622 = vrot.lane.b32.xlu0 %v9621, 35
        %v9623 = vpop.permute.xlu0 %9622
        %9626 = vrot.lane.b32.xlu0 %v9423, 40
        %v9627 = vpop.permute.xlu0 %9626
        %v9629 = vrot.slane %v9423, 1
        %9630 = vrot.lane.b32.xlu0 %v9629, 45
        %v9631 = vpop.permute.xlu0 %9630
        %v9633 = vrot.slane %v9423, 2
        %9634 = vrot.lane.b32.xlu0 %v9633, 50
        %v9635 = vpop.permute.xlu0 %9634
        %v9637 = vrot.slane %v9423, 3
        %9638 = vrot.lane.b32.xlu0 %v9637, 55
        %v9639 = vpop.permute.xlu0 %9638
        %v9641 = vrot.slane %v9423, 4
        %9642 = vrot.lane.b32.xlu0 %v9641, 60
        %v9643 = vpop.permute.xlu0 %9642
        %v9645 = vrot.slane %v9423, 5
        %9646 = vrot.lane.b32.xlu0 %v9645, 65
        %v9647 = vpop.permute.xlu0 %9646
        %v9649 = vrot.slane %v9423, 6
        %9650 = vrot.lane.b32.xlu0 %v9649, 70
        %v9651 = vpop.permute.xlu0 %9650
        %v9653 = vrot.slane %v9423, 7
        %9654 = vrot.lane.b32.xlu0 %v9653, 75
        %v9655 = vpop.permute.xlu0 %9654
        %v9657 = vsel %vm9493, %v9422, %v9599
        %v9658 = vsel %vm9118, %v9657, %v9603
        %v9659 = vsel %vm9496, %v9658, %v9607
        %v9660 = vsel %vm9498, %v9659, %v9611
        %v9661 = vsel %vm2631, %v9660, %v9615
        %v9662 = vsel %vm463, %v9661, %v9619
        %v9663 = vsel %vm9502, %v9662, %v9623
        %v9664 = vsel %vm9504, %v9663, %v9627
        %v9665 = vsel %vm9506, %v9664, %v9631
        %v9666 = vsel %vm9508, %v9665, %v9635
        %v9667 = vsel %vm9510, %v9666, %v9639
        %v9668 = vsel %vm9512, %v9667, %v9643
        %v9669 = vsel %vm9514, %v9668, %v9647
        %v9670 = vsel %vm9516, %v9669, %v9651
        %v9671 = vsel %vm9518, %v9670, %v9655
        %v9673 = vrot.slane %v9426, 1
        %9674 = vrot.lane.b32.xlu0 %v9673, 5
        %v9675 = vpop.permute.xlu0 %9674
        %v9677 = vrot.slane %v9426, 2
        %9678 = vrot.lane.b32.xlu0 %v9677, 10
        %v9679 = vpop.permute.xlu0 %9678
        %v9681 = vrot.slane %v9426, 3
        %9682 = vrot.lane.b32.xlu0 %v9681, 15
        %v9683 = vpop.permute.xlu0 %9682
        %v9685 = vrot.slane %v9426, 4
        %9686 = vrot.lane.b32.xlu0 %v9685, 20
        %v9687 = vpop.permute.xlu0 %9686
        %v9689 = vrot.slane %v9426, 5
        %9690 = vrot.lane.b32.xlu0 %v9689, 25
        %v9691 = vpop.permute.xlu0 %9690
        %v9693 = vrot.slane %v9426, 6
        %9694 = vrot.lane.b32.xlu0 %v9693, 30
        %v9695 = vpop.permute.xlu0 %9694
        %v9697 = vrot.slane %v9426, 7
        %9698 = vrot.lane.b32.xlu0 %v9697, 35
        %v9699 = vpop.permute.xlu0 %9698
        %9702 = vrot.lane.b32.xlu0 %v9427, 40
        %v9703 = vpop.permute.xlu0 %9702
        %v9705 = vrot.slane %v9427, 1
        %9706 = vrot.lane.b32.xlu0 %v9705, 45
        %v9707 = vpop.permute.xlu0 %9706
        %v9709 = vrot.slane %v9427, 2
        %9710 = vrot.lane.b32.xlu0 %v9709, 50
        %v9711 = vpop.permute.xlu0 %9710
        %v9713 = vrot.slane %v9427, 3
        %9714 = vrot.lane.b32.xlu0 %v9713, 55
        %v9715 = vpop.permute.xlu0 %9714
        %v9717 = vrot.slane %v9427, 4
        %9718 = vrot.lane.b32.xlu0 %v9717, 60
        %v9719 = vpop.permute.xlu0 %9718
        %v9721 = vrot.slane %v9427, 5
        %9722 = vrot.lane.b32.xlu0 %v9721, 65
        %v9723 = vpop.permute.xlu0 %9722
        %v9725 = vrot.slane %v9427, 6
        %9726 = vrot.lane.b32.xlu0 %v9725, 70
        %v9727 = vpop.permute.xlu0 %9726
        %v9729 = vrot.slane %v9427, 7
        %9730 = vrot.lane.b32.xlu0 %v9729, 75
        %v9731 = vpop.permute.xlu0 %9730
        %v9733 = vsel %vm9493, %v9426, %v9675
        %v9734 = vsel %vm9118, %v9733, %v9679
        %v9735 = vsel %vm9496, %v9734, %v9683
        %v9736 = vsel %vm9498, %v9735, %v9687
        %v9737 = vsel %vm2631, %v9736, %v9691
        %v9738 = vsel %vm463, %v9737, %v9695
        %v9739 = vsel %vm9502, %v9738, %v9699
        %v9740 = vsel %vm9504, %v9739, %v9703
        %v9741 = vsel %vm9506, %v9740, %v9707
        %v9742 = vsel %vm9508, %v9741, %v9711
        %v9743 = vsel %vm9510, %v9742, %v9715
        %v9744 = vsel %vm9512, %v9743, %v9719
        %v9745 = vsel %vm9514, %v9744, %v9723
        %v9746 = vsel %vm9516, %v9745, %v9727
        %v9747 = vsel %vm9518, %v9746, %v9731
        %v9749 = vrot.slane %v9430, 1
        %9750 = vrot.lane.b32.xlu0 %v9749, 5
        %v9751 = vpop.permute.xlu0 %9750
        %v9753 = vrot.slane %v9430, 2
        %9754 = vrot.lane.b32.xlu0 %v9753, 10
        %v9755 = vpop.permute.xlu0 %9754
        %v9757 = vrot.slane %v9430, 3
        %9758 = vrot.lane.b32.xlu0 %v9757, 15
        %v9759 = vpop.permute.xlu0 %9758
        %v9761 = vrot.slane %v9430, 4
        %9762 = vrot.lane.b32.xlu0 %v9761, 20
        %v9763 = vpop.permute.xlu0 %9762
        %v9765 = vrot.slane %v9430, 5
        %9766 = vrot.lane.b32.xlu0 %v9765, 25
        %v9767 = vpop.permute.xlu0 %9766
        %v9769 = vrot.slane %v9430, 6
        %9770 = vrot.lane.b32.xlu0 %v9769, 30
        %v9771 = vpop.permute.xlu0 %9770
        %v9773 = vrot.slane %v9430, 7
        %9774 = vrot.lane.b32.xlu0 %v9773, 35
        %v9775 = vpop.permute.xlu0 %9774
        %9778 = vrot.lane.b32.xlu0 %v9431, 40
        %v9779 = vpop.permute.xlu0 %9778
        %v9781 = vrot.slane %v9431, 1
        %9782 = vrot.lane.b32.xlu0 %v9781, 45
        %v9783 = vpop.permute.xlu0 %9782
        %v9785 = vrot.slane %v9431, 2
        %9786 = vrot.lane.b32.xlu0 %v9785, 50
        %v9787 = vpop.permute.xlu0 %9786
        %v9789 = vrot.slane %v9431, 3
        %9790 = vrot.lane.b32.xlu0 %v9789, 55
        %v9791 = vpop.permute.xlu0 %9790
        %v9793 = vrot.slane %v9431, 4
        %9794 = vrot.lane.b32.xlu0 %v9793, 60
        %v9795 = vpop.permute.xlu0 %9794
        %v9797 = vrot.slane %v9431, 5
        %9798 = vrot.lane.b32.xlu0 %v9797, 65
        %v9799 = vpop.permute.xlu0 %9798
        %v9801 = vrot.slane %v9431, 6
        %9802 = vrot.lane.b32.xlu0 %v9801, 70
        %v9803 = vpop.permute.xlu0 %9802
        %v9805 = vrot.slane %v9431, 7
        %9806 = vrot.lane.b32.xlu0 %v9805, 75
        %v9807 = vpop.permute.xlu0 %9806
        %v9809 = vsel %vm9493, %v9430, %v9751
        %v9810 = vsel %vm9118, %v9809, %v9755
        %v9811 = vsel %vm9496, %v9810, %v9759
        %v9812 = vsel %vm9498, %v9811, %v9763
        %v9813 = vsel %vm2631, %v9812, %v9767
        %v9814 = vsel %vm463, %v9813, %v9771
        %v9815 = vsel %vm9502, %v9814, %v9775
        %v9816 = vsel %vm9504, %v9815, %v9779
        %v9817 = vsel %vm9506, %v9816, %v9783
        %v9818 = vsel %vm9508, %v9817, %v9787
        %v9819 = vsel %vm9510, %v9818, %v9791
        %v9820 = vsel %vm9512, %v9819, %v9795
        %v9821 = vsel %vm9514, %v9820, %v9799
        %v9822 = vsel %vm9516, %v9821, %v9803
        %v9823 = vsel %vm9518, %v9822, %v9807
        %9825 = vrot.lane.b32.xlu0 %v9595, 80
        %v9826 = vpop.permute.xlu0 %9825
        %9829 = vrot.lane.b32.xlu0 %v9671, 32
        %v9830 = vpop.permute.xlu0 %9829
        %9833 = vrot.lane.b32.xlu0 %v9747, 112
        %v9834 = vpop.permute.xlu0 %9833
        %9837 = vrot.lane.b32.xlu0 %v9823, 64
        %v9838 = vpop.permute.xlu0 %9837
        %vm9840 = vcmask 654336
        %v9841 = vsel %vm9840, %v9519, %v9826
        %vm9842 = vcmask 261120
        %v9843 = vsel %vm9842, %v9826, %v9830
        %vm9844 = vcmask 916480
        %v9845 = vsel %vm9844, %v9843, %v9834
        %vm9846 = vcmask 523264
        %v9847 = vsel %vm9846, %v9834, %v9838
        %v9848 = vld [vmem:[%s5] sm:$0xff]
        %v9849 = vld [vmem:[%s5 + $0x8] sm:$0xff]
        %v9850 = vld [vmem:[%s5 + $0x10] sm:$0xff]
        %v9851 = vld [vmem:[%s5 + $0x18] sm:$0xff]
        %v9852 = vld [vmem:[%s5 + $0x20] sm:$0xff]
        %v9853 = vld [vmem:[%s5 + $0x28] sm:$0xff]
        %v9854 = vld [vmem:[%s5 + $0x30] sm:$0xff]
        %v9855 = vld [vmem:[%s5 + $0x38] sm:$0xff]
        %v9856 = vld [vmem:[%s5 + $0x40] sm:$0xff]
        %v9857 = vld [vmem:[%s5 + $0x48] sm:$0xff]
        %v9858 = vld [vmem:[%s5 + $0x50] sm:$0xff]
        %v9859 = vld [vmem:[%s5 + $0x58] sm:$0xff]
        %v9860 = vld [vmem:[%s5 + $0x60] sm:$0xff]
        %v9861 = vld [vmem:[%s5 + $0x68] sm:$0xff]
        %v9862 = vld [vmem:[%s5 + $0x70] sm:$0xff]
        %v9863 = vld [vmem:[%s5 + $0x78] sm:$0xff]
        %v9864 = vld [vmem:[%s5 + $0x80] sm:$0xff]
        %v9865 = vld [vmem:[%s5 + $0x88] sm:$0xff]
        %v9866 = vld [vmem:[%s5 + $0x90] sm:$0xff]
        %v9867 = vld [vmem:[%s5 + $0x98] sm:$0xff]
        %v9868 = vld [vmem:[%s5 + $0xa0] sm:$0xff]
        %v9869 = vld [vmem:[%s5 + $0xa8] sm:$0xff]
        %v9870 = vld [vmem:[%s5 + $0xb0] sm:$0xff]
        %v9871 = vld [vmem:[%s5 + $0xb8] sm:$0xff]
        %v9872 = vld [vmem:[%s5 + $0xc0] sm:$0xff]
        %v9873 = vld [vmem:[%s5 + $0xc8] sm:$0xff]
        %v9874 = vld [vmem:[%s5 + $0xd0] sm:$0xff]
        %v9875 = vld [vmem:[%s5 + $0xd8] sm:$0xff]
        %v9876 = vld [vmem:[%s5 + $0xe0] sm:$0xff]
        %v9877 = vld [vmem:[%s5 + $0xe8] sm:$0xff]
        %v9878 = vld [vmem:[%s5 + $0xf0] sm:$0xff]
        %v9879 = vld [vmem:[%s5 + $0xf8] sm:$0xff]
        %v9880 = vld [vmem:[%s5 + $0x100] sm:$0xff]
        %v9881 = vld [vmem:[%s5 + $0x108] sm:$0xff]
        %v9882 = vld [vmem:[%s5 + $0x110] sm:$0xff]
        %v9883 = vld [vmem:[%s5 + $0x118] sm:$0xff]
        %v9884 = vld [vmem:[%s5 + $0x120] sm:$0xff]
        %v9885 = vld [vmem:[%s5 + $0x128] sm:$0xff]
        %v9886 = vld [vmem:[%s5 + $0x130] sm:$0xff]
        %v9887 = vld [vmem:[%s5 + $0x138] sm:$0xff]
        %v9888 = vld [vmem:[%s5 + $0x140] sm:$0xff]
        %v9889 = vld [vmem:[%s5 + $0x148] sm:$0xff]
        %v9890 = vld [vmem:[%s5 + $0x150] sm:$0xff]
        %v9891 = vld [vmem:[%s5 + $0x158] sm:$0xff]
        %v9892 = vld [vmem:[%s5 + $0x160] sm:$0xff]
        %v9893 = vld [vmem:[%s5 + $0x168] sm:$0xff]
        %v9894 = vld [vmem:[%s5 + $0x170] sm:$0xff]
        %v9895 = vld [vmem:[%s5 + $0x178] sm:$0xff]
        %v9896 = vld [vmem:[%s5 + $0x180] sm:$0xff]
        %v9897 = vld [vmem:[%s5 + $0x188] sm:$0xff]
        %v9898 = vld [vmem:[%s6] sm:$0x1]
        %vm9899 = vcmask 130048
        %v9900 = vsel %vm9899, %v9838, 0
        %9902 = vmatpush.msra.mxu0 %v9863
        %9903 = vmatpush.msra.mxu0 %v9862
        %9904 = vmatpush.msra.mxu0 %v9861
        %9905 = vmatpush.msra.mxu0 %v9860
        %9906 = vmatpush.msra.mxu0 %v9859
        %9907 = vmatpush.msra.mxu0 %v9858
        %9908 = vmatpush.msra.mxu0 %v9857
        %9909 = vmatpush.msra.mxu0 %v9856
        %9910 = vmatpush.msra.mxu0 %v9855
        %9911 = vmatpush.msra.mxu0 %v9854
        %9912 = vmatpush.msra.mxu0 %v9853
        %9913 = vmatpush.msra.mxu0 %v9852
        %9914 = vmatpush.msra.mxu0 %v9851
        %9915 = vmatpush.msra.mxu0 %v9850
        %9916 = vmatpush.msra.mxu0 %v9849
        %9917 = vmatpush.msra.mxu0 %v9848
        %9918 = vmatmul.f32.gmra.mxu0 %v9841
        %v9919 = vpop.f32.mrf.mxu0
        %v9920 = vadd.f32 %v9898, %v9919
        %9921 = vdwg.mxu0
        %9922 = vmatpush.msra.mxu0 %v9879
        %9923 = vmatpush.msra.mxu0 %v9878
        %9924 = vmatpush.msra.mxu0 %v9877
        %9925 = vmatpush.msra.mxu0 %v9876
        %9926 = vmatpush.msra.mxu0 %v9875
        %9927 = vmatpush.msra.mxu0 %v9874
        %9928 = vmatpush.msra.mxu0 %v9873
        %9929 = vmatpush.msra.mxu0 %v9872
        %9930 = vmatpush.msra.mxu0 %v9871
        %9931 = vmatpush.msra.mxu0 %v9870
        %9932 = vmatpush.msra.mxu0 %v9869
        %9933 = vmatpush.msra.mxu0 %v9868
        %9934 = vmatpush.msra.mxu0 %v9867
        %9935 = vmatpush.msra.mxu0 %v9866
        %9936 = vmatpush.msra.mxu0 %v9865
        %9937 = vmatpush.msra.mxu0 %v9864
        %9938 = vmatmul.f32.gmra.mxu0 %v9845
        %v9939 = vpop.f32.mrf.mxu0
        %v9940 = vadd.f32 %v9920, %v9939
        %9941 = vdwg.mxu0
        %9942 = vmatpush.msra.mxu0 %v9895
        %9943 = vmatpush.msra.mxu0 %v9894
        %9944 = vmatpush.msra.mxu0 %v9893
        %9945 = vmatpush.msra.mxu0 %v9892
        %9946 = vmatpush.msra.mxu0 %v9891
        %9947 = vmatpush.msra.mxu0 %v9890
        %9948 = vmatpush.msra.mxu0 %v9889
        %9949 = vmatpush.msra.mxu0 %v9888
        %9950 = vmatpush.msra.mxu0 %v9887
        %9951 = vmatpush.msra.mxu0 %v9886
        %9952 = vmatpush.msra.mxu0 %v9885
        %9953 = vmatpush.msra.mxu0 %v9884
        %9954 = vmatpush.msra.mxu0 %v9883
        %9955 = vmatpush.msra.mxu0 %v9882
        %9956 = vmatpush.msra.mxu0 %v9881
        %9957 = vmatpush.msra.mxu0 %v9880
        %9958 = vmatmul.f32.gmra.mxu0 %v9847
        %v9959 = vpop.f32.mrf.mxu0
        %v9960 = vadd.f32 %v9940, %v9959
        %9961 = vdwg.mxu0
        %9962 = vmatpush.msra.mxu0 0.0
        %9963 = vmatpush.msra.mxu0 0.0
        %9964 = vmatpush.msra.mxu0 0.0
        %9965 = vmatpush.msra.mxu0 0.0
        %9966 = vmatpush.msra.mxu0 0.0
        %9967 = vmatpush.msra.mxu0 0.0
        %9968 = vmatpush.msra.mxu0 0.0
        %9969 = vmatpush.msra.mxu0 0.0
        %9970 = vmatpush.msra.mxu0 0.0
        %9971 = vmatpush.msra.mxu0 0.0
        %9972 = vmatpush.msra.mxu0 0.0
        %9973 = vmatpush.msra.mxu0 0.0
        %9974 = vmatpush.msra.mxu0 0.0
        %9975 = vmatpush.msra.mxu0 0.0
        %9976 = vmatpush.msra.mxu0 %v9897
        %9977 = vmatpush.msra.mxu0 %v9896
        %9978 = vmatmul.f32.gmra.mxu0 %v9900
        %v9979 = vpop.f32.mrf.mxu0
        %v9980 = vadd.f32 %v9960, %v9979
        %9981 = vdwg.mxu0
        %v9982 = vxor.u32 %v9980, 2147483648
        %v9983 = vmul.f32 %v9982, 1.442695
        %v9984 = vpow.pop %v9983
        %v9985 = vadd.f32 %v9984, 1.0
        %v9986 = vrcp.pop %v9985
        %v9987 = vmul.f32 %v9985, %v9986
        %v9988 = vsub.f32 1.0, %v9987
        %v9989 = vmul.f32 %v9986, %v9988
        %v9990 = vadd.f32 %v9986, %v9989
        %vm9991 = vweird.f32 %v9985
        %vm9992 = vweird.f32 %v9986
        %vm9993 = vmor %vm9991, %vm9992
        %v9994 = vsel %vm9993, %v9986, %v9990
        %v9995 = vand.u32 2147483647, %v9985
        %vm9996 = vcmp.eq.f32.partialorder %v9995, 8.507059e+37
        %v9997 = vand.u32 %v9985, 2147483648
        %v9998 = vor.u32 1.1754944e-38, %v9997
        %v9999 = vsel %vm9996, %v9998, %v9994
        %v10000 = vmul.f32 1.0, %v9999
        %v10001 = vld [vmem:[%s7] sm:$0xff]
        %v10002 = vld [vmem:[%s7 + $0x8] sm:$0xff]
        %v10003 = vld [vmem:[%s7 + $0x10] sm:$0xff]
        %v10004 = vld [vmem:[%s7 + $0x18] sm:$0xff]
        %v10005 = vld [vmem:[%s7 + $0x20] sm:$0xff]
        %v10006 = vld [vmem:[%s7 + $0x28] sm:$0xff]
        %v10007 = vld [vmem:[%s7 + $0x30] sm:$0xff]
        %v10008 = vld [vmem:[%s7 + $0x38] sm:$0xff]
        %v10009 = vld [vmem:[%s7 + $0x40] sm:$0xff]
        %v10010 = vld [vmem:[%s7 + $0x48] sm:$0xff]
        %v10011 = vld [vmem:[%s7 + $0x50] sm:$0xff]
        %v10012 = vld [vmem:[%s7 + $0x58] sm:$0xff]
        %v10013 = vld [vmem:[%s7 + $0x60] sm:$0xff]
        %v10014 = vld [vmem:[%s7 + $0x68] sm:$0xff]
        %v10015 = vld [vmem:[%s7 + $0x70] sm:$0xff]
        %v10016 = vld [vmem:[%s8] sm:$0x1]
        %vm10017 = vcmask 982016
        %v10019 = vsel %vm10017, %v10000, 0
        %10021 = vmatpush.msra.mxu0 0.0
        %10022 = vmatpush.msra.mxu0 %v10015
        %10023 = vmatpush.msra.mxu0 %v10014
        %10024 = vmatpush.msra.mxu0 %v10013
        %10025 = vmatpush.msra.mxu0 %v10012
        %10026 = vmatpush.msra.mxu0 %v10011
        %10027 = vmatpush.msra.mxu0 %v10010
        %10028 = vmatpush.msra.mxu0 %v10009
        %10029 = vmatpush.msra.mxu0 %v10008
        %10030 = vmatpush.msra.mxu0 %v10007
        %10031 = vmatpush.msra.mxu0 %v10006
        %10032 = vmatpush.msra.mxu0 %v10005
        %10033 = vmatpush.msra.mxu0 %v10004
        %10034 = vmatpush.msra.mxu0 %v10003
        %10035 = vmatpush.msra.mxu0 %v10002
        %10036 = vmatpush.msra.mxu0 %v10001
        %10037 = vmatmul.f32.gmra.mxu0 %v10019
        %v10038 = vpop.f32.mrf.mxu0
        %v10039 = vadd.f32 %v10016, %v10038
        %10040 = vdwg.mxu0
        %v10041 = vxor.u32 %v10039, 2147483648
        %v10042 = vmul.f32 %v10041, 1.442695
        %v10043 = vpow.pop %v10042
        %v10044 = vadd.f32 %v10043, 1.0
        %v10045 = vrcp.pop %v10044
        %v10046 = vmul.f32 %v10044, %v10045
        %v10047 = vsub.f32 1.0, %v10046
        %v10048 = vmul.f32 %v10045, %v10047
        %v10049 = vadd.f32 %v10045, %v10048
        %vm10050 = vweird.f32 %v10044
        %vm10051 = vweird.f32 %v10045
        %vm10052 = vmor %vm10050, %vm10051
        %v10053 = vsel %vm10052, %v10045, %v10049
        %v10054 = vand.u32 2147483647, %v10044
        %vm10055 = vcmp.eq.f32.partialorder %v10054, 8.507059e+37
        %v10056 = vand.u32 %v10044, 2147483648
        %v10057 = vor.u32 1.1754944e-38, %v10056
        %v10058 = vsel %vm10055, %v10057, %v10053
        %v10059 = vmul.f32 1.0, %v10058
        %v10060 = vld [vmem:[%s9] sm:$0xff]
        %v10061 = vld [vmem:[%s9 + $0x8] sm:$0xff]
        %v10062 = vld [vmem:[%s9 + $0x10] sm:$0xff]
        %v10063 = vld [vmem:[%s9 + $0x18] sm:$0xff]
        %v10064 = vld [vmem:[%s9 + $0x20] sm:$0xff]
        %v10065 = vld [vmem:[%s9 + $0x28] sm:$0xff]
        %v10066 = vld [vmem:[%s9 + $0x30] sm:$0xff]
        %v10067 = vld [vmem:[%s9 + $0x38] sm:$0xff]
        %v10068 = vld [vmem:[%s9 + $0x40] sm:$0xff]
        %v10069 = vld [vmem:[%s9 + $0x48] sm:$0xff]
        %v10070 = vld [vmem:[%s9 + $0x50] sm:$0xf]
        %v10071 = vld [vmem:[%s10] sm:$0x1]
        %vm10072 = vcmask 687104
        %v10074 = vsel %vm10072, %v10059, 0
        %v10077 = vsel %vm1877, %v10070, 0
        %10079 = vmatpush.msra.mxu0 0.0
        %10080 = vmatpush.msra.mxu0 0.0
        %10081 = vmatpush.msra.mxu0 0.0
        %10082 = vmatpush.msra.mxu0 0.0
        %10083 = vmatpush.msra.mxu0 0.0
        %10084 = vmatpush.msra.mxu0 %v10077
        %10085 = vmatpush.msra.mxu0 %v10069
        %10086 = vmatpush.msra.mxu0 %v10068
        %10087 = vmatpush.msra.mxu0 %v10067
        %10088 = vmatpush.msra.mxu0 %v10066
        %10089 = vmatpush.msra.mxu0 %v10065
        %10090 = vmatpush.msra.mxu0 %v10064
        %10091 = vmatpush.msra.mxu0 %v10063
        %10092 = vmatpush.msra.mxu0 %v10062
        %10093 = vmatpush.msra.mxu0 %v10061
        %10094 = vmatpush.msra.mxu0 %v10060
        %10095 = vmatmul.f32.gmra.mxu0 %v10074
        %v10096 = vpop.f32.mrf.mxu0
        %v10097 = vadd.f32 %v10071, %v10096
        %10098 = vdwg.mxu0
        %vm10099 = vcmask 73728
        %10100 = vst.msk [vmem:[%s432] sm:$0x1] %vm10099, %v10097
        %s10101 = sand.u32 %s313, 1
        %s10102 = scalar_lea.sflag [#allocation3], %s10101
        %s10103 = sand.u32 %s313, 1
        %s10104 = scalar_lea.vmem [#allocation2], %s10103
        // Predicated region
        $region73: #{lenet_forward.1} parent=71 // pred_check
          %p10105 = pneg %p323
        $region74: #{lenet_forward.1} parent=71 // pred_check_branch
          %10107 = sbr.rel (%p10105) target = $region76
        $region75: #{lenet_forward.1} parent=71 // pred_region
          %10109 = vsyncadd %s10102, 0
          %s10110 = scalar_lea.hbm %s13, %s27
          %s10112 = sshll.u32 %s10104, 4
          %s10113 = int_to_ptr.vmem [resolvable:$true] %s10112
          %s10114 = sshll.u32 %s10110, 4
          %s10115 = int_to_ptr.hbm [resolvable:$true] %s10114
          %10117 = dma.vmem_to_hbm [thread:$0]  %s10113, 16, %s10115, %s10102
        $region76: #{lenet_forward.1} parent=71 // pred_fallthru
          _
      $region72: #{lenet_forward.1} parent=5 // pred_fallthru
        _
      %p10118 = scmp.le.s32.totalorder 2, %s22
      // Predicated region
      $region77: #{lenet_forward.1} parent=5 // pred_check
        %p10119 = pneg %p10118
      $region78: #{lenet_forward.1} parent=5 // pred_check_branch
        %10121 = sbr.rel (%p10119) target = $region80
      $region79: #{lenet_forward.1} parent=5 // pred_region
        %s10122 = ssub.s32 %s22, 2
        // Predicated region
        $region81: #{lenet_forward.1} parent=79 // pred_check
          %p10123 = pneg %p329
        $region82: #{lenet_forward.1} parent=79 // pred_check_branch
          %10125 = sbr.rel (%p10123) target = $region84
        $region83: #{lenet_forward.1} parent=79 // pred_region
          %s10126 = sand.u32 %s314, 1
          %s10127 = scalar_lea.sflag [#allocation3], %s10126
          %s10128 = sand.u32 %s314, 1
          %s10129 = scalar_lea.vmem [#allocation2], %s10128
          %10131 = dma.done %s10127, 16
        $region84: #{lenet_forward.1} parent=79 // pred_fallthru
          _
      $region80: #{lenet_forward.1} parent=5 // pred_fallthru
        _
    $region6: #{lenet_forward.1} parent=1 // loop_footer
      %s26 = sadd.s32 1, %s22
    $region7: #{lenet_forward.1} parent=1 // loop_footer_branch
      %21 = sbr.rel target = $region3
    $region8: #{lenet_forward.1} parent=1 // loop_exit
      _
    %10132 = vsyncpa [#allocation3], 1
    %s10133 = scalar_lea.sflag [#allocation3], 1
    %10134 = vsyncpa %s10133, 1

</llo_original>
